<compile_context>
chip_gen: v6e
topology: v6e:2x2x1
jax: 0.10.0
libtpu: 0.0.40
codegen_flags: <defaults>
</compile_context>

<pallas_src>
import functools

import jax
import jax.numpy as jnp
from jax.experimental import pallas as pl
from jax.experimental.pallas import tpu as pltpu


def _round_up(a, b):
    return ((a + b - 1) // b) * b


def _masked_conv_taps_kernel(x_ref, halo_ref, w_ref, b_ref, o_ref, slab_ref,
                             *, tm, hb, row_stride):
    """One (tm, tn) output tile of the flattened padded-grid conv.

    x_ref    : (tm, C_in)    bf16  body rows of the flattened padded input
    halo_ref : (hb, C_in)    bf16  next hb rows (tap halo)
    w_ref    : (9, C_in, tn) bf16  per-tap weight slices (mask folded in)
    b_ref    : (1, tn)       f32   masked bias
    o_ref    : (tm, tn)      f32   output tile (accumulated in place)
    slab_ref : (tm+hb, C_in) bf16  VMEM scratch: contiguous body+halo slab
    """
    # Assemble the contiguous slab once; all 9 taps are static row-offset
    # slices of it (VMEM-only traffic, no additional HBM reads).
    slab_ref[0:tm, :] = x_ref[...]
    slab_ref[tm:tm + hb, :] = halo_ref[...]

    # Init with the (masked) bias, then accumulate the 9 shifted matmuls
    # directly into the f32 output block (no separate accumulator scratch).
    o_ref[...] = jnp.broadcast_to(b_ref[...], o_ref.shape)
    for t in range(9):
        kh, kw = divmod(t, 3)
        off = kh * row_stride + kw            # static row shift of tap (kh, kw)
        o_ref[...] += jnp.dot(slab_ref[off:off + tm, :], w_ref[t],
                              preferred_element_type=jnp.float32)


def _pick_tiles(m_flat, c_in, c_pad, hb):
    """Generation-aware tile sizes (large on v5e/v6e 128MiB VMEM, safe on v7x 64MiB)."""
    try:
        vmem_cap = pltpu.get_tpu_info().vmem_capacity_bytes
    except Exception:
        vmem_cap = 64 * 1024 * 1024
    if vmem_cap >= 100 * 1024 * 1024:         # v5e / v6e (128 MiB physical VMEM)
        vmem_limit = 96 * 1024 * 1024
        tm_cap = 2048
    else:                                     # v7x (64 MiB per TensorCore)
        vmem_limit = 44 * 1024 * 1024
        tm_cap = 1024
    budget = int(vmem_limit * 0.7)            # headroom for Mosaic internal scratch

    # Output-channel tile: multiple of 128 (lane-dense stores) dividing C_pad.
    tn = 128
    for t in (512, 384, 256, 128):
        if t <= c_pad and c_pad % t == 0:
            tn = t
            break

    # Rough per-step VMEM bytes: 2x (body + out) double buffers + halo + slab + weights.
    per_row = 2 * (c_in * 2 + tn * 4) + c_in * 2
    const = 3 * hb * c_in * 2 + 9 * c_in * tn * 2 + tn * 4
    tm_fit = max(hb, (budget - const) // max(per_row, 1))
    tm = min(tm_cap, tm_fit, _round_up(m_flat, hb))
    tm = max(hb, (tm // hb) * hb)             # multiple of hb (halo-block alignment)
    return tm, tn, vmem_limit


def masked_conv2d_pallas(x_nchw, weight, bias, mask):
    """Conv2d(kernel=3, stride=1, padding=1) followed by a per-channel mask.

    x_nchw : (N, C_in, H, W) float32
    weight : (C_out, C_in, 3, 3) float32   (PyTorch OIHW layout)
    bias   : (C_out,) float32
    mask   : (C_out,) float32              (broadcast like (1, C_out, 1, 1))
    returns: (N, C_out, H, W) float32
    """
    N, C_in, H, W = x_nchw.shape
    C_out, C_in_w, KH, KW = weight.shape
    assert C_in_w == C_in and (KH, KW) == (3, 3)

    Hp, Wp = H + 2, W + 2
    M_flat = N * Hp * Wp                      # output rows on the padded flat grid
    row_stride = Wp                           # flat-row shift of a +1 step in h
    halo = 2 * Wp + 2                         # max tap offset (kh=2, kw=2)
    hb = _round_up(halo, 16)                  # halo block rows (sublane aligned)

    C_in_pad = _round_up(C_in, 8)             # keep contraction dim sublane-friendly
    C_pad = _round_up(C_out, 128)             # lane-dense output stores
    tm, tn, vmem_limit = _pick_tiles(M_flat, C_in_pad, C_pad, hb)
    M_pad = _round_up(M_flat, tm)

    # ---- glue: NCHW -> padded NHWC -> flattened (rows, C_in), bf16 ----------
    x_nhwc = jnp.transpose(x_nchw, (0, 2, 3, 1)).astype(jnp.bfloat16)
    xp = jnp.pad(x_nhwc, ((0, 0), (1, 1), (1, 1), (0, C_in_pad - C_in)))
    x_flat = xp.reshape(M_flat, C_in_pad)
    x_flat = jnp.pad(x_flat, ((0, M_pad + hb - M_flat), (0, 0)))

    # ---- fold the pruning mask into weight & bias ---------------------------
    # Masked output channels become all-zero weight columns and zero bias, so
    # the kernel needs no mask stream and pruned channels come out exactly 0.
    w_taps = jnp.transpose(weight, (2, 3, 1, 0)).reshape(9, C_in, C_out)
    w_taps = w_taps * mask.reshape(1, 1, C_out)
    w_taps = jnp.pad(
        w_taps, ((0, 0), (0, C_in_pad - C_in), (0, C_pad - C_out))
    ).astype(jnp.bfloat16)
    b_row = jnp.pad((bias * mask).reshape(1, C_out),
                    ((0, 0), (0, C_pad - C_out))).astype(jnp.float32)

    grid = (M_pad // tm, C_pad // tn)         # (row tiles, channel tiles), both parallel
    blocks_per_tile = tm // hb

    kernel = functools.partial(_masked_conv_taps_kernel,
                               tm=tm, hb=hb, row_stride=row_stride)

    cost = pl.CostEstimate(
        flops=2 * M_pad * 9 * C_in_pad * C_pad,
        transcendentals=0,
        bytes_accessed=int(x_flat.size * 2 + w_taps.size * 2 * grid[0]
                           + b_row.size * 4 + M_pad * C_pad * 4),
    )

    out_flat = pl.pallas_call(
        kernel,
        out_shape=jax.ShapeDtypeStruct((M_pad, C_pad), jnp.float32),
        grid_spec=pltpu.PrefetchScalarGridSpec(
            num_scalar_prefetch=0,
            grid=grid,
            in_specs=[
                pl.BlockSpec((tm, C_in_pad), lambda i, j: (i, 0)),
                pl.BlockSpec((hb, C_in_pad),
                             lambda i, j: ((i + 1) * blocks_per_tile, 0)),
                pl.BlockSpec((9, C_in_pad, tn), lambda i, j: (0, 0, j)),
                pl.BlockSpec((1, tn), lambda i, j: (0, j)),
            ],
            out_specs=pl.BlockSpec((tm, tn), lambda i, j: (i, j)),
            scratch_shapes=[pltpu.VMEM((tm + hb, C_in_pad), jnp.bfloat16)],
        ),
        compiler_params=pltpu.CompilerParams(
            dimension_semantics=("parallel", "parallel"),
            vmem_limit_bytes=vmem_limit,
        ),
        cost_estimate=cost,
    )(x_flat, x_flat, w_taps, b_row)

    # ---- glue: padded flat grid -> NCHW --------------------------------------
    out_grid = out_flat[:M_flat, :C_out].reshape(N, Hp, Wp, C_out)
    out_nhwc = out_grid[:, :H, :W, :]
    return jnp.transpose(out_nhwc, (0, 3, 1, 2))


def reference_masked_conv2d(x_nchw, weight, bias, mask):
    out = jax.lax.conv_general_dilated(
        x_nchw, weight, window_strides=(1, 1), padding=((1, 1), (1, 1)),
        dimension_numbers=("NCHW", "OIHW", "NCHW"),
        precision=jax.lax.Precision.HIGHEST)
    out = out + bias.reshape(1, -1, 1, 1)
    return out * mask.reshape(1, -1, 1, 1)


if __name__ == "__main__":
    key = jax.random.PRNGKey(0)
    k_x, k_w, k_b = jax.random.split(key, 3)

    N, C_in, H, W = 2, 4, 16, 16
    C_out = 8

    x = jax.random.normal(k_x, (N, C_in, H, W), dtype=jnp.float32)
    weight = jax.random.normal(k_w, (C_out, C_in, 3, 3), dtype=jnp.float32) * 0.1
    bias = jax.random.normal(k_b, (C_out,), dtype=jnp.float32) * 0.01
    # deterministic pruning mask: zero out every other output channel
    mask = (jnp.arange(C_out) % 2).astype(jnp.float32)

    fn = jax.jit(masked_conv2d_pallas)
    out = jax.block_until_ready(fn(x, weight, bias, mask))

    ref = reference_masked_conv2d(x, weight, bias, mask)
    assert out.shape == (N, C_out, H, W)
    assert out.dtype == jnp.float32
    # bf16 MXU inputs with f32 accumulation -> loose elementwise tolerance
    assert jnp.allclose(out, ref, atol=5e-2, rtol=5e-2), float(
        jnp.max(jnp.abs(out - ref)))
    # pruned (masked) channels must be exactly zero
    assert bool(jnp.all(out[:, 0::2] == 0.0))

    print("KERNEL_OK")
</pallas_src>

<mosaic_0001>
module attributes {stable_mosaic.version = 11 : i64} {
  func.func @_masked_conv_taps_kernel(%arg0: i32, %arg1: i32, %arg2: memref<672x8xbf16, #tpu.memory_space<vmem>>, %arg3: memref<48x8xbf16, #tpu.memory_space<vmem>>, %arg4: memref<9x8x128xbf16, #tpu.memory_space<vmem>>, %arg5: memref<1x128xf32, #tpu.memory_space<vmem>>, %arg6: memref<672x128xf32, #tpu.memory_space<vmem>>, %arg7: memref<720x8xbf16, #tpu.memory_space<vmem>>) attributes {dimension_semantics = [#tpu.dimension_semantics<parallel>, #tpu.dimension_semantics<parallel>], iteration_bounds = array<i64: 1, 1>, scalar_prefetch = 0 : i64, scratch_operands = 1 : i64, tpu.core_type = #tpu.core_type<tc>, window_params = [{transform_indices = @transform_0, window_bounds = array<i64: 672, 8>}, {transform_indices = @transform_1, window_bounds = array<i64: 48, 8>}, {transform_indices = @transform_2, window_bounds = array<i64: 9, 8, 128>}, {transform_indices = @transform_3, window_bounds = array<i64: 1, 128>}, {transform_indices = @transform_4, window_bounds = array<i64: 672, 128>}]} {
    %c0 = arith.constant 0 : index
    %c0_0 = arith.constant 0 : index
    %0 = vector.load %arg2[%c0, %c0_0] : memref<672x8xbf16, #tpu.memory_space<vmem>>, vector<672x8xbf16>
    %c0_1 = arith.constant 0 : index
    %c0_2 = arith.constant 0 : index
    %1 = vector.load %arg7[%c0_1, %c0_2] : memref<720x8xbf16, #tpu.memory_space<vmem>>, vector<672x8xbf16>
    tpu.vector_store %arg7[%c0_1, %c0_2], %0 {strides = array<i32>} : memref<720x8xbf16, #tpu.memory_space<vmem>>, vector<672x8xbf16>,
    %c0_3 = arith.constant 0 : index
    %c0_4 = arith.constant 0 : index
    %2 = vector.load %arg3[%c0_3, %c0_4] : memref<48x8xbf16, #tpu.memory_space<vmem>>, vector<48x8xbf16>
    %c672 = arith.constant 672 : index
    %c0_5 = arith.constant 0 : index
    %3 = vector.load %arg7[%c672, %c0_5] : memref<720x8xbf16, #tpu.memory_space<vmem>>, vector<48x8xbf16>
    tpu.vector_store %arg7[%c672, %c0_5], %2 {strides = array<i32>} : memref<720x8xbf16, #tpu.memory_space<vmem>>, vector<48x8xbf16>,
    %c0_6 = arith.constant 0 : index
    %c0_7 = arith.constant 0 : index
    %4 = vector.load %arg5[%c0_6, %c0_7] : memref<1x128xf32, #tpu.memory_space<vmem>>, vector<1x128xf32>
    %5 = vector.shape_cast %4 : vector<1x128xf32> to vector<1x128xf32>
    %6 = vector.broadcast %5 : vector<1x128xf32> to vector<672x128xf32>
    %c0_8 = arith.constant 0 : index
    %c0_9 = arith.constant 0 : index
    %7 = vector.load %arg6[%c0_8, %c0_9] : memref<672x128xf32, #tpu.memory_space<vmem>>, vector<672x128xf32>
    tpu.vector_store %arg6[%c0_8, %c0_9], %6 {strides = array<i32>} : memref<672x128xf32, #tpu.memory_space<vmem>>, vector<672x128xf32>,
    %c0_10 = arith.constant 0 : index
    %c0_11 = arith.constant 0 : index
    %8 = vector.load %arg6[%c0_10, %c0_11] : memref<672x128xf32, #tpu.memory_space<vmem>>, vector<672x128xf32>
    %c0_12 = arith.constant 0 : index
    %c0_13 = arith.constant 0 : index
    %9 = vector.load %arg7[%c0_12, %c0_13] : memref<720x8xbf16, #tpu.memory_space<vmem>>, vector<672x8xbf16>
    %c0_14 = arith.constant 0 : index
    %c0_15 = arith.constant 0 : index
    %c0_16 = arith.constant 0 : index
    %10 = vector.load %arg4[%c0_14, %c0_15, %c0_16] : memref<9x8x128xbf16, #tpu.memory_space<vmem>>, vector<1x8x128xbf16>
    %11 = vector.shape_cast %10 : vector<1x8x128xbf16> to vector<8x128xbf16>
    %cst = arith.constant dense<0.000000e+00> : vector<672x128xf32>
    %12 = tpu.matmul %9, %11, %cst {dimension_numbers = #tpu.dot_dimension_numbers<[1], [0], [0], [1], [0, 0, 1, 1], [], []>} : vector<672x8xbf16>, vector<8x128xbf16>, vector<672x128xf32> -> vector<672x128xf32>
    %13 = arith.addf %8, %12 : vector<672x128xf32>
    %c0_17 = arith.constant 0 : index
    %c0_18 = arith.constant 0 : index
    %14 = vector.load %arg6[%c0_17, %c0_18] : memref<672x128xf32, #tpu.memory_space<vmem>>, vector<672x128xf32>
    tpu.vector_store %arg6[%c0_17, %c0_18], %13 {strides = array<i32>} : memref<672x128xf32, #tpu.memory_space<vmem>>, vector<672x128xf32>,
    %c0_19 = arith.constant 0 : index
    %c0_20 = arith.constant 0 : index
    %15 = vector.load %arg6[%c0_19, %c0_20] : memref<672x128xf32, #tpu.memory_space<vmem>>, vector<672x128xf32>
    %c1 = arith.constant 1 : index
    %c0_21 = arith.constant 0 : index
    %16 = vector.load %arg7[%c1, %c0_21] : memref<720x8xbf16, #tpu.memory_space<vmem>>, vector<672x8xbf16>
    %c1_22 = arith.constant 1 : index
    %c0_23 = arith.constant 0 : index
    %c0_24 = arith.constant 0 : index
    %17 = vector.load %arg4[%c1_22, %c0_23, %c0_24] : memref<9x8x128xbf16, #tpu.memory_space<vmem>>, vector<1x8x128xbf16>
    %18 = vector.shape_cast %17 : vector<1x8x128xbf16> to vector<8x128xbf16>
    %cst_25 = arith.constant dense<0.000000e+00> : vector<672x128xf32>
    %19 = tpu.matmul %16, %18, %cst_25 {dimension_numbers = #tpu.dot_dimension_numbers<[1], [0], [0], [1], [0, 0, 1, 1], [], []>} : vector<672x8xbf16>, vector<8x128xbf16>, vector<672x128xf32> -> vector<672x128xf32>
    %20 = arith.addf %15, %19 : vector<672x128xf32>
    %c0_26 = arith.constant 0 : index
    %c0_27 = arith.constant 0 : index
    %21 = vector.load %arg6[%c0_26, %c0_27] : memref<672x128xf32, #tpu.memory_space<vmem>>, vector<672x128xf32>
    tpu.vector_store %arg6[%c0_26, %c0_27], %20 {strides = array<i32>} : memref<672x128xf32, #tpu.memory_space<vmem>>, vector<672x128xf32>,
    %c0_28 = arith.constant 0 : index
    %c0_29 = arith.constant 0 : index
    %22 = vector.load %arg6[%c0_28, %c0_29] : memref<672x128xf32, #tpu.memory_space<vmem>>, vector<672x128xf32>
    %c2 = arith.constant 2 : index
    %c0_30 = arith.constant 0 : index
    %23 = vector.load %arg7[%c2, %c0_30] : memref<720x8xbf16, #tpu.memory_space<vmem>>, vector<672x8xbf16>
    %c2_31 = arith.constant 2 : index
    %c0_32 = arith.constant 0 : index
    %c0_33 = arith.constant 0 : index
    %24 = vector.load %arg4[%c2_31, %c0_32, %c0_33] : memref<9x8x128xbf16, #tpu.memory_space<vmem>>, vector<1x8x128xbf16>
    %25 = vector.shape_cast %24 : vector<1x8x128xbf16> to vector<8x128xbf16>
    %cst_34 = arith.constant dense<0.000000e+00> : vector<672x128xf32>
    %26 = tpu.matmul %23, %25, %cst_34 {dimension_numbers = #tpu.dot_dimension_numbers<[1], [0], [0], [1], [0, 0, 1, 1], [], []>} : vector<672x8xbf16>, vector<8x128xbf16>, vector<672x128xf32> -> vector<672x128xf32>
    %27 = arith.addf %22, %26 : vector<672x128xf32>
    %c0_35 = arith.constant 0 : index
    %c0_36 = arith.constant 0 : index
    %28 = vector.load %arg6[%c0_35, %c0_36] : memref<672x128xf32, #tpu.memory_space<vmem>>, vector<672x128xf32>
    tpu.vector_store %arg6[%c0_35, %c0_36], %27 {strides = array<i32>} : memref<672x128xf32, #tpu.memory_space<vmem>>, vector<672x128xf32>,
    %c0_37 = arith.constant 0 : index
    %c0_38 = arith.constant 0 : index
    %29 = vector.load %arg6[%c0_37, %c0_38] : memref<672x128xf32, #tpu.memory_space<vmem>>, vector<672x128xf32>
    %c18 = arith.constant 18 : index
    %c0_39 = arith.constant 0 : index
    %30 = vector.load %arg7[%c18, %c0_39] : memref<720x8xbf16, #tpu.memory_space<vmem>>, vector<672x8xbf16>
    %c3 = arith.constant 3 : index
    %c0_40 = arith.constant 0 : index
    %c0_41 = arith.constant 0 : index
    %31 = vector.load %arg4[%c3, %c0_40, %c0_41] : memref<9x8x128xbf16, #tpu.memory_space<vmem>>, vector<1x8x128xbf16>
    %32 = vector.shape_cast %31 : vector<1x8x128xbf16> to vector<8x128xbf16>
    %cst_42 = arith.constant dense<0.000000e+00> : vector<672x128xf32>
    %33 = tpu.matmul %30, %32, %cst_42 {dimension_numbers = #tpu.dot_dimension_numbers<[1], [0], [0], [1], [0, 0, 1, 1], [], []>} : vector<672x8xbf16>, vector<8x128xbf16>, vector<672x128xf32> -> vector<672x128xf32>
    %34 = arith.addf %29, %33 : vector<672x128xf32>
    %c0_43 = arith.constant 0 : index
    %c0_44 = arith.constant 0 : index
    %35 = vector.load %arg6[%c0_43, %c0_44] : memref<672x128xf32, #tpu.memory_space<vmem>>, vector<672x128xf32>
    tpu.vector_store %arg6[%c0_43, %c0_44], %34 {strides = array<i32>} : memref<672x128xf32, #tpu.memory_space<vmem>>, vector<672x128xf32>,
    %c0_45 = arith.constant 0 : index
    %c0_46 = arith.constant 0 : index
    %36 = vector.load %arg6[%c0_45, %c0_46] : memref<672x128xf32, #tpu.memory_space<vmem>>, vector<672x128xf32>
    %c19 = arith.constant 19 : index
    %c0_47 = arith.constant 0 : index
    %37 = vector.load %arg7[%c19, %c0_47] : memref<720x8xbf16, #tpu.memory_space<vmem>>, vector<672x8xbf16>
    %c4 = arith.constant 4 : index
    %c0_48 = arith.constant 0 : index
    %c0_49 = arith.constant 0 : index
    %38 = vector.load %arg4[%c4, %c0_48, %c0_49] : memref<9x8x128xbf16, #tpu.memory_space<vmem>>, vector<1x8x128xbf16>
    %39 = vector.shape_cast %38 : vector<1x8x128xbf16> to vector<8x128xbf16>
    %cst_50 = arith.constant dense<0.000000e+00> : vector<672x128xf32>
    %40 = tpu.matmul %37, %39, %cst_50 {dimension_numbers = #tpu.dot_dimension_numbers<[1], [0], [0], [1], [0, 0, 1, 1], [], []>} : vector<672x8xbf16>, vector<8x128xbf16>, vector<672x128xf32> -> vector<672x128xf32>
    %41 = arith.addf %36, %40 : vector<672x128xf32>
    %c0_51 = arith.constant 0 : index
    %c0_52 = arith.constant 0 : index
    %42 = vector.load %arg6[%c0_51, %c0_52] : memref<672x128xf32, #tpu.memory_space<vmem>>, vector<672x128xf32>
    tpu.vector_store %arg6[%c0_51, %c0_52], %41 {strides = array<i32>} : memref<672x128xf32, #tpu.memory_space<vmem>>, vector<672x128xf32>,
    %c0_53 = arith.constant 0 : index
    %c0_54 = arith.constant 0 : index
    %43 = vector.load %arg6[%c0_53, %c0_54] : memref<672x128xf32, #tpu.memory_space<vmem>>, vector<672x128xf32>
    %c20 = arith.constant 20 : index
    %c0_55 = arith.constant 0 : index
    %44 = vector.load %arg7[%c20, %c0_55] : memref<720x8xbf16, #tpu.memory_space<vmem>>, vector<672x8xbf16>
    %c5 = arith.constant 5 : index
    %c0_56 = arith.constant 0 : index
    %c0_57 = arith.constant 0 : index
    %45 = vector.load %arg4[%c5, %c0_56, %c0_57] : memref<9x8x128xbf16, #tpu.memory_space<vmem>>, vector<1x8x128xbf16>
    %46 = vector.shape_cast %45 : vector<1x8x128xbf16> to vector<8x128xbf16>
    %cst_58 = arith.constant dense<0.000000e+00> : vector<672x128xf32>
    %47 = tpu.matmul %44, %46, %cst_58 {dimension_numbers = #tpu.dot_dimension_numbers<[1], [0], [0], [1], [0, 0, 1, 1], [], []>} : vector<672x8xbf16>, vector<8x128xbf16>, vector<672x128xf32> -> vector<672x128xf32>
    %48 = arith.addf %43, %47 : vector<672x128xf32>
    %c0_59 = arith.constant 0 : index
    %c0_60 = arith.constant 0 : index
    %49 = vector.load %arg6[%c0_59, %c0_60] : memref<672x128xf32, #tpu.memory_space<vmem>>, vector<672x128xf32>
    tpu.vector_store %arg6[%c0_59, %c0_60], %48 {strides = array<i32>} : memref<672x128xf32, #tpu.memory_space<vmem>>, vector<672x128xf32>,
    %c0_61 = arith.constant 0 : index
    %c0_62 = arith.constant 0 : index
    %50 = vector.load %arg6[%c0_61, %c0_62] : memref<672x128xf32, #tpu.memory_space<vmem>>, vector<672x128xf32>
    %c36 = arith.constant 36 : index
    %c0_63 = arith.constant 0 : index
    %51 = vector.load %arg7[%c36, %c0_63] : memref<720x8xbf16, #tpu.memory_space<vmem>>, vector<672x8xbf16>
    %c6 = arith.constant 6 : index
    %c0_64 = arith.constant 0 : index
    %c0_65 = arith.constant 0 : index
    %52 = vector.load %arg4[%c6, %c0_64, %c0_65] : memref<9x8x128xbf16, #tpu.memory_space<vmem>>, vector<1x8x128xbf16>
    %53 = vector.shape_cast %52 : vector<1x8x128xbf16> to vector<8x128xbf16>
    %cst_66 = arith.constant dense<0.000000e+00> : vector<672x128xf32>
    %54 = tpu.matmul %51, %53, %cst_66 {dimension_numbers = #tpu.dot_dimension_numbers<[1], [0], [0], [1], [0, 0, 1, 1], [], []>} : vector<672x8xbf16>, vector<8x128xbf16>, vector<672x128xf32> -> vector<672x128xf32>
    %55 = arith.addf %50, %54 : vector<672x128xf32>
    %c0_67 = arith.constant 0 : index
    %c0_68 = arith.constant 0 : index
    %56 = vector.load %arg6[%c0_67, %c0_68] : memref<672x128xf32, #tpu.memory_space<vmem>>, vector<672x128xf32>
    tpu.vector_store %arg6[%c0_67, %c0_68], %55 {strides = array<i32>} : memref<672x128xf32, #tpu.memory_space<vmem>>, vector<672x128xf32>,
    %c0_69 = arith.constant 0 : index
    %c0_70 = arith.constant 0 : index
    %57 = vector.load %arg6[%c0_69, %c0_70] : memref<672x128xf32, #tpu.memory_space<vmem>>, vector<672x128xf32>
    %c37 = arith.constant 37 : index
    %c0_71 = arith.constant 0 : index
    %58 = vector.load %arg7[%c37, %c0_71] : memref<720x8xbf16, #tpu.memory_space<vmem>>, vector<672x8xbf16>
    %c7 = arith.constant 7 : index
    %c0_72 = arith.constant 0 : index
    %c0_73 = arith.constant 0 : index
    %59 = vector.load %arg4[%c7, %c0_72, %c0_73] : memref<9x8x128xbf16, #tpu.memory_space<vmem>>, vector<1x8x128xbf16>
    %60 = vector.shape_cast %59 : vector<1x8x128xbf16> to vector<8x128xbf16>
    %cst_74 = arith.constant dense<0.000000e+00> : vector<672x128xf32>
    %61 = tpu.matmul %58, %60, %cst_74 {dimension_numbers = #tpu.dot_dimension_numbers<[1], [0], [0], [1], [0, 0, 1, 1], [], []>} : vector<672x8xbf16>, vector<8x128xbf16>, vector<672x128xf32> -> vector<672x128xf32>
    %62 = arith.addf %57, %61 : vector<672x128xf32>
    %c0_75 = arith.constant 0 : index
    %c0_76 = arith.constant 0 : index
    %63 = vector.load %arg6[%c0_75, %c0_76] : memref<672x128xf32, #tpu.memory_space<vmem>>, vector<672x128xf32>
    tpu.vector_store %arg6[%c0_75, %c0_76], %62 {strides = array<i32>} : memref<672x128xf32, #tpu.memory_space<vmem>>, vector<672x128xf32>,
    %c0_77 = arith.constant 0 : index
    %c0_78 = arith.constant 0 : index
    %64 = vector.load %arg6[%c0_77, %c0_78] : memref<672x128xf32, #tpu.memory_space<vmem>>, vector<672x128xf32>
    %c38 = arith.constant 38 : index
    %c0_79 = arith.constant 0 : index
    %65 = vector.load %arg7[%c38, %c0_79] : memref<720x8xbf16, #tpu.memory_space<vmem>>, vector<672x8xbf16>
    %c8 = arith.constant 8 : index
    %c0_80 = arith.constant 0 : index
    %c0_81 = arith.constant 0 : index
    %66 = vector.load %arg4[%c8, %c0_80, %c0_81] : memref<9x8x128xbf16, #tpu.memory_space<vmem>>, vector<1x8x128xbf16>
    %67 = vector.shape_cast %66 : vector<1x8x128xbf16> to vector<8x128xbf16>
    %cst_82 = arith.constant dense<0.000000e+00> : vector<672x128xf32>
    %68 = tpu.matmul %65, %67, %cst_82 {dimension_numbers = #tpu.dot_dimension_numbers<[1], [0], [0], [1], [0, 0, 1, 1], [], []>} : vector<672x8xbf16>, vector<8x128xbf16>, vector<672x128xf32> -> vector<672x128xf32>
    %69 = arith.addf %64, %68 : vector<672x128xf32>
    %c0_83 = arith.constant 0 : index
    %c0_84 = arith.constant 0 : index
    %70 = vector.load %arg6[%c0_83, %c0_84] : memref<672x128xf32, #tpu.memory_space<vmem>>, vector<672x128xf32>
    tpu.vector_store %arg6[%c0_83, %c0_84], %69 {strides = array<i32>} : memref<672x128xf32, #tpu.memory_space<vmem>>, vector<672x128xf32>,
    return
  }
  func.func @transform_0(%arg0: i32, %arg1: i32) -> (i32, i32) {
    %c0_i32 = arith.constant 0 : i32
    %c0_i32_0 = arith.constant 0 : i32
    return %arg0, %c0_i32 : i32, i32
  }
  func.func @transform_1(%arg0: i32, %arg1: i32) -> (i32, i32) {
    %c1_i32 = arith.constant 1 : i32
    %0 = arith.addi %arg0, %c1_i32 : i32
    %c14_i32 = arith.constant 14 : i32
    %1 = arith.muli %0, %c14_i32 : i32
    %c0_i32 = arith.constant 0 : i32
    %c0_i32_0 = arith.constant 0 : i32
    return %1, %c0_i32 : i32, i32
  }
  func.func @transform_2(%arg0: i32, %arg1: i32) -> (i32, i32, i32) {
    %c0_i32 = arith.constant 0 : i32
    %c0_i32_0 = arith.constant 0 : i32
    %c0_i32_1 = arith.constant 0 : i32
    return %c0_i32, %c0_i32_0, %arg1 : i32, i32, i32
  }
  func.func @transform_3(%arg0: i32, %arg1: i32) -> (i32, i32) {
    %c0_i32 = arith.constant 0 : i32
    %c0_i32_0 = arith.constant 0 : i32
    return %c0_i32, %arg1 : i32, i32
  }
  func.func @transform_4(%arg0: i32, %arg1: i32) -> (i32, i32) {
    %c0_i32 = arith.constant 0 : i32
    return %arg0, %arg1 : i32, i32
  }
}

</mosaic_0001>

<llo_original>
// kernel: masked_conv2d_pallas.1
$region0: #{masked_conv2d_pallas.1}
  #allocation0 [shape = 'u32[]', space=smem, size = 0x4, offset = 0x4, fixed_abs, tag = 'smem constant byte address 0x4 - core index']
  #allocation1 [shape = 'u32[144,128]{1,0:T(1,128)}', space=vmem, size = 0x12000, scoped, tag = 'internal scratch']
  #allocation2 [shape = 'bf16[720,8]{1,0:T(8,128)(2,1)}', space=vmem, size = 0x2d000, scoped, tag = 'scratch operand']
  %s0 = inlined_call_operand.vmem [shape: bf16[720,8], index: 0, kind: input, shape index: {}, may-alias: {0,1}]
  %s1 = inlined_call_operand.vmem [shape: bf16[720,8], index: 1, kind: input, shape index: {}, may-alias: {0,1}]
  %s2 = inlined_call_operand.vmem [shape: bf16[9,8,128], index: 2, kind: input, shape index: {}]
  %s3 = inlined_call_operand.vmem [shape: f32[1,128], index: 3, kind: input, shape index: {}]
  %s4 = inlined_call_operand.vmem [shape: f32[672,128], index: 4, kind: output, shape index: {}]
  %s5 = sld [smem:[#allocation0]]
  $region26: #{masked_conv2d_pallas.1} parent=0
    _
  %s7 = ssub.s32 1, %s5
  %s8 = scalar_select 0, %s7, %s5
  // Predicated region
  $region2: #{masked_conv2d_pallas.1} parent=0 // pred_check
    _
  $region3: #{masked_conv2d_pallas.1} parent=0 // pred_check_branch
    %10 = sbr.rel (0) target = $region5
  $region4: #{masked_conv2d_pallas.1} parent=0 // pred_region
    _
  $region5: #{masked_conv2d_pallas.1} parent=0 // pred_fallthru
    _
  // Predicated region
  $region6: #{masked_conv2d_pallas.1} parent=0 // pred_check
    _
  $region7: #{masked_conv2d_pallas.1} parent=0 // pred_check_branch
    %12 = sbr.rel (0) target = $region9
  $region8: #{masked_conv2d_pallas.1} parent=0 // pred_region
    %s13 = sadd.s32 0, 1
    %s14 = smul.u32 %s13, 14
    %s15 = smul.u32 6, %s14
    %p16 = scmp.lt.s32.totalorder %s15, 89
    %s17 = scalar_select %p16, %s15, 89
    %s18 = smul.addr %s17, 4
    %s19 = scalar_lea.vmem %s1, %s18
    %s20 = sadd.s32 0, 1
    %s21 = smul.u32 %s20, 14
    %s22 = smul.u32 6, %s21
  $region9: #{masked_conv2d_pallas.1} parent=0 // pred_fallthru
    _
  // Predicated region
  $region10: #{masked_conv2d_pallas.1} parent=0 // pred_check
    _
  $region11: #{masked_conv2d_pallas.1} parent=0 // pred_check_branch
    %24 = sbr.rel (0) target = $region13
  $region12: #{masked_conv2d_pallas.1} parent=0 // pred_region
    _
  $region13: #{masked_conv2d_pallas.1} parent=0 // pred_fallthru
    _
  // Predicated region
  $region14: #{masked_conv2d_pallas.1} parent=0 // pred_check
    _
  $region15: #{masked_conv2d_pallas.1} parent=0 // pred_check_branch
    %26 = sbr.rel (0) target = $region17
  $region16: #{masked_conv2d_pallas.1} parent=0 // pred_region
    _
  $region17: #{masked_conv2d_pallas.1} parent=0 // pred_fallthru
    _
  %s27 = sadd.s32 0, 1
  %s28 = smul.u32 %s27, 14
  %s29 = smul.u32 6, %s28
  %p30 = scmp.lt.s32.totalorder %s29, 89
  %s31 = scalar_select %p30, %s29, 89
  %s32 = smul.addr %s31, 4
  %s33 = scalar_lea.vmem %s1, %s32
  %s34 = sadd.s32 0, 1
  %s35 = smul.u32 %s34, 14
  %s36 = smul.u32 6, %s35
  %p37 = scmp.lt.s32.totalorder %s36, 89
  %s38 = scalar_select %p37, %s36, 89
  %s39 = smul.addr %s38, 4
  %s40 = scalar_lea.vmem %s1, %s39
  %s41 = sadd.s32 0, 1
  %s42 = smul.u32 %s41, 14
  %s43 = smul.u32 6, %s42
  %v45 = vld [vmem:[%s0] sm:$0xf]
  %v46 = vld [vmem:[%s0 + $0x4] sm:$0xf]
  %v47 = vld [vmem:[%s0 + $0x8] sm:$0xf]
  %v48 = vld [vmem:[%s0 + $0xc] sm:$0xf]
  %v49 = vld [vmem:[%s0 + $0x10] sm:$0xf]
  %v50 = vld [vmem:[%s0 + $0x14] sm:$0xf]
  %v51 = vld [vmem:[%s0 + $0x18] sm:$0xf]
  %v52 = vld [vmem:[%s0 + $0x1c] sm:$0xf]
  %v53 = vld [vmem:[%s0 + $0x20] sm:$0xf]
  %v54 = vld [vmem:[%s0 + $0x24] sm:$0xf]
  %v55 = vld [vmem:[%s0 + $0x28] sm:$0xf]
  %v56 = vld [vmem:[%s0 + $0x2c] sm:$0xf]
  %v57 = vld [vmem:[%s0 + $0x30] sm:$0xf]
  %v58 = vld [vmem:[%s0 + $0x34] sm:$0xf]
  %v59 = vld [vmem:[%s0 + $0x38] sm:$0xf]
  %v60 = vld [vmem:[%s0 + $0x3c] sm:$0xf]
  %v61 = vld [vmem:[%s0 + $0x40] sm:$0xf]
  %v62 = vld [vmem:[%s0 + $0x44] sm:$0xf]
  %v63 = vld [vmem:[%s0 + $0x48] sm:$0xf]
  %v64 = vld [vmem:[%s0 + $0x4c] sm:$0xf]
  %v65 = vld [vmem:[%s0 + $0x50] sm:$0xf]
  %v66 = vld [vmem:[%s0 + $0x54] sm:$0xf]
  %v67 = vld [vmem:[%s0 + $0x58] sm:$0xf]
  %v68 = vld [vmem:[%s0 + $0x5c] sm:$0xf]
  %v69 = vld [vmem:[%s0 + $0x60] sm:$0xf]
  %v70 = vld [vmem:[%s0 + $0x64] sm:$0xf]
  %v71 = vld [vmem:[%s0 + $0x68] sm:$0xf]
  %v72 = vld [vmem:[%s0 + $0x6c] sm:$0xf]
  %v73 = vld [vmem:[%s0 + $0x70] sm:$0xf]
  %v74 = vld [vmem:[%s0 + $0x74] sm:$0xf]
  %v75 = vld [vmem:[%s0 + $0x78] sm:$0xf]
  %v76 = vld [vmem:[%s0 + $0x7c] sm:$0xf]
  %v77 = vld [vmem:[%s0 + $0x80] sm:$0xf]
  %v78 = vld [vmem:[%s0 + $0x84] sm:$0xf]
  %v79 = vld [vmem:[%s0 + $0x88] sm:$0xf]
  %v80 = vld [vmem:[%s0 + $0x8c] sm:$0xf]
  %v81 = vld [vmem:[%s0 + $0x90] sm:$0xf]
  %v82 = vld [vmem:[%s0 + $0x94] sm:$0xf]
  %v83 = vld [vmem:[%s0 + $0x98] sm:$0xf]
  %v84 = vld [vmem:[%s0 + $0x9c] sm:$0xf]
  %v85 = vld [vmem:[%s0 + $0xa0] sm:$0xf]
  %v86 = vld [vmem:[%s0 + $0xa4] sm:$0xf]
  %v87 = vld [vmem:[%s0 + $0xa8] sm:$0xf]
  %v88 = vld [vmem:[%s0 + $0xac] sm:$0xf]
  %v89 = vld [vmem:[%s0 + $0xb0] sm:$0xf]
  %v90 = vld [vmem:[%s0 + $0xb4] sm:$0xf]
  %v91 = vld [vmem:[%s0 + $0xb8] sm:$0xf]
  %v92 = vld [vmem:[%s0 + $0xbc] sm:$0xf]
  %v93 = vld [vmem:[%s0 + $0xc0] sm:$0xf]
  %v94 = vld [vmem:[%s0 + $0xc4] sm:$0xf]
  %v95 = vld [vmem:[%s0 + $0xc8] sm:$0xf]
  %v96 = vld [vmem:[%s0 + $0xcc] sm:$0xf]
  %v97 = vld [vmem:[%s0 + $0xd0] sm:$0xf]
  %v98 = vld [vmem:[%s0 + $0xd4] sm:$0xf]
  %v99 = vld [vmem:[%s0 + $0xd8] sm:$0xf]
  %v100 = vld [vmem:[%s0 + $0xdc] sm:$0xf]
  %v101 = vld [vmem:[%s0 + $0xe0] sm:$0xf]
  %v102 = vld [vmem:[%s0 + $0xe4] sm:$0xf]
  %v103 = vld [vmem:[%s0 + $0xe8] sm:$0xf]
  %v104 = vld [vmem:[%s0 + $0xec] sm:$0xf]
  %v105 = vld [vmem:[%s0 + $0xf0] sm:$0xf]
  %v106 = vld [vmem:[%s0 + $0xf4] sm:$0xf]
  %v107 = vld [vmem:[%s0 + $0xf8] sm:$0xf]
  %v108 = vld [vmem:[%s0 + $0xfc] sm:$0xf]
  %v109 = vld [vmem:[%s0 + $0x100] sm:$0xf]
  %v110 = vld [vmem:[%s0 + $0x104] sm:$0xf]
  %v111 = vld [vmem:[%s0 + $0x108] sm:$0xf]
  %v112 = vld [vmem:[%s0 + $0x10c] sm:$0xf]
  %v113 = vld [vmem:[%s0 + $0x110] sm:$0xf]
  %v114 = vld [vmem:[%s0 + $0x114] sm:$0xf]
  %v115 = vld [vmem:[%s0 + $0x118] sm:$0xf]
  %v116 = vld [vmem:[%s0 + $0x11c] sm:$0xf]
  %v117 = vld [vmem:[%s0 + $0x120] sm:$0xf]
  %v118 = vld [vmem:[%s0 + $0x124] sm:$0xf]
  %v119 = vld [vmem:[%s0 + $0x128] sm:$0xf]
  %v120 = vld [vmem:[%s0 + $0x12c] sm:$0xf]
  %v121 = vld [vmem:[%s0 + $0x130] sm:$0xf]
  %v122 = vld [vmem:[%s0 + $0x134] sm:$0xf]
  %v123 = vld [vmem:[%s0 + $0x138] sm:$0xf]
  %v124 = vld [vmem:[%s0 + $0x13c] sm:$0xf]
  %v125 = vld [vmem:[%s0 + $0x140] sm:$0xf]
  %v126 = vld [vmem:[%s0 + $0x144] sm:$0xf]
  %v127 = vld [vmem:[%s0 + $0x148] sm:$0xf]
  %v128 = vld [vmem:[%s0 + $0x14c] sm:$0xf]
  %vm129 = vcmask 60416
  %130 = vst.msk [vmem:[#allocation2] sm:$0xf] %vm129, %v45
  %131 = vst.msk [vmem:[#allocation2 + $0x4] sm:$0xf] %vm129, %v46
  %132 = vst.msk [vmem:[#allocation2 + $0x8] sm:$0xf] %vm129, %v47
  %133 = vst.msk [vmem:[#allocation2 + $0xc] sm:$0xf] %vm129, %v48
  %134 = vst.msk [vmem:[#allocation2 + $0x10] sm:$0xf] %vm129, %v49
  %135 = vst.msk [vmem:[#allocation2 + $0x14] sm:$0xf] %vm129, %v50
  %136 = vst.msk [vmem:[#allocation2 + $0x18] sm:$0xf] %vm129, %v51
  %137 = vst.msk [vmem:[#allocation2 + $0x1c] sm:$0xf] %vm129, %v52
  %138 = vst.msk [vmem:[#allocation2 + $0x20] sm:$0xf] %vm129, %v53
  %139 = vst.msk [vmem:[#allocation2 + $0x24] sm:$0xf] %vm129, %v54
  %140 = vst.msk [vmem:[#allocation2 + $0x28] sm:$0xf] %vm129, %v55
  %141 = vst.msk [vmem:[#allocation2 + $0x2c] sm:$0xf] %vm129, %v56
  %142 = vst.msk [vmem:[#allocation2 + $0x30] sm:$0xf] %vm129, %v57
  %143 = vst.msk [vmem:[#allocation2 + $0x34] sm:$0xf] %vm129, %v58
  %144 = vst.msk [vmem:[#allocation2 + $0x38] sm:$0xf] %vm129, %v59
  %145 = vst.msk [vmem:[#allocation2 + $0x3c] sm:$0xf] %vm129, %v60
  %146 = vst.msk [vmem:[#allocation2 + $0x40] sm:$0xf] %vm129, %v61
  %147 = vst.msk [vmem:[#allocation2 + $0x44] sm:$0xf] %vm129, %v62
  %148 = vst.msk [vmem:[#allocation2 + $0x48] sm:$0xf] %vm129, %v63
  %149 = vst.msk [vmem:[#allocation2 + $0x4c] sm:$0xf] %vm129, %v64
  %150 = vst.msk [vmem:[#allocation2 + $0x50] sm:$0xf] %vm129, %v65
  %151 = vst.msk [vmem:[#allocation2 + $0x54] sm:$0xf] %vm129, %v66
  %152 = vst.msk [vmem:[#allocation2 + $0x58] sm:$0xf] %vm129, %v67
  %153 = vst.msk [vmem:[#allocation2 + $0x5c] sm:$0xf] %vm129, %v68
  %154 = vst.msk [vmem:[#allocation2 + $0x60] sm:$0xf] %vm129, %v69
  %155 = vst.msk [vmem:[#allocation2 + $0x64] sm:$0xf] %vm129, %v70
  %156 = vst.msk [vmem:[#allocation2 + $0x68] sm:$0xf] %vm129, %v71
  %157 = vst.msk [vmem:[#allocation2 + $0x6c] sm:$0xf] %vm129, %v72
  %158 = vst.msk [vmem:[#allocation2 + $0x70] sm:$0xf] %vm129, %v73
  %159 = vst.msk [vmem:[#allocation2 + $0x74] sm:$0xf] %vm129, %v74
  %160 = vst.msk [vmem:[#allocation2 + $0x78] sm:$0xf] %vm129, %v75
  %161 = vst.msk [vmem:[#allocation2 + $0x7c] sm:$0xf] %vm129, %v76
  %162 = vst.msk [vmem:[#allocation2 + $0x80] sm:$0xf] %vm129, %v77
  %163 = vst.msk [vmem:[#allocation2 + $0x84] sm:$0xf] %vm129, %v78
  %164 = vst.msk [vmem:[#allocation2 + $0x88] sm:$0xf] %vm129, %v79
  %165 = vst.msk [vmem:[#allocation2 + $0x8c] sm:$0xf] %vm129, %v80
  %166 = vst.msk [vmem:[#allocation2 + $0x90] sm:$0xf] %vm129, %v81
  %167 = vst.msk [vmem:[#allocation2 + $0x94] sm:$0xf] %vm129, %v82
  %168 = vst.msk [vmem:[#allocation2 + $0x98] sm:$0xf] %vm129, %v83
  %169 = vst.msk [vmem:[#allocation2 + $0x9c] sm:$0xf] %vm129, %v84
  %170 = vst.msk [vmem:[#allocation2 + $0xa0] sm:$0xf] %vm129, %v85
  %171 = vst.msk [vmem:[#allocation2 + $0xa4] sm:$0xf] %vm129, %v86
  %172 = vst.msk [vmem:[#allocation2 + $0xa8] sm:$0xf] %vm129, %v87
  %173 = vst.msk [vmem:[#allocation2 + $0xac] sm:$0xf] %vm129, %v88
  %174 = vst.msk [vmem:[#allocation2 + $0xb0] sm:$0xf] %vm129, %v89
  %175 = vst.msk [vmem:[#allocation2 + $0xb4] sm:$0xf] %vm129, %v90
  %176 = vst.msk [vmem:[#allocation2 + $0xb8] sm:$0xf] %vm129, %v91
  %177 = vst.msk [vmem:[#allocation2 + $0xbc] sm:$0xf] %vm129, %v92
  %178 = vst.msk [vmem:[#allocation2 + $0xc0] sm:$0xf] %vm129, %v93
  %179 = vst.msk [vmem:[#allocation2 + $0xc4] sm:$0xf] %vm129, %v94
  %180 = vst.msk [vmem:[#allocation2 + $0xc8] sm:$0xf] %vm129, %v95
  %181 = vst.msk [vmem:[#allocation2 + $0xcc] sm:$0xf] %vm129, %v96
  %182 = vst.msk [vmem:[#allocation2 + $0xd0] sm:$0xf] %vm129, %v97
  %183 = vst.msk [vmem:[#allocation2 + $0xd4] sm:$0xf] %vm129, %v98
  %184 = vst.msk [vmem:[#allocation2 + $0xd8] sm:$0xf] %vm129, %v99
  %185 = vst.msk [vmem:[#allocation2 + $0xdc] sm:$0xf] %vm129, %v100
  %186 = vst.msk [vmem:[#allocation2 + $0xe0] sm:$0xf] %vm129, %v101
  %187 = vst.msk [vmem:[#allocation2 + $0xe4] sm:$0xf] %vm129, %v102
  %188 = vst.msk [vmem:[#allocation2 + $0xe8] sm:$0xf] %vm129, %v103
  %189 = vst.msk [vmem:[#allocation2 + $0xec] sm:$0xf] %vm129, %v104
  %190 = vst.msk [vmem:[#allocation2 + $0xf0] sm:$0xf] %vm129, %v105
  %191 = vst.msk [vmem:[#allocation2 + $0xf4] sm:$0xf] %vm129, %v106
  %192 = vst.msk [vmem:[#allocation2 + $0xf8] sm:$0xf] %vm129, %v107
  %193 = vst.msk [vmem:[#allocation2 + $0xfc] sm:$0xf] %vm129, %v108
  %194 = vst.msk [vmem:[#allocation2 + $0x100] sm:$0xf] %vm129, %v109
  %195 = vst.msk [vmem:[#allocation2 + $0x104] sm:$0xf] %vm129, %v110
  %196 = vst.msk [vmem:[#allocation2 + $0x108] sm:$0xf] %vm129, %v111
  %197 = vst.msk [vmem:[#allocation2 + $0x10c] sm:$0xf] %vm129, %v112
  %198 = vst.msk [vmem:[#allocation2 + $0x110] sm:$0xf] %vm129, %v113
  %199 = vst.msk [vmem:[#allocation2 + $0x114] sm:$0xf] %vm129, %v114
  %200 = vst.msk [vmem:[#allocation2 + $0x118] sm:$0xf] %vm129, %v115
  %201 = vst.msk [vmem:[#allocation2 + $0x11c] sm:$0xf] %vm129, %v116
  %202 = vst.msk [vmem:[#allocation2 + $0x120] sm:$0xf] %vm129, %v117
  %203 = vst.msk [vmem:[#allocation2 + $0x124] sm:$0xf] %vm129, %v118
  %204 = vst.msk [vmem:[#allocation2 + $0x128] sm:$0xf] %vm129, %v119
  %205 = vst.msk [vmem:[#allocation2 + $0x12c] sm:$0xf] %vm129, %v120
  %206 = vst.msk [vmem:[#allocation2 + $0x130] sm:$0xf] %vm129, %v121
  %207 = vst.msk [vmem:[#allocation2 + $0x134] sm:$0xf] %vm129, %v122
  %208 = vst.msk [vmem:[#allocation2 + $0x138] sm:$0xf] %vm129, %v123
  %209 = vst.msk [vmem:[#allocation2 + $0x13c] sm:$0xf] %vm129, %v124
  %210 = vst.msk [vmem:[#allocation2 + $0x140] sm:$0xf] %vm129, %v125
  %211 = vst.msk [vmem:[#allocation2 + $0x144] sm:$0xf] %vm129, %v126
  %212 = vst.msk [vmem:[#allocation2 + $0x148] sm:$0xf] %vm129, %v127
  %213 = vst.msk [vmem:[#allocation2 + $0x14c] sm:$0xf] %vm129, %v128
  %v214 = vld [vmem:[%s40] sm:$0xf]
  %v215 = vld [vmem:[%s40 + $0x4] sm:$0xf]
  %v216 = vld [vmem:[%s40 + $0x8] sm:$0xf]
  %v217 = vld [vmem:[%s40 + $0xc] sm:$0xf]
  %v218 = vld [vmem:[%s40 + $0x10] sm:$0xf]
  %v219 = vld [vmem:[%s40 + $0x14] sm:$0xf]
  %220 = vst.msk [vmem:[#allocation2 + $0x150] sm:$0xf] %vm129, %v214
  %221 = vst.msk [vmem:[#allocation2 + $0x154] sm:$0xf] %vm129, %v215
  %222 = vst.msk [vmem:[#allocation2 + $0x158] sm:$0xf] %vm129, %v216
  %223 = vst.msk [vmem:[#allocation2 + $0x15c] sm:$0xf] %vm129, %v217
  %224 = vst.msk [vmem:[#allocation2 + $0x160] sm:$0xf] %vm129, %v218
  %225 = vst.msk [vmem:[#allocation2 + $0x164] sm:$0xf] %vm129, %v219
  %v226 = vld [vmem:[%s3] sm:$0x1]
  %v228 = vlaneseq
  %v229 = vshrl.u32 %v228, 7
  %v230 = vsub.s32 0, %v229
  %v231 = vrot.slane %v226, %v230
  %233 = vst [vmem:[%s4] sm:$0xff] %v231
  %234 = vst [vmem:[%s4 + $0x8] sm:$0xff] %v231
  %235 = vst [vmem:[%s4 + $0x10] sm:$0xff] %v231
  %236 = vst [vmem:[%s4 + $0x18] sm:$0xff] %v231
  %237 = vst [vmem:[%s4 + $0x20] sm:$0xff] %v231
  %238 = vst [vmem:[%s4 + $0x28] sm:$0xff] %v231
  %239 = vst [vmem:[%s4 + $0x30] sm:$0xff] %v231
  %240 = vst [vmem:[%s4 + $0x38] sm:$0xff] %v231
  %241 = vst [vmem:[%s4 + $0x40] sm:$0xff] %v231
  %242 = vst [vmem:[%s4 + $0x48] sm:$0xff] %v231
  %243 = vst [vmem:[%s4 + $0x50] sm:$0xff] %v231
  %244 = vst [vmem:[%s4 + $0x58] sm:$0xff] %v231
  %245 = vst [vmem:[%s4 + $0x60] sm:$0xff] %v231
  %246 = vst [vmem:[%s4 + $0x68] sm:$0xff] %v231
  %247 = vst [vmem:[%s4 + $0x70] sm:$0xff] %v231
  %248 = vst [vmem:[%s4 + $0x78] sm:$0xff] %v231
  %249 = vst [vmem:[%s4 + $0x80] sm:$0xff] %v231
  %250 = vst [vmem:[%s4 + $0x88] sm:$0xff] %v231
  %251 = vst [vmem:[%s4 + $0x90] sm:$0xff] %v231
  %252 = vst [vmem:[%s4 + $0x98] sm:$0xff] %v231
  %253 = vst [vmem:[%s4 + $0xa0] sm:$0xff] %v231
  %254 = vst [vmem:[%s4 + $0xa8] sm:$0xff] %v231
  %255 = vst [vmem:[%s4 + $0xb0] sm:$0xff] %v231
  %256 = vst [vmem:[%s4 + $0xb8] sm:$0xff] %v231
  %257 = vst [vmem:[%s4 + $0xc0] sm:$0xff] %v231
  %258 = vst [vmem:[%s4 + $0xc8] sm:$0xff] %v231
  %259 = vst [vmem:[%s4 + $0xd0] sm:$0xff] %v231
  %260 = vst [vmem:[%s4 + $0xd8] sm:$0xff] %v231
  %261 = vst [vmem:[%s4 + $0xe0] sm:$0xff] %v231
  %262 = vst [vmem:[%s4 + $0xe8] sm:$0xff] %v231
  %263 = vst [vmem:[%s4 + $0xf0] sm:$0xff] %v231
  %264 = vst [vmem:[%s4 + $0xf8] sm:$0xff] %v231
  %265 = vst [vmem:[%s4 + $0x100] sm:$0xff] %v231
  %266 = vst [vmem:[%s4 + $0x108] sm:$0xff] %v231
  %267 = vst [vmem:[%s4 + $0x110] sm:$0xff] %v231
  %268 = vst [vmem:[%s4 + $0x118] sm:$0xff] %v231
  %269 = vst [vmem:[%s4 + $0x120] sm:$0xff] %v231
  %270 = vst [vmem:[%s4 + $0x128] sm:$0xff] %v231
  %271 = vst [vmem:[%s4 + $0x130] sm:$0xff] %v231
  %272 = vst [vmem:[%s4 + $0x138] sm:$0xff] %v231
  %273 = vst [vmem:[%s4 + $0x140] sm:$0xff] %v231
  %274 = vst [vmem:[%s4 + $0x148] sm:$0xff] %v231
  %275 = vst [vmem:[%s4 + $0x150] sm:$0xff] %v231
  %276 = vst [vmem:[%s4 + $0x158] sm:$0xff] %v231
  %277 = vst [vmem:[%s4 + $0x160] sm:$0xff] %v231
  %278 = vst [vmem:[%s4 + $0x168] sm:$0xff] %v231
  %279 = vst [vmem:[%s4 + $0x170] sm:$0xff] %v231
  %280 = vst [vmem:[%s4 + $0x178] sm:$0xff] %v231
  %281 = vst [vmem:[%s4 + $0x180] sm:$0xff] %v231
  %282 = vst [vmem:[%s4 + $0x188] sm:$0xff] %v231
  %283 = vst [vmem:[%s4 + $0x190] sm:$0xff] %v231
  %284 = vst [vmem:[%s4 + $0x198] sm:$0xff] %v231
  %285 = vst [vmem:[%s4 + $0x1a0] sm:$0xff] %v231
  %286 = vst [vmem:[%s4 + $0x1a8] sm:$0xff] %v231
  %287 = vst [vmem:[%s4 + $0x1b0] sm:$0xff] %v231
  %288 = vst [vmem:[%s4 + $0x1b8] sm:$0xff] %v231
  %289 = vst [vmem:[%s4 + $0x1c0] sm:$0xff] %v231
  %290 = vst [vmem:[%s4 + $0x1c8] sm:$0xff] %v231
  %291 = vst [vmem:[%s4 + $0x1d0] sm:$0xff] %v231
  %292 = vst [vmem:[%s4 + $0x1d8] sm:$0xff] %v231
  %293 = vst [vmem:[%s4 + $0x1e0] sm:$0xff] %v231
  %294 = vst [vmem:[%s4 + $0x1e8] sm:$0xff] %v231
  %295 = vst [vmem:[%s4 + $0x1f0] sm:$0xff] %v231
  %296 = vst [vmem:[%s4 + $0x1f8] sm:$0xff] %v231
  %297 = vst [vmem:[%s4 + $0x200] sm:$0xff] %v231
  %298 = vst [vmem:[%s4 + $0x208] sm:$0xff] %v231
  %299 = vst [vmem:[%s4 + $0x210] sm:$0xff] %v231
  %300 = vst [vmem:[%s4 + $0x218] sm:$0xff] %v231
  %301 = vst [vmem:[%s4 + $0x220] sm:$0xff] %v231
  %302 = vst [vmem:[%s4 + $0x228] sm:$0xff] %v231
  %303 = vst [vmem:[%s4 + $0x230] sm:$0xff] %v231
  %304 = vst [vmem:[%s4 + $0x238] sm:$0xff] %v231
  %305 = vst [vmem:[%s4 + $0x240] sm:$0xff] %v231
  %306 = vst [vmem:[%s4 + $0x248] sm:$0xff] %v231
  %307 = vst [vmem:[%s4 + $0x250] sm:$0xff] %v231
  %308 = vst [vmem:[%s4 + $0x258] sm:$0xff] %v231
  %309 = vst [vmem:[%s4 + $0x260] sm:$0xff] %v231
  %310 = vst [vmem:[%s4 + $0x268] sm:$0xff] %v231
  %311 = vst [vmem:[%s4 + $0x270] sm:$0xff] %v231
  %312 = vst [vmem:[%s4 + $0x278] sm:$0xff] %v231
  %313 = vst [vmem:[%s4 + $0x280] sm:$0xff] %v231
  %314 = vst [vmem:[%s4 + $0x288] sm:$0xff] %v231
  %315 = vst [vmem:[%s4 + $0x290] sm:$0xff] %v231
  %316 = vst [vmem:[%s4 + $0x298] sm:$0xff] %v231
  %v317 = vld [vmem:[%s4] sm:$0xff]
  %v318 = vld [vmem:[%s4 + $0x8] sm:$0xff]
  %v319 = vld [vmem:[%s4 + $0x10] sm:$0xff]
  %v320 = vld [vmem:[%s4 + $0x18] sm:$0xff]
  %v321 = vld [vmem:[%s4 + $0x20] sm:$0xff]
  %v322 = vld [vmem:[%s4 + $0x28] sm:$0xff]
  %v323 = vld [vmem:[%s4 + $0x30] sm:$0xff]
  %v324 = vld [vmem:[%s4 + $0x38] sm:$0xff]
  %v325 = vld [vmem:[%s4 + $0x40] sm:$0xff]
  %v326 = vld [vmem:[%s4 + $0x48] sm:$0xff]
  %v327 = vld [vmem:[%s4 + $0x50] sm:$0xff]
  %v328 = vld [vmem:[%s4 + $0x58] sm:$0xff]
  %v329 = vld [vmem:[%s4 + $0x60] sm:$0xff]
  %v330 = vld [vmem:[%s4 + $0x68] sm:$0xff]
  %v331 = vld [vmem:[%s4 + $0x70] sm:$0xff]
  %v332 = vld [vmem:[%s4 + $0x78] sm:$0xff]
  %v333 = vld [vmem:[%s4 + $0x80] sm:$0xff]
  %v334 = vld [vmem:[%s4 + $0x88] sm:$0xff]
  %v335 = vld [vmem:[%s4 + $0x90] sm:$0xff]
  %v336 = vld [vmem:[%s4 + $0x98] sm:$0xff]
  %v337 = vld [vmem:[%s4 + $0xa0] sm:$0xff]
  %v338 = vld [vmem:[%s4 + $0xa8] sm:$0xff]
  %v339 = vld [vmem:[%s4 + $0xb0] sm:$0xff]
  %v340 = vld [vmem:[%s4 + $0xb8] sm:$0xff]
  %v341 = vld [vmem:[%s4 + $0xc0] sm:$0xff]
  %v342 = vld [vmem:[%s4 + $0xc8] sm:$0xff]
  %v343 = vld [vmem:[%s4 + $0xd0] sm:$0xff]
  %v344 = vld [vmem:[%s4 + $0xd8] sm:$0xff]
  %v345 = vld [vmem:[%s4 + $0xe0] sm:$0xff]
  %v346 = vld [vmem:[%s4 + $0xe8] sm:$0xff]
  %v347 = vld [vmem:[%s4 + $0xf0] sm:$0xff]
  %v348 = vld [vmem:[%s4 + $0xf8] sm:$0xff]
  %v349 = vld [vmem:[%s4 + $0x100] sm:$0xff]
  %v350 = vld [vmem:[%s4 + $0x108] sm:$0xff]
  %v351 = vld [vmem:[%s4 + $0x110] sm:$0xff]
  %v352 = vld [vmem:[%s4 + $0x118] sm:$0xff]
  %v353 = vld [vmem:[%s4 + $0x120] sm:$0xff]
  %v354 = vld [vmem:[%s4 + $0x128] sm:$0xff]
  %v355 = vld [vmem:[%s4 + $0x130] sm:$0xff]
  %v356 = vld [vmem:[%s4 + $0x138] sm:$0xff]
  %v357 = vld [vmem:[%s4 + $0x140] sm:$0xff]
  %v358 = vld [vmem:[%s4 + $0x148] sm:$0xff]
  %v359 = vld [vmem:[%s4 + $0x150] sm:$0xff]
  %v360 = vld [vmem:[%s4 + $0x158] sm:$0xff]
  %v361 = vld [vmem:[%s4 + $0x160] sm:$0xff]
  %v362 = vld [vmem:[%s4 + $0x168] sm:$0xff]
  %v363 = vld [vmem:[%s4 + $0x170] sm:$0xff]
  %v364 = vld [vmem:[%s4 + $0x178] sm:$0xff]
  %v365 = vld [vmem:[%s4 + $0x180] sm:$0xff]
  %v366 = vld [vmem:[%s4 + $0x188] sm:$0xff]
  %v367 = vld [vmem:[%s4 + $0x190] sm:$0xff]
  %v368 = vld [vmem:[%s4 + $0x198] sm:$0xff]
  %v369 = vld [vmem:[%s4 + $0x1a0] sm:$0xff]
  %v370 = vld [vmem:[%s4 + $0x1a8] sm:$0xff]
  %v371 = vld [vmem:[%s4 + $0x1b0] sm:$0xff]
  %v372 = vld [vmem:[%s4 + $0x1b8] sm:$0xff]
  %v373 = vld [vmem:[%s4 + $0x1c0] sm:$0xff]
  %v374 = vld [vmem:[%s4 + $0x1c8] sm:$0xff]
  %v375 = vld [vmem:[%s4 + $0x1d0] sm:$0xff]
  %v376 = vld [vmem:[%s4 + $0x1d8] sm:$0xff]
  %v377 = vld [vmem:[%s4 + $0x1e0] sm:$0xff]
  %v378 = vld [vmem:[%s4 + $0x1e8] sm:$0xff]
  %v379 = vld [vmem:[%s4 + $0x1f0] sm:$0xff]
  %v380 = vld [vmem:[%s4 + $0x1f8] sm:$0xff]
  %v381 = vld [vmem:[%s4 + $0x200] sm:$0xff]
  %v382 = vld [vmem:[%s4 + $0x208] sm:$0xff]
  %v383 = vld [vmem:[%s4 + $0x210] sm:$0xff]
  %v384 = vld [vmem:[%s4 + $0x218] sm:$0xff]
  %v385 = vld [vmem:[%s4 + $0x220] sm:$0xff]
  %v386 = vld [vmem:[%s4 + $0x228] sm:$0xff]
  %v387 = vld [vmem:[%s4 + $0x230] sm:$0xff]
  %v388 = vld [vmem:[%s4 + $0x238] sm:$0xff]
  %v389 = vld [vmem:[%s4 + $0x240] sm:$0xff]
  %v390 = vld [vmem:[%s4 + $0x248] sm:$0xff]
  %v391 = vld [vmem:[%s4 + $0x250] sm:$0xff]
  %v392 = vld [vmem:[%s4 + $0x258] sm:$0xff]
  %v393 = vld [vmem:[%s4 + $0x260] sm:$0xff]
  %v394 = vld [vmem:[%s4 + $0x268] sm:$0xff]
  %v395 = vld [vmem:[%s4 + $0x270] sm:$0xff]
  %v396 = vld [vmem:[%s4 + $0x278] sm:$0xff]
  %v397 = vld [vmem:[%s4 + $0x280] sm:$0xff]
  %v398 = vld [vmem:[%s4 + $0x288] sm:$0xff]
  %v399 = vld [vmem:[%s4 + $0x290] sm:$0xff]
  %v400 = vld [vmem:[%s4 + $0x298] sm:$0xff]
  %v401 = vld [vmem:[#allocation2] sm:$0xf]
  %v402 = vld [vmem:[#allocation2 + $0x4] sm:$0xf]
  %v403 = vld [vmem:[#allocation2 + $0x8] sm:$0xf]
  %v404 = vld [vmem:[#allocation2 + $0xc] sm:$0xf]
  %v405 = vld [vmem:[#allocation2 + $0x10] sm:$0xf]
  %v406 = vld [vmem:[#allocation2 + $0x14] sm:$0xf]
  %v407 = vld [vmem:[#allocation2 + $0x18] sm:$0xf]
  %v408 = vld [vmem:[#allocation2 + $0x1c] sm:$0xf]
  %v409 = vld [vmem:[#allocation2 + $0x20] sm:$0xf]
  %v410 = vld [vmem:[#allocation2 + $0x24] sm:$0xf]
  %v411 = vld [vmem:[#allocation2 + $0x28] sm:$0xf]
  %v412 = vld [vmem:[#allocation2 + $0x2c] sm:$0xf]
  %v413 = vld [vmem:[#allocation2 + $0x30] sm:$0xf]
  %v414 = vld [vmem:[#allocation2 + $0x34] sm:$0xf]
  %v415 = vld [vmem:[#allocation2 + $0x38] sm:$0xf]
  %v416 = vld [vmem:[#allocation2 + $0x3c] sm:$0xf]
  %v417 = vld [vmem:[#allocation2 + $0x40] sm:$0xf]
  %v418 = vld [vmem:[#allocation2 + $0x44] sm:$0xf]
  %v419 = vld [vmem:[#allocation2 + $0x48] sm:$0xf]
  %v420 = vld [vmem:[#allocation2 + $0x4c] sm:$0xf]
  %v421 = vld [vmem:[#allocation2 + $0x50] sm:$0xf]
  %v422 = vld [vmem:[#allocation2 + $0x54] sm:$0xf]
  %v423 = vld [vmem:[#allocation2 + $0x58] sm:$0xf]
  %v424 = vld [vmem:[#allocation2 + $0x5c] sm:$0xf]
  %v425 = vld [vmem:[#allocation2 + $0x60] sm:$0xf]
  %v426 = vld [vmem:[#allocation2 + $0x64] sm:$0xf]
  %v427 = vld [vmem:[#allocation2 + $0x68] sm:$0xf]
  %v428 = vld [vmem:[#allocation2 + $0x6c] sm:$0xf]
  %v429 = vld [vmem:[#allocation2 + $0x70] sm:$0xf]
  %v430 = vld [vmem:[#allocation2 + $0x74] sm:$0xf]
  %v431 = vld [vmem:[#allocation2 + $0x78] sm:$0xf]
  %v432 = vld [vmem:[#allocation2 + $0x7c] sm:$0xf]
  %v433 = vld [vmem:[#allocation2 + $0x80] sm:$0xf]
  %v434 = vld [vmem:[#allocation2 + $0x84] sm:$0xf]
  %v435 = vld [vmem:[#allocation2 + $0x88] sm:$0xf]
  %v436 = vld [vmem:[#allocation2 + $0x8c] sm:$0xf]
  %v437 = vld [vmem:[#allocation2 + $0x90] sm:$0xf]
  %v438 = vld [vmem:[#allocation2 + $0x94] sm:$0xf]
  %v439 = vld [vmem:[#allocation2 + $0x98] sm:$0xf]
  %v440 = vld [vmem:[#allocation2 + $0x9c] sm:$0xf]
  %v441 = vld [vmem:[#allocation2 + $0xa0] sm:$0xf]
  %v442 = vld [vmem:[#allocation2 + $0xa4] sm:$0xf]
  %v443 = vld [vmem:[#allocation2 + $0xa8] sm:$0xf]
  %v444 = vld [vmem:[#allocation2 + $0xac] sm:$0xf]
  %v445 = vld [vmem:[#allocation2 + $0xb0] sm:$0xf]
  %v446 = vld [vmem:[#allocation2 + $0xb4] sm:$0xf]
  %v447 = vld [vmem:[#allocation2 + $0xb8] sm:$0xf]
  %v448 = vld [vmem:[#allocation2 + $0xbc] sm:$0xf]
  %v449 = vld [vmem:[#allocation2 + $0xc0] sm:$0xf]
  %v450 = vld [vmem:[#allocation2 + $0xc4] sm:$0xf]
  %v451 = vld [vmem:[#allocation2 + $0xc8] sm:$0xf]
  %v452 = vld [vmem:[#allocation2 + $0xcc] sm:$0xf]
  %v453 = vld [vmem:[#allocation2 + $0xd0] sm:$0xf]
  %v454 = vld [vmem:[#allocation2 + $0xd4] sm:$0xf]
  %v455 = vld [vmem:[#allocation2 + $0xd8] sm:$0xf]
  %v456 = vld [vmem:[#allocation2 + $0xdc] sm:$0xf]
  %v457 = vld [vmem:[#allocation2 + $0xe0] sm:$0xf]
  %v458 = vld [vmem:[#allocation2 + $0xe4] sm:$0xf]
  %v459 = vld [vmem:[#allocation2 + $0xe8] sm:$0xf]
  %v460 = vld [vmem:[#allocation2 + $0xec] sm:$0xf]
  %v461 = vld [vmem:[#allocation2 + $0xf0] sm:$0xf]
  %v462 = vld [vmem:[#allocation2 + $0xf4] sm:$0xf]
  %v463 = vld [vmem:[#allocation2 + $0xf8] sm:$0xf]
  %v464 = vld [vmem:[#allocation2 + $0xfc] sm:$0xf]
  %v465 = vld [vmem:[#allocation2 + $0x100] sm:$0xf]
  %v466 = vld [vmem:[#allocation2 + $0x104] sm:$0xf]
  %v467 = vld [vmem:[#allocation2 + $0x108] sm:$0xf]
  %v468 = vld [vmem:[#allocation2 + $0x10c] sm:$0xf]
  %v469 = vld [vmem:[#allocation2 + $0x110] sm:$0xf]
  %v470 = vld [vmem:[#allocation2 + $0x114] sm:$0xf]
  %v471 = vld [vmem:[#allocation2 + $0x118] sm:$0xf]
  %v472 = vld [vmem:[#allocation2 + $0x11c] sm:$0xf]
  %v473 = vld [vmem:[#allocation2 + $0x120] sm:$0xf]
  %v474 = vld [vmem:[#allocation2 + $0x124] sm:$0xf]
  %v475 = vld [vmem:[#allocation2 + $0x128] sm:$0xf]
  %v476 = vld [vmem:[#allocation2 + $0x12c] sm:$0xf]
  %v477 = vld [vmem:[#allocation2 + $0x130] sm:$0xf]
  %v478 = vld [vmem:[#allocation2 + $0x134] sm:$0xf]
  %v479 = vld [vmem:[#allocation2 + $0x138] sm:$0xf]
  %v480 = vld [vmem:[#allocation2 + $0x13c] sm:$0xf]
  %v481 = vld [vmem:[#allocation2 + $0x140] sm:$0xf]
  %v482 = vld [vmem:[#allocation2 + $0x144] sm:$0xf]
  %v483 = vld [vmem:[#allocation2 + $0x148] sm:$0xf]
  %v484 = vld [vmem:[#allocation2 + $0x14c] sm:$0xf]
  %v485 = vld [vmem:[%s2] sm:$0xf]
  %v570 = vunpack.c.l.b16 %v401
  %v571 = vunpack.c.l.b16 %v402
  %v572 = vunpack.c.l.b16 %v403
  %v573 = vunpack.c.l.b16 %v404
  %v574 = vunpack.c.l.b16 %v405
  %v575 = vunpack.c.l.b16 %v406
  %v576 = vunpack.c.l.b16 %v407
  %v577 = vunpack.c.l.b16 %v408
  %v578 = vunpack.c.l.b16 %v409
  %v579 = vunpack.c.l.b16 %v410
  %v580 = vunpack.c.l.b16 %v411
  %v581 = vunpack.c.l.b16 %v412
  %v582 = vunpack.c.l.b16 %v413
  %v583 = vunpack.c.l.b16 %v414
  %v584 = vunpack.c.l.b16 %v415
  %v585 = vunpack.c.l.b16 %v416
  %v586 = vunpack.c.l.b16 %v417
  %v587 = vunpack.c.l.b16 %v418
  %v588 = vunpack.c.l.b16 %v419
  %v589 = vunpack.c.l.b16 %v420
  %v590 = vunpack.c.l.b16 %v421
  %v591 = vunpack.c.l.b16 %v422
  %v592 = vunpack.c.l.b16 %v423
  %v593 = vunpack.c.l.b16 %v424
  %v594 = vunpack.c.l.b16 %v425
  %v595 = vunpack.c.l.b16 %v426
  %v596 = vunpack.c.l.b16 %v427
  %v597 = vunpack.c.l.b16 %v428
  %v598 = vunpack.c.l.b16 %v429
  %v599 = vunpack.c.l.b16 %v430
  %v600 = vunpack.c.l.b16 %v431
  %v601 = vunpack.c.l.b16 %v432
  %v602 = vunpack.c.l.b16 %v433
  %v603 = vunpack.c.l.b16 %v434
  %v604 = vunpack.c.l.b16 %v435
  %v605 = vunpack.c.l.b16 %v436
  %v606 = vunpack.c.l.b16 %v437
  %v607 = vunpack.c.l.b16 %v438
  %v608 = vunpack.c.l.b16 %v439
  %v609 = vunpack.c.l.b16 %v440
  %v610 = vunpack.c.l.b16 %v441
  %v611 = vunpack.c.l.b16 %v442
  %v612 = vunpack.c.l.b16 %v443
  %v613 = vunpack.c.l.b16 %v444
  %v614 = vunpack.c.l.b16 %v445
  %v615 = vunpack.c.l.b16 %v446
  %v616 = vunpack.c.l.b16 %v447
  %v617 = vunpack.c.l.b16 %v448
  %v618 = vunpack.c.l.b16 %v449
  %v619 = vunpack.c.l.b16 %v450
  %v620 = vunpack.c.l.b16 %v451
  %v621 = vunpack.c.l.b16 %v452
  %v622 = vunpack.c.l.b16 %v453
  %v623 = vunpack.c.l.b16 %v454
  %v624 = vunpack.c.l.b16 %v455
  %v625 = vunpack.c.l.b16 %v456
  %v626 = vunpack.c.l.b16 %v457
  %v627 = vunpack.c.l.b16 %v458
  %v628 = vunpack.c.l.b16 %v459
  %v629 = vunpack.c.l.b16 %v460
  %v630 = vunpack.c.l.b16 %v461
  %v631 = vunpack.c.l.b16 %v462
  %v632 = vunpack.c.l.b16 %v463
  %v633 = vunpack.c.l.b16 %v464
  %v634 = vunpack.c.l.b16 %v465
  %v635 = vunpack.c.l.b16 %v466
  %v636 = vunpack.c.l.b16 %v467
  %v637 = vunpack.c.l.b16 %v468
  %v638 = vunpack.c.l.b16 %v469
  %v639 = vunpack.c.l.b16 %v470
  %v640 = vunpack.c.l.b16 %v471
  %v641 = vunpack.c.l.b16 %v472
  %v642 = vunpack.c.l.b16 %v473
  %v643 = vunpack.c.l.b16 %v474
  %v644 = vunpack.c.l.b16 %v475
  %v645 = vunpack.c.l.b16 %v476
  %v646 = vunpack.c.l.b16 %v477
  %v647 = vunpack.c.l.b16 %v478
  %v648 = vunpack.c.l.b16 %v479
  %v649 = vunpack.c.l.b16 %v480
  %v650 = vunpack.c.l.b16 %v481
  %v651 = vunpack.c.l.b16 %v482
  %v652 = vunpack.c.l.b16 %v483
  %v653 = vunpack.c.l.b16 %v484
  %v654 = vpack.c.b16 %v571, %v570
  %v655 = vpack.c.b16 %v573, %v572
  %v656 = vpack.c.b16 %v575, %v574
  %v657 = vpack.c.b16 %v577, %v576
  %v658 = vpack.c.b16 %v579, %v578
  %v659 = vpack.c.b16 %v581, %v580
  %v660 = vpack.c.b16 %v583, %v582
  %v661 = vpack.c.b16 %v585, %v584
  %v662 = vpack.c.b16 %v587, %v586
  %v663 = vpack.c.b16 %v589, %v588
  %v664 = vpack.c.b16 %v591, %v590
  %v665 = vpack.c.b16 %v593, %v592
  %v666 = vpack.c.b16 %v595, %v594
  %v667 = vpack.c.b16 %v597, %v596
  %v668 = vpack.c.b16 %v599, %v598
  %v669 = vpack.c.b16 %v601, %v600
  %v670 = vpack.c.b16 %v603, %v602
  %v671 = vpack.c.b16 %v605, %v604
  %v672 = vpack.c.b16 %v607, %v606
  %v673 = vpack.c.b16 %v609, %v608
  %v674 = vpack.c.b16 %v611, %v610
  %v675 = vpack.c.b16 %v613, %v612
  %v676 = vpack.c.b16 %v615, %v614
  %v677 = vpack.c.b16 %v617, %v616
  %v678 = vpack.c.b16 %v619, %v618
  %v679 = vpack.c.b16 %v621, %v620
  %v680 = vpack.c.b16 %v623, %v622
  %v681 = vpack.c.b16 %v625, %v624
  %v682 = vpack.c.b16 %v627, %v626
  %v683 = vpack.c.b16 %v629, %v628
  %v684 = vpack.c.b16 %v631, %v630
  %v685 = vpack.c.b16 %v633, %v632
  %v686 = vpack.c.b16 %v635, %v634
  %v687 = vpack.c.b16 %v637, %v636
  %v688 = vpack.c.b16 %v639, %v638
  %v689 = vpack.c.b16 %v641, %v640
  %v690 = vpack.c.b16 %v643, %v642
  %v691 = vpack.c.b16 %v645, %v644
  %v692 = vpack.c.b16 %v647, %v646
  %v693 = vpack.c.b16 %v649, %v648
  %v694 = vpack.c.b16 %v651, %v650
  %v695 = vpack.c.b16 %v653, %v652
  %vm696 = vcmask 64512
  %v698 = vsel %vm696, %v654, 0
  %v701 = vsel %vm696, %v655, 0
  %v704 = vsel %vm696, %v656, 0
  %v707 = vsel %vm696, %v657, 0
  %v710 = vsel %vm696, %v658, 0
  %v713 = vsel %vm696, %v659, 0
  %v716 = vsel %vm696, %v660, 0
  %v719 = vsel %vm696, %v661, 0
  %v722 = vsel %vm696, %v662, 0
  %v725 = vsel %vm696, %v663, 0
  %v728 = vsel %vm696, %v664, 0
  %v731 = vsel %vm696, %v665, 0
  %v734 = vsel %vm696, %v666, 0
  %v737 = vsel %vm696, %v667, 0
  %v740 = vsel %vm696, %v668, 0
  %v743 = vsel %vm696, %v669, 0
  %v746 = vsel %vm696, %v670, 0
  %v749 = vsel %vm696, %v671, 0
  %v752 = vsel %vm696, %v672, 0
  %v755 = vsel %vm696, %v673, 0
  %v758 = vsel %vm696, %v674, 0
  %v761 = vsel %vm696, %v675, 0
  %v764 = vsel %vm696, %v676, 0
  %v767 = vsel %vm696, %v677, 0
  %v770 = vsel %vm696, %v678, 0
  %v773 = vsel %vm696, %v679, 0
  %v776 = vsel %vm696, %v680, 0
  %v779 = vsel %vm696, %v681, 0
  %v782 = vsel %vm696, %v682, 0
  %v785 = vsel %vm696, %v683, 0
  %v788 = vsel %vm696, %v684, 0
  %v791 = vsel %vm696, %v685, 0
  %v794 = vsel %vm696, %v686, 0
  %v797 = vsel %vm696, %v687, 0
  %v800 = vsel %vm696, %v688, 0
  %v803 = vsel %vm696, %v689, 0
  %v806 = vsel %vm696, %v690, 0
  %v809 = vsel %vm696, %v691, 0
  %v812 = vsel %vm696, %v692, 0
  %v815 = vsel %vm696, %v693, 0
  %v818 = vsel %vm696, %v694, 0
  %v821 = vsel %vm696, %v695, 0
  %vm823 = vcmask 1043456
  %v825 = vsel %vm823, %v485, 0
  %827 = vmatprep.subr.bf16.mxu0 0
  %828 = vmatpush1.bf16.msra.mxu0 0
  %829 = vmatprep.subr.bf16.mxu0 0
  %830 = vmatpush1.bf16.msra.mxu0 0
  %831 = vmatprep.subr.bf16.mxu0 0
  %832 = vmatpush1.bf16.msra.mxu0 0
  %833 = vmatprep.subr.bf16.mxu0 0
  %834 = vmatpush1.bf16.msra.mxu0 0
  %835 = vmatprep.subr.bf16.mxu0 0
  %836 = vmatpush1.bf16.msra.mxu0 0
  %837 = vmatprep.subr.bf16.mxu0 0
  %838 = vmatpush1.bf16.msra.mxu0 0
  %839 = vmatprep.subr.bf16.mxu0 0
  %840 = vmatpush1.bf16.msra.mxu0 0
  %841 = vmatprep.subr.bf16.mxu0 0
  %842 = vmatpush1.bf16.msra.mxu0 %v825
  %843 = vmatprep.subr.bf16.mxu0 0
  %844 = vmatpush2.bf16.msra.mxu0 0
  %845 = vmatprep.subr.bf16.mxu0 0
  %846 = vmatpush2.bf16.msra.mxu0 0
  %847 = vmatprep.subr.bf16.mxu0 0
  %848 = vmatpush2.bf16.msra.mxu0 0
  %849 = vmatprep.subr.bf16.mxu0 0
  %850 = vmatpush2.bf16.msra.mxu0 0
  %851 = vmatprep.subr.bf16.mxu0 0
  %852 = vmatpush2.bf16.msra.mxu0 0
  %853 = vmatprep.subr.bf16.mxu0 0
  %854 = vmatpush2.bf16.msra.mxu0 0
  %855 = vmatprep.subr.bf16.mxu0 0
  %856 = vmatpush2.bf16.msra.mxu0 0
  %857 = vmatprep.subr.bf16.mxu0 0
  %858 = vmatpush2.bf16.msra.mxu0 0
  %859 = vmatprep.mubr.bf16.mxu0 0
  %860 = vmatmul.mubr.bf16.gmra.mxu0 %v698
  %v861 = vpop.f32.mrf.mxu0
  %v862 = vadd.f32 0.0, %v861
  %v863 = vpop.f32.mrf.mxu0
  %v864 = vpop.f32.mrf.mxu0
  %v865 = vadd.f32 0.0, %v864
  %v866 = vpop.f32.mrf.mxu0
  %867 = vmatprep.mubr.bf16.mxu0 0
  %868 = vmatmul.mubr.bf16.gmra.mxu0 %v701
  %v869 = vpop.f32.mrf.mxu0
  %v870 = vadd.f32 0.0, %v869
  %v871 = vpop.f32.mrf.mxu0
  %v872 = vpop.f32.mrf.mxu0
  %v873 = vadd.f32 0.0, %v872
  %v874 = vpop.f32.mrf.mxu0
  %875 = vmatprep.mubr.bf16.mxu0 0
  %876 = vmatmul.mubr.bf16.gmra.mxu0 %v704
  %v877 = vpop.f32.mrf.mxu0
  %v878 = vadd.f32 0.0, %v877
  %v879 = vpop.f32.mrf.mxu0
  %v880 = vpop.f32.mrf.mxu0
  %v881 = vadd.f32 0.0, %v880
  %v882 = vpop.f32.mrf.mxu0
  %883 = vmatprep.mubr.bf16.mxu0 0
  %884 = vmatmul.mubr.bf16.gmra.mxu0 %v707
  %v885 = vpop.f32.mrf.mxu0
  %v886 = vadd.f32 0.0, %v885
  %v887 = vpop.f32.mrf.mxu0
  %v888 = vpop.f32.mrf.mxu0
  %v889 = vadd.f32 0.0, %v888
  %v890 = vpop.f32.mrf.mxu0
  %891 = vmatprep.mubr.bf16.mxu0 0
  %892 = vmatmul.mubr.bf16.gmra.mxu0 %v710
  %v893 = vpop.f32.mrf.mxu0
  %v894 = vadd.f32 0.0, %v893
  %v895 = vpop.f32.mrf.mxu0
  %v896 = vpop.f32.mrf.mxu0
  %v897 = vadd.f32 0.0, %v896
  %v898 = vpop.f32.mrf.mxu0
  %899 = vmatprep.mubr.bf16.mxu0 0
  %900 = vmatmul.mubr.bf16.gmra.mxu0 %v713
  %v901 = vpop.f32.mrf.mxu0
  %v902 = vadd.f32 0.0, %v901
  %v903 = vpop.f32.mrf.mxu0
  %v904 = vpop.f32.mrf.mxu0
  %v905 = vadd.f32 0.0, %v904
  %v906 = vpop.f32.mrf.mxu0
  %907 = vmatprep.mubr.bf16.mxu0 0
  %908 = vmatmul.mubr.bf16.gmra.mxu0 %v716
  %v909 = vpop.f32.mrf.mxu0
  %v910 = vadd.f32 0.0, %v909
  %v911 = vpop.f32.mrf.mxu0
  %v912 = vpop.f32.mrf.mxu0
  %v913 = vadd.f32 0.0, %v912
  %v914 = vpop.f32.mrf.mxu0
  %915 = vmatprep.mubr.bf16.mxu0 0
  %916 = vmatmul.mubr.bf16.gmra.mxu0 %v719
  %v917 = vpop.f32.mrf.mxu0
  %v918 = vadd.f32 0.0, %v917
  %v919 = vpop.f32.mrf.mxu0
  %v920 = vpop.f32.mrf.mxu0
  %v921 = vadd.f32 0.0, %v920
  %v922 = vpop.f32.mrf.mxu0
  %923 = vmatprep.mubr.bf16.mxu0 0
  %924 = vmatmul.mubr.bf16.gmra.mxu0 %v722
  %v925 = vpop.f32.mrf.mxu0
  %v926 = vadd.f32 0.0, %v925
  %v927 = vpop.f32.mrf.mxu0
  %v928 = vpop.f32.mrf.mxu0
  %v929 = vadd.f32 0.0, %v928
  %v930 = vpop.f32.mrf.mxu0
  %931 = vmatprep.mubr.bf16.mxu0 0
  %932 = vmatmul.mubr.bf16.gmra.mxu0 %v725
  %v933 = vpop.f32.mrf.mxu0
  %v934 = vadd.f32 0.0, %v933
  %v935 = vpop.f32.mrf.mxu0
  %v936 = vpop.f32.mrf.mxu0
  %v937 = vadd.f32 0.0, %v936
  %v938 = vpop.f32.mrf.mxu0
  %939 = vmatprep.mubr.bf16.mxu0 0
  %940 = vmatmul.mubr.bf16.gmra.mxu0 %v728
  %v941 = vpop.f32.mrf.mxu0
  %v942 = vadd.f32 0.0, %v941
  %v943 = vpop.f32.mrf.mxu0
  %v944 = vpop.f32.mrf.mxu0
  %v945 = vadd.f32 0.0, %v944
  %v946 = vpop.f32.mrf.mxu0
  %947 = vmatprep.mubr.bf16.mxu0 0
  %948 = vmatmul.mubr.bf16.gmra.mxu0 %v731
  %v949 = vpop.f32.mrf.mxu0
  %v950 = vadd.f32 0.0, %v949
  %v951 = vpop.f32.mrf.mxu0
  %v952 = vpop.f32.mrf.mxu0
  %v953 = vadd.f32 0.0, %v952
  %v954 = vpop.f32.mrf.mxu0
  %955 = vmatprep.mubr.bf16.mxu0 0
  %956 = vmatmul.mubr.bf16.gmra.mxu0 %v734
  %v957 = vpop.f32.mrf.mxu0
  %v958 = vadd.f32 0.0, %v957
  %v959 = vpop.f32.mrf.mxu0
  %v960 = vpop.f32.mrf.mxu0
  %v961 = vadd.f32 0.0, %v960
  %v962 = vpop.f32.mrf.mxu0
  %963 = vmatprep.mubr.bf16.mxu0 0
  %964 = vmatmul.mubr.bf16.gmra.mxu0 %v737
  %v965 = vpop.f32.mrf.mxu0
  %v966 = vadd.f32 0.0, %v965
  %v967 = vpop.f32.mrf.mxu0
  %v968 = vpop.f32.mrf.mxu0
  %v969 = vadd.f32 0.0, %v968
  %v970 = vpop.f32.mrf.mxu0
  %971 = vmatprep.mubr.bf16.mxu0 0
  %972 = vmatmul.mubr.bf16.gmra.mxu0 %v740
  %v973 = vpop.f32.mrf.mxu0
  %v974 = vadd.f32 0.0, %v973
  %v975 = vpop.f32.mrf.mxu0
  %v976 = vpop.f32.mrf.mxu0
  %v977 = vadd.f32 0.0, %v976
  %v978 = vpop.f32.mrf.mxu0
  %979 = vmatprep.mubr.bf16.mxu0 0
  %980 = vmatmul.mubr.bf16.gmra.mxu0 %v743
  %v981 = vpop.f32.mrf.mxu0
  %v982 = vadd.f32 0.0, %v981
  %v983 = vpop.f32.mrf.mxu0
  %v984 = vpop.f32.mrf.mxu0
  %v985 = vadd.f32 0.0, %v984
  %v986 = vpop.f32.mrf.mxu0
  %987 = vmatprep.mubr.bf16.mxu0 0
  %988 = vmatmul.mubr.bf16.gmra.mxu0 %v746
  %v989 = vpop.f32.mrf.mxu0
  %v990 = vadd.f32 0.0, %v989
  %v991 = vpop.f32.mrf.mxu0
  %v992 = vpop.f32.mrf.mxu0
  %v993 = vadd.f32 0.0, %v992
  %v994 = vpop.f32.mrf.mxu0
  %995 = vmatprep.mubr.bf16.mxu0 0
  %996 = vmatmul.mubr.bf16.gmra.mxu0 %v749
  %v997 = vpop.f32.mrf.mxu0
  %v998 = vadd.f32 0.0, %v997
  %v999 = vpop.f32.mrf.mxu0
  %v1000 = vpop.f32.mrf.mxu0
  %v1001 = vadd.f32 0.0, %v1000
  %v1002 = vpop.f32.mrf.mxu0
  %1003 = vmatprep.mubr.bf16.mxu0 0
  %1004 = vmatmul.mubr.bf16.gmra.mxu0 %v752
  %v1005 = vpop.f32.mrf.mxu0
  %v1006 = vadd.f32 0.0, %v1005
  %v1007 = vpop.f32.mrf.mxu0
  %v1008 = vpop.f32.mrf.mxu0
  %v1009 = vadd.f32 0.0, %v1008
  %v1010 = vpop.f32.mrf.mxu0
  %1011 = vmatprep.mubr.bf16.mxu0 0
  %1012 = vmatmul.mubr.bf16.gmra.mxu0 %v755
  %v1013 = vpop.f32.mrf.mxu0
  %v1014 = vadd.f32 0.0, %v1013
  %v1015 = vpop.f32.mrf.mxu0
  %v1016 = vpop.f32.mrf.mxu0
  %v1017 = vadd.f32 0.0, %v1016
  %v1018 = vpop.f32.mrf.mxu0
  %1019 = vmatprep.mubr.bf16.mxu0 0
  %1020 = vmatmul.mubr.bf16.gmra.mxu0 %v758
  %v1021 = vpop.f32.mrf.mxu0
  %v1022 = vadd.f32 0.0, %v1021
  %v1023 = vpop.f32.mrf.mxu0
  %v1024 = vpop.f32.mrf.mxu0
  %v1025 = vadd.f32 0.0, %v1024
  %v1026 = vpop.f32.mrf.mxu0
  %1027 = vmatprep.mubr.bf16.mxu0 0
  %1028 = vmatmul.mubr.bf16.gmra.mxu0 %v761
  %v1029 = vpop.f32.mrf.mxu0
  %v1030 = vadd.f32 0.0, %v1029
  %v1031 = vpop.f32.mrf.mxu0
  %v1032 = vpop.f32.mrf.mxu0
  %v1033 = vadd.f32 0.0, %v1032
  %v1034 = vpop.f32.mrf.mxu0
  %1035 = vmatprep.mubr.bf16.mxu0 0
  %1036 = vmatmul.mubr.bf16.gmra.mxu0 %v764
  %v1037 = vpop.f32.mrf.mxu0
  %v1038 = vadd.f32 0.0, %v1037
  %v1039 = vpop.f32.mrf.mxu0
  %v1040 = vpop.f32.mrf.mxu0
  %v1041 = vadd.f32 0.0, %v1040
  %v1042 = vpop.f32.mrf.mxu0
  %1043 = vmatprep.mubr.bf16.mxu0 0
  %1044 = vmatmul.mubr.bf16.gmra.mxu0 %v767
  %v1045 = vpop.f32.mrf.mxu0
  %v1046 = vadd.f32 0.0, %v1045
  %v1047 = vpop.f32.mrf.mxu0
  %v1048 = vpop.f32.mrf.mxu0
  %v1049 = vadd.f32 0.0, %v1048
  %v1050 = vpop.f32.mrf.mxu0
  %1051 = vmatprep.mubr.bf16.mxu0 0
  %1052 = vmatmul.mubr.bf16.gmra.mxu0 %v770
  %v1053 = vpop.f32.mrf.mxu0
  %v1054 = vadd.f32 0.0, %v1053
  %v1055 = vpop.f32.mrf.mxu0
  %v1056 = vpop.f32.mrf.mxu0
  %v1057 = vadd.f32 0.0, %v1056
  %v1058 = vpop.f32.mrf.mxu0
  %1059 = vmatprep.mubr.bf16.mxu0 0
  %1060 = vmatmul.mubr.bf16.gmra.mxu0 %v773
  %v1061 = vpop.f32.mrf.mxu0
  %v1062 = vadd.f32 0.0, %v1061
  %v1063 = vpop.f32.mrf.mxu0
  %v1064 = vpop.f32.mrf.mxu0
  %v1065 = vadd.f32 0.0, %v1064
  %v1066 = vpop.f32.mrf.mxu0
  %1067 = vmatprep.mubr.bf16.mxu0 0
  %1068 = vmatmul.mubr.bf16.gmra.mxu0 %v776
  %v1069 = vpop.f32.mrf.mxu0
  %v1070 = vadd.f32 0.0, %v1069
  %v1071 = vpop.f32.mrf.mxu0
  %v1072 = vpop.f32.mrf.mxu0
  %v1073 = vadd.f32 0.0, %v1072
  %v1074 = vpop.f32.mrf.mxu0
  %1075 = vmatprep.mubr.bf16.mxu0 0
  %1076 = vmatmul.mubr.bf16.gmra.mxu0 %v779
  %v1077 = vpop.f32.mrf.mxu0
  %v1078 = vadd.f32 0.0, %v1077
  %v1079 = vpop.f32.mrf.mxu0
  %v1080 = vpop.f32.mrf.mxu0
  %v1081 = vadd.f32 0.0, %v1080
  %v1082 = vpop.f32.mrf.mxu0
  %1083 = vmatprep.mubr.bf16.mxu0 0
  %1084 = vmatmul.mubr.bf16.gmra.mxu0 %v782
  %v1085 = vpop.f32.mrf.mxu0
  %v1086 = vadd.f32 0.0, %v1085
  %v1087 = vpop.f32.mrf.mxu0
  %v1088 = vpop.f32.mrf.mxu0
  %v1089 = vadd.f32 0.0, %v1088
  %v1090 = vpop.f32.mrf.mxu0
  %1091 = vmatprep.mubr.bf16.mxu0 0
  %1092 = vmatmul.mubr.bf16.gmra.mxu0 %v785
  %v1093 = vpop.f32.mrf.mxu0
  %v1094 = vadd.f32 0.0, %v1093
  %v1095 = vpop.f32.mrf.mxu0
  %v1096 = vpop.f32.mrf.mxu0
  %v1097 = vadd.f32 0.0, %v1096
  %v1098 = vpop.f32.mrf.mxu0
  %1099 = vmatprep.mubr.bf16.mxu0 0
  %1100 = vmatmul.mubr.bf16.gmra.mxu0 %v788
  %v1101 = vpop.f32.mrf.mxu0
  %v1102 = vadd.f32 0.0, %v1101
  %v1103 = vpop.f32.mrf.mxu0
  %v1104 = vpop.f32.mrf.mxu0
  %v1105 = vadd.f32 0.0, %v1104
  %v1106 = vpop.f32.mrf.mxu0
  %1107 = vmatprep.mubr.bf16.mxu0 0
  %1108 = vmatmul.mubr.bf16.gmra.mxu0 %v791
  %v1109 = vpop.f32.mrf.mxu0
  %v1110 = vadd.f32 0.0, %v1109
  %v1111 = vpop.f32.mrf.mxu0
  %v1112 = vpop.f32.mrf.mxu0
  %v1113 = vadd.f32 0.0, %v1112
  %v1114 = vpop.f32.mrf.mxu0
  %1115 = vmatprep.mubr.bf16.mxu0 0
  %1116 = vmatmul.mubr.bf16.gmra.mxu0 %v794
  %v1117 = vpop.f32.mrf.mxu0
  %v1118 = vadd.f32 0.0, %v1117
  %v1119 = vpop.f32.mrf.mxu0
  %v1120 = vpop.f32.mrf.mxu0
  %v1121 = vadd.f32 0.0, %v1120
  %v1122 = vpop.f32.mrf.mxu0
  %1123 = vmatprep.mubr.bf16.mxu0 0
  %1124 = vmatmul.mubr.bf16.gmra.mxu0 %v797
  %v1125 = vpop.f32.mrf.mxu0
  %v1126 = vadd.f32 0.0, %v1125
  %v1127 = vpop.f32.mrf.mxu0
  %v1128 = vpop.f32.mrf.mxu0
  %v1129 = vadd.f32 0.0, %v1128
  %v1130 = vpop.f32.mrf.mxu0
  %1131 = vmatprep.mubr.bf16.mxu0 0
  %1132 = vmatmul.mubr.bf16.gmra.mxu0 %v800
  %v1133 = vpop.f32.mrf.mxu0
  %v1134 = vadd.f32 0.0, %v1133
  %v1135 = vpop.f32.mrf.mxu0
  %v1136 = vpop.f32.mrf.mxu0
  %v1137 = vadd.f32 0.0, %v1136
  %v1138 = vpop.f32.mrf.mxu0
  %1139 = vmatprep.mubr.bf16.mxu0 0
  %1140 = vmatmul.mubr.bf16.gmra.mxu0 %v803
  %v1141 = vpop.f32.mrf.mxu0
  %v1142 = vadd.f32 0.0, %v1141
  %v1143 = vpop.f32.mrf.mxu0
  %v1144 = vpop.f32.mrf.mxu0
  %v1145 = vadd.f32 0.0, %v1144
  %v1146 = vpop.f32.mrf.mxu0
  %1147 = vmatprep.mubr.bf16.mxu0 0
  %1148 = vmatmul.mubr.bf16.gmra.mxu0 %v806
  %v1149 = vpop.f32.mrf.mxu0
  %v1150 = vadd.f32 0.0, %v1149
  %v1151 = vpop.f32.mrf.mxu0
  %v1152 = vpop.f32.mrf.mxu0
  %v1153 = vadd.f32 0.0, %v1152
  %v1154 = vpop.f32.mrf.mxu0
  %1155 = vmatprep.mubr.bf16.mxu0 0
  %1156 = vmatmul.mubr.bf16.gmra.mxu0 %v809
  %v1157 = vpop.f32.mrf.mxu0
  %v1158 = vadd.f32 0.0, %v1157
  %v1159 = vpop.f32.mrf.mxu0
  %v1160 = vpop.f32.mrf.mxu0
  %v1161 = vadd.f32 0.0, %v1160
  %v1162 = vpop.f32.mrf.mxu0
  %1163 = vmatprep.mubr.bf16.mxu0 0
  %1164 = vmatmul.mubr.bf16.gmra.mxu0 %v812
  %v1165 = vpop.f32.mrf.mxu0
  %v1166 = vadd.f32 0.0, %v1165
  %v1167 = vpop.f32.mrf.mxu0
  %v1168 = vpop.f32.mrf.mxu0
  %v1169 = vadd.f32 0.0, %v1168
  %v1170 = vpop.f32.mrf.mxu0
  %1171 = vmatprep.mubr.bf16.mxu0 0
  %1172 = vmatmul.mubr.bf16.gmra.mxu0 %v815
  %v1173 = vpop.f32.mrf.mxu0
  %v1174 = vadd.f32 0.0, %v1173
  %v1175 = vpop.f32.mrf.mxu0
  %v1176 = vpop.f32.mrf.mxu0
  %v1177 = vadd.f32 0.0, %v1176
  %v1178 = vpop.f32.mrf.mxu0
  %1179 = vmatprep.mubr.bf16.mxu0 0
  %1180 = vmatmul.mubr.bf16.gmra.mxu0 %v818
  %v1181 = vpop.f32.mrf.mxu0
  %v1182 = vadd.f32 0.0, %v1181
  %v1183 = vpop.f32.mrf.mxu0
  %v1184 = vpop.f32.mrf.mxu0
  %v1185 = vadd.f32 0.0, %v1184
  %v1186 = vpop.f32.mrf.mxu0
  %1187 = vmatprep.mubr.bf16.mxu0 0
  %1188 = vmatmul.mubr.bf16.gmra.mxu0 %v821
  %v1189 = vpop.f32.mrf.mxu0
  %v1190 = vadd.f32 0.0, %v1189
  %v1191 = vpop.f32.mrf.mxu0
  %v1192 = vpop.f32.mrf.mxu0
  %v1193 = vadd.f32 0.0, %v1192
  %v1194 = vpop.f32.mrf.mxu0
  %1195 = vdwg.mxu0
  %v1196 = vadd.f32 %v317, %v862
  %v1197 = vadd.f32 %v318, %v865
  %v1198 = vadd.f32 %v319, %v870
  %v1199 = vadd.f32 %v320, %v873
  %v1200 = vadd.f32 %v321, %v878
  %v1201 = vadd.f32 %v322, %v881
  %v1202 = vadd.f32 %v323, %v886
  %v1203 = vadd.f32 %v324, %v889
  %v1204 = vadd.f32 %v325, %v894
  %v1205 = vadd.f32 %v326, %v897
  %v1206 = vadd.f32 %v327, %v902
  %v1207 = vadd.f32 %v328, %v905
  %v1208 = vadd.f32 %v329, %v910
  %v1209 = vadd.f32 %v330, %v913
  %v1210 = vadd.f32 %v331, %v918
  %v1211 = vadd.f32 %v332, %v921
  %v1212 = vadd.f32 %v333, %v926
  %v1213 = vadd.f32 %v334, %v929
  %v1214 = vadd.f32 %v335, %v934
  %v1215 = vadd.f32 %v336, %v937
  %v1216 = vadd.f32 %v337, %v942
  %v1217 = vadd.f32 %v338, %v945
  %v1218 = vadd.f32 %v339, %v950
  %v1219 = vadd.f32 %v340, %v953
  %v1220 = vadd.f32 %v341, %v958
  %v1221 = vadd.f32 %v342, %v961
  %v1222 = vadd.f32 %v343, %v966
  %v1223 = vadd.f32 %v344, %v969
  %v1224 = vadd.f32 %v345, %v974
  %v1225 = vadd.f32 %v346, %v977
  %v1226 = vadd.f32 %v347, %v982
  %v1227 = vadd.f32 %v348, %v985
  %v1228 = vadd.f32 %v349, %v990
  %v1229 = vadd.f32 %v350, %v993
  %v1230 = vadd.f32 %v351, %v998
  %v1231 = vadd.f32 %v352, %v1001
  %v1232 = vadd.f32 %v353, %v1006
  %v1233 = vadd.f32 %v354, %v1009
  %v1234 = vadd.f32 %v355, %v1014
  %v1235 = vadd.f32 %v356, %v1017
  %v1236 = vadd.f32 %v357, %v1022
  %v1237 = vadd.f32 %v358, %v1025
  %v1238 = vadd.f32 %v359, %v1030
  %v1239 = vadd.f32 %v360, %v1033
  %v1240 = vadd.f32 %v361, %v1038
  %v1241 = vadd.f32 %v362, %v1041
  %v1242 = vadd.f32 %v363, %v1046
  %v1243 = vadd.f32 %v364, %v1049
  %v1244 = vadd.f32 %v365, %v1054
  %v1245 = vadd.f32 %v366, %v1057
  %v1246 = vadd.f32 %v367, %v1062
  %v1247 = vadd.f32 %v368, %v1065
  %v1248 = vadd.f32 %v369, %v1070
  %v1249 = vadd.f32 %v370, %v1073
  %v1250 = vadd.f32 %v371, %v1078
  %v1251 = vadd.f32 %v372, %v1081
  %v1252 = vadd.f32 %v373, %v1086
  %v1253 = vadd.f32 %v374, %v1089
  %v1254 = vadd.f32 %v375, %v1094
  %v1255 = vadd.f32 %v376, %v1097
  %v1256 = vadd.f32 %v377, %v1102
  %v1257 = vadd.f32 %v378, %v1105
  %v1258 = vadd.f32 %v379, %v1110
  %v1259 = vadd.f32 %v380, %v1113
  %v1260 = vadd.f32 %v381, %v1118
  %v1261 = vadd.f32 %v382, %v1121
  %v1262 = vadd.f32 %v383, %v1126
  %v1263 = vadd.f32 %v384, %v1129
  %v1264 = vadd.f32 %v385, %v1134
  %v1265 = vadd.f32 %v386, %v1137
  %v1266 = vadd.f32 %v387, %v1142
  %v1267 = vadd.f32 %v388, %v1145
  %v1268 = vadd.f32 %v389, %v1150
  %v1269 = vadd.f32 %v390, %v1153
  %v1270 = vadd.f32 %v391, %v1158
  %v1271 = vadd.f32 %v392, %v1161
  %v1272 = vadd.f32 %v393, %v1166
  %v1273 = vadd.f32 %v394, %v1169
  %v1274 = vadd.f32 %v395, %v1174
  %v1275 = vadd.f32 %v396, %v1177
  %v1276 = vadd.f32 %v397, %v1182
  %v1277 = vadd.f32 %v398, %v1185
  %v1278 = vadd.f32 %v399, %v1190
  %v1279 = vadd.f32 %v400, %v1193
  %1280 = vst [vmem:[%s4] sm:$0xff] %v1196
  %1281 = vst [vmem:[%s4 + $0x8] sm:$0xff] %v1197
  %1282 = vst [vmem:[%s4 + $0x10] sm:$0xff] %v1198
  %1283 = vst [vmem:[%s4 + $0x18] sm:$0xff] %v1199
  %1284 = vst [vmem:[%s4 + $0x20] sm:$0xff] %v1200
  %1285 = vst [vmem:[%s4 + $0x28] sm:$0xff] %v1201
  %1286 = vst [vmem:[%s4 + $0x30] sm:$0xff] %v1202
  %1287 = vst [vmem:[%s4 + $0x38] sm:$0xff] %v1203
  %1288 = vst [vmem:[%s4 + $0x40] sm:$0xff] %v1204
  %1289 = vst [vmem:[%s4 + $0x48] sm:$0xff] %v1205
  %1290 = vst [vmem:[%s4 + $0x50] sm:$0xff] %v1206
  %1291 = vst [vmem:[%s4 + $0x58] sm:$0xff] %v1207
  %1292 = vst [vmem:[%s4 + $0x60] sm:$0xff] %v1208
  %1293 = vst [vmem:[%s4 + $0x68] sm:$0xff] %v1209
  %1294 = vst [vmem:[%s4 + $0x70] sm:$0xff] %v1210
  %1295 = vst [vmem:[%s4 + $0x78] sm:$0xff] %v1211
  %1296 = vst [vmem:[%s4 + $0x80] sm:$0xff] %v1212
  %1297 = vst [vmem:[%s4 + $0x88] sm:$0xff] %v1213
  %1298 = vst [vmem:[%s4 + $0x90] sm:$0xff] %v1214
  %1299 = vst [vmem:[%s4 + $0x98] sm:$0xff] %v1215
  %1300 = vst [vmem:[%s4 + $0xa0] sm:$0xff] %v1216
  %1301 = vst [vmem:[%s4 + $0xa8] sm:$0xff] %v1217
  %1302 = vst [vmem:[%s4 + $0xb0] sm:$0xff] %v1218
  %1303 = vst [vmem:[%s4 + $0xb8] sm:$0xff] %v1219
  %1304 = vst [vmem:[%s4 + $0xc0] sm:$0xff] %v1220
  %1305 = vst [vmem:[%s4 + $0xc8] sm:$0xff] %v1221
  %1306 = vst [vmem:[%s4 + $0xd0] sm:$0xff] %v1222
  %1307 = vst [vmem:[%s4 + $0xd8] sm:$0xff] %v1223
  %1308 = vst [vmem:[%s4 + $0xe0] sm:$0xff] %v1224
  %1309 = vst [vmem:[%s4 + $0xe8] sm:$0xff] %v1225
  %1310 = vst [vmem:[%s4 + $0xf0] sm:$0xff] %v1226
  %1311 = vst [vmem:[%s4 + $0xf8] sm:$0xff] %v1227
  %1312 = vst [vmem:[%s4 + $0x100] sm:$0xff] %v1228
  %1313 = vst [vmem:[%s4 + $0x108] sm:$0xff] %v1229
  %1314 = vst [vmem:[%s4 + $0x110] sm:$0xff] %v1230
  %1315 = vst [vmem:[%s4 + $0x118] sm:$0xff] %v1231
  %1316 = vst [vmem:[%s4 + $0x120] sm:$0xff] %v1232
  %1317 = vst [vmem:[%s4 + $0x128] sm:$0xff] %v1233
  %1318 = vst [vmem:[%s4 + $0x130] sm:$0xff] %v1234
  %1319 = vst [vmem:[%s4 + $0x138] sm:$0xff] %v1235
  %1320 = vst [vmem:[%s4 + $0x140] sm:$0xff] %v1236
  %1321 = vst [vmem:[%s4 + $0x148] sm:$0xff] %v1237
  %1322 = vst [vmem:[%s4 + $0x150] sm:$0xff] %v1238
  %1323 = vst [vmem:[%s4 + $0x158] sm:$0xff] %v1239
  %1324 = vst [vmem:[%s4 + $0x160] sm:$0xff] %v1240
  %1325 = vst [vmem:[%s4 + $0x168] sm:$0xff] %v1241
  %1326 = vst [vmem:[%s4 + $0x170] sm:$0xff] %v1242
  %1327 = vst [vmem:[%s4 + $0x178] sm:$0xff] %v1243
  %1328 = vst [vmem:[%s4 + $0x180] sm:$0xff] %v1244
  %1329 = vst [vmem:[%s4 + $0x188] sm:$0xff] %v1245
  %1330 = vst [vmem:[%s4 + $0x190] sm:$0xff] %v1246
  %1331 = vst [vmem:[%s4 + $0x198] sm:$0xff] %v1247
  %1332 = vst [vmem:[%s4 + $0x1a0] sm:$0xff] %v1248
  %1333 = vst [vmem:[%s4 + $0x1a8] sm:$0xff] %v1249
  %1334 = vst [vmem:[%s4 + $0x1b0] sm:$0xff] %v1250
  %1335 = vst [vmem:[%s4 + $0x1b8] sm:$0xff] %v1251
  %1336 = vst [vmem:[%s4 + $0x1c0] sm:$0xff] %v1252
  %1337 = vst [vmem:[%s4 + $0x1c8] sm:$0xff] %v1253
  %1338 = vst [vmem:[%s4 + $0x1d0] sm:$0xff] %v1254
  %1339 = vst [vmem:[%s4 + $0x1d8] sm:$0xff] %v1255
  %1340 = vst [vmem:[%s4 + $0x1e0] sm:$0xff] %v1256
  %1341 = vst [vmem:[%s4 + $0x1e8] sm:$0xff] %v1257
  %1342 = vst [vmem:[%s4 + $0x1f0] sm:$0xff] %v1258
  %1343 = vst [vmem:[%s4 + $0x1f8] sm:$0xff] %v1259
  %1344 = vst [vmem:[%s4 + $0x200] sm:$0xff] %v1260
  %1345 = vst [vmem:[%s4 + $0x208] sm:$0xff] %v1261
  %1346 = vst [vmem:[%s4 + $0x210] sm:$0xff] %v1262
  %1347 = vst [vmem:[%s4 + $0x218] sm:$0xff] %v1263
  %1348 = vst [vmem:[%s4 + $0x220] sm:$0xff] %v1264
  %1349 = vst [vmem:[%s4 + $0x228] sm:$0xff] %v1265
  %1350 = vst [vmem:[%s4 + $0x230] sm:$0xff] %v1266
  %1351 = vst [vmem:[%s4 + $0x238] sm:$0xff] %v1267
  %1352 = vst [vmem:[%s4 + $0x240] sm:$0xff] %v1268
  %1353 = vst [vmem:[%s4 + $0x248] sm:$0xff] %v1269
  %1354 = vst [vmem:[%s4 + $0x250] sm:$0xff] %v1270
  %1355 = vst [vmem:[%s4 + $0x258] sm:$0xff] %v1271
  %1356 = vst [vmem:[%s4 + $0x260] sm:$0xff] %v1272
  %1357 = vst [vmem:[%s4 + $0x268] sm:$0xff] %v1273
  %1358 = vst [vmem:[%s4 + $0x270] sm:$0xff] %v1274
  %1359 = vst [vmem:[%s4 + $0x278] sm:$0xff] %v1275
  %1360 = vst [vmem:[%s4 + $0x280] sm:$0xff] %v1276
  %1361 = vst [vmem:[%s4 + $0x288] sm:$0xff] %v1277
  %1362 = vst [vmem:[%s4 + $0x290] sm:$0xff] %v1278
  %1363 = vst [vmem:[%s4 + $0x298] sm:$0xff] %v1279
  %v1364 = vld [vmem:[%s4] sm:$0xff]
  %v1365 = vld [vmem:[%s4 + $0x8] sm:$0xff]
  %v1366 = vld [vmem:[%s4 + $0x10] sm:$0xff]
  %v1367 = vld [vmem:[%s4 + $0x18] sm:$0xff]
  %v1368 = vld [vmem:[%s4 + $0x20] sm:$0xff]
  %v1369 = vld [vmem:[%s4 + $0x28] sm:$0xff]
  %v1370 = vld [vmem:[%s4 + $0x30] sm:$0xff]
  %v1371 = vld [vmem:[%s4 + $0x38] sm:$0xff]
  %v1372 = vld [vmem:[%s4 + $0x40] sm:$0xff]
  %v1373 = vld [vmem:[%s4 + $0x48] sm:$0xff]
  %v1374 = vld [vmem:[%s4 + $0x50] sm:$0xff]
  %v1375 = vld [vmem:[%s4 + $0x58] sm:$0xff]
  %v1376 = vld [vmem:[%s4 + $0x60] sm:$0xff]
  %v1377 = vld [vmem:[%s4 + $0x68] sm:$0xff]
  %v1378 = vld [vmem:[%s4 + $0x70] sm:$0xff]
  %v1379 = vld [vmem:[%s4 + $0x78] sm:$0xff]
  %v1380 = vld [vmem:[%s4 + $0x80] sm:$0xff]
  %v1381 = vld [vmem:[%s4 + $0x88] sm:$0xff]
  %v1382 = vld [vmem:[%s4 + $0x90] sm:$0xff]
  %v1383 = vld [vmem:[%s4 + $0x98] sm:$0xff]
  %v1384 = vld [vmem:[%s4 + $0xa0] sm:$0xff]
  %v1385 = vld [vmem:[%s4 + $0xa8] sm:$0xff]
  %v1386 = vld [vmem:[%s4 + $0xb0] sm:$0xff]
  %v1387 = vld [vmem:[%s4 + $0xb8] sm:$0xff]
  %v1388 = vld [vmem:[%s4 + $0xc0] sm:$0xff]
  %v1389 = vld [vmem:[%s4 + $0xc8] sm:$0xff]
  %v1390 = vld [vmem:[%s4 + $0xd0] sm:$0xff]
  %v1391 = vld [vmem:[%s4 + $0xd8] sm:$0xff]
  %v1392 = vld [vmem:[%s4 + $0xe0] sm:$0xff]
  %v1393 = vld [vmem:[%s4 + $0xe8] sm:$0xff]
  %v1394 = vld [vmem:[%s4 + $0xf0] sm:$0xff]
  %v1395 = vld [vmem:[%s4 + $0xf8] sm:$0xff]
  %v1396 = vld [vmem:[%s4 + $0x100] sm:$0xff]
  %v1397 = vld [vmem:[%s4 + $0x108] sm:$0xff]
  %v1398 = vld [vmem:[%s4 + $0x110] sm:$0xff]
  %v1399 = vld [vmem:[%s4 + $0x118] sm:$0xff]
  %v1400 = vld [vmem:[%s4 + $0x120] sm:$0xff]
  %v1401 = vld [vmem:[%s4 + $0x128] sm:$0xff]
  %v1402 = vld [vmem:[%s4 + $0x130] sm:$0xff]
  %v1403 = vld [vmem:[%s4 + $0x138] sm:$0xff]
  %v1404 = vld [vmem:[%s4 + $0x140] sm:$0xff]
  %v1405 = vld [vmem:[%s4 + $0x148] sm:$0xff]
  %v1406 = vld [vmem:[%s4 + $0x150] sm:$0xff]
  %v1407 = vld [vmem:[%s4 + $0x158] sm:$0xff]
  %v1408 = vld [vmem:[%s4 + $0x160] sm:$0xff]
  %v1409 = vld [vmem:[%s4 + $0x168] sm:$0xff]
  %v1410 = vld [vmem:[%s4 + $0x170] sm:$0xff]
  %v1411 = vld [vmem:[%s4 + $0x178] sm:$0xff]
  %v1412 = vld [vmem:[%s4 + $0x180] sm:$0xff]
  %v1413 = vld [vmem:[%s4 + $0x188] sm:$0xff]
  %v1414 = vld [vmem:[%s4 + $0x190] sm:$0xff]
  %v1415 = vld [vmem:[%s4 + $0x198] sm:$0xff]
  %v1416 = vld [vmem:[%s4 + $0x1a0] sm:$0xff]
  %v1417 = vld [vmem:[%s4 + $0x1a8] sm:$0xff]
  %v1418 = vld [vmem:[%s4 + $0x1b0] sm:$0xff]
  %v1419 = vld [vmem:[%s4 + $0x1b8] sm:$0xff]
  %v1420 = vld [vmem:[%s4 + $0x1c0] sm:$0xff]
  %v1421 = vld [vmem:[%s4 + $0x1c8] sm:$0xff]
  %v1422 = vld [vmem:[%s4 + $0x1d0] sm:$0xff]
  %v1423 = vld [vmem:[%s4 + $0x1d8] sm:$0xff]
  %v1424 = vld [vmem:[%s4 + $0x1e0] sm:$0xff]
  %v1425 = vld [vmem:[%s4 + $0x1e8] sm:$0xff]
  %v1426 = vld [vmem:[%s4 + $0x1f0] sm:$0xff]
  %v1427 = vld [vmem:[%s4 + $0x1f8] sm:$0xff]
  %v1428 = vld [vmem:[%s4 + $0x200] sm:$0xff]
  %v1429 = vld [vmem:[%s4 + $0x208] sm:$0xff]
  %v1430 = vld [vmem:[%s4 + $0x210] sm:$0xff]
  %v1431 = vld [vmem:[%s4 + $0x218] sm:$0xff]
  %v1432 = vld [vmem:[%s4 + $0x220] sm:$0xff]
  %v1433 = vld [vmem:[%s4 + $0x228] sm:$0xff]
  %v1434 = vld [vmem:[%s4 + $0x230] sm:$0xff]
  %v1435 = vld [vmem:[%s4 + $0x238] sm:$0xff]
  %v1436 = vld [vmem:[%s4 + $0x240] sm:$0xff]
  %v1437 = vld [vmem:[%s4 + $0x248] sm:$0xff]
  %v1438 = vld [vmem:[%s4 + $0x250] sm:$0xff]
  %v1439 = vld [vmem:[%s4 + $0x258] sm:$0xff]
  %v1440 = vld [vmem:[%s4 + $0x260] sm:$0xff]
  %v1441 = vld [vmem:[%s4 + $0x268] sm:$0xff]
  %v1442 = vld [vmem:[%s4 + $0x270] sm:$0xff]
  %v1443 = vld [vmem:[%s4 + $0x278] sm:$0xff]
  %v1444 = vld [vmem:[%s4 + $0x280] sm:$0xff]
  %v1445 = vld [vmem:[%s4 + $0x288] sm:$0xff]
  %v1446 = vld [vmem:[%s4 + $0x290] sm:$0xff]
  %v1447 = vld [vmem:[%s4 + $0x298] sm:$0xff]
  %v1448 = vld [vmem:[#allocation2] sm:$0xf]
  %v1449 = vld [vmem:[#allocation2 + $0x4] sm:$0xf]
  %v1450 = vld [vmem:[#allocation2 + $0x8] sm:$0xf]
  %v1451 = vld [vmem:[#allocation2 + $0xc] sm:$0xf]
  %v1452 = vld [vmem:[#allocation2 + $0x10] sm:$0xf]
  %v1453 = vld [vmem:[#allocation2 + $0x14] sm:$0xf]
  %v1454 = vld [vmem:[#allocation2 + $0x18] sm:$0xf]
  %v1455 = vld [vmem:[#allocation2 + $0x1c] sm:$0xf]
  %v1456 = vld [vmem:[#allocation2 + $0x20] sm:$0xf]
  %v1457 = vld [vmem:[#allocation2 + $0x24] sm:$0xf]
  %v1458 = vld [vmem:[#allocation2 + $0x28] sm:$0xf]
  %v1459 = vld [vmem:[#allocation2 + $0x2c] sm:$0xf]
  %v1460 = vld [vmem:[#allocation2 + $0x30] sm:$0xf]
  %v1461 = vld [vmem:[#allocation2 + $0x34] sm:$0xf]
  %v1462 = vld [vmem:[#allocation2 + $0x38] sm:$0xf]
  %v1463 = vld [vmem:[#allocation2 + $0x3c] sm:$0xf]
  %v1464 = vld [vmem:[#allocation2 + $0x40] sm:$0xf]
  %v1465 = vld [vmem:[#allocation2 + $0x44] sm:$0xf]
  %v1466 = vld [vmem:[#allocation2 + $0x48] sm:$0xf]
  %v1467 = vld [vmem:[#allocation2 + $0x4c] sm:$0xf]
  %v1468 = vld [vmem:[#allocation2 + $0x50] sm:$0xf]
  %v1469 = vld [vmem:[#allocation2 + $0x54] sm:$0xf]
  %v1470 = vld [vmem:[#allocation2 + $0x58] sm:$0xf]
  %v1471 = vld [vmem:[#allocation2 + $0x5c] sm:$0xf]
  %v1472 = vld [vmem:[#allocation2 + $0x60] sm:$0xf]
  %v1473 = vld [vmem:[#allocation2 + $0x64] sm:$0xf]
  %v1474 = vld [vmem:[#allocation2 + $0x68] sm:$0xf]
  %v1475 = vld [vmem:[#allocation2 + $0x6c] sm:$0xf]
  %v1476 = vld [vmem:[#allocation2 + $0x70] sm:$0xf]
  %v1477 = vld [vmem:[#allocation2 + $0x74] sm:$0xf]
  %v1478 = vld [vmem:[#allocation2 + $0x78] sm:$0xf]
  %v1479 = vld [vmem:[#allocation2 + $0x7c] sm:$0xf]
  %v1480 = vld [vmem:[#allocation2 + $0x80] sm:$0xf]
  %v1481 = vld [vmem:[#allocation2 + $0x84] sm:$0xf]
  %v1482 = vld [vmem:[#allocation2 + $0x88] sm:$0xf]
  %v1483 = vld [vmem:[#allocation2 + $0x8c] sm:$0xf]
  %v1484 = vld [vmem:[#allocation2 + $0x90] sm:$0xf]
  %v1485 = vld [vmem:[#allocation2 + $0x94] sm:$0xf]
  %v1486 = vld [vmem:[#allocation2 + $0x98] sm:$0xf]
  %v1487 = vld [vmem:[#allocation2 + $0x9c] sm:$0xf]
  %v1488 = vld [vmem:[#allocation2 + $0xa0] sm:$0xf]
  %v1489 = vld [vmem:[#allocation2 + $0xa4] sm:$0xf]
  %v1490 = vld [vmem:[#allocation2 + $0xa8] sm:$0xf]
  %v1491 = vld [vmem:[#allocation2 + $0xac] sm:$0xf]
  %v1492 = vld [vmem:[#allocation2 + $0xb0] sm:$0xf]
  %v1493 = vld [vmem:[#allocation2 + $0xb4] sm:$0xf]
  %v1494 = vld [vmem:[#allocation2 + $0xb8] sm:$0xf]
  %v1495 = vld [vmem:[#allocation2 + $0xbc] sm:$0xf]
  %v1496 = vld [vmem:[#allocation2 + $0xc0] sm:$0xf]
  %v1497 = vld [vmem:[#allocation2 + $0xc4] sm:$0xf]
  %v1498 = vld [vmem:[#allocation2 + $0xc8] sm:$0xf]
  %v1499 = vld [vmem:[#allocation2 + $0xcc] sm:$0xf]
  %v1500 = vld [vmem:[#allocation2 + $0xd0] sm:$0xf]
  %v1501 = vld [vmem:[#allocation2 + $0xd4] sm:$0xf]
  %v1502 = vld [vmem:[#allocation2 + $0xd8] sm:$0xf]
  %v1503 = vld [vmem:[#allocation2 + $0xdc] sm:$0xf]
  %v1504 = vld [vmem:[#allocation2 + $0xe0] sm:$0xf]
  %v1505 = vld [vmem:[#allocation2 + $0xe4] sm:$0xf]
  %v1506 = vld [vmem:[#allocation2 + $0xe8] sm:$0xf]
  %v1507 = vld [vmem:[#allocation2 + $0xec] sm:$0xf]
  %v1508 = vld [vmem:[#allocation2 + $0xf0] sm:$0xf]
  %v1509 = vld [vmem:[#allocation2 + $0xf4] sm:$0xf]
  %v1510 = vld [vmem:[#allocation2 + $0xf8] sm:$0xf]
  %v1511 = vld [vmem:[#allocation2 + $0xfc] sm:$0xf]
  %v1512 = vld [vmem:[#allocation2 + $0x100] sm:$0xf]
  %v1513 = vld [vmem:[#allocation2 + $0x104] sm:$0xf]
  %v1514 = vld [vmem:[#allocation2 + $0x108] sm:$0xf]
  %v1515 = vld [vmem:[#allocation2 + $0x10c] sm:$0xf]
  %v1516 = vld [vmem:[#allocation2 + $0x110] sm:$0xf]
  %v1517 = vld [vmem:[#allocation2 + $0x114] sm:$0xf]
  %v1518 = vld [vmem:[#allocation2 + $0x118] sm:$0xf]
  %v1519 = vld [vmem:[#allocation2 + $0x11c] sm:$0xf]
  %v1520 = vld [vmem:[#allocation2 + $0x120] sm:$0xf]
  %v1521 = vld [vmem:[#allocation2 + $0x124] sm:$0xf]
  %v1522 = vld [vmem:[#allocation2 + $0x128] sm:$0xf]
  %v1523 = vld [vmem:[#allocation2 + $0x12c] sm:$0xf]
  %v1524 = vld [vmem:[#allocation2 + $0x130] sm:$0xf]
  %v1525 = vld [vmem:[#allocation2 + $0x134] sm:$0xf]
  %v1526 = vld [vmem:[#allocation2 + $0x138] sm:$0xf]
  %v1527 = vld [vmem:[#allocation2 + $0x13c] sm:$0xf]
  %v1528 = vld [vmem:[#allocation2 + $0x140] sm:$0xf]
  %v1529 = vld [vmem:[#allocation2 + $0x144] sm:$0xf]
  %v1530 = vld [vmem:[#allocation2 + $0x148] sm:$0xf]
  %v1531 = vld [vmem:[#allocation2 + $0x14c] sm:$0xf]
  %v1532 = vld [vmem:[#allocation2 + $0x150] sm:$0x1]
  %s1533 = scalar_lea.vmem %s2, 4
  %v1534 = vld [vmem:[%s1533] sm:$0xf]
  %v1620 = vunpack.c.l.b16 %v1448
  %v1621 = vunpack.c.l.b16 %v1449
  %v1622 = vunpack.c.l.b16 %v1450
  %v1623 = vunpack.c.l.b16 %v1451
  %v1624 = vunpack.c.l.b16 %v1452
  %v1625 = vunpack.c.l.b16 %v1453
  %v1626 = vunpack.c.l.b16 %v1454
  %v1627 = vunpack.c.l.b16 %v1455
  %v1628 = vunpack.c.l.b16 %v1456
  %v1629 = vunpack.c.l.b16 %v1457
  %v1630 = vunpack.c.l.b16 %v1458
  %v1631 = vunpack.c.l.b16 %v1459
  %v1632 = vunpack.c.l.b16 %v1460
  %v1633 = vunpack.c.l.b16 %v1461
  %v1634 = vunpack.c.l.b16 %v1462
  %v1635 = vunpack.c.l.b16 %v1463
  %v1636 = vunpack.c.l.b16 %v1464
  %v1637 = vunpack.c.l.b16 %v1465
  %v1638 = vunpack.c.l.b16 %v1466
  %v1639 = vunpack.c.l.b16 %v1467
  %v1640 = vunpack.c.l.b16 %v1468
  %v1641 = vunpack.c.l.b16 %v1469
  %v1642 = vunpack.c.l.b16 %v1470
  %v1643 = vunpack.c.l.b16 %v1471
  %v1644 = vunpack.c.l.b16 %v1472
  %v1645 = vunpack.c.l.b16 %v1473
  %v1646 = vunpack.c.l.b16 %v1474
  %v1647 = vunpack.c.l.b16 %v1475
  %v1648 = vunpack.c.l.b16 %v1476
  %v1649 = vunpack.c.l.b16 %v1477
  %v1650 = vunpack.c.l.b16 %v1478
  %v1651 = vunpack.c.l.b16 %v1479
  %v1652 = vunpack.c.l.b16 %v1480
  %v1653 = vunpack.c.l.b16 %v1481
  %v1654 = vunpack.c.l.b16 %v1482
  %v1655 = vunpack.c.l.b16 %v1483
  %v1656 = vunpack.c.l.b16 %v1484
  %v1657 = vunpack.c.l.b16 %v1485
  %v1658 = vunpack.c.l.b16 %v1486
  %v1659 = vunpack.c.l.b16 %v1487
  %v1660 = vunpack.c.l.b16 %v1488
  %v1661 = vunpack.c.l.b16 %v1489
  %v1662 = vunpack.c.l.b16 %v1490
  %v1663 = vunpack.c.l.b16 %v1491
  %v1664 = vunpack.c.l.b16 %v1492
  %v1665 = vunpack.c.l.b16 %v1493
  %v1666 = vunpack.c.l.b16 %v1494
  %v1667 = vunpack.c.l.b16 %v1495
  %v1668 = vunpack.c.l.b16 %v1496
  %v1669 = vunpack.c.l.b16 %v1497
  %v1670 = vunpack.c.l.b16 %v1498
  %v1671 = vunpack.c.l.b16 %v1499
  %v1672 = vunpack.c.l.b16 %v1500
  %v1673 = vunpack.c.l.b16 %v1501
  %v1674 = vunpack.c.l.b16 %v1502
  %v1675 = vunpack.c.l.b16 %v1503
  %v1676 = vunpack.c.l.b16 %v1504
  %v1677 = vunpack.c.l.b16 %v1505
  %v1678 = vunpack.c.l.b16 %v1506
  %v1679 = vunpack.c.l.b16 %v1507
  %v1680 = vunpack.c.l.b16 %v1508
  %v1681 = vunpack.c.l.b16 %v1509
  %v1682 = vunpack.c.l.b16 %v1510
  %v1683 = vunpack.c.l.b16 %v1511
  %v1684 = vunpack.c.l.b16 %v1512
  %v1685 = vunpack.c.l.b16 %v1513
  %v1686 = vunpack.c.l.b16 %v1514
  %v1687 = vunpack.c.l.b16 %v1515
  %v1688 = vunpack.c.l.b16 %v1516
  %v1689 = vunpack.c.l.b16 %v1517
  %v1690 = vunpack.c.l.b16 %v1518
  %v1691 = vunpack.c.l.b16 %v1519
  %v1692 = vunpack.c.l.b16 %v1520
  %v1693 = vunpack.c.l.b16 %v1521
  %v1694 = vunpack.c.l.b16 %v1522
  %v1695 = vunpack.c.l.b16 %v1523
  %v1696 = vunpack.c.l.b16 %v1524
  %v1697 = vunpack.c.l.b16 %v1525
  %v1698 = vunpack.c.l.b16 %v1526
  %v1699 = vunpack.c.l.b16 %v1527
  %v1700 = vunpack.c.l.b16 %v1528
  %v1701 = vunpack.c.l.b16 %v1529
  %v1702 = vunpack.c.l.b16 %v1530
  %v1703 = vunpack.c.l.b16 %v1531
  %v1704 = vunpack.c.l.b16 %v1532
  %v1705 = vpack.c.b16 %v1621, %v1620
  %v1706 = vpack.c.b16 %v1623, %v1622
  %v1707 = vpack.c.b16 %v1625, %v1624
  %v1708 = vpack.c.b16 %v1627, %v1626
  %v1709 = vpack.c.b16 %v1629, %v1628
  %v1710 = vpack.c.b16 %v1631, %v1630
  %v1711 = vpack.c.b16 %v1633, %v1632
  %v1712 = vpack.c.b16 %v1635, %v1634
  %v1713 = vpack.c.b16 %v1637, %v1636
  %v1714 = vpack.c.b16 %v1639, %v1638
  %v1715 = vpack.c.b16 %v1641, %v1640
  %v1716 = vpack.c.b16 %v1643, %v1642
  %v1717 = vpack.c.b16 %v1645, %v1644
  %v1718 = vpack.c.b16 %v1647, %v1646
  %v1719 = vpack.c.b16 %v1649, %v1648
  %v1720 = vpack.c.b16 %v1651, %v1650
  %v1721 = vpack.c.b16 %v1653, %v1652
  %v1722 = vpack.c.b16 %v1655, %v1654
  %v1723 = vpack.c.b16 %v1657, %v1656
  %v1724 = vpack.c.b16 %v1659, %v1658
  %v1725 = vpack.c.b16 %v1661, %v1660
  %v1726 = vpack.c.b16 %v1663, %v1662
  %v1727 = vpack.c.b16 %v1665, %v1664
  %v1728 = vpack.c.b16 %v1667, %v1666
  %v1729 = vpack.c.b16 %v1669, %v1668
  %v1730 = vpack.c.b16 %v1671, %v1670
  %v1731 = vpack.c.b16 %v1673, %v1672
  %v1732 = vpack.c.b16 %v1675, %v1674
  %v1733 = vpack.c.b16 %v1677, %v1676
  %v1734 = vpack.c.b16 %v1679, %v1678
  %v1735 = vpack.c.b16 %v1681, %v1680
  %v1736 = vpack.c.b16 %v1683, %v1682
  %v1737 = vpack.c.b16 %v1685, %v1684
  %v1738 = vpack.c.b16 %v1687, %v1686
  %v1739 = vpack.c.b16 %v1689, %v1688
  %v1740 = vpack.c.b16 %v1691, %v1690
  %v1741 = vpack.c.b16 %v1693, %v1692
  %v1742 = vpack.c.b16 %v1695, %v1694
  %v1743 = vpack.c.b16 %v1697, %v1696
  %v1744 = vpack.c.b16 %v1699, %v1698
  %v1745 = vpack.c.b16 %v1701, %v1700
  %v1746 = vpack.c.b16 %v1703, %v1702
  %v1747 = vpack.c.b16 %v1704, %v1704
  %vm1748 = vsmask.f32 7424
  %v1750 = vshrl.u32 %v1705, 16
  %v1752 = vshll.u32 %v1705, 16
  %v1754 = vrot.slane %v1752, 1
  %v1755 = vor.u32 %v1750, %v1754
  %v1757 = vshll.u32 %v1706, 16
  %v1759 = vrot.slane %v1757, 1
  %v1760 = vsel %vm1748, %v1755, %v1759
  %v1761 = vshrl.u32 %v1706, 16
  %v1763 = vor.u32 %v1761, %v1759
  %v1765 = vshll.u32 %v1707, 16
  %v1767 = vrot.slane %v1765, 1
  %v1768 = vsel %vm1748, %v1763, %v1767
  %v1769 = vshrl.u32 %v1707, 16
  %v1771 = vor.u32 %v1769, %v1767
  %v1773 = vshll.u32 %v1708, 16
  %v1775 = vrot.slane %v1773, 1
  %v1776 = vsel %vm1748, %v1771, %v1775
  %v1777 = vshrl.u32 %v1708, 16
  %v1779 = vor.u32 %v1777, %v1775
  %v1781 = vshll.u32 %v1709, 16
  %v1783 = vrot.slane %v1781, 1
  %v1784 = vsel %vm1748, %v1779, %v1783
  %v1785 = vshrl.u32 %v1709, 16
  %v1787 = vor.u32 %v1785, %v1783
  %v1789 = vshll.u32 %v1710, 16
  %v1791 = vrot.slane %v1789, 1
  %v1792 = vsel %vm1748, %v1787, %v1791
  %v1793 = vshrl.u32 %v1710, 16
  %v1795 = vor.u32 %v1793, %v1791
  %v1797 = vshll.u32 %v1711, 16
  %v1799 = vrot.slane %v1797, 1
  %v1800 = vsel %vm1748, %v1795, %v1799
  %v1801 = vshrl.u32 %v1711, 16
  %v1803 = vor.u32 %v1801, %v1799
  %v1805 = vshll.u32 %v1712, 16
  %v1807 = vrot.slane %v1805, 1
  %v1808 = vsel %vm1748, %v1803, %v1807
  %v1809 = vshrl.u32 %v1712, 16
  %v1811 = vor.u32 %v1809, %v1807
  %v1813 = vshll.u32 %v1713, 16
  %v1815 = vrot.slane %v1813, 1
  %v1816 = vsel %vm1748, %v1811, %v1815
  %v1817 = vshrl.u32 %v1713, 16
  %v1819 = vor.u32 %v1817, %v1815
  %v1821 = vshll.u32 %v1714, 16
  %v1823 = vrot.slane %v1821, 1
  %v1824 = vsel %vm1748, %v1819, %v1823
  %v1825 = vshrl.u32 %v1714, 16
  %v1827 = vor.u32 %v1825, %v1823
  %v1829 = vshll.u32 %v1715, 16
  %v1831 = vrot.slane %v1829, 1
  %v1832 = vsel %vm1748, %v1827, %v1831
  %v1833 = vshrl.u32 %v1715, 16
  %v1835 = vor.u32 %v1833, %v1831
  %v1837 = vshll.u32 %v1716, 16
  %v1839 = vrot.slane %v1837, 1
  %v1840 = vsel %vm1748, %v1835, %v1839
  %v1841 = vshrl.u32 %v1716, 16
  %v1843 = vor.u32 %v1841, %v1839
  %v1845 = vshll.u32 %v1717, 16
  %v1847 = vrot.slane %v1845, 1
  %v1848 = vsel %vm1748, %v1843, %v1847
  %v1849 = vshrl.u32 %v1717, 16
  %v1851 = vor.u32 %v1849, %v1847
  %v1853 = vshll.u32 %v1718, 16
  %v1855 = vrot.slane %v1853, 1
  %v1856 = vsel %vm1748, %v1851, %v1855
  %v1857 = vshrl.u32 %v1718, 16
  %v1859 = vor.u32 %v1857, %v1855
  %v1861 = vshll.u32 %v1719, 16
  %v1863 = vrot.slane %v1861, 1
  %v1864 = vsel %vm1748, %v1859, %v1863
  %v1865 = vshrl.u32 %v1719, 16
  %v1867 = vor.u32 %v1865, %v1863
  %v1869 = vshll.u32 %v1720, 16
  %v1871 = vrot.slane %v1869, 1
  %v1872 = vsel %vm1748, %v1867, %v1871
  %v1873 = vshrl.u32 %v1720, 16
  %v1875 = vor.u32 %v1873, %v1871
  %v1877 = vshll.u32 %v1721, 16
  %v1879 = vrot.slane %v1877, 1
  %v1880 = vsel %vm1748, %v1875, %v1879
  %v1881 = vshrl.u32 %v1721, 16
  %v1883 = vor.u32 %v1881, %v1879
  %v1885 = vshll.u32 %v1722, 16
  %v1887 = vrot.slane %v1885, 1
  %v1888 = vsel %vm1748, %v1883, %v1887
  %v1889 = vshrl.u32 %v1722, 16
  %v1891 = vor.u32 %v1889, %v1887
  %v1893 = vshll.u32 %v1723, 16
  %v1895 = vrot.slane %v1893, 1
  %v1896 = vsel %vm1748, %v1891, %v1895
  %v1897 = vshrl.u32 %v1723, 16
  %v1899 = vor.u32 %v1897, %v1895
  %v1901 = vshll.u32 %v1724, 16
  %v1903 = vrot.slane %v1901, 1
  %v1904 = vsel %vm1748, %v1899, %v1903
  %v1905 = vshrl.u32 %v1724, 16
  %v1907 = vor.u32 %v1905, %v1903
  %v1909 = vshll.u32 %v1725, 16
  %v1911 = vrot.slane %v1909, 1
  %v1912 = vsel %vm1748, %v1907, %v1911
  %v1913 = vshrl.u32 %v1725, 16
  %v1915 = vor.u32 %v1913, %v1911
  %v1917 = vshll.u32 %v1726, 16
  %v1919 = vrot.slane %v1917, 1
  %v1920 = vsel %vm1748, %v1915, %v1919
  %v1921 = vshrl.u32 %v1726, 16
  %v1923 = vor.u32 %v1921, %v1919
  %v1925 = vshll.u32 %v1727, 16
  %v1927 = vrot.slane %v1925, 1
  %v1928 = vsel %vm1748, %v1923, %v1927
  %v1929 = vshrl.u32 %v1727, 16
  %v1931 = vor.u32 %v1929, %v1927
  %v1933 = vshll.u32 %v1728, 16
  %v1935 = vrot.slane %v1933, 1
  %v1936 = vsel %vm1748, %v1931, %v1935
  %v1937 = vshrl.u32 %v1728, 16
  %v1939 = vor.u32 %v1937, %v1935
  %v1941 = vshll.u32 %v1729, 16
  %v1943 = vrot.slane %v1941, 1
  %v1944 = vsel %vm1748, %v1939, %v1943
  %v1945 = vshrl.u32 %v1729, 16
  %v1947 = vor.u32 %v1945, %v1943
  %v1949 = vshll.u32 %v1730, 16
  %v1951 = vrot.slane %v1949, 1
  %v1952 = vsel %vm1748, %v1947, %v1951
  %v1953 = vshrl.u32 %v1730, 16
  %v1955 = vor.u32 %v1953, %v1951
  %v1957 = vshll.u32 %v1731, 16
  %v1959 = vrot.slane %v1957, 1
  %v1960 = vsel %vm1748, %v1955, %v1959
  %v1961 = vshrl.u32 %v1731, 16
  %v1963 = vor.u32 %v1961, %v1959
  %v1965 = vshll.u32 %v1732, 16
  %v1967 = vrot.slane %v1965, 1
  %v1968 = vsel %vm1748, %v1963, %v1967
  %v1969 = vshrl.u32 %v1732, 16
  %v1971 = vor.u32 %v1969, %v1967
  %v1973 = vshll.u32 %v1733, 16
  %v1975 = vrot.slane %v1973, 1
  %v1976 = vsel %vm1748, %v1971, %v1975
  %v1977 = vshrl.u32 %v1733, 16
  %v1979 = vor.u32 %v1977, %v1975
  %v1981 = vshll.u32 %v1734, 16
  %v1983 = vrot.slane %v1981, 1
  %v1984 = vsel %vm1748, %v1979, %v1983
  %v1985 = vshrl.u32 %v1734, 16
  %v1987 = vor.u32 %v1985, %v1983
  %v1989 = vshll.u32 %v1735, 16
  %v1991 = vrot.slane %v1989, 1
  %v1992 = vsel %vm1748, %v1987, %v1991
  %v1993 = vshrl.u32 %v1735, 16
  %v1995 = vor.u32 %v1993, %v1991
  %v1997 = vshll.u32 %v1736, 16
  %v1999 = vrot.slane %v1997, 1
  %v2000 = vsel %vm1748, %v1995, %v1999
  %v2001 = vshrl.u32 %v1736, 16
  %v2003 = vor.u32 %v2001, %v1999
  %v2005 = vshll.u32 %v1737, 16
  %v2007 = vrot.slane %v2005, 1
  %v2008 = vsel %vm1748, %v2003, %v2007
  %v2009 = vshrl.u32 %v1737, 16
  %v2011 = vor.u32 %v2009, %v2007
  %v2013 = vshll.u32 %v1738, 16
  %v2015 = vrot.slane %v2013, 1
  %v2016 = vsel %vm1748, %v2011, %v2015
  %v2017 = vshrl.u32 %v1738, 16
  %v2019 = vor.u32 %v2017, %v2015
  %v2021 = vshll.u32 %v1739, 16
  %v2023 = vrot.slane %v2021, 1
  %v2024 = vsel %vm1748, %v2019, %v2023
  %v2025 = vshrl.u32 %v1739, 16
  %v2027 = vor.u32 %v2025, %v2023
  %v2029 = vshll.u32 %v1740, 16
  %v2031 = vrot.slane %v2029, 1
  %v2032 = vsel %vm1748, %v2027, %v2031
  %v2033 = vshrl.u32 %v1740, 16
  %v2035 = vor.u32 %v2033, %v2031
  %v2037 = vshll.u32 %v1741, 16
  %v2039 = vrot.slane %v2037, 1
  %v2040 = vsel %vm1748, %v2035, %v2039
  %v2041 = vshrl.u32 %v1741, 16
  %v2043 = vor.u32 %v2041, %v2039
  %v2045 = vshll.u32 %v1742, 16
  %v2047 = vrot.slane %v2045, 1
  %v2048 = vsel %vm1748, %v2043, %v2047
  %v2049 = vshrl.u32 %v1742, 16
  %v2051 = vor.u32 %v2049, %v2047
  %v2053 = vshll.u32 %v1743, 16
  %v2055 = vrot.slane %v2053, 1
  %v2056 = vsel %vm1748, %v2051, %v2055
  %v2057 = vshrl.u32 %v1743, 16
  %v2059 = vor.u32 %v2057, %v2055
  %v2061 = vshll.u32 %v1744, 16
  %v2063 = vrot.slane %v2061, 1
  %v2064 = vsel %vm1748, %v2059, %v2063
  %v2065 = vshrl.u32 %v1744, 16
  %v2067 = vor.u32 %v2065, %v2063
  %v2069 = vshll.u32 %v1745, 16
  %v2071 = vrot.slane %v2069, 1
  %v2072 = vsel %vm1748, %v2067, %v2071
  %v2073 = vshrl.u32 %v1745, 16
  %v2075 = vor.u32 %v2073, %v2071
  %v2077 = vshll.u32 %v1746, 16
  %v2079 = vrot.slane %v2077, 1
  %v2080 = vsel %vm1748, %v2075, %v2079
  %v2081 = vshrl.u32 %v1746, 16
  %v2083 = vor.u32 %v2081, %v2079
  %v2085 = vshll.u32 %v1747, 16
  %v2087 = vrot.slane %v2085, 1
  %v2088 = vsel %vm1748, %v2083, %v2087
  %v2090 = vsel %vm696, %v1760, 0
  %v2093 = vsel %vm696, %v1768, 0
  %v2096 = vsel %vm696, %v1776, 0
  %v2099 = vsel %vm696, %v1784, 0
  %v2102 = vsel %vm696, %v1792, 0
  %v2105 = vsel %vm696, %v1800, 0
  %v2108 = vsel %vm696, %v1808, 0
  %v2111 = vsel %vm696, %v1816, 0
  %v2114 = vsel %vm696, %v1824, 0
  %v2117 = vsel %vm696, %v1832, 0
  %v2120 = vsel %vm696, %v1840, 0
  %v2123 = vsel %vm696, %v1848, 0
  %v2126 = vsel %vm696, %v1856, 0
  %v2129 = vsel %vm696, %v1864, 0
  %v2132 = vsel %vm696, %v1872, 0
  %v2135 = vsel %vm696, %v1880, 0
  %v2138 = vsel %vm696, %v1888, 0
  %v2141 = vsel %vm696, %v1896, 0
  %v2144 = vsel %vm696, %v1904, 0
  %v2147 = vsel %vm696, %v1912, 0
  %v2150 = vsel %vm696, %v1920, 0
  %v2153 = vsel %vm696, %v1928, 0
  %v2156 = vsel %vm696, %v1936, 0
  %v2159 = vsel %vm696, %v1944, 0
  %v2162 = vsel %vm696, %v1952, 0
  %v2165 = vsel %vm696, %v1960, 0
  %v2168 = vsel %vm696, %v1968, 0
  %v2171 = vsel %vm696, %v1976, 0
  %v2174 = vsel %vm696, %v1984, 0
  %v2177 = vsel %vm696, %v1992, 0
  %v2180 = vsel %vm696, %v2000, 0
  %v2183 = vsel %vm696, %v2008, 0
  %v2186 = vsel %vm696, %v2016, 0
  %v2189 = vsel %vm696, %v2024, 0
  %v2192 = vsel %vm696, %v2032, 0
  %v2195 = vsel %vm696, %v2040, 0
  %v2198 = vsel %vm696, %v2048, 0
  %v2201 = vsel %vm696, %v2056, 0
  %v2204 = vsel %vm696, %v2064, 0
  %v2207 = vsel %vm696, %v2072, 0
  %v2210 = vsel %vm696, %v2080, 0
  %v2213 = vsel %vm696, %v2088, 0
  %v2216 = vsel %vm823, %v1534, 0
  %2218 = vmatprep.subr.bf16.mxu0 0
  %2219 = vmatpush1.bf16.msra.mxu0 0
  %2220 = vmatprep.subr.bf16.mxu0 0
  %2221 = vmatpush1.bf16.msra.mxu0 0
  %2222 = vmatprep.subr.bf16.mxu0 0
  %2223 = vmatpush1.bf16.msra.mxu0 0
  %2224 = vmatprep.subr.bf16.mxu0 0
  %2225 = vmatpush1.bf16.msra.mxu0 0
  %2226 = vmatprep.subr.bf16.mxu0 0
  %2227 = vmatpush1.bf16.msra.mxu0 0
  %2228 = vmatprep.subr.bf16.mxu0 0
  %2229 = vmatpush1.bf16.msra.mxu0 0
  %2230 = vmatprep.subr.bf16.mxu0 0
  %2231 = vmatpush1.bf16.msra.mxu0 0
  %2232 = vmatprep.subr.bf16.mxu0 0
  %2233 = vmatpush1.bf16.msra.mxu0 %v2216
  %2234 = vmatprep.subr.bf16.mxu0 0
  %2235 = vmatpush2.bf16.msra.mxu0 0
  %2236 = vmatprep.subr.bf16.mxu0 0
  %2237 = vmatpush2.bf16.msra.mxu0 0
  %2238 = vmatprep.subr.bf16.mxu0 0
  %2239 = vmatpush2.bf16.msra.mxu0 0
  %2240 = vmatprep.subr.bf16.mxu0 0
  %2241 = vmatpush2.bf16.msra.mxu0 0
  %2242 = vmatprep.subr.bf16.mxu0 0
  %2243 = vmatpush2.bf16.msra.mxu0 0
  %2244 = vmatprep.subr.bf16.mxu0 0
  %2245 = vmatpush2.bf16.msra.mxu0 0
  %2246 = vmatprep.subr.bf16.mxu0 0
  %2247 = vmatpush2.bf16.msra.mxu0 0
  %2248 = vmatprep.subr.bf16.mxu0 0
  %2249 = vmatpush2.bf16.msra.mxu0 0
  %2250 = vmatprep.mubr.bf16.mxu0 0
  %2251 = vmatmul.mubr.bf16.gmra.mxu0 %v2090
  %v2252 = vpop.f32.mrf.mxu0
  %v2253 = vadd.f32 0.0, %v2252
  %v2254 = vpop.f32.mrf.mxu0
  %v2255 = vpop.f32.mrf.mxu0
  %v2256 = vadd.f32 0.0, %v2255
  %v2257 = vpop.f32.mrf.mxu0
  %2258 = vmatprep.mubr.bf16.mxu0 0
  %2259 = vmatmul.mubr.bf16.gmra.mxu0 %v2093
  %v2260 = vpop.f32.mrf.mxu0
  %v2261 = vadd.f32 0.0, %v2260
  %v2262 = vpop.f32.mrf.mxu0
  %v2263 = vpop.f32.mrf.mxu0
  %v2264 = vadd.f32 0.0, %v2263
  %v2265 = vpop.f32.mrf.mxu0
  %2266 = vmatprep.mubr.bf16.mxu0 0
  %2267 = vmatmul.mubr.bf16.gmra.mxu0 %v2096
  %v2268 = vpop.f32.mrf.mxu0
  %v2269 = vadd.f32 0.0, %v2268
  %v2270 = vpop.f32.mrf.mxu0
  %v2271 = vpop.f32.mrf.mxu0
  %v2272 = vadd.f32 0.0, %v2271
  %v2273 = vpop.f32.mrf.mxu0
  %2274 = vmatprep.mubr.bf16.mxu0 0
  %2275 = vmatmul.mubr.bf16.gmra.mxu0 %v2099
  %v2276 = vpop.f32.mrf.mxu0
  %v2277 = vadd.f32 0.0, %v2276
  %v2278 = vpop.f32.mrf.mxu0
  %v2279 = vpop.f32.mrf.mxu0
  %v2280 = vadd.f32 0.0, %v2279
  %v2281 = vpop.f32.mrf.mxu0
  %2282 = vmatprep.mubr.bf16.mxu0 0
  %2283 = vmatmul.mubr.bf16.gmra.mxu0 %v2102
  %v2284 = vpop.f32.mrf.mxu0
  %v2285 = vadd.f32 0.0, %v2284
  %v2286 = vpop.f32.mrf.mxu0
  %v2287 = vpop.f32.mrf.mxu0
  %v2288 = vadd.f32 0.0, %v2287
  %v2289 = vpop.f32.mrf.mxu0
  %2290 = vmatprep.mubr.bf16.mxu0 0
  %2291 = vmatmul.mubr.bf16.gmra.mxu0 %v2105
  %v2292 = vpop.f32.mrf.mxu0
  %v2293 = vadd.f32 0.0, %v2292
  %v2294 = vpop.f32.mrf.mxu0
  %v2295 = vpop.f32.mrf.mxu0
  %v2296 = vadd.f32 0.0, %v2295
  %v2297 = vpop.f32.mrf.mxu0
  %2298 = vmatprep.mubr.bf16.mxu0 0
  %2299 = vmatmul.mubr.bf16.gmra.mxu0 %v2108
  %v2300 = vpop.f32.mrf.mxu0
  %v2301 = vadd.f32 0.0, %v2300
  %v2302 = vpop.f32.mrf.mxu0
  %v2303 = vpop.f32.mrf.mxu0
  %v2304 = vadd.f32 0.0, %v2303
  %v2305 = vpop.f32.mrf.mxu0
  %2306 = vmatprep.mubr.bf16.mxu0 0
  %2307 = vmatmul.mubr.bf16.gmra.mxu0 %v2111
  %v2308 = vpop.f32.mrf.mxu0
  %v2309 = vadd.f32 0.0, %v2308
  %v2310 = vpop.f32.mrf.mxu0
  %v2311 = vpop.f32.mrf.mxu0
  %v2312 = vadd.f32 0.0, %v2311
  %v2313 = vpop.f32.mrf.mxu0
  %2314 = vmatprep.mubr.bf16.mxu0 0
  %2315 = vmatmul.mubr.bf16.gmra.mxu0 %v2114
  %v2316 = vpop.f32.mrf.mxu0
  %v2317 = vadd.f32 0.0, %v2316
  %v2318 = vpop.f32.mrf.mxu0
  %v2319 = vpop.f32.mrf.mxu0
  %v2320 = vadd.f32 0.0, %v2319
  %v2321 = vpop.f32.mrf.mxu0
  %2322 = vmatprep.mubr.bf16.mxu0 0
  %2323 = vmatmul.mubr.bf16.gmra.mxu0 %v2117
  %v2324 = vpop.f32.mrf.mxu0
  %v2325 = vadd.f32 0.0, %v2324
  %v2326 = vpop.f32.mrf.mxu0
  %v2327 = vpop.f32.mrf.mxu0
  %v2328 = vadd.f32 0.0, %v2327
  %v2329 = vpop.f32.mrf.mxu0
  %2330 = vmatprep.mubr.bf16.mxu0 0
  %2331 = vmatmul.mubr.bf16.gmra.mxu0 %v2120
  %v2332 = vpop.f32.mrf.mxu0
  %v2333 = vadd.f32 0.0, %v2332
  %v2334 = vpop.f32.mrf.mxu0
  %v2335 = vpop.f32.mrf.mxu0
  %v2336 = vadd.f32 0.0, %v2335
  %v2337 = vpop.f32.mrf.mxu0
  %2338 = vmatprep.mubr.bf16.mxu0 0
  %2339 = vmatmul.mubr.bf16.gmra.mxu0 %v2123
  %v2340 = vpop.f32.mrf.mxu0
  %v2341 = vadd.f32 0.0, %v2340
  %v2342 = vpop.f32.mrf.mxu0
  %v2343 = vpop.f32.mrf.mxu0
  %v2344 = vadd.f32 0.0, %v2343
  %v2345 = vpop.f32.mrf.mxu0
  %2346 = vmatprep.mubr.bf16.mxu0 0
  %2347 = vmatmul.mubr.bf16.gmra.mxu0 %v2126
  %v2348 = vpop.f32.mrf.mxu0
  %v2349 = vadd.f32 0.0, %v2348
  %v2350 = vpop.f32.mrf.mxu0
  %v2351 = vpop.f32.mrf.mxu0
  %v2352 = vadd.f32 0.0, %v2351
  %v2353 = vpop.f32.mrf.mxu0
  %2354 = vmatprep.mubr.bf16.mxu0 0
  %2355 = vmatmul.mubr.bf16.gmra.mxu0 %v2129
  %v2356 = vpop.f32.mrf.mxu0
  %v2357 = vadd.f32 0.0, %v2356
  %v2358 = vpop.f32.mrf.mxu0
  %v2359 = vpop.f32.mrf.mxu0
  %v2360 = vadd.f32 0.0, %v2359
  %v2361 = vpop.f32.mrf.mxu0
  %2362 = vmatprep.mubr.bf16.mxu0 0
  %2363 = vmatmul.mubr.bf16.gmra.mxu0 %v2132
  %v2364 = vpop.f32.mrf.mxu0
  %v2365 = vadd.f32 0.0, %v2364
  %v2366 = vpop.f32.mrf.mxu0
  %v2367 = vpop.f32.mrf.mxu0
  %v2368 = vadd.f32 0.0, %v2367
  %v2369 = vpop.f32.mrf.mxu0
  %2370 = vmatprep.mubr.bf16.mxu0 0
  %2371 = vmatmul.mubr.bf16.gmra.mxu0 %v2135
  %v2372 = vpop.f32.mrf.mxu0
  %v2373 = vadd.f32 0.0, %v2372
  %v2374 = vpop.f32.mrf.mxu0
  %v2375 = vpop.f32.mrf.mxu0
  %v2376 = vadd.f32 0.0, %v2375
  %v2377 = vpop.f32.mrf.mxu0
  %2378 = vmatprep.mubr.bf16.mxu0 0
  %2379 = vmatmul.mubr.bf16.gmra.mxu0 %v2138
  %v2380 = vpop.f32.mrf.mxu0
  %v2381 = vadd.f32 0.0, %v2380
  %v2382 = vpop.f32.mrf.mxu0
  %v2383 = vpop.f32.mrf.mxu0
  %v2384 = vadd.f32 0.0, %v2383
  %v2385 = vpop.f32.mrf.mxu0
  %2386 = vmatprep.mubr.bf16.mxu0 0
  %2387 = vmatmul.mubr.bf16.gmra.mxu0 %v2141
  %v2388 = vpop.f32.mrf.mxu0
  %v2389 = vadd.f32 0.0, %v2388
  %v2390 = vpop.f32.mrf.mxu0
  %v2391 = vpop.f32.mrf.mxu0
  %v2392 = vadd.f32 0.0, %v2391
  %v2393 = vpop.f32.mrf.mxu0
  %2394 = vmatprep.mubr.bf16.mxu0 0
  %2395 = vmatmul.mubr.bf16.gmra.mxu0 %v2144
  %v2396 = vpop.f32.mrf.mxu0
  %v2397 = vadd.f32 0.0, %v2396
  %v2398 = vpop.f32.mrf.mxu0
  %v2399 = vpop.f32.mrf.mxu0
  %v2400 = vadd.f32 0.0, %v2399
  %v2401 = vpop.f32.mrf.mxu0
  %2402 = vmatprep.mubr.bf16.mxu0 0
  %2403 = vmatmul.mubr.bf16.gmra.mxu0 %v2147
  %v2404 = vpop.f32.mrf.mxu0
  %v2405 = vadd.f32 0.0, %v2404
  %v2406 = vpop.f32.mrf.mxu0
  %v2407 = vpop.f32.mrf.mxu0
  %v2408 = vadd.f32 0.0, %v2407
  %v2409 = vpop.f32.mrf.mxu0
  %2410 = vmatprep.mubr.bf16.mxu0 0
  %2411 = vmatmul.mubr.bf16.gmra.mxu0 %v2150
  %v2412 = vpop.f32.mrf.mxu0
  %v2413 = vadd.f32 0.0, %v2412
  %v2414 = vpop.f32.mrf.mxu0
  %v2415 = vpop.f32.mrf.mxu0
  %v2416 = vadd.f32 0.0, %v2415
  %v2417 = vpop.f32.mrf.mxu0
  %2418 = vmatprep.mubr.bf16.mxu0 0
  %2419 = vmatmul.mubr.bf16.gmra.mxu0 %v2153
  %v2420 = vpop.f32.mrf.mxu0
  %v2421 = vadd.f32 0.0, %v2420
  %v2422 = vpop.f32.mrf.mxu0
  %v2423 = vpop.f32.mrf.mxu0
  %v2424 = vadd.f32 0.0, %v2423
  %v2425 = vpop.f32.mrf.mxu0
  %2426 = vmatprep.mubr.bf16.mxu0 0
  %2427 = vmatmul.mubr.bf16.gmra.mxu0 %v2156
  %v2428 = vpop.f32.mrf.mxu0
  %v2429 = vadd.f32 0.0, %v2428
  %v2430 = vpop.f32.mrf.mxu0
  %v2431 = vpop.f32.mrf.mxu0
  %v2432 = vadd.f32 0.0, %v2431
  %v2433 = vpop.f32.mrf.mxu0
  %2434 = vmatprep.mubr.bf16.mxu0 0
  %2435 = vmatmul.mubr.bf16.gmra.mxu0 %v2159
  %v2436 = vpop.f32.mrf.mxu0
  %v2437 = vadd.f32 0.0, %v2436
  %v2438 = vpop.f32.mrf.mxu0
  %v2439 = vpop.f32.mrf.mxu0
  %v2440 = vadd.f32 0.0, %v2439
  %v2441 = vpop.f32.mrf.mxu0
  %2442 = vmatprep.mubr.bf16.mxu0 0
  %2443 = vmatmul.mubr.bf16.gmra.mxu0 %v2162
  %v2444 = vpop.f32.mrf.mxu0
  %v2445 = vadd.f32 0.0, %v2444
  %v2446 = vpop.f32.mrf.mxu0
  %v2447 = vpop.f32.mrf.mxu0
  %v2448 = vadd.f32 0.0, %v2447
  %v2449 = vpop.f32.mrf.mxu0
  %2450 = vmatprep.mubr.bf16.mxu0 0
  %2451 = vmatmul.mubr.bf16.gmra.mxu0 %v2165
  %v2452 = vpop.f32.mrf.mxu0
  %v2453 = vadd.f32 0.0, %v2452
  %v2454 = vpop.f32.mrf.mxu0
  %v2455 = vpop.f32.mrf.mxu0
  %v2456 = vadd.f32 0.0, %v2455
  %v2457 = vpop.f32.mrf.mxu0
  %2458 = vmatprep.mubr.bf16.mxu0 0
  %2459 = vmatmul.mubr.bf16.gmra.mxu0 %v2168
  %v2460 = vpop.f32.mrf.mxu0
  %v2461 = vadd.f32 0.0, %v2460
  %v2462 = vpop.f32.mrf.mxu0
  %v2463 = vpop.f32.mrf.mxu0
  %v2464 = vadd.f32 0.0, %v2463
  %v2465 = vpop.f32.mrf.mxu0
  %2466 = vmatprep.mubr.bf16.mxu0 0
  %2467 = vmatmul.mubr.bf16.gmra.mxu0 %v2171
  %v2468 = vpop.f32.mrf.mxu0
  %v2469 = vadd.f32 0.0, %v2468
  %v2470 = vpop.f32.mrf.mxu0
  %v2471 = vpop.f32.mrf.mxu0
  %v2472 = vadd.f32 0.0, %v2471
  %v2473 = vpop.f32.mrf.mxu0
  %2474 = vmatprep.mubr.bf16.mxu0 0
  %2475 = vmatmul.mubr.bf16.gmra.mxu0 %v2174
  %v2476 = vpop.f32.mrf.mxu0
  %v2477 = vadd.f32 0.0, %v2476
  %v2478 = vpop.f32.mrf.mxu0
  %v2479 = vpop.f32.mrf.mxu0
  %v2480 = vadd.f32 0.0, %v2479
  %v2481 = vpop.f32.mrf.mxu0
  %2482 = vmatprep.mubr.bf16.mxu0 0
  %2483 = vmatmul.mubr.bf16.gmra.mxu0 %v2177
  %v2484 = vpop.f32.mrf.mxu0
  %v2485 = vadd.f32 0.0, %v2484
  %v2486 = vpop.f32.mrf.mxu0
  %v2487 = vpop.f32.mrf.mxu0
  %v2488 = vadd.f32 0.0, %v2487
  %v2489 = vpop.f32.mrf.mxu0
  %2490 = vmatprep.mubr.bf16.mxu0 0
  %2491 = vmatmul.mubr.bf16.gmra.mxu0 %v2180
  %v2492 = vpop.f32.mrf.mxu0
  %v2493 = vadd.f32 0.0, %v2492
  %v2494 = vpop.f32.mrf.mxu0
  %v2495 = vpop.f32.mrf.mxu0
  %v2496 = vadd.f32 0.0, %v2495
  %v2497 = vpop.f32.mrf.mxu0
  %2498 = vmatprep.mubr.bf16.mxu0 0
  %2499 = vmatmul.mubr.bf16.gmra.mxu0 %v2183
  %v2500 = vpop.f32.mrf.mxu0
  %v2501 = vadd.f32 0.0, %v2500
  %v2502 = vpop.f32.mrf.mxu0
  %v2503 = vpop.f32.mrf.mxu0
  %v2504 = vadd.f32 0.0, %v2503
  %v2505 = vpop.f32.mrf.mxu0
  %2506 = vmatprep.mubr.bf16.mxu0 0
  %2507 = vmatmul.mubr.bf16.gmra.mxu0 %v2186
  %v2508 = vpop.f32.mrf.mxu0
  %v2509 = vadd.f32 0.0, %v2508
  %v2510 = vpop.f32.mrf.mxu0
  %v2511 = vpop.f32.mrf.mxu0
  %v2512 = vadd.f32 0.0, %v2511
  %v2513 = vpop.f32.mrf.mxu0
  %2514 = vmatprep.mubr.bf16.mxu0 0
  %2515 = vmatmul.mubr.bf16.gmra.mxu0 %v2189
  %v2516 = vpop.f32.mrf.mxu0
  %v2517 = vadd.f32 0.0, %v2516
  %v2518 = vpop.f32.mrf.mxu0
  %v2519 = vpop.f32.mrf.mxu0
  %v2520 = vadd.f32 0.0, %v2519
  %v2521 = vpop.f32.mrf.mxu0
  %2522 = vmatprep.mubr.bf16.mxu0 0
  %2523 = vmatmul.mubr.bf16.gmra.mxu0 %v2192
  %v2524 = vpop.f32.mrf.mxu0
  %v2525 = vadd.f32 0.0, %v2524
  %v2526 = vpop.f32.mrf.mxu0
  %v2527 = vpop.f32.mrf.mxu0
  %v2528 = vadd.f32 0.0, %v2527
  %v2529 = vpop.f32.mrf.mxu0
  %2530 = vmatprep.mubr.bf16.mxu0 0
  %2531 = vmatmul.mubr.bf16.gmra.mxu0 %v2195
  %v2532 = vpop.f32.mrf.mxu0
  %v2533 = vadd.f32 0.0, %v2532
  %v2534 = vpop.f32.mrf.mxu0
  %v2535 = vpop.f32.mrf.mxu0
  %v2536 = vadd.f32 0.0, %v2535
  %v2537 = vpop.f32.mrf.mxu0
  %2538 = vmatprep.mubr.bf16.mxu0 0
  %2539 = vmatmul.mubr.bf16.gmra.mxu0 %v2198
  %v2540 = vpop.f32.mrf.mxu0
  %v2541 = vadd.f32 0.0, %v2540
  %v2542 = vpop.f32.mrf.mxu0
  %v2543 = vpop.f32.mrf.mxu0
  %v2544 = vadd.f32 0.0, %v2543
  %v2545 = vpop.f32.mrf.mxu0
  %2546 = vmatprep.mubr.bf16.mxu0 0
  %2547 = vmatmul.mubr.bf16.gmra.mxu0 %v2201
  %v2548 = vpop.f32.mrf.mxu0
  %v2549 = vadd.f32 0.0, %v2548
  %v2550 = vpop.f32.mrf.mxu0
  %v2551 = vpop.f32.mrf.mxu0
  %v2552 = vadd.f32 0.0, %v2551
  %v2553 = vpop.f32.mrf.mxu0
  %2554 = vmatprep.mubr.bf16.mxu0 0
  %2555 = vmatmul.mubr.bf16.gmra.mxu0 %v2204
  %v2556 = vpop.f32.mrf.mxu0
  %v2557 = vadd.f32 0.0, %v2556
  %v2558 = vpop.f32.mrf.mxu0
  %v2559 = vpop.f32.mrf.mxu0
  %v2560 = vadd.f32 0.0, %v2559
  %v2561 = vpop.f32.mrf.mxu0
  %2562 = vmatprep.mubr.bf16.mxu0 0
  %2563 = vmatmul.mubr.bf16.gmra.mxu0 %v2207
  %v2564 = vpop.f32.mrf.mxu0
  %v2565 = vadd.f32 0.0, %v2564
  %v2566 = vpop.f32.mrf.mxu0
  %v2567 = vpop.f32.mrf.mxu0
  %v2568 = vadd.f32 0.0, %v2567
  %v2569 = vpop.f32.mrf.mxu0
  %2570 = vmatprep.mubr.bf16.mxu0 0
  %2571 = vmatmul.mubr.bf16.gmra.mxu0 %v2210
  %v2572 = vpop.f32.mrf.mxu0
  %v2573 = vadd.f32 0.0, %v2572
  %v2574 = vpop.f32.mrf.mxu0
  %v2575 = vpop.f32.mrf.mxu0
  %v2576 = vadd.f32 0.0, %v2575
  %v2577 = vpop.f32.mrf.mxu0
  %2578 = vmatprep.mubr.bf16.mxu0 0
  %2579 = vmatmul.mubr.bf16.gmra.mxu0 %v2213
  %v2580 = vpop.f32.mrf.mxu0
  %v2581 = vadd.f32 0.0, %v2580
  %v2582 = vpop.f32.mrf.mxu0
  %v2583 = vpop.f32.mrf.mxu0
  %v2584 = vadd.f32 0.0, %v2583
  %v2585 = vpop.f32.mrf.mxu0
  %2586 = vdwg.mxu0
  %v2587 = vadd.f32 %v1364, %v2253
  %v2588 = vadd.f32 %v1365, %v2256
  %v2589 = vadd.f32 %v1366, %v2261
  %v2590 = vadd.f32 %v1367, %v2264
  %v2591 = vadd.f32 %v1368, %v2269
  %v2592 = vadd.f32 %v1369, %v2272
  %v2593 = vadd.f32 %v1370, %v2277
  %v2594 = vadd.f32 %v1371, %v2280
  %v2595 = vadd.f32 %v1372, %v2285
  %v2596 = vadd.f32 %v1373, %v2288
  %v2597 = vadd.f32 %v1374, %v2293
  %v2598 = vadd.f32 %v1375, %v2296
  %v2599 = vadd.f32 %v1376, %v2301
  %v2600 = vadd.f32 %v1377, %v2304
  %v2601 = vadd.f32 %v1378, %v2309
  %v2602 = vadd.f32 %v1379, %v2312
  %v2603 = vadd.f32 %v1380, %v2317
  %v2604 = vadd.f32 %v1381, %v2320
  %v2605 = vadd.f32 %v1382, %v2325
  %v2606 = vadd.f32 %v1383, %v2328
  %v2607 = vadd.f32 %v1384, %v2333
  %v2608 = vadd.f32 %v1385, %v2336
  %v2609 = vadd.f32 %v1386, %v2341
  %v2610 = vadd.f32 %v1387, %v2344
  %v2611 = vadd.f32 %v1388, %v2349
  %v2612 = vadd.f32 %v1389, %v2352
  %v2613 = vadd.f32 %v1390, %v2357
  %v2614 = vadd.f32 %v1391, %v2360
  %v2615 = vadd.f32 %v1392, %v2365
  %v2616 = vadd.f32 %v1393, %v2368
  %v2617 = vadd.f32 %v1394, %v2373
  %v2618 = vadd.f32 %v1395, %v2376
  %v2619 = vadd.f32 %v1396, %v2381
  %v2620 = vadd.f32 %v1397, %v2384
  %v2621 = vadd.f32 %v1398, %v2389
  %v2622 = vadd.f32 %v1399, %v2392
  %v2623 = vadd.f32 %v1400, %v2397
  %v2624 = vadd.f32 %v1401, %v2400
  %v2625 = vadd.f32 %v1402, %v2405
  %v2626 = vadd.f32 %v1403, %v2408
  %v2627 = vadd.f32 %v1404, %v2413
  %v2628 = vadd.f32 %v1405, %v2416
  %v2629 = vadd.f32 %v1406, %v2421
  %v2630 = vadd.f32 %v1407, %v2424
  %v2631 = vadd.f32 %v1408, %v2429
  %v2632 = vadd.f32 %v1409, %v2432
  %v2633 = vadd.f32 %v1410, %v2437
  %v2634 = vadd.f32 %v1411, %v2440
  %v2635 = vadd.f32 %v1412, %v2445
  %v2636 = vadd.f32 %v1413, %v2448
  %v2637 = vadd.f32 %v1414, %v2453
  %v2638 = vadd.f32 %v1415, %v2456
  %v2639 = vadd.f32 %v1416, %v2461
  %v2640 = vadd.f32 %v1417, %v2464
  %v2641 = vadd.f32 %v1418, %v2469
  %v2642 = vadd.f32 %v1419, %v2472
  %v2643 = vadd.f32 %v1420, %v2477
  %v2644 = vadd.f32 %v1421, %v2480
  %v2645 = vadd.f32 %v1422, %v2485
  %v2646 = vadd.f32 %v1423, %v2488
  %v2647 = vadd.f32 %v1424, %v2493
  %v2648 = vadd.f32 %v1425, %v2496
  %v2649 = vadd.f32 %v1426, %v2501
  %v2650 = vadd.f32 %v1427, %v2504
  %v2651 = vadd.f32 %v1428, %v2509
  %v2652 = vadd.f32 %v1429, %v2512
  %v2653 = vadd.f32 %v1430, %v2517
  %v2654 = vadd.f32 %v1431, %v2520
  %v2655 = vadd.f32 %v1432, %v2525
  %v2656 = vadd.f32 %v1433, %v2528
  %v2657 = vadd.f32 %v1434, %v2533
  %v2658 = vadd.f32 %v1435, %v2536
  %v2659 = vadd.f32 %v1436, %v2541
  %v2660 = vadd.f32 %v1437, %v2544
  %v2661 = vadd.f32 %v1438, %v2549
  %v2662 = vadd.f32 %v1439, %v2552
  %v2663 = vadd.f32 %v1440, %v2557
  %v2664 = vadd.f32 %v1441, %v2560
  %v2665 = vadd.f32 %v1442, %v2565
  %v2666 = vadd.f32 %v1443, %v2568
  %v2667 = vadd.f32 %v1444, %v2573
  %v2668 = vadd.f32 %v1445, %v2576
  %v2669 = vadd.f32 %v1446, %v2581
  %v2670 = vadd.f32 %v1447, %v2584
  %2671 = vst [vmem:[%s4] sm:$0xff] %v2587
  %2672 = vst [vmem:[%s4 + $0x8] sm:$0xff] %v2588
  %2673 = vst [vmem:[%s4 + $0x10] sm:$0xff] %v2589
  %2674 = vst [vmem:[%s4 + $0x18] sm:$0xff] %v2590
  %2675 = vst [vmem:[%s4 + $0x20] sm:$0xff] %v2591
  %2676 = vst [vmem:[%s4 + $0x28] sm:$0xff] %v2592
  %2677 = vst [vmem:[%s4 + $0x30] sm:$0xff] %v2593
  %2678 = vst [vmem:[%s4 + $0x38] sm:$0xff] %v2594
  %2679 = vst [vmem:[%s4 + $0x40] sm:$0xff] %v2595
  %2680 = vst [vmem:[%s4 + $0x48] sm:$0xff] %v2596
  %2681 = vst [vmem:[%s4 + $0x50] sm:$0xff] %v2597
  %2682 = vst [vmem:[%s4 + $0x58] sm:$0xff] %v2598
  %2683 = vst [vmem:[%s4 + $0x60] sm:$0xff] %v2599
  %2684 = vst [vmem:[%s4 + $0x68] sm:$0xff] %v2600
  %2685 = vst [vmem:[%s4 + $0x70] sm:$0xff] %v2601
  %2686 = vst [vmem:[%s4 + $0x78] sm:$0xff] %v2602
  %2687 = vst [vmem:[%s4 + $0x80] sm:$0xff] %v2603
  %2688 = vst [vmem:[%s4 + $0x88] sm:$0xff] %v2604
  %2689 = vst [vmem:[%s4 + $0x90] sm:$0xff] %v2605
  %2690 = vst [vmem:[%s4 + $0x98] sm:$0xff] %v2606
  %2691 = vst [vmem:[%s4 + $0xa0] sm:$0xff] %v2607
  %2692 = vst [vmem:[%s4 + $0xa8] sm:$0xff] %v2608
  %2693 = vst [vmem:[%s4 + $0xb0] sm:$0xff] %v2609
  %2694 = vst [vmem:[%s4 + $0xb8] sm:$0xff] %v2610
  %2695 = vst [vmem:[%s4 + $0xc0] sm:$0xff] %v2611
  %2696 = vst [vmem:[%s4 + $0xc8] sm:$0xff] %v2612
  %2697 = vst [vmem:[%s4 + $0xd0] sm:$0xff] %v2613
  %2698 = vst [vmem:[%s4 + $0xd8] sm:$0xff] %v2614
  %2699 = vst [vmem:[%s4 + $0xe0] sm:$0xff] %v2615
  %2700 = vst [vmem:[%s4 + $0xe8] sm:$0xff] %v2616
  %2701 = vst [vmem:[%s4 + $0xf0] sm:$0xff] %v2617
  %2702 = vst [vmem:[%s4 + $0xf8] sm:$0xff] %v2618
  %2703 = vst [vmem:[%s4 + $0x100] sm:$0xff] %v2619
  %2704 = vst [vmem:[%s4 + $0x108] sm:$0xff] %v2620
  %2705 = vst [vmem:[%s4 + $0x110] sm:$0xff] %v2621
  %2706 = vst [vmem:[%s4 + $0x118] sm:$0xff] %v2622
  %2707 = vst [vmem:[%s4 + $0x120] sm:$0xff] %v2623
  %2708 = vst [vmem:[%s4 + $0x128] sm:$0xff] %v2624
  %2709 = vst [vmem:[%s4 + $0x130] sm:$0xff] %v2625
  %2710 = vst [vmem:[%s4 + $0x138] sm:$0xff] %v2626
  %2711 = vst [vmem:[%s4 + $0x140] sm:$0xff] %v2627
  %2712 = vst [vmem:[%s4 + $0x148] sm:$0xff] %v2628
  %2713 = vst [vmem:[%s4 + $0x150] sm:$0xff] %v2629
  %2714 = vst [vmem:[%s4 + $0x158] sm:$0xff] %v2630
  %2715 = vst [vmem:[%s4 + $0x160] sm:$0xff] %v2631
  %2716 = vst [vmem:[%s4 + $0x168] sm:$0xff] %v2632
  %2717 = vst [vmem:[%s4 + $0x170] sm:$0xff] %v2633
  %2718 = vst [vmem:[%s4 + $0x178] sm:$0xff] %v2634
  %2719 = vst [vmem:[%s4 + $0x180] sm:$0xff] %v2635
  %2720 = vst [vmem:[%s4 + $0x188] sm:$0xff] %v2636
  %2721 = vst [vmem:[%s4 + $0x190] sm:$0xff] %v2637
  %2722 = vst [vmem:[%s4 + $0x198] sm:$0xff] %v2638
  %2723 = vst [vmem:[%s4 + $0x1a0] sm:$0xff] %v2639
  %2724 = vst [vmem:[%s4 + $0x1a8] sm:$0xff] %v2640
  %2725 = vst [vmem:[%s4 + $0x1b0] sm:$0xff] %v2641
  %2726 = vst [vmem:[%s4 + $0x1b8] sm:$0xff] %v2642
  %2727 = vst [vmem:[%s4 + $0x1c0] sm:$0xff] %v2643
  %2728 = vst [vmem:[%s4 + $0x1c8] sm:$0xff] %v2644
  %2729 = vst [vmem:[%s4 + $0x1d0] sm:$0xff] %v2645
  %2730 = vst [vmem:[%s4 + $0x1d8] sm:$0xff] %v2646
  %2731 = vst [vmem:[%s4 + $0x1e0] sm:$0xff] %v2647
  %2732 = vst [vmem:[%s4 + $0x1e8] sm:$0xff] %v2648
  %2733 = vst [vmem:[%s4 + $0x1f0] sm:$0xff] %v2649
  %2734 = vst [vmem:[%s4 + $0x1f8] sm:$0xff] %v2650
  %2735 = vst [vmem:[%s4 + $0x200] sm:$0xff] %v2651
  %2736 = vst [vmem:[%s4 + $0x208] sm:$0xff] %v2652
  %2737 = vst [vmem:[%s4 + $0x210] sm:$0xff] %v2653
  %2738 = vst [vmem:[%s4 + $0x218] sm:$0xff] %v2654
  %2739 = vst [vmem:[%s4 + $0x220] sm:$0xff] %v2655
  %2740 = vst [vmem:[%s4 + $0x228] sm:$0xff] %v2656
  %2741 = vst [vmem:[%s4 + $0x230] sm:$0xff] %v2657
  %2742 = vst [vmem:[%s4 + $0x238] sm:$0xff] %v2658
  %2743 = vst [vmem:[%s4 + $0x240] sm:$0xff] %v2659
  %2744 = vst [vmem:[%s4 + $0x248] sm:$0xff] %v2660
  %2745 = vst [vmem:[%s4 + $0x250] sm:$0xff] %v2661
  %2746 = vst [vmem:[%s4 + $0x258] sm:$0xff] %v2662
  %2747 = vst [vmem:[%s4 + $0x260] sm:$0xff] %v2663
  %2748 = vst [vmem:[%s4 + $0x268] sm:$0xff] %v2664
  %2749 = vst [vmem:[%s4 + $0x270] sm:$0xff] %v2665
  %2750 = vst [vmem:[%s4 + $0x278] sm:$0xff] %v2666
  %2751 = vst [vmem:[%s4 + $0x280] sm:$0xff] %v2667
  %2752 = vst [vmem:[%s4 + $0x288] sm:$0xff] %v2668
  %2753 = vst [vmem:[%s4 + $0x290] sm:$0xff] %v2669
  %2754 = vst [vmem:[%s4 + $0x298] sm:$0xff] %v2670
  %v2755 = vld [vmem:[%s4] sm:$0xff]
  %v2756 = vld [vmem:[%s4 + $0x8] sm:$0xff]
  %v2757 = vld [vmem:[%s4 + $0x10] sm:$0xff]
  %v2758 = vld [vmem:[%s4 + $0x18] sm:$0xff]
  %v2759 = vld [vmem:[%s4 + $0x20] sm:$0xff]
  %v2760 = vld [vmem:[%s4 + $0x28] sm:$0xff]
  %v2761 = vld [vmem:[%s4 + $0x30] sm:$0xff]
  %v2762 = vld [vmem:[%s4 + $0x38] sm:$0xff]
  %v2763 = vld [vmem:[%s4 + $0x40] sm:$0xff]
  %v2764 = vld [vmem:[%s4 + $0x48] sm:$0xff]
  %v2765 = vld [vmem:[%s4 + $0x50] sm:$0xff]
  %v2766 = vld [vmem:[%s4 + $0x58] sm:$0xff]
  %v2767 = vld [vmem:[%s4 + $0x60] sm:$0xff]
  %v2768 = vld [vmem:[%s4 + $0x68] sm:$0xff]
  %v2769 = vld [vmem:[%s4 + $0x70] sm:$0xff]
  %v2770 = vld [vmem:[%s4 + $0x78] sm:$0xff]
  %v2771 = vld [vmem:[%s4 + $0x80] sm:$0xff]
  %v2772 = vld [vmem:[%s4 + $0x88] sm:$0xff]
  %v2773 = vld [vmem:[%s4 + $0x90] sm:$0xff]
  %v2774 = vld [vmem:[%s4 + $0x98] sm:$0xff]
  %v2775 = vld [vmem:[%s4 + $0xa0] sm:$0xff]
  %v2776 = vld [vmem:[%s4 + $0xa8] sm:$0xff]
  %v2777 = vld [vmem:[%s4 + $0xb0] sm:$0xff]
  %v2778 = vld [vmem:[%s4 + $0xb8] sm:$0xff]
  %v2779 = vld [vmem:[%s4 + $0xc0] sm:$0xff]
  %v2780 = vld [vmem:[%s4 + $0xc8] sm:$0xff]
  %v2781 = vld [vmem:[%s4 + $0xd0] sm:$0xff]
  %v2782 = vld [vmem:[%s4 + $0xd8] sm:$0xff]
  %v2783 = vld [vmem:[%s4 + $0xe0] sm:$0xff]
  %v2784 = vld [vmem:[%s4 + $0xe8] sm:$0xff]
  %v2785 = vld [vmem:[%s4 + $0xf0] sm:$0xff]
  %v2786 = vld [vmem:[%s4 + $0xf8] sm:$0xff]
  %v2787 = vld [vmem:[%s4 + $0x100] sm:$0xff]
  %v2788 = vld [vmem:[%s4 + $0x108] sm:$0xff]
  %v2789 = vld [vmem:[%s4 + $0x110] sm:$0xff]
  %v2790 = vld [vmem:[%s4 + $0x118] sm:$0xff]
  %v2791 = vld [vmem:[%s4 + $0x120] sm:$0xff]
  %v2792 = vld [vmem:[%s4 + $0x128] sm:$0xff]
  %v2793 = vld [vmem:[%s4 + $0x130] sm:$0xff]
  %v2794 = vld [vmem:[%s4 + $0x138] sm:$0xff]
  %v2795 = vld [vmem:[%s4 + $0x140] sm:$0xff]
  %v2796 = vld [vmem:[%s4 + $0x148] sm:$0xff]
  %v2797 = vld [vmem:[%s4 + $0x150] sm:$0xff]
  %v2798 = vld [vmem:[%s4 + $0x158] sm:$0xff]
  %v2799 = vld [vmem:[%s4 + $0x160] sm:$0xff]
  %v2800 = vld [vmem:[%s4 + $0x168] sm:$0xff]
  %v2801 = vld [vmem:[%s4 + $0x170] sm:$0xff]
  %v2802 = vld [vmem:[%s4 + $0x178] sm:$0xff]
  %v2803 = vld [vmem:[%s4 + $0x180] sm:$0xff]
  %v2804 = vld [vmem:[%s4 + $0x188] sm:$0xff]
  %v2805 = vld [vmem:[%s4 + $0x190] sm:$0xff]
  %v2806 = vld [vmem:[%s4 + $0x198] sm:$0xff]
  %v2807 = vld [vmem:[%s4 + $0x1a0] sm:$0xff]
  %v2808 = vld [vmem:[%s4 + $0x1a8] sm:$0xff]
  %v2809 = vld [vmem:[%s4 + $0x1b0] sm:$0xff]
  %v2810 = vld [vmem:[%s4 + $0x1b8] sm:$0xff]
  %v2811 = vld [vmem:[%s4 + $0x1c0] sm:$0xff]
  %v2812 = vld [vmem:[%s4 + $0x1c8] sm:$0xff]
  %v2813 = vld [vmem:[%s4 + $0x1d0] sm:$0xff]
  %v2814 = vld [vmem:[%s4 + $0x1d8] sm:$0xff]
  %v2815 = vld [vmem:[%s4 + $0x1e0] sm:$0xff]
  %v2816 = vld [vmem:[%s4 + $0x1e8] sm:$0xff]
  %v2817 = vld [vmem:[%s4 + $0x1f0] sm:$0xff]
  %v2818 = vld [vmem:[%s4 + $0x1f8] sm:$0xff]
  %v2819 = vld [vmem:[%s4 + $0x200] sm:$0xff]
  %v2820 = vld [vmem:[%s4 + $0x208] sm:$0xff]
  %v2821 = vld [vmem:[%s4 + $0x210] sm:$0xff]
  %v2822 = vld [vmem:[%s4 + $0x218] sm:$0xff]
  %v2823 = vld [vmem:[%s4 + $0x220] sm:$0xff]
  %v2824 = vld [vmem:[%s4 + $0x228] sm:$0xff]
  %v2825 = vld [vmem:[%s4 + $0x230] sm:$0xff]
  %v2826 = vld [vmem:[%s4 + $0x238] sm:$0xff]
  %v2827 = vld [vmem:[%s4 + $0x240] sm:$0xff]
  %v2828 = vld [vmem:[%s4 + $0x248] sm:$0xff]
  %v2829 = vld [vmem:[%s4 + $0x250] sm:$0xff]
  %v2830 = vld [vmem:[%s4 + $0x258] sm:$0xff]
  %v2831 = vld [vmem:[%s4 + $0x260] sm:$0xff]
  %v2832 = vld [vmem:[%s4 + $0x268] sm:$0xff]
  %v2833 = vld [vmem:[%s4 + $0x270] sm:$0xff]
  %v2834 = vld [vmem:[%s4 + $0x278] sm:$0xff]
  %v2835 = vld [vmem:[%s4 + $0x280] sm:$0xff]
  %v2836 = vld [vmem:[%s4 + $0x288] sm:$0xff]
  %v2837 = vld [vmem:[%s4 + $0x290] sm:$0xff]
  %v2838 = vld [vmem:[%s4 + $0x298] sm:$0xff]
  %v2839 = vld [vmem:[#allocation2] sm:$0xe]
  %v2840 = vld [vmem:[#allocation2 + $0x4] sm:$0xf]
  %v2841 = vld [vmem:[#allocation2 + $0x8] sm:$0xf]
  %v2842 = vld [vmem:[#allocation2 + $0xc] sm:$0xf]
  %v2843 = vld [vmem:[#allocation2 + $0x10] sm:$0xf]
  %v2844 = vld [vmem:[#allocation2 + $0x14] sm:$0xf]
  %v2845 = vld [vmem:[#allocation2 + $0x18] sm:$0xf]
  %v2846 = vld [vmem:[#allocation2 + $0x1c] sm:$0xf]
  %v2847 = vld [vmem:[#allocation2 + $0x20] sm:$0xf]
  %v2848 = vld [vmem:[#allocation2 + $0x24] sm:$0xf]
  %v2849 = vld [vmem:[#allocation2 + $0x28] sm:$0xf]
  %v2850 = vld [vmem:[#allocation2 + $0x2c] sm:$0xf]
  %v2851 = vld [vmem:[#allocation2 + $0x30] sm:$0xf]
  %v2852 = vld [vmem:[#allocation2 + $0x34] sm:$0xf]
  %v2853 = vld [vmem:[#allocation2 + $0x38] sm:$0xf]
  %v2854 = vld [vmem:[#allocation2 + $0x3c] sm:$0xf]
  %v2855 = vld [vmem:[#allocation2 + $0x40] sm:$0xf]
  %v2856 = vld [vmem:[#allocation2 + $0x44] sm:$0xf]
  %v2857 = vld [vmem:[#allocation2 + $0x48] sm:$0xf]
  %v2858 = vld [vmem:[#allocation2 + $0x4c] sm:$0xf]
  %v2859 = vld [vmem:[#allocation2 + $0x50] sm:$0xf]
  %v2860 = vld [vmem:[#allocation2 + $0x54] sm:$0xf]
  %v2861 = vld [vmem:[#allocation2 + $0x58] sm:$0xf]
  %v2862 = vld [vmem:[#allocation2 + $0x5c] sm:$0xf]
  %v2863 = vld [vmem:[#allocation2 + $0x60] sm:$0xf]
  %v2864 = vld [vmem:[#allocation2 + $0x64] sm:$0xf]
  %v2865 = vld [vmem:[#allocation2 + $0x68] sm:$0xf]
  %v2866 = vld [vmem:[#allocation2 + $0x6c] sm:$0xf]
  %v2867 = vld [vmem:[#allocation2 + $0x70] sm:$0xf]
  %v2868 = vld [vmem:[#allocation2 + $0x74] sm:$0xf]
  %v2869 = vld [vmem:[#allocation2 + $0x78] sm:$0xf]
  %v2870 = vld [vmem:[#allocation2 + $0x7c] sm:$0xf]
  %v2871 = vld [vmem:[#allocation2 + $0x80] sm:$0xf]
  %v2872 = vld [vmem:[#allocation2 + $0x84] sm:$0xf]
  %v2873 = vld [vmem:[#allocation2 + $0x88] sm:$0xf]
  %v2874 = vld [vmem:[#allocation2 + $0x8c] sm:$0xf]
  %v2875 = vld [vmem:[#allocation2 + $0x90] sm:$0xf]
  %v2876 = vld [vmem:[#allocation2 + $0x94] sm:$0xf]
  %v2877 = vld [vmem:[#allocation2 + $0x98] sm:$0xf]
  %v2878 = vld [vmem:[#allocation2 + $0x9c] sm:$0xf]
  %v2879 = vld [vmem:[#allocation2 + $0xa0] sm:$0xf]
  %v2880 = vld [vmem:[#allocation2 + $0xa4] sm:$0xf]
  %v2881 = vld [vmem:[#allocation2 + $0xa8] sm:$0xf]
  %v2882 = vld [vmem:[#allocation2 + $0xac] sm:$0xf]
  %v2883 = vld [vmem:[#allocation2 + $0xb0] sm:$0xf]
  %v2884 = vld [vmem:[#allocation2 + $0xb4] sm:$0xf]
  %v2885 = vld [vmem:[#allocation2 + $0xb8] sm:$0xf]
  %v2886 = vld [vmem:[#allocation2 + $0xbc] sm:$0xf]
  %v2887 = vld [vmem:[#allocation2 + $0xc0] sm:$0xf]
  %v2888 = vld [vmem:[#allocation2 + $0xc4] sm:$0xf]
  %v2889 = vld [vmem:[#allocation2 + $0xc8] sm:$0xf]
  %v2890 = vld [vmem:[#allocation2 + $0xcc] sm:$0xf]
  %v2891 = vld [vmem:[#allocation2 + $0xd0] sm:$0xf]
  %v2892 = vld [vmem:[#allocation2 + $0xd4] sm:$0xf]
  %v2893 = vld [vmem:[#allocation2 + $0xd8] sm:$0xf]
  %v2894 = vld [vmem:[#allocation2 + $0xdc] sm:$0xf]
  %v2895 = vld [vmem:[#allocation2 + $0xe0] sm:$0xf]
  %v2896 = vld [vmem:[#allocation2 + $0xe4] sm:$0xf]
  %v2897 = vld [vmem:[#allocation2 + $0xe8] sm:$0xf]
  %v2898 = vld [vmem:[#allocation2 + $0xec] sm:$0xf]
  %v2899 = vld [vmem:[#allocation2 + $0xf0] sm:$0xf]
  %v2900 = vld [vmem:[#allocation2 + $0xf4] sm:$0xf]
  %v2901 = vld [vmem:[#allocation2 + $0xf8] sm:$0xf]
  %v2902 = vld [vmem:[#allocation2 + $0xfc] sm:$0xf]
  %v2903 = vld [vmem:[#allocation2 + $0x100] sm:$0xf]
  %v2904 = vld [vmem:[#allocation2 + $0x104] sm:$0xf]
  %v2905 = vld [vmem:[#allocation2 + $0x108] sm:$0xf]
  %v2906 = vld [vmem:[#allocation2 + $0x10c] sm:$0xf]
  %v2907 = vld [vmem:[#allocation2 + $0x110] sm:$0xf]
  %v2908 = vld [vmem:[#allocation2 + $0x114] sm:$0xf]
  %v2909 = vld [vmem:[#allocation2 + $0x118] sm:$0xf]
  %v2910 = vld [vmem:[#allocation2 + $0x11c] sm:$0xf]
  %v2911 = vld [vmem:[#allocation2 + $0x120] sm:$0xf]
  %v2912 = vld [vmem:[#allocation2 + $0x124] sm:$0xf]
  %v2913 = vld [vmem:[#allocation2 + $0x128] sm:$0xf]
  %v2914 = vld [vmem:[#allocation2 + $0x12c] sm:$0xf]
  %v2915 = vld [vmem:[#allocation2 + $0x130] sm:$0xf]
  %v2916 = vld [vmem:[#allocation2 + $0x134] sm:$0xf]
  %v2917 = vld [vmem:[#allocation2 + $0x138] sm:$0xf]
  %v2918 = vld [vmem:[#allocation2 + $0x13c] sm:$0xf]
  %v2919 = vld [vmem:[#allocation2 + $0x140] sm:$0xf]
  %v2920 = vld [vmem:[#allocation2 + $0x144] sm:$0xf]
  %v2921 = vld [vmem:[#allocation2 + $0x148] sm:$0xf]
  %v2922 = vld [vmem:[#allocation2 + $0x14c] sm:$0xf]
  %v2923 = vld [vmem:[#allocation2 + $0x150] sm:$0x1]
  %s2924 = scalar_lea.vmem %s2, 8
  %v2925 = vld [vmem:[%s2924] sm:$0xf]
  %v3011 = vunpack.c.l.b16 %v2839
  %v3012 = vunpack.c.l.b16 %v2840
  %v3013 = vunpack.c.l.b16 %v2841
  %v3014 = vunpack.c.l.b16 %v2842
  %v3015 = vunpack.c.l.b16 %v2843
  %v3016 = vunpack.c.l.b16 %v2844
  %v3017 = vunpack.c.l.b16 %v2845
  %v3018 = vunpack.c.l.b16 %v2846
  %v3019 = vunpack.c.l.b16 %v2847
  %v3020 = vunpack.c.l.b16 %v2848
  %v3021 = vunpack.c.l.b16 %v2849
  %v3022 = vunpack.c.l.b16 %v2850
  %v3023 = vunpack.c.l.b16 %v2851
  %v3024 = vunpack.c.l.b16 %v2852
  %v3025 = vunpack.c.l.b16 %v2853
  %v3026 = vunpack.c.l.b16 %v2854
  %v3027 = vunpack.c.l.b16 %v2855
  %v3028 = vunpack.c.l.b16 %v2856
  %v3029 = vunpack.c.l.b16 %v2857
  %v3030 = vunpack.c.l.b16 %v2858
  %v3031 = vunpack.c.l.b16 %v2859
  %v3032 = vunpack.c.l.b16 %v2860
  %v3033 = vunpack.c.l.b16 %v2861
  %v3034 = vunpack.c.l.b16 %v2862
  %v3035 = vunpack.c.l.b16 %v2863
  %v3036 = vunpack.c.l.b16 %v2864
  %v3037 = vunpack.c.l.b16 %v2865
  %v3038 = vunpack.c.l.b16 %v2866
  %v3039 = vunpack.c.l.b16 %v2867
  %v3040 = vunpack.c.l.b16 %v2868
  %v3041 = vunpack.c.l.b16 %v2869
  %v3042 = vunpack.c.l.b16 %v2870
  %v3043 = vunpack.c.l.b16 %v2871
  %v3044 = vunpack.c.l.b16 %v2872
  %v3045 = vunpack.c.l.b16 %v2873
  %v3046 = vunpack.c.l.b16 %v2874
  %v3047 = vunpack.c.l.b16 %v2875
  %v3048 = vunpack.c.l.b16 %v2876
  %v3049 = vunpack.c.l.b16 %v2877
  %v3050 = vunpack.c.l.b16 %v2878
  %v3051 = vunpack.c.l.b16 %v2879
  %v3052 = vunpack.c.l.b16 %v2880
  %v3053 = vunpack.c.l.b16 %v2881
  %v3054 = vunpack.c.l.b16 %v2882
  %v3055 = vunpack.c.l.b16 %v2883
  %v3056 = vunpack.c.l.b16 %v2884
  %v3057 = vunpack.c.l.b16 %v2885
  %v3058 = vunpack.c.l.b16 %v2886
  %v3059 = vunpack.c.l.b16 %v2887
  %v3060 = vunpack.c.l.b16 %v2888
  %v3061 = vunpack.c.l.b16 %v2889
  %v3062 = vunpack.c.l.b16 %v2890
  %v3063 = vunpack.c.l.b16 %v2891
  %v3064 = vunpack.c.l.b16 %v2892
  %v3065 = vunpack.c.l.b16 %v2893
  %v3066 = vunpack.c.l.b16 %v2894
  %v3067 = vunpack.c.l.b16 %v2895
  %v3068 = vunpack.c.l.b16 %v2896
  %v3069 = vunpack.c.l.b16 %v2897
  %v3070 = vunpack.c.l.b16 %v2898
  %v3071 = vunpack.c.l.b16 %v2899
  %v3072 = vunpack.c.l.b16 %v2900
  %v3073 = vunpack.c.l.b16 %v2901
  %v3074 = vunpack.c.l.b16 %v2902
  %v3075 = vunpack.c.l.b16 %v2903
  %v3076 = vunpack.c.l.b16 %v2904
  %v3077 = vunpack.c.l.b16 %v2905
  %v3078 = vunpack.c.l.b16 %v2906
  %v3079 = vunpack.c.l.b16 %v2907
  %v3080 = vunpack.c.l.b16 %v2908
  %v3081 = vunpack.c.l.b16 %v2909
  %v3082 = vunpack.c.l.b16 %v2910
  %v3083 = vunpack.c.l.b16 %v2911
  %v3084 = vunpack.c.l.b16 %v2912
  %v3085 = vunpack.c.l.b16 %v2913
  %v3086 = vunpack.c.l.b16 %v2914
  %v3087 = vunpack.c.l.b16 %v2915
  %v3088 = vunpack.c.l.b16 %v2916
  %v3089 = vunpack.c.l.b16 %v2917
  %v3090 = vunpack.c.l.b16 %v2918
  %v3091 = vunpack.c.l.b16 %v2919
  %v3092 = vunpack.c.l.b16 %v2920
  %v3093 = vunpack.c.l.b16 %v2921
  %v3094 = vunpack.c.l.b16 %v2922
  %v3095 = vunpack.c.l.b16 %v2923
  %v3096 = vpack.c.b16 %v3012, %v3011
  %v3097 = vpack.c.b16 %v3014, %v3013
  %v3098 = vpack.c.b16 %v3016, %v3015
  %v3099 = vpack.c.b16 %v3018, %v3017
  %v3100 = vpack.c.b16 %v3020, %v3019
  %v3101 = vpack.c.b16 %v3022, %v3021
  %v3102 = vpack.c.b16 %v3024, %v3023
  %v3103 = vpack.c.b16 %v3026, %v3025
  %v3104 = vpack.c.b16 %v3028, %v3027
  %v3105 = vpack.c.b16 %v3030, %v3029
  %v3106 = vpack.c.b16 %v3032, %v3031
  %v3107 = vpack.c.b16 %v3034, %v3033
  %v3108 = vpack.c.b16 %v3036, %v3035
  %v3109 = vpack.c.b16 %v3038, %v3037
  %v3110 = vpack.c.b16 %v3040, %v3039
  %v3111 = vpack.c.b16 %v3042, %v3041
  %v3112 = vpack.c.b16 %v3044, %v3043
  %v3113 = vpack.c.b16 %v3046, %v3045
  %v3114 = vpack.c.b16 %v3048, %v3047
  %v3115 = vpack.c.b16 %v3050, %v3049
  %v3116 = vpack.c.b16 %v3052, %v3051
  %v3117 = vpack.c.b16 %v3054, %v3053
  %v3118 = vpack.c.b16 %v3056, %v3055
  %v3119 = vpack.c.b16 %v3058, %v3057
  %v3120 = vpack.c.b16 %v3060, %v3059
  %v3121 = vpack.c.b16 %v3062, %v3061
  %v3122 = vpack.c.b16 %v3064, %v3063
  %v3123 = vpack.c.b16 %v3066, %v3065
  %v3124 = vpack.c.b16 %v3068, %v3067
  %v3125 = vpack.c.b16 %v3070, %v3069
  %v3126 = vpack.c.b16 %v3072, %v3071
  %v3127 = vpack.c.b16 %v3074, %v3073
  %v3128 = vpack.c.b16 %v3076, %v3075
  %v3129 = vpack.c.b16 %v3078, %v3077
  %v3130 = vpack.c.b16 %v3080, %v3079
  %v3131 = vpack.c.b16 %v3082, %v3081
  %v3132 = vpack.c.b16 %v3084, %v3083
  %v3133 = vpack.c.b16 %v3086, %v3085
  %v3134 = vpack.c.b16 %v3088, %v3087
  %v3135 = vpack.c.b16 %v3090, %v3089
  %v3136 = vpack.c.b16 %v3092, %v3091
  %v3137 = vpack.c.b16 %v3094, %v3093
  %v3138 = vpack.c.b16 %v3095, %v3095
  %vm3139 = vcmask 1046528
  %v3140 = vrot.slane %v3096, 1
  %v3141 = vrot.slane %v3097, 1
  %v3142 = vsel %vm3139, %v3140, %v3141
  %v3143 = vrot.slane %v3098, 1
  %v3144 = vsel %vm3139, %v3141, %v3143
  %v3145 = vrot.slane %v3099, 1
  %v3146 = vsel %vm3139, %v3143, %v3145
  %v3147 = vrot.slane %v3100, 1
  %v3148 = vsel %vm3139, %v3145, %v3147
  %v3149 = vrot.slane %v3101, 1
  %v3150 = vsel %vm3139, %v3147, %v3149
  %v3151 = vrot.slane %v3102, 1
  %v3152 = vsel %vm3139, %v3149, %v3151
  %v3153 = vrot.slane %v3103, 1
  %v3154 = vsel %vm3139, %v3151, %v3153
  %v3155 = vrot.slane %v3104, 1
  %v3156 = vsel %vm3139, %v3153, %v3155
  %v3157 = vrot.slane %v3105, 1
  %v3158 = vsel %vm3139, %v3155, %v3157
  %v3159 = vrot.slane %v3106, 1
  %v3160 = vsel %vm3139, %v3157, %v3159
  %v3161 = vrot.slane %v3107, 1
  %v3162 = vsel %vm3139, %v3159, %v3161
  %v3163 = vrot.slane %v3108, 1
  %v3164 = vsel %vm3139, %v3161, %v3163
  %v3165 = vrot.slane %v3109, 1
  %v3166 = vsel %vm3139, %v3163, %v3165
  %v3167 = vrot.slane %v3110, 1
  %v3168 = vsel %vm3139, %v3165, %v3167
  %v3169 = vrot.slane %v3111, 1
  %v3170 = vsel %vm3139, %v3167, %v3169
  %v3171 = vrot.slane %v3112, 1
  %v3172 = vsel %vm3139, %v3169, %v3171
  %v3173 = vrot.slane %v3113, 1
  %v3174 = vsel %vm3139, %v3171, %v3173
  %v3175 = vrot.slane %v3114, 1
  %v3176 = vsel %vm3139, %v3173, %v3175
  %v3177 = vrot.slane %v3115, 1
  %v3178 = vsel %vm3139, %v3175, %v3177
  %v3179 = vrot.slane %v3116, 1
  %v3180 = vsel %vm3139, %v3177, %v3179
  %v3181 = vrot.slane %v3117, 1
  %v3182 = vsel %vm3139, %v3179, %v3181
  %v3183 = vrot.slane %v3118, 1
  %v3184 = vsel %vm3139, %v3181, %v3183
  %v3185 = vrot.slane %v3119, 1
  %v3186 = vsel %vm3139, %v3183, %v3185
  %v3187 = vrot.slane %v3120, 1
  %v3188 = vsel %vm3139, %v3185, %v3187
  %v3189 = vrot.slane %v3121, 1
  %v3190 = vsel %vm3139, %v3187, %v3189
  %v3191 = vrot.slane %v3122, 1
  %v3192 = vsel %vm3139, %v3189, %v3191
  %v3193 = vrot.slane %v3123, 1
  %v3194 = vsel %vm3139, %v3191, %v3193
  %v3195 = vrot.slane %v3124, 1
  %v3196 = vsel %vm3139, %v3193, %v3195
  %v3197 = vrot.slane %v3125, 1
  %v3198 = vsel %vm3139, %v3195, %v3197
  %v3199 = vrot.slane %v3126, 1
  %v3200 = vsel %vm3139, %v3197, %v3199
  %v3201 = vrot.slane %v3127, 1
  %v3202 = vsel %vm3139, %v3199, %v3201
  %v3203 = vrot.slane %v3128, 1
  %v3204 = vsel %vm3139, %v3201, %v3203
  %v3205 = vrot.slane %v3129, 1
  %v3206 = vsel %vm3139, %v3203, %v3205
  %v3207 = vrot.slane %v3130, 1
  %v3208 = vsel %vm3139, %v3205, %v3207
  %v3209 = vrot.slane %v3131, 1
  %v3210 = vsel %vm3139, %v3207, %v3209
  %v3211 = vrot.slane %v3132, 1
  %v3212 = vsel %vm3139, %v3209, %v3211
  %v3213 = vrot.slane %v3133, 1
  %v3214 = vsel %vm3139, %v3211, %v3213
  %v3215 = vrot.slane %v3134, 1
  %v3216 = vsel %vm3139, %v3213, %v3215
  %v3217 = vrot.slane %v3135, 1
  %v3218 = vsel %vm3139, %v3215, %v3217
  %v3219 = vrot.slane %v3136, 1
  %v3220 = vsel %vm3139, %v3217, %v3219
  %v3221 = vrot.slane %v3137, 1
  %v3222 = vsel %vm3139, %v3219, %v3221
  %v3223 = vrot.slane %v3138, 1
  %v3224 = vsel %vm3139, %v3221, %v3223
  %v3226 = vsel %vm696, %v3142, 0
  %v3229 = vsel %vm696, %v3144, 0
  %v3232 = vsel %vm696, %v3146, 0
  %v3235 = vsel %vm696, %v3148, 0
  %v3238 = vsel %vm696, %v3150, 0
  %v3241 = vsel %vm696, %v3152, 0
  %v3244 = vsel %vm696, %v3154, 0
  %v3247 = vsel %vm696, %v3156, 0
  %v3250 = vsel %vm696, %v3158, 0
  %v3253 = vsel %vm696, %v3160, 0
  %v3256 = vsel %vm696, %v3162, 0
  %v3259 = vsel %vm696, %v3164, 0
  %v3262 = vsel %vm696, %v3166, 0
  %v3265 = vsel %vm696, %v3168, 0
  %v3268 = vsel %vm696, %v3170, 0
  %v3271 = vsel %vm696, %v3172, 0
  %v3274 = vsel %vm696, %v3174, 0
  %v3277 = vsel %vm696, %v3176, 0
  %v3280 = vsel %vm696, %v3178, 0
  %v3283 = vsel %vm696, %v3180, 0
  %v3286 = vsel %vm696, %v3182, 0
  %v3289 = vsel %vm696, %v3184, 0
  %v3292 = vsel %vm696, %v3186, 0
  %v3295 = vsel %vm696, %v3188, 0
  %v3298 = vsel %vm696, %v3190, 0
  %v3301 = vsel %vm696, %v3192, 0
  %v3304 = vsel %vm696, %v3194, 0
  %v3307 = vsel %vm696, %v3196, 0
  %v3310 = vsel %vm696, %v3198, 0
  %v3313 = vsel %vm696, %v3200, 0
  %v3316 = vsel %vm696, %v3202, 0
  %v3319 = vsel %vm696, %v3204, 0
  %v3322 = vsel %vm696, %v3206, 0
  %v3325 = vsel %vm696, %v3208, 0
  %v3328 = vsel %vm696, %v3210, 0
  %v3331 = vsel %vm696, %v3212, 0
  %v3334 = vsel %vm696, %v3214, 0
  %v3337 = vsel %vm696, %v3216, 0
  %v3340 = vsel %vm696, %v3218, 0
  %v3343 = vsel %vm696, %v3220, 0
  %v3346 = vsel %vm696, %v3222, 0
  %v3349 = vsel %vm696, %v3224, 0
  %v3352 = vsel %vm823, %v2925, 0
  %3354 = vmatprep.subr.bf16.mxu0 0
  %3355 = vmatpush1.bf16.msra.mxu0 0
  %3356 = vmatprep.subr.bf16.mxu0 0
  %3357 = vmatpush1.bf16.msra.mxu0 0
  %3358 = vmatprep.subr.bf16.mxu0 0
  %3359 = vmatpush1.bf16.msra.mxu0 0
  %3360 = vmatprep.subr.bf16.mxu0 0
  %3361 = vmatpush1.bf16.msra.mxu0 0
  %3362 = vmatprep.subr.bf16.mxu0 0
  %3363 = vmatpush1.bf16.msra.mxu0 0
  %3364 = vmatprep.subr.bf16.mxu0 0
  %3365 = vmatpush1.bf16.msra.mxu0 0
  %3366 = vmatprep.subr.bf16.mxu0 0
  %3367 = vmatpush1.bf16.msra.mxu0 0
  %3368 = vmatprep.subr.bf16.mxu0 0
  %3369 = vmatpush1.bf16.msra.mxu0 %v3352
  %3370 = vmatprep.subr.bf16.mxu0 0
  %3371 = vmatpush2.bf16.msra.mxu0 0
  %3372 = vmatprep.subr.bf16.mxu0 0
  %3373 = vmatpush2.bf16.msra.mxu0 0
  %3374 = vmatprep.subr.bf16.mxu0 0
  %3375 = vmatpush2.bf16.msra.mxu0 0
  %3376 = vmatprep.subr.bf16.mxu0 0
  %3377 = vmatpush2.bf16.msra.mxu0 0
  %3378 = vmatprep.subr.bf16.mxu0 0
  %3379 = vmatpush2.bf16.msra.mxu0 0
  %3380 = vmatprep.subr.bf16.mxu0 0
  %3381 = vmatpush2.bf16.msra.mxu0 0
  %3382 = vmatprep.subr.bf16.mxu0 0
  %3383 = vmatpush2.bf16.msra.mxu0 0
  %3384 = vmatprep.subr.bf16.mxu0 0
  %3385 = vmatpush2.bf16.msra.mxu0 0
  %3386 = vmatprep.mubr.bf16.mxu0 0
  %3387 = vmatmul.mubr.bf16.gmra.mxu0 %v3226
  %v3388 = vpop.f32.mrf.mxu0
  %v3389 = vadd.f32 0.0, %v3388
  %v3390 = vpop.f32.mrf.mxu0
  %v3391 = vpop.f32.mrf.mxu0
  %v3392 = vadd.f32 0.0, %v3391
  %v3393 = vpop.f32.mrf.mxu0
  %3394 = vmatprep.mubr.bf16.mxu0 0
  %3395 = vmatmul.mubr.bf16.gmra.mxu0 %v3229
  %v3396 = vpop.f32.mrf.mxu0
  %v3397 = vadd.f32 0.0, %v3396
  %v3398 = vpop.f32.mrf.mxu0
  %v3399 = vpop.f32.mrf.mxu0
  %v3400 = vadd.f32 0.0, %v3399
  %v3401 = vpop.f32.mrf.mxu0
  %3402 = vmatprep.mubr.bf16.mxu0 0
  %3403 = vmatmul.mubr.bf16.gmra.mxu0 %v3232
  %v3404 = vpop.f32.mrf.mxu0
  %v3405 = vadd.f32 0.0, %v3404
  %v3406 = vpop.f32.mrf.mxu0
  %v3407 = vpop.f32.mrf.mxu0
  %v3408 = vadd.f32 0.0, %v3407
  %v3409 = vpop.f32.mrf.mxu0
  %3410 = vmatprep.mubr.bf16.mxu0 0
  %3411 = vmatmul.mubr.bf16.gmra.mxu0 %v3235
  %v3412 = vpop.f32.mrf.mxu0
  %v3413 = vadd.f32 0.0, %v3412
  %v3414 = vpop.f32.mrf.mxu0
  %v3415 = vpop.f32.mrf.mxu0
  %v3416 = vadd.f32 0.0, %v3415
  %v3417 = vpop.f32.mrf.mxu0
  %3418 = vmatprep.mubr.bf16.mxu0 0
  %3419 = vmatmul.mubr.bf16.gmra.mxu0 %v3238
  %v3420 = vpop.f32.mrf.mxu0
  %v3421 = vadd.f32 0.0, %v3420
  %v3422 = vpop.f32.mrf.mxu0
  %v3423 = vpop.f32.mrf.mxu0
  %v3424 = vadd.f32 0.0, %v3423
  %v3425 = vpop.f32.mrf.mxu0
  %3426 = vmatprep.mubr.bf16.mxu0 0
  %3427 = vmatmul.mubr.bf16.gmra.mxu0 %v3241
  %v3428 = vpop.f32.mrf.mxu0
  %v3429 = vadd.f32 0.0, %v3428
  %v3430 = vpop.f32.mrf.mxu0
  %v3431 = vpop.f32.mrf.mxu0
  %v3432 = vadd.f32 0.0, %v3431
  %v3433 = vpop.f32.mrf.mxu0
  %3434 = vmatprep.mubr.bf16.mxu0 0
  %3435 = vmatmul.mubr.bf16.gmra.mxu0 %v3244
  %v3436 = vpop.f32.mrf.mxu0
  %v3437 = vadd.f32 0.0, %v3436
  %v3438 = vpop.f32.mrf.mxu0
  %v3439 = vpop.f32.mrf.mxu0
  %v3440 = vadd.f32 0.0, %v3439
  %v3441 = vpop.f32.mrf.mxu0
  %3442 = vmatprep.mubr.bf16.mxu0 0
  %3443 = vmatmul.mubr.bf16.gmra.mxu0 %v3247
  %v3444 = vpop.f32.mrf.mxu0
  %v3445 = vadd.f32 0.0, %v3444
  %v3446 = vpop.f32.mrf.mxu0
  %v3447 = vpop.f32.mrf.mxu0
  %v3448 = vadd.f32 0.0, %v3447
  %v3449 = vpop.f32.mrf.mxu0
  %3450 = vmatprep.mubr.bf16.mxu0 0
  %3451 = vmatmul.mubr.bf16.gmra.mxu0 %v3250
  %v3452 = vpop.f32.mrf.mxu0
  %v3453 = vadd.f32 0.0, %v3452
  %v3454 = vpop.f32.mrf.mxu0
  %v3455 = vpop.f32.mrf.mxu0
  %v3456 = vadd.f32 0.0, %v3455
  %v3457 = vpop.f32.mrf.mxu0
  %3458 = vmatprep.mubr.bf16.mxu0 0
  %3459 = vmatmul.mubr.bf16.gmra.mxu0 %v3253
  %v3460 = vpop.f32.mrf.mxu0
  %v3461 = vadd.f32 0.0, %v3460
  %v3462 = vpop.f32.mrf.mxu0
  %v3463 = vpop.f32.mrf.mxu0
  %v3464 = vadd.f32 0.0, %v3463
  %v3465 = vpop.f32.mrf.mxu0
  %3466 = vmatprep.mubr.bf16.mxu0 0
  %3467 = vmatmul.mubr.bf16.gmra.mxu0 %v3256
  %v3468 = vpop.f32.mrf.mxu0
  %v3469 = vadd.f32 0.0, %v3468
  %v3470 = vpop.f32.mrf.mxu0
  %v3471 = vpop.f32.mrf.mxu0
  %v3472 = vadd.f32 0.0, %v3471
  %v3473 = vpop.f32.mrf.mxu0
  %3474 = vmatprep.mubr.bf16.mxu0 0
  %3475 = vmatmul.mubr.bf16.gmra.mxu0 %v3259
  %v3476 = vpop.f32.mrf.mxu0
  %v3477 = vadd.f32 0.0, %v3476
  %v3478 = vpop.f32.mrf.mxu0
  %v3479 = vpop.f32.mrf.mxu0
  %v3480 = vadd.f32 0.0, %v3479
  %v3481 = vpop.f32.mrf.mxu0
  %3482 = vmatprep.mubr.bf16.mxu0 0
  %3483 = vmatmul.mubr.bf16.gmra.mxu0 %v3262
  %v3484 = vpop.f32.mrf.mxu0
  %v3485 = vadd.f32 0.0, %v3484
  %v3486 = vpop.f32.mrf.mxu0
  %v3487 = vpop.f32.mrf.mxu0
  %v3488 = vadd.f32 0.0, %v3487
  %v3489 = vpop.f32.mrf.mxu0
  %3490 = vmatprep.mubr.bf16.mxu0 0
  %3491 = vmatmul.mubr.bf16.gmra.mxu0 %v3265
  %v3492 = vpop.f32.mrf.mxu0
  %v3493 = vadd.f32 0.0, %v3492
  %v3494 = vpop.f32.mrf.mxu0
  %v3495 = vpop.f32.mrf.mxu0
  %v3496 = vadd.f32 0.0, %v3495
  %v3497 = vpop.f32.mrf.mxu0
  %3498 = vmatprep.mubr.bf16.mxu0 0
  %3499 = vmatmul.mubr.bf16.gmra.mxu0 %v3268
  %v3500 = vpop.f32.mrf.mxu0
  %v3501 = vadd.f32 0.0, %v3500
  %v3502 = vpop.f32.mrf.mxu0
  %v3503 = vpop.f32.mrf.mxu0
  %v3504 = vadd.f32 0.0, %v3503
  %v3505 = vpop.f32.mrf.mxu0
  %3506 = vmatprep.mubr.bf16.mxu0 0
  %3507 = vmatmul.mubr.bf16.gmra.mxu0 %v3271
  %v3508 = vpop.f32.mrf.mxu0
  %v3509 = vadd.f32 0.0, %v3508
  %v3510 = vpop.f32.mrf.mxu0
  %v3511 = vpop.f32.mrf.mxu0
  %v3512 = vadd.f32 0.0, %v3511
  %v3513 = vpop.f32.mrf.mxu0
  %3514 = vmatprep.mubr.bf16.mxu0 0
  %3515 = vmatmul.mubr.bf16.gmra.mxu0 %v3274
  %v3516 = vpop.f32.mrf.mxu0
  %v3517 = vadd.f32 0.0, %v3516
  %v3518 = vpop.f32.mrf.mxu0
  %v3519 = vpop.f32.mrf.mxu0
  %v3520 = vadd.f32 0.0, %v3519
  %v3521 = vpop.f32.mrf.mxu0
  %3522 = vmatprep.mubr.bf16.mxu0 0
  %3523 = vmatmul.mubr.bf16.gmra.mxu0 %v3277
  %v3524 = vpop.f32.mrf.mxu0
  %v3525 = vadd.f32 0.0, %v3524
  %v3526 = vpop.f32.mrf.mxu0
  %v3527 = vpop.f32.mrf.mxu0
  %v3528 = vadd.f32 0.0, %v3527
  %v3529 = vpop.f32.mrf.mxu0
  %3530 = vmatprep.mubr.bf16.mxu0 0
  %3531 = vmatmul.mubr.bf16.gmra.mxu0 %v3280
  %v3532 = vpop.f32.mrf.mxu0
  %v3533 = vadd.f32 0.0, %v3532
  %v3534 = vpop.f32.mrf.mxu0
  %v3535 = vpop.f32.mrf.mxu0
  %v3536 = vadd.f32 0.0, %v3535
  %v3537 = vpop.f32.mrf.mxu0
  %3538 = vmatprep.mubr.bf16.mxu0 0
  %3539 = vmatmul.mubr.bf16.gmra.mxu0 %v3283
  %v3540 = vpop.f32.mrf.mxu0
  %v3541 = vadd.f32 0.0, %v3540
  %v3542 = vpop.f32.mrf.mxu0
  %v3543 = vpop.f32.mrf.mxu0
  %v3544 = vadd.f32 0.0, %v3543
  %v3545 = vpop.f32.mrf.mxu0
  %3546 = vmatprep.mubr.bf16.mxu0 0
  %3547 = vmatmul.mubr.bf16.gmra.mxu0 %v3286
  %v3548 = vpop.f32.mrf.mxu0
  %v3549 = vadd.f32 0.0, %v3548
  %v3550 = vpop.f32.mrf.mxu0
  %v3551 = vpop.f32.mrf.mxu0
  %v3552 = vadd.f32 0.0, %v3551
  %v3553 = vpop.f32.mrf.mxu0
  %3554 = vmatprep.mubr.bf16.mxu0 0
  %3555 = vmatmul.mubr.bf16.gmra.mxu0 %v3289
  %v3556 = vpop.f32.mrf.mxu0
  %v3557 = vadd.f32 0.0, %v3556
  %v3558 = vpop.f32.mrf.mxu0
  %v3559 = vpop.f32.mrf.mxu0
  %v3560 = vadd.f32 0.0, %v3559
  %v3561 = vpop.f32.mrf.mxu0
  %3562 = vmatprep.mubr.bf16.mxu0 0
  %3563 = vmatmul.mubr.bf16.gmra.mxu0 %v3292
  %v3564 = vpop.f32.mrf.mxu0
  %v3565 = vadd.f32 0.0, %v3564
  %v3566 = vpop.f32.mrf.mxu0
  %v3567 = vpop.f32.mrf.mxu0
  %v3568 = vadd.f32 0.0, %v3567
  %v3569 = vpop.f32.mrf.mxu0
  %3570 = vmatprep.mubr.bf16.mxu0 0
  %3571 = vmatmul.mubr.bf16.gmra.mxu0 %v3295
  %v3572 = vpop.f32.mrf.mxu0
  %v3573 = vadd.f32 0.0, %v3572
  %v3574 = vpop.f32.mrf.mxu0
  %v3575 = vpop.f32.mrf.mxu0
  %v3576 = vadd.f32 0.0, %v3575
  %v3577 = vpop.f32.mrf.mxu0
  %3578 = vmatprep.mubr.bf16.mxu0 0
  %3579 = vmatmul.mubr.bf16.gmra.mxu0 %v3298
  %v3580 = vpop.f32.mrf.mxu0
  %v3581 = vadd.f32 0.0, %v3580
  %v3582 = vpop.f32.mrf.mxu0
  %v3583 = vpop.f32.mrf.mxu0
  %v3584 = vadd.f32 0.0, %v3583
  %v3585 = vpop.f32.mrf.mxu0
  %3586 = vmatprep.mubr.bf16.mxu0 0
  %3587 = vmatmul.mubr.bf16.gmra.mxu0 %v3301
  %v3588 = vpop.f32.mrf.mxu0
  %v3589 = vadd.f32 0.0, %v3588
  %v3590 = vpop.f32.mrf.mxu0
  %v3591 = vpop.f32.mrf.mxu0
  %v3592 = vadd.f32 0.0, %v3591
  %v3593 = vpop.f32.mrf.mxu0
  %3594 = vmatprep.mubr.bf16.mxu0 0
  %3595 = vmatmul.mubr.bf16.gmra.mxu0 %v3304
  %v3596 = vpop.f32.mrf.mxu0
  %v3597 = vadd.f32 0.0, %v3596
  %v3598 = vpop.f32.mrf.mxu0
  %v3599 = vpop.f32.mrf.mxu0
  %v3600 = vadd.f32 0.0, %v3599
  %v3601 = vpop.f32.mrf.mxu0
  %3602 = vmatprep.mubr.bf16.mxu0 0
  %3603 = vmatmul.mubr.bf16.gmra.mxu0 %v3307
  %v3604 = vpop.f32.mrf.mxu0
  %v3605 = vadd.f32 0.0, %v3604
  %v3606 = vpop.f32.mrf.mxu0
  %v3607 = vpop.f32.mrf.mxu0
  %v3608 = vadd.f32 0.0, %v3607
  %v3609 = vpop.f32.mrf.mxu0
  %3610 = vmatprep.mubr.bf16.mxu0 0
  %3611 = vmatmul.mubr.bf16.gmra.mxu0 %v3310
  %v3612 = vpop.f32.mrf.mxu0
  %v3613 = vadd.f32 0.0, %v3612
  %v3614 = vpop.f32.mrf.mxu0
  %v3615 = vpop.f32.mrf.mxu0
  %v3616 = vadd.f32 0.0, %v3615
  %v3617 = vpop.f32.mrf.mxu0
  %3618 = vmatprep.mubr.bf16.mxu0 0
  %3619 = vmatmul.mubr.bf16.gmra.mxu0 %v3313
  %v3620 = vpop.f32.mrf.mxu0
  %v3621 = vadd.f32 0.0, %v3620
  %v3622 = vpop.f32.mrf.mxu0
  %v3623 = vpop.f32.mrf.mxu0
  %v3624 = vadd.f32 0.0, %v3623
  %v3625 = vpop.f32.mrf.mxu0
  %3626 = vmatprep.mubr.bf16.mxu0 0
  %3627 = vmatmul.mubr.bf16.gmra.mxu0 %v3316
  %v3628 = vpop.f32.mrf.mxu0
  %v3629 = vadd.f32 0.0, %v3628
  %v3630 = vpop.f32.mrf.mxu0
  %v3631 = vpop.f32.mrf.mxu0
  %v3632 = vadd.f32 0.0, %v3631
  %v3633 = vpop.f32.mrf.mxu0
  %3634 = vmatprep.mubr.bf16.mxu0 0
  %3635 = vmatmul.mubr.bf16.gmra.mxu0 %v3319
  %v3636 = vpop.f32.mrf.mxu0
  %v3637 = vadd.f32 0.0, %v3636
  %v3638 = vpop.f32.mrf.mxu0
  %v3639 = vpop.f32.mrf.mxu0
  %v3640 = vadd.f32 0.0, %v3639
  %v3641 = vpop.f32.mrf.mxu0
  %3642 = vmatprep.mubr.bf16.mxu0 0
  %3643 = vmatmul.mubr.bf16.gmra.mxu0 %v3322
  %v3644 = vpop.f32.mrf.mxu0
  %v3645 = vadd.f32 0.0, %v3644
  %v3646 = vpop.f32.mrf.mxu0
  %v3647 = vpop.f32.mrf.mxu0
  %v3648 = vadd.f32 0.0, %v3647
  %v3649 = vpop.f32.mrf.mxu0
  %3650 = vmatprep.mubr.bf16.mxu0 0
  %3651 = vmatmul.mubr.bf16.gmra.mxu0 %v3325
  %v3652 = vpop.f32.mrf.mxu0
  %v3653 = vadd.f32 0.0, %v3652
  %v3654 = vpop.f32.mrf.mxu0
  %v3655 = vpop.f32.mrf.mxu0
  %v3656 = vadd.f32 0.0, %v3655
  %v3657 = vpop.f32.mrf.mxu0
  %3658 = vmatprep.mubr.bf16.mxu0 0
  %3659 = vmatmul.mubr.bf16.gmra.mxu0 %v3328
  %v3660 = vpop.f32.mrf.mxu0
  %v3661 = vadd.f32 0.0, %v3660
  %v3662 = vpop.f32.mrf.mxu0
  %v3663 = vpop.f32.mrf.mxu0
  %v3664 = vadd.f32 0.0, %v3663
  %v3665 = vpop.f32.mrf.mxu0
  %3666 = vmatprep.mubr.bf16.mxu0 0
  %3667 = vmatmul.mubr.bf16.gmra.mxu0 %v3331
  %v3668 = vpop.f32.mrf.mxu0
  %v3669 = vadd.f32 0.0, %v3668
  %v3670 = vpop.f32.mrf.mxu0
  %v3671 = vpop.f32.mrf.mxu0
  %v3672 = vadd.f32 0.0, %v3671
  %v3673 = vpop.f32.mrf.mxu0
  %3674 = vmatprep.mubr.bf16.mxu0 0
  %3675 = vmatmul.mubr.bf16.gmra.mxu0 %v3334
  %v3676 = vpop.f32.mrf.mxu0
  %v3677 = vadd.f32 0.0, %v3676
  %v3678 = vpop.f32.mrf.mxu0
  %v3679 = vpop.f32.mrf.mxu0
  %v3680 = vadd.f32 0.0, %v3679
  %v3681 = vpop.f32.mrf.mxu0
  %3682 = vmatprep.mubr.bf16.mxu0 0
  %3683 = vmatmul.mubr.bf16.gmra.mxu0 %v3337
  %v3684 = vpop.f32.mrf.mxu0
  %v3685 = vadd.f32 0.0, %v3684
  %v3686 = vpop.f32.mrf.mxu0
  %v3687 = vpop.f32.mrf.mxu0
  %v3688 = vadd.f32 0.0, %v3687
  %v3689 = vpop.f32.mrf.mxu0
  %3690 = vmatprep.mubr.bf16.mxu0 0
  %3691 = vmatmul.mubr.bf16.gmra.mxu0 %v3340
  %v3692 = vpop.f32.mrf.mxu0
  %v3693 = vadd.f32 0.0, %v3692
  %v3694 = vpop.f32.mrf.mxu0
  %v3695 = vpop.f32.mrf.mxu0
  %v3696 = vadd.f32 0.0, %v3695
  %v3697 = vpop.f32.mrf.mxu0
  %3698 = vmatprep.mubr.bf16.mxu0 0
  %3699 = vmatmul.mubr.bf16.gmra.mxu0 %v3343
  %v3700 = vpop.f32.mrf.mxu0
  %v3701 = vadd.f32 0.0, %v3700
  %v3702 = vpop.f32.mrf.mxu0
  %v3703 = vpop.f32.mrf.mxu0
  %v3704 = vadd.f32 0.0, %v3703
  %v3705 = vpop.f32.mrf.mxu0
  %3706 = vmatprep.mubr.bf16.mxu0 0
  %3707 = vmatmul.mubr.bf16.gmra.mxu0 %v3346
  %v3708 = vpop.f32.mrf.mxu0
  %v3709 = vadd.f32 0.0, %v3708
  %v3710 = vpop.f32.mrf.mxu0
  %v3711 = vpop.f32.mrf.mxu0
  %v3712 = vadd.f32 0.0, %v3711
  %v3713 = vpop.f32.mrf.mxu0
  %3714 = vmatprep.mubr.bf16.mxu0 0
  %3715 = vmatmul.mubr.bf16.gmra.mxu0 %v3349
  %v3716 = vpop.f32.mrf.mxu0
  %v3717 = vadd.f32 0.0, %v3716
  %v3718 = vpop.f32.mrf.mxu0
  %v3719 = vpop.f32.mrf.mxu0
  %v3720 = vadd.f32 0.0, %v3719
  %v3721 = vpop.f32.mrf.mxu0
  %3722 = vdwg.mxu0
  %v3723 = vadd.f32 %v2755, %v3389
  %v3724 = vadd.f32 %v2756, %v3392
  %v3725 = vadd.f32 %v2757, %v3397
  %v3726 = vadd.f32 %v2758, %v3400
  %v3727 = vadd.f32 %v2759, %v3405
  %v3728 = vadd.f32 %v2760, %v3408
  %v3729 = vadd.f32 %v2761, %v3413
  %v3730 = vadd.f32 %v2762, %v3416
  %v3731 = vadd.f32 %v2763, %v3421
  %v3732 = vadd.f32 %v2764, %v3424
  %v3733 = vadd.f32 %v2765, %v3429
  %v3734 = vadd.f32 %v2766, %v3432
  %v3735 = vadd.f32 %v2767, %v3437
  %v3736 = vadd.f32 %v2768, %v3440
  %v3737 = vadd.f32 %v2769, %v3445
  %v3738 = vadd.f32 %v2770, %v3448
  %v3739 = vadd.f32 %v2771, %v3453
  %v3740 = vadd.f32 %v2772, %v3456
  %v3741 = vadd.f32 %v2773, %v3461
  %v3742 = vadd.f32 %v2774, %v3464
  %v3743 = vadd.f32 %v2775, %v3469
  %v3744 = vadd.f32 %v2776, %v3472
  %v3745 = vadd.f32 %v2777, %v3477
  %v3746 = vadd.f32 %v2778, %v3480
  %v3747 = vadd.f32 %v2779, %v3485
  %v3748 = vadd.f32 %v2780, %v3488
  %v3749 = vadd.f32 %v2781, %v3493
  %v3750 = vadd.f32 %v2782, %v3496
  %v3751 = vadd.f32 %v2783, %v3501
  %v3752 = vadd.f32 %v2784, %v3504
  %v3753 = vadd.f32 %v2785, %v3509
  %v3754 = vadd.f32 %v2786, %v3512
  %v3755 = vadd.f32 %v2787, %v3517
  %v3756 = vadd.f32 %v2788, %v3520
  %v3757 = vadd.f32 %v2789, %v3525
  %v3758 = vadd.f32 %v2790, %v3528
  %v3759 = vadd.f32 %v2791, %v3533
  %v3760 = vadd.f32 %v2792, %v3536
  %v3761 = vadd.f32 %v2793, %v3541
  %v3762 = vadd.f32 %v2794, %v3544
  %v3763 = vadd.f32 %v2795, %v3549
  %v3764 = vadd.f32 %v2796, %v3552
  %v3765 = vadd.f32 %v2797, %v3557
  %v3766 = vadd.f32 %v2798, %v3560
  %v3767 = vadd.f32 %v2799, %v3565
  %v3768 = vadd.f32 %v2800, %v3568
  %v3769 = vadd.f32 %v2801, %v3573
  %v3770 = vadd.f32 %v2802, %v3576
  %v3771 = vadd.f32 %v2803, %v3581
  %v3772 = vadd.f32 %v2804, %v3584
  %v3773 = vadd.f32 %v2805, %v3589
  %v3774 = vadd.f32 %v2806, %v3592
  %v3775 = vadd.f32 %v2807, %v3597
  %v3776 = vadd.f32 %v2808, %v3600
  %v3777 = vadd.f32 %v2809, %v3605
  %v3778 = vadd.f32 %v2810, %v3608
  %v3779 = vadd.f32 %v2811, %v3613
  %v3780 = vadd.f32 %v2812, %v3616
  %v3781 = vadd.f32 %v2813, %v3621
  %v3782 = vadd.f32 %v2814, %v3624
  %v3783 = vadd.f32 %v2815, %v3629
  %v3784 = vadd.f32 %v2816, %v3632
  %v3785 = vadd.f32 %v2817, %v3637
  %v3786 = vadd.f32 %v2818, %v3640
  %v3787 = vadd.f32 %v2819, %v3645
  %v3788 = vadd.f32 %v2820, %v3648
  %v3789 = vadd.f32 %v2821, %v3653
  %v3790 = vadd.f32 %v2822, %v3656
  %v3791 = vadd.f32 %v2823, %v3661
  %v3792 = vadd.f32 %v2824, %v3664
  %v3793 = vadd.f32 %v2825, %v3669
  %v3794 = vadd.f32 %v2826, %v3672
  %v3795 = vadd.f32 %v2827, %v3677
  %v3796 = vadd.f32 %v2828, %v3680
  %v3797 = vadd.f32 %v2829, %v3685
  %v3798 = vadd.f32 %v2830, %v3688
  %v3799 = vadd.f32 %v2831, %v3693
  %v3800 = vadd.f32 %v2832, %v3696
  %v3801 = vadd.f32 %v2833, %v3701
  %v3802 = vadd.f32 %v2834, %v3704
  %v3803 = vadd.f32 %v2835, %v3709
  %v3804 = vadd.f32 %v2836, %v3712
  %v3805 = vadd.f32 %v2837, %v3717
  %v3806 = vadd.f32 %v2838, %v3720
  %3807 = vst [vmem:[%s4] sm:$0xff] %v3723
  %3808 = vst [vmem:[%s4 + $0x8] sm:$0xff] %v3724
  %3809 = vst [vmem:[%s4 + $0x10] sm:$0xff] %v3725
  %3810 = vst [vmem:[%s4 + $0x18] sm:$0xff] %v3726
  %3811 = vst [vmem:[%s4 + $0x20] sm:$0xff] %v3727
  %3812 = vst [vmem:[%s4 + $0x28] sm:$0xff] %v3728
  %3813 = vst [vmem:[%s4 + $0x30] sm:$0xff] %v3729
  %3814 = vst [vmem:[%s4 + $0x38] sm:$0xff] %v3730
  %3815 = vst [vmem:[%s4 + $0x40] sm:$0xff] %v3731
  %3816 = vst [vmem:[%s4 + $0x48] sm:$0xff] %v3732
  %3817 = vst [vmem:[%s4 + $0x50] sm:$0xff] %v3733
  %3818 = vst [vmem:[%s4 + $0x58] sm:$0xff] %v3734
  %3819 = vst [vmem:[%s4 + $0x60] sm:$0xff] %v3735
  %3820 = vst [vmem:[%s4 + $0x68] sm:$0xff] %v3736
  %3821 = vst [vmem:[%s4 + $0x70] sm:$0xff] %v3737
  %3822 = vst [vmem:[%s4 + $0x78] sm:$0xff] %v3738
  %3823 = vst [vmem:[%s4 + $0x80] sm:$0xff] %v3739
  %3824 = vst [vmem:[%s4 + $0x88] sm:$0xff] %v3740
  %3825 = vst [vmem:[%s4 + $0x90] sm:$0xff] %v3741
  %3826 = vst [vmem:[%s4 + $0x98] sm:$0xff] %v3742
  %3827 = vst [vmem:[%s4 + $0xa0] sm:$0xff] %v3743
  %3828 = vst [vmem:[%s4 + $0xa8] sm:$0xff] %v3744
  %3829 = vst [vmem:[%s4 + $0xb0] sm:$0xff] %v3745
  %3830 = vst [vmem:[%s4 + $0xb8] sm:$0xff] %v3746
  %3831 = vst [vmem:[%s4 + $0xc0] sm:$0xff] %v3747
  %3832 = vst [vmem:[%s4 + $0xc8] sm:$0xff] %v3748
  %3833 = vst [vmem:[%s4 + $0xd0] sm:$0xff] %v3749
  %3834 = vst [vmem:[%s4 + $0xd8] sm:$0xff] %v3750
  %3835 = vst [vmem:[%s4 + $0xe0] sm:$0xff] %v3751
  %3836 = vst [vmem:[%s4 + $0xe8] sm:$0xff] %v3752
  %3837 = vst [vmem:[%s4 + $0xf0] sm:$0xff] %v3753
  %3838 = vst [vmem:[%s4 + $0xf8] sm:$0xff] %v3754
  %3839 = vst [vmem:[%s4 + $0x100] sm:$0xff] %v3755
  %3840 = vst [vmem:[%s4 + $0x108] sm:$0xff] %v3756
  %3841 = vst [vmem:[%s4 + $0x110] sm:$0xff] %v3757
  %3842 = vst [vmem:[%s4 + $0x118] sm:$0xff] %v3758
  %3843 = vst [vmem:[%s4 + $0x120] sm:$0xff] %v3759
  %3844 = vst [vmem:[%s4 + $0x128] sm:$0xff] %v3760
  %3845 = vst [vmem:[%s4 + $0x130] sm:$0xff] %v3761
  %3846 = vst [vmem:[%s4 + $0x138] sm:$0xff] %v3762
  %3847 = vst [vmem:[%s4 + $0x140] sm:$0xff] %v3763
  %3848 = vst [vmem:[%s4 + $0x148] sm:$0xff] %v3764
  %3849 = vst [vmem:[%s4 + $0x150] sm:$0xff] %v3765
  %3850 = vst [vmem:[%s4 + $0x158] sm:$0xff] %v3766
  %3851 = vst [vmem:[%s4 + $0x160] sm:$0xff] %v3767
  %3852 = vst [vmem:[%s4 + $0x168] sm:$0xff] %v3768
  %3853 = vst [vmem:[%s4 + $0x170] sm:$0xff] %v3769
  %3854 = vst [vmem:[%s4 + $0x178] sm:$0xff] %v3770
  %3855 = vst [vmem:[%s4 + $0x180] sm:$0xff] %v3771
  %3856 = vst [vmem:[%s4 + $0x188] sm:$0xff] %v3772
  %3857 = vst [vmem:[%s4 + $0x190] sm:$0xff] %v3773
  %3858 = vst [vmem:[%s4 + $0x198] sm:$0xff] %v3774
  %3859 = vst [vmem:[%s4 + $0x1a0] sm:$0xff] %v3775
  %3860 = vst [vmem:[%s4 + $0x1a8] sm:$0xff] %v3776
  %3861 = vst [vmem:[%s4 + $0x1b0] sm:$0xff] %v3777
  %3862 = vst [vmem:[%s4 + $0x1b8] sm:$0xff] %v3778
  %3863 = vst [vmem:[%s4 + $0x1c0] sm:$0xff] %v3779
  %3864 = vst [vmem:[%s4 + $0x1c8] sm:$0xff] %v3780
  %3865 = vst [vmem:[%s4 + $0x1d0] sm:$0xff] %v3781
  %3866 = vst [vmem:[%s4 + $0x1d8] sm:$0xff] %v3782
  %3867 = vst [vmem:[%s4 + $0x1e0] sm:$0xff] %v3783
  %3868 = vst [vmem:[%s4 + $0x1e8] sm:$0xff] %v3784
  %3869 = vst [vmem:[%s4 + $0x1f0] sm:$0xff] %v3785
  %3870 = vst [vmem:[%s4 + $0x1f8] sm:$0xff] %v3786
  %3871 = vst [vmem:[%s4 + $0x200] sm:$0xff] %v3787
  %3872 = vst [vmem:[%s4 + $0x208] sm:$0xff] %v3788
  %3873 = vst [vmem:[%s4 + $0x210] sm:$0xff] %v3789
  %3874 = vst [vmem:[%s4 + $0x218] sm:$0xff] %v3790
  %3875 = vst [vmem:[%s4 + $0x220] sm:$0xff] %v3791
  %3876 = vst [vmem:[%s4 + $0x228] sm:$0xff] %v3792
  %3877 = vst [vmem:[%s4 + $0x230] sm:$0xff] %v3793
  %3878 = vst [vmem:[%s4 + $0x238] sm:$0xff] %v3794
  %3879 = vst [vmem:[%s4 + $0x240] sm:$0xff] %v3795
  %3880 = vst [vmem:[%s4 + $0x248] sm:$0xff] %v3796
  %3881 = vst [vmem:[%s4 + $0x250] sm:$0xff] %v3797
  %3882 = vst [vmem:[%s4 + $0x258] sm:$0xff] %v3798
  %3883 = vst [vmem:[%s4 + $0x260] sm:$0xff] %v3799
  %3884 = vst [vmem:[%s4 + $0x268] sm:$0xff] %v3800
  %3885 = vst [vmem:[%s4 + $0x270] sm:$0xff] %v3801
  %3886 = vst [vmem:[%s4 + $0x278] sm:$0xff] %v3802
  %3887 = vst [vmem:[%s4 + $0x280] sm:$0xff] %v3803
  %3888 = vst [vmem:[%s4 + $0x288] sm:$0xff] %v3804
  %3889 = vst [vmem:[%s4 + $0x290] sm:$0xff] %v3805
  %3890 = vst [vmem:[%s4 + $0x298] sm:$0xff] %v3806
  %v3891 = vld [vmem:[%s4] sm:$0xff]
  %v3892 = vld [vmem:[%s4 + $0x8] sm:$0xff]
  %v3893 = vld [vmem:[%s4 + $0x10] sm:$0xff]
  %v3894 = vld [vmem:[%s4 + $0x18] sm:$0xff]
  %v3895 = vld [vmem:[%s4 + $0x20] sm:$0xff]
  %v3896 = vld [vmem:[%s4 + $0x28] sm:$0xff]
  %v3897 = vld [vmem:[%s4 + $0x30] sm:$0xff]
  %v3898 = vld [vmem:[%s4 + $0x38] sm:$0xff]
  %v3899 = vld [vmem:[%s4 + $0x40] sm:$0xff]
  %v3900 = vld [vmem:[%s4 + $0x48] sm:$0xff]
  %v3901 = vld [vmem:[%s4 + $0x50] sm:$0xff]
  %v3902 = vld [vmem:[%s4 + $0x58] sm:$0xff]
  %v3903 = vld [vmem:[%s4 + $0x60] sm:$0xff]
  %v3904 = vld [vmem:[%s4 + $0x68] sm:$0xff]
  %v3905 = vld [vmem:[%s4 + $0x70] sm:$0xff]
  %v3906 = vld [vmem:[%s4 + $0x78] sm:$0xff]
  %v3907 = vld [vmem:[%s4 + $0x80] sm:$0xff]
  %v3908 = vld [vmem:[%s4 + $0x88] sm:$0xff]
  %v3909 = vld [vmem:[%s4 + $0x90] sm:$0xff]
  %v3910 = vld [vmem:[%s4 + $0x98] sm:$0xff]
  %v3911 = vld [vmem:[%s4 + $0xa0] sm:$0xff]
  %v3912 = vld [vmem:[%s4 + $0xa8] sm:$0xff]
  %v3913 = vld [vmem:[%s4 + $0xb0] sm:$0xff]
  %v3914 = vld [vmem:[%s4 + $0xb8] sm:$0xff]
  %v3915 = vld [vmem:[%s4 + $0xc0] sm:$0xff]
  %v3916 = vld [vmem:[%s4 + $0xc8] sm:$0xff]
  %v3917 = vld [vmem:[%s4 + $0xd0] sm:$0xff]
  %v3918 = vld [vmem:[%s4 + $0xd8] sm:$0xff]
  %v3919 = vld [vmem:[%s4 + $0xe0] sm:$0xff]
  %v3920 = vld [vmem:[%s4 + $0xe8] sm:$0xff]
  %v3921 = vld [vmem:[%s4 + $0xf0] sm:$0xff]
  %v3922 = vld [vmem:[%s4 + $0xf8] sm:$0xff]
  %v3923 = vld [vmem:[%s4 + $0x100] sm:$0xff]
  %v3924 = vld [vmem:[%s4 + $0x108] sm:$0xff]
  %v3925 = vld [vmem:[%s4 + $0x110] sm:$0xff]
  %v3926 = vld [vmem:[%s4 + $0x118] sm:$0xff]
  %v3927 = vld [vmem:[%s4 + $0x120] sm:$0xff]
  %v3928 = vld [vmem:[%s4 + $0x128] sm:$0xff]
  %v3929 = vld [vmem:[%s4 + $0x130] sm:$0xff]
  %v3930 = vld [vmem:[%s4 + $0x138] sm:$0xff]
  %v3931 = vld [vmem:[%s4 + $0x140] sm:$0xff]
  %v3932 = vld [vmem:[%s4 + $0x148] sm:$0xff]
  %v3933 = vld [vmem:[%s4 + $0x150] sm:$0xff]
  %v3934 = vld [vmem:[%s4 + $0x158] sm:$0xff]
  %v3935 = vld [vmem:[%s4 + $0x160] sm:$0xff]
  %v3936 = vld [vmem:[%s4 + $0x168] sm:$0xff]
  %v3937 = vld [vmem:[%s4 + $0x170] sm:$0xff]
  %v3938 = vld [vmem:[%s4 + $0x178] sm:$0xff]
  %v3939 = vld [vmem:[%s4 + $0x180] sm:$0xff]
  %v3940 = vld [vmem:[%s4 + $0x188] sm:$0xff]
  %v3941 = vld [vmem:[%s4 + $0x190] sm:$0xff]
  %v3942 = vld [vmem:[%s4 + $0x198] sm:$0xff]
  %v3943 = vld [vmem:[%s4 + $0x1a0] sm:$0xff]
  %v3944 = vld [vmem:[%s4 + $0x1a8] sm:$0xff]
  %v3945 = vld [vmem:[%s4 + $0x1b0] sm:$0xff]
  %v3946 = vld [vmem:[%s4 + $0x1b8] sm:$0xff]
  %v3947 = vld [vmem:[%s4 + $0x1c0] sm:$0xff]
  %v3948 = vld [vmem:[%s4 + $0x1c8] sm:$0xff]
  %v3949 = vld [vmem:[%s4 + $0x1d0] sm:$0xff]
  %v3950 = vld [vmem:[%s4 + $0x1d8] sm:$0xff]
  %v3951 = vld [vmem:[%s4 + $0x1e0] sm:$0xff]
  %v3952 = vld [vmem:[%s4 + $0x1e8] sm:$0xff]
  %v3953 = vld [vmem:[%s4 + $0x1f0] sm:$0xff]
  %v3954 = vld [vmem:[%s4 + $0x1f8] sm:$0xff]
  %v3955 = vld [vmem:[%s4 + $0x200] sm:$0xff]
  %v3956 = vld [vmem:[%s4 + $0x208] sm:$0xff]
  %v3957 = vld [vmem:[%s4 + $0x210] sm:$0xff]
  %v3958 = vld [vmem:[%s4 + $0x218] sm:$0xff]
  %v3959 = vld [vmem:[%s4 + $0x220] sm:$0xff]
  %v3960 = vld [vmem:[%s4 + $0x228] sm:$0xff]
  %v3961 = vld [vmem:[%s4 + $0x230] sm:$0xff]
  %v3962 = vld [vmem:[%s4 + $0x238] sm:$0xff]
  %v3963 = vld [vmem:[%s4 + $0x240] sm:$0xff]
  %v3964 = vld [vmem:[%s4 + $0x248] sm:$0xff]
  %v3965 = vld [vmem:[%s4 + $0x250] sm:$0xff]
  %v3966 = vld [vmem:[%s4 + $0x258] sm:$0xff]
  %v3967 = vld [vmem:[%s4 + $0x260] sm:$0xff]
  %v3968 = vld [vmem:[%s4 + $0x268] sm:$0xff]
  %v3969 = vld [vmem:[%s4 + $0x270] sm:$0xff]
  %v3970 = vld [vmem:[%s4 + $0x278] sm:$0xff]
  %v3971 = vld [vmem:[%s4 + $0x280] sm:$0xff]
  %v3972 = vld [vmem:[%s4 + $0x288] sm:$0xff]
  %v3973 = vld [vmem:[%s4 + $0x290] sm:$0xff]
  %v3974 = vld [vmem:[%s4 + $0x298] sm:$0xff]
  %v3975 = vld [vmem:[#allocation2 + $0x8] sm:$0xe]
  %v3976 = vld [vmem:[#allocation2 + $0xc] sm:$0xf]
  %v3977 = vld [vmem:[#allocation2 + $0x10] sm:$0xf]
  %v3978 = vld [vmem:[#allocation2 + $0x14] sm:$0xf]
  %v3979 = vld [vmem:[#allocation2 + $0x18] sm:$0xf]
  %v3980 = vld [vmem:[#allocation2 + $0x1c] sm:$0xf]
  %v3981 = vld [vmem:[#allocation2 + $0x20] sm:$0xf]
  %v3982 = vld [vmem:[#allocation2 + $0x24] sm:$0xf]
  %v3983 = vld [vmem:[#allocation2 + $0x28] sm:$0xf]
  %v3984 = vld [vmem:[#allocation2 + $0x2c] sm:$0xf]
  %v3985 = vld [vmem:[#allocation2 + $0x30] sm:$0xf]
  %v3986 = vld [vmem:[#allocation2 + $0x34] sm:$0xf]
  %v3987 = vld [vmem:[#allocation2 + $0x38] sm:$0xf]
  %v3988 = vld [vmem:[#allocation2 + $0x3c] sm:$0xf]
  %v3989 = vld [vmem:[#allocation2 + $0x40] sm:$0xf]
  %v3990 = vld [vmem:[#allocation2 + $0x44] sm:$0xf]
  %v3991 = vld [vmem:[#allocation2 + $0x48] sm:$0xf]
  %v3992 = vld [vmem:[#allocation2 + $0x4c] sm:$0xf]
  %v3993 = vld [vmem:[#allocation2 + $0x50] sm:$0xf]
  %v3994 = vld [vmem:[#allocation2 + $0x54] sm:$0xf]
  %v3995 = vld [vmem:[#allocation2 + $0x58] sm:$0xf]
  %v3996 = vld [vmem:[#allocation2 + $0x5c] sm:$0xf]
  %v3997 = vld [vmem:[#allocation2 + $0x60] sm:$0xf]
  %v3998 = vld [vmem:[#allocation2 + $0x64] sm:$0xf]
  %v3999 = vld [vmem:[#allocation2 + $0x68] sm:$0xf]
  %v4000 = vld [vmem:[#allocation2 + $0x6c] sm:$0xf]
  %v4001 = vld [vmem:[#allocation2 + $0x70] sm:$0xf]
  %v4002 = vld [vmem:[#allocation2 + $0x74] sm:$0xf]
  %v4003 = vld [vmem:[#allocation2 + $0x78] sm:$0xf]
  %v4004 = vld [vmem:[#allocation2 + $0x7c] sm:$0xf]
  %v4005 = vld [vmem:[#allocation2 + $0x80] sm:$0xf]
  %v4006 = vld [vmem:[#allocation2 + $0x84] sm:$0xf]
  %v4007 = vld [vmem:[#allocation2 + $0x88] sm:$0xf]
  %v4008 = vld [vmem:[#allocation2 + $0x8c] sm:$0xf]
  %v4009 = vld [vmem:[#allocation2 + $0x90] sm:$0xf]
  %v4010 = vld [vmem:[#allocation2 + $0x94] sm:$0xf]
  %v4011 = vld [vmem:[#allocation2 + $0x98] sm:$0xf]
  %v4012 = vld [vmem:[#allocation2 + $0x9c] sm:$0xf]
  %v4013 = vld [vmem:[#allocation2 + $0xa0] sm:$0xf]
  %v4014 = vld [vmem:[#allocation2 + $0xa4] sm:$0xf]
  %v4015 = vld [vmem:[#allocation2 + $0xa8] sm:$0xf]
  %v4016 = vld [vmem:[#allocation2 + $0xac] sm:$0xf]
  %v4017 = vld [vmem:[#allocation2 + $0xb0] sm:$0xf]
  %v4018 = vld [vmem:[#allocation2 + $0xb4] sm:$0xf]
  %v4019 = vld [vmem:[#allocation2 + $0xb8] sm:$0xf]
  %v4020 = vld [vmem:[#allocation2 + $0xbc] sm:$0xf]
  %v4021 = vld [vmem:[#allocation2 + $0xc0] sm:$0xf]
  %v4022 = vld [vmem:[#allocation2 + $0xc4] sm:$0xf]
  %v4023 = vld [vmem:[#allocation2 + $0xc8] sm:$0xf]
  %v4024 = vld [vmem:[#allocation2 + $0xcc] sm:$0xf]
  %v4025 = vld [vmem:[#allocation2 + $0xd0] sm:$0xf]
  %v4026 = vld [vmem:[#allocation2 + $0xd4] sm:$0xf]
  %v4027 = vld [vmem:[#allocation2 + $0xd8] sm:$0xf]
  %v4028 = vld [vmem:[#allocation2 + $0xdc] sm:$0xf]
  %v4029 = vld [vmem:[#allocation2 + $0xe0] sm:$0xf]
  %v4030 = vld [vmem:[#allocation2 + $0xe4] sm:$0xf]
  %v4031 = vld [vmem:[#allocation2 + $0xe8] sm:$0xf]
  %v4032 = vld [vmem:[#allocation2 + $0xec] sm:$0xf]
  %v4033 = vld [vmem:[#allocation2 + $0xf0] sm:$0xf]
  %v4034 = vld [vmem:[#allocation2 + $0xf4] sm:$0xf]
  %v4035 = vld [vmem:[#allocation2 + $0xf8] sm:$0xf]
  %v4036 = vld [vmem:[#allocation2 + $0xfc] sm:$0xf]
  %v4037 = vld [vmem:[#allocation2 + $0x100] sm:$0xf]
  %v4038 = vld [vmem:[#allocation2 + $0x104] sm:$0xf]
  %v4039 = vld [vmem:[#allocation2 + $0x108] sm:$0xf]
  %v4040 = vld [vmem:[#allocation2 + $0x10c] sm:$0xf]
  %v4041 = vld [vmem:[#allocation2 + $0x110] sm:$0xf]
  %v4042 = vld [vmem:[#allocation2 + $0x114] sm:$0xf]
  %v4043 = vld [vmem:[#allocation2 + $0x118] sm:$0xf]
  %v4044 = vld [vmem:[#allocation2 + $0x11c] sm:$0xf]
  %v4045 = vld [vmem:[#allocation2 + $0x120] sm:$0xf]
  %v4046 = vld [vmem:[#allocation2 + $0x124] sm:$0xf]
  %v4047 = vld [vmem:[#allocation2 + $0x128] sm:$0xf]
  %v4048 = vld [vmem:[#allocation2 + $0x12c] sm:$0xf]
  %v4049 = vld [vmem:[#allocation2 + $0x130] sm:$0xf]
  %v4050 = vld [vmem:[#allocation2 + $0x134] sm:$0xf]
  %v4051 = vld [vmem:[#allocation2 + $0x138] sm:$0xf]
  %v4052 = vld [vmem:[#allocation2 + $0x13c] sm:$0xf]
  %v4053 = vld [vmem:[#allocation2 + $0x140] sm:$0xf]
  %v4054 = vld [vmem:[#allocation2 + $0x144] sm:$0xf]
  %v4055 = vld [vmem:[#allocation2 + $0x148] sm:$0xf]
  %v4056 = vld [vmem:[#allocation2 + $0x14c] sm:$0xf]
  %v4057 = vld [vmem:[#allocation2 + $0x150] sm:$0xf]
  %v4058 = vld [vmem:[#allocation2 + $0x154] sm:$0xf]
  %v4059 = vld [vmem:[#allocation2 + $0x158] sm:$0x1]
  %s4060 = scalar_lea.vmem %s2, 12
  %v4061 = vld [vmem:[%s4060] sm:$0xf]
  %v4147 = vunpack.c.l.b16 %v3975
  %v4148 = vunpack.c.l.b16 %v3976
  %v4149 = vunpack.c.l.b16 %v3977
  %v4150 = vunpack.c.l.b16 %v3978
  %v4151 = vunpack.c.l.b16 %v3979
  %v4152 = vunpack.c.l.b16 %v3980
  %v4153 = vunpack.c.l.b16 %v3981
  %v4154 = vunpack.c.l.b16 %v3982
  %v4155 = vunpack.c.l.b16 %v3983
  %v4156 = vunpack.c.l.b16 %v3984
  %v4157 = vunpack.c.l.b16 %v3985
  %v4158 = vunpack.c.l.b16 %v3986
  %v4159 = vunpack.c.l.b16 %v3987
  %v4160 = vunpack.c.l.b16 %v3988
  %v4161 = vunpack.c.l.b16 %v3989
  %v4162 = vunpack.c.l.b16 %v3990
  %v4163 = vunpack.c.l.b16 %v3991
  %v4164 = vunpack.c.l.b16 %v3992
  %v4165 = vunpack.c.l.b16 %v3993
  %v4166 = vunpack.c.l.b16 %v3994
  %v4167 = vunpack.c.l.b16 %v3995
  %v4168 = vunpack.c.l.b16 %v3996
  %v4169 = vunpack.c.l.b16 %v3997
  %v4170 = vunpack.c.l.b16 %v3998
  %v4171 = vunpack.c.l.b16 %v3999
  %v4172 = vunpack.c.l.b16 %v4000
  %v4173 = vunpack.c.l.b16 %v4001
  %v4174 = vunpack.c.l.b16 %v4002
  %v4175 = vunpack.c.l.b16 %v4003
  %v4176 = vunpack.c.l.b16 %v4004
  %v4177 = vunpack.c.l.b16 %v4005
  %v4178 = vunpack.c.l.b16 %v4006
  %v4179 = vunpack.c.l.b16 %v4007
  %v4180 = vunpack.c.l.b16 %v4008
  %v4181 = vunpack.c.l.b16 %v4009
  %v4182 = vunpack.c.l.b16 %v4010
  %v4183 = vunpack.c.l.b16 %v4011
  %v4184 = vunpack.c.l.b16 %v4012
  %v4185 = vunpack.c.l.b16 %v4013
  %v4186 = vunpack.c.l.b16 %v4014
  %v4187 = vunpack.c.l.b16 %v4015
  %v4188 = vunpack.c.l.b16 %v4016
  %v4189 = vunpack.c.l.b16 %v4017
  %v4190 = vunpack.c.l.b16 %v4018
  %v4191 = vunpack.c.l.b16 %v4019
  %v4192 = vunpack.c.l.b16 %v4020
  %v4193 = vunpack.c.l.b16 %v4021
  %v4194 = vunpack.c.l.b16 %v4022
  %v4195 = vunpack.c.l.b16 %v4023
  %v4196 = vunpack.c.l.b16 %v4024
  %v4197 = vunpack.c.l.b16 %v4025
  %v4198 = vunpack.c.l.b16 %v4026
  %v4199 = vunpack.c.l.b16 %v4027
  %v4200 = vunpack.c.l.b16 %v4028
  %v4201 = vunpack.c.l.b16 %v4029
  %v4202 = vunpack.c.l.b16 %v4030
  %v4203 = vunpack.c.l.b16 %v4031
  %v4204 = vunpack.c.l.b16 %v4032
  %v4205 = vunpack.c.l.b16 %v4033
  %v4206 = vunpack.c.l.b16 %v4034
  %v4207 = vunpack.c.l.b16 %v4035
  %v4208 = vunpack.c.l.b16 %v4036
  %v4209 = vunpack.c.l.b16 %v4037
  %v4210 = vunpack.c.l.b16 %v4038
  %v4211 = vunpack.c.l.b16 %v4039
  %v4212 = vunpack.c.l.b16 %v4040
  %v4213 = vunpack.c.l.b16 %v4041
  %v4214 = vunpack.c.l.b16 %v4042
  %v4215 = vunpack.c.l.b16 %v4043
  %v4216 = vunpack.c.l.b16 %v4044
  %v4217 = vunpack.c.l.b16 %v4045
  %v4218 = vunpack.c.l.b16 %v4046
  %v4219 = vunpack.c.l.b16 %v4047
  %v4220 = vunpack.c.l.b16 %v4048
  %v4221 = vunpack.c.l.b16 %v4049
  %v4222 = vunpack.c.l.b16 %v4050
  %v4223 = vunpack.c.l.b16 %v4051
  %v4224 = vunpack.c.l.b16 %v4052
  %v4225 = vunpack.c.l.b16 %v4053
  %v4226 = vunpack.c.l.b16 %v4054
  %v4227 = vunpack.c.l.b16 %v4055
  %v4228 = vunpack.c.l.b16 %v4056
  %v4229 = vunpack.c.l.b16 %v4057
  %v4230 = vunpack.c.l.b16 %v4058
  %v4231 = vunpack.c.l.b16 %v4059
  %v4232 = vpack.c.b16 %v4148, %v4147
  %v4233 = vpack.c.b16 %v4150, %v4149
  %v4234 = vpack.c.b16 %v4152, %v4151
  %v4235 = vpack.c.b16 %v4154, %v4153
  %v4236 = vpack.c.b16 %v4156, %v4155
  %v4237 = vpack.c.b16 %v4158, %v4157
  %v4238 = vpack.c.b16 %v4160, %v4159
  %v4239 = vpack.c.b16 %v4162, %v4161
  %v4240 = vpack.c.b16 %v4164, %v4163
  %v4241 = vpack.c.b16 %v4166, %v4165
  %v4242 = vpack.c.b16 %v4168, %v4167
  %v4243 = vpack.c.b16 %v4170, %v4169
  %v4244 = vpack.c.b16 %v4172, %v4171
  %v4245 = vpack.c.b16 %v4174, %v4173
  %v4246 = vpack.c.b16 %v4176, %v4175
  %v4247 = vpack.c.b16 %v4178, %v4177
  %v4248 = vpack.c.b16 %v4180, %v4179
  %v4249 = vpack.c.b16 %v4182, %v4181
  %v4250 = vpack.c.b16 %v4184, %v4183
  %v4251 = vpack.c.b16 %v4186, %v4185
  %v4252 = vpack.c.b16 %v4188, %v4187
  %v4253 = vpack.c.b16 %v4190, %v4189
  %v4254 = vpack.c.b16 %v4192, %v4191
  %v4255 = vpack.c.b16 %v4194, %v4193
  %v4256 = vpack.c.b16 %v4196, %v4195
  %v4257 = vpack.c.b16 %v4198, %v4197
  %v4258 = vpack.c.b16 %v4200, %v4199
  %v4259 = vpack.c.b16 %v4202, %v4201
  %v4260 = vpack.c.b16 %v4204, %v4203
  %v4261 = vpack.c.b16 %v4206, %v4205
  %v4262 = vpack.c.b16 %v4208, %v4207
  %v4263 = vpack.c.b16 %v4210, %v4209
  %v4264 = vpack.c.b16 %v4212, %v4211
  %v4265 = vpack.c.b16 %v4214, %v4213
  %v4266 = vpack.c.b16 %v4216, %v4215
  %v4267 = vpack.c.b16 %v4218, %v4217
  %v4268 = vpack.c.b16 %v4220, %v4219
  %v4269 = vpack.c.b16 %v4222, %v4221
  %v4270 = vpack.c.b16 %v4224, %v4223
  %v4271 = vpack.c.b16 %v4226, %v4225
  %v4272 = vpack.c.b16 %v4228, %v4227
  %v4273 = vpack.c.b16 %v4230, %v4229
  %v4274 = vpack.c.b16 %v4231, %v4231
  %v4275 = vrot.slane %v4232, 1
  %v4276 = vrot.slane %v4233, 1
  %v4277 = vsel %vm3139, %v4275, %v4276
  %v4278 = vrot.slane %v4234, 1
  %v4279 = vsel %vm3139, %v4276, %v4278
  %v4280 = vrot.slane %v4235, 1
  %v4281 = vsel %vm3139, %v4278, %v4280
  %v4282 = vrot.slane %v4236, 1
  %v4283 = vsel %vm3139, %v4280, %v4282
  %v4284 = vrot.slane %v4237, 1
  %v4285 = vsel %vm3139, %v4282, %v4284
  %v4286 = vrot.slane %v4238, 1
  %v4287 = vsel %vm3139, %v4284, %v4286
  %v4288 = vrot.slane %v4239, 1
  %v4289 = vsel %vm3139, %v4286, %v4288
  %v4290 = vrot.slane %v4240, 1
  %v4291 = vsel %vm3139, %v4288, %v4290
  %v4292 = vrot.slane %v4241, 1
  %v4293 = vsel %vm3139, %v4290, %v4292
  %v4294 = vrot.slane %v4242, 1
  %v4295 = vsel %vm3139, %v4292, %v4294
  %v4296 = vrot.slane %v4243, 1
  %v4297 = vsel %vm3139, %v4294, %v4296
  %v4298 = vrot.slane %v4244, 1
  %v4299 = vsel %vm3139, %v4296, %v4298
  %v4300 = vrot.slane %v4245, 1
  %v4301 = vsel %vm3139, %v4298, %v4300
  %v4302 = vrot.slane %v4246, 1
  %v4303 = vsel %vm3139, %v4300, %v4302
  %v4304 = vrot.slane %v4247, 1
  %v4305 = vsel %vm3139, %v4302, %v4304
  %v4306 = vrot.slane %v4248, 1
  %v4307 = vsel %vm3139, %v4304, %v4306
  %v4308 = vrot.slane %v4249, 1
  %v4309 = vsel %vm3139, %v4306, %v4308
  %v4310 = vrot.slane %v4250, 1
  %v4311 = vsel %vm3139, %v4308, %v4310
  %v4312 = vrot.slane %v4251, 1
  %v4313 = vsel %vm3139, %v4310, %v4312
  %v4314 = vrot.slane %v4252, 1
  %v4315 = vsel %vm3139, %v4312, %v4314
  %v4316 = vrot.slane %v4253, 1
  %v4317 = vsel %vm3139, %v4314, %v4316
  %v4318 = vrot.slane %v4254, 1
  %v4319 = vsel %vm3139, %v4316, %v4318
  %v4320 = vrot.slane %v4255, 1
  %v4321 = vsel %vm3139, %v4318, %v4320
  %v4322 = vrot.slane %v4256, 1
  %v4323 = vsel %vm3139, %v4320, %v4322
  %v4324 = vrot.slane %v4257, 1
  %v4325 = vsel %vm3139, %v4322, %v4324
  %v4326 = vrot.slane %v4258, 1
  %v4327 = vsel %vm3139, %v4324, %v4326
  %v4328 = vrot.slane %v4259, 1
  %v4329 = vsel %vm3139, %v4326, %v4328
  %v4330 = vrot.slane %v4260, 1
  %v4331 = vsel %vm3139, %v4328, %v4330
  %v4332 = vrot.slane %v4261, 1
  %v4333 = vsel %vm3139, %v4330, %v4332
  %v4334 = vrot.slane %v4262, 1
  %v4335 = vsel %vm3139, %v4332, %v4334
  %v4336 = vrot.slane %v4263, 1
  %v4337 = vsel %vm3139, %v4334, %v4336
  %v4338 = vrot.slane %v4264, 1
  %v4339 = vsel %vm3139, %v4336, %v4338
  %v4340 = vrot.slane %v4265, 1
  %v4341 = vsel %vm3139, %v4338, %v4340
  %v4342 = vrot.slane %v4266, 1
  %v4343 = vsel %vm3139, %v4340, %v4342
  %v4344 = vrot.slane %v4267, 1
  %v4345 = vsel %vm3139, %v4342, %v4344
  %v4346 = vrot.slane %v4268, 1
  %v4347 = vsel %vm3139, %v4344, %v4346
  %v4348 = vrot.slane %v4269, 1
  %v4349 = vsel %vm3139, %v4346, %v4348
  %v4350 = vrot.slane %v4270, 1
  %v4351 = vsel %vm3139, %v4348, %v4350
  %v4352 = vrot.slane %v4271, 1
  %v4353 = vsel %vm3139, %v4350, %v4352
  %v4354 = vrot.slane %v4272, 1
  %v4355 = vsel %vm3139, %v4352, %v4354
  %v4356 = vrot.slane %v4273, 1
  %v4357 = vsel %vm3139, %v4354, %v4356
  %v4358 = vrot.slane %v4274, 1
  %v4359 = vsel %vm3139, %v4356, %v4358
  %v4361 = vsel %vm696, %v4277, 0
  %v4364 = vsel %vm696, %v4279, 0
  %v4367 = vsel %vm696, %v4281, 0
  %v4370 = vsel %vm696, %v4283, 0
  %v4373 = vsel %vm696, %v4285, 0
  %v4376 = vsel %vm696, %v4287, 0
  %v4379 = vsel %vm696, %v4289, 0
  %v4382 = vsel %vm696, %v4291, 0
  %v4385 = vsel %vm696, %v4293, 0
  %v4388 = vsel %vm696, %v4295, 0
  %v4391 = vsel %vm696, %v4297, 0
  %v4394 = vsel %vm696, %v4299, 0
  %v4397 = vsel %vm696, %v4301, 0
  %v4400 = vsel %vm696, %v4303, 0
  %v4403 = vsel %vm696, %v4305, 0
  %v4406 = vsel %vm696, %v4307, 0
  %v4409 = vsel %vm696, %v4309, 0
  %v4412 = vsel %vm696, %v4311, 0
  %v4415 = vsel %vm696, %v4313, 0
  %v4418 = vsel %vm696, %v4315, 0
  %v4421 = vsel %vm696, %v4317, 0
  %v4424 = vsel %vm696, %v4319, 0
  %v4427 = vsel %vm696, %v4321, 0
  %v4430 = vsel %vm696, %v4323, 0
  %v4433 = vsel %vm696, %v4325, 0
  %v4436 = vsel %vm696, %v4327, 0
  %v4439 = vsel %vm696, %v4329, 0
  %v4442 = vsel %vm696, %v4331, 0
  %v4445 = vsel %vm696, %v4333, 0
  %v4448 = vsel %vm696, %v4335, 0
  %v4451 = vsel %vm696, %v4337, 0
  %v4454 = vsel %vm696, %v4339, 0
  %v4457 = vsel %vm696, %v4341, 0
  %v4460 = vsel %vm696, %v4343, 0
  %v4463 = vsel %vm696, %v4345, 0
  %v4466 = vsel %vm696, %v4347, 0
  %v4469 = vsel %vm696, %v4349, 0
  %v4472 = vsel %vm696, %v4351, 0
  %v4475 = vsel %vm696, %v4353, 0
  %v4478 = vsel %vm696, %v4355, 0
  %v4481 = vsel %vm696, %v4357, 0
  %v4484 = vsel %vm696, %v4359, 0
  %v4487 = vsel %vm823, %v4061, 0
  %4489 = vmatprep.subr.bf16.mxu0 0
  %4490 = vmatpush1.bf16.msra.mxu0 0
  %4491 = vmatprep.subr.bf16.mxu0 0
  %4492 = vmatpush1.bf16.msra.mxu0 0
  %4493 = vmatprep.subr.bf16.mxu0 0
  %4494 = vmatpush1.bf16.msra.mxu0 0
  %4495 = vmatprep.subr.bf16.mxu0 0
  %4496 = vmatpush1.bf16.msra.mxu0 0
  %4497 = vmatprep.subr.bf16.mxu0 0
  %4498 = vmatpush1.bf16.msra.mxu0 0
  %4499 = vmatprep.subr.bf16.mxu0 0
  %4500 = vmatpush1.bf16.msra.mxu0 0
  %4501 = vmatprep.subr.bf16.mxu0 0
  %4502 = vmatpush1.bf16.msra.mxu0 0
  %4503 = vmatprep.subr.bf16.mxu0 0
  %4504 = vmatpush1.bf16.msra.mxu0 %v4487
  %4505 = vmatprep.subr.bf16.mxu0 0
  %4506 = vmatpush2.bf16.msra.mxu0 0
  %4507 = vmatprep.subr.bf16.mxu0 0
  %4508 = vmatpush2.bf16.msra.mxu0 0
  %4509 = vmatprep.subr.bf16.mxu0 0
  %4510 = vmatpush2.bf16.msra.mxu0 0
  %4511 = vmatprep.subr.bf16.mxu0 0
  %4512 = vmatpush2.bf16.msra.mxu0 0
  %4513 = vmatprep.subr.bf16.mxu0 0
  %4514 = vmatpush2.bf16.msra.mxu0 0
  %4515 = vmatprep.subr.bf16.mxu0 0
  %4516 = vmatpush2.bf16.msra.mxu0 0
  %4517 = vmatprep.subr.bf16.mxu0 0
  %4518 = vmatpush2.bf16.msra.mxu0 0
  %4519 = vmatprep.subr.bf16.mxu0 0
  %4520 = vmatpush2.bf16.msra.mxu0 0
  %4521 = vmatprep.mubr.bf16.mxu0 0
  %4522 = vmatmul.mubr.bf16.gmra.mxu0 %v4361
  %v4523 = vpop.f32.mrf.mxu0
  %v4524 = vadd.f32 0.0, %v4523
  %v4525 = vpop.f32.mrf.mxu0
  %v4526 = vpop.f32.mrf.mxu0
  %v4527 = vadd.f32 0.0, %v4526
  %v4528 = vpop.f32.mrf.mxu0
  %4529 = vmatprep.mubr.bf16.mxu0 0
  %4530 = vmatmul.mubr.bf16.gmra.mxu0 %v4364
  %v4531 = vpop.f32.mrf.mxu0
  %v4532 = vadd.f32 0.0, %v4531
  %v4533 = vpop.f32.mrf.mxu0
  %v4534 = vpop.f32.mrf.mxu0
  %v4535 = vadd.f32 0.0, %v4534
  %v4536 = vpop.f32.mrf.mxu0
  %4537 = vmatprep.mubr.bf16.mxu0 0
  %4538 = vmatmul.mubr.bf16.gmra.mxu0 %v4367
  %v4539 = vpop.f32.mrf.mxu0
  %v4540 = vadd.f32 0.0, %v4539
  %v4541 = vpop.f32.mrf.mxu0
  %v4542 = vpop.f32.mrf.mxu0
  %v4543 = vadd.f32 0.0, %v4542
  %v4544 = vpop.f32.mrf.mxu0
  %4545 = vmatprep.mubr.bf16.mxu0 0
  %4546 = vmatmul.mubr.bf16.gmra.mxu0 %v4370
  %v4547 = vpop.f32.mrf.mxu0
  %v4548 = vadd.f32 0.0, %v4547
  %v4549 = vpop.f32.mrf.mxu0
  %v4550 = vpop.f32.mrf.mxu0
  %v4551 = vadd.f32 0.0, %v4550
  %v4552 = vpop.f32.mrf.mxu0
  %4553 = vmatprep.mubr.bf16.mxu0 0
  %4554 = vmatmul.mubr.bf16.gmra.mxu0 %v4373
  %v4555 = vpop.f32.mrf.mxu0
  %v4556 = vadd.f32 0.0, %v4555
  %v4557 = vpop.f32.mrf.mxu0
  %v4558 = vpop.f32.mrf.mxu0
  %v4559 = vadd.f32 0.0, %v4558
  %v4560 = vpop.f32.mrf.mxu0
  %4561 = vmatprep.mubr.bf16.mxu0 0
  %4562 = vmatmul.mubr.bf16.gmra.mxu0 %v4376
  %v4563 = vpop.f32.mrf.mxu0
  %v4564 = vadd.f32 0.0, %v4563
  %v4565 = vpop.f32.mrf.mxu0
  %v4566 = vpop.f32.mrf.mxu0
  %v4567 = vadd.f32 0.0, %v4566
  %v4568 = vpop.f32.mrf.mxu0
  %4569 = vmatprep.mubr.bf16.mxu0 0
  %4570 = vmatmul.mubr.bf16.gmra.mxu0 %v4379
  %v4571 = vpop.f32.mrf.mxu0
  %v4572 = vadd.f32 0.0, %v4571
  %v4573 = vpop.f32.mrf.mxu0
  %v4574 = vpop.f32.mrf.mxu0
  %v4575 = vadd.f32 0.0, %v4574
  %v4576 = vpop.f32.mrf.mxu0
  %4577 = vmatprep.mubr.bf16.mxu0 0
  %4578 = vmatmul.mubr.bf16.gmra.mxu0 %v4382
  %v4579 = vpop.f32.mrf.mxu0
  %v4580 = vadd.f32 0.0, %v4579
  %v4581 = vpop.f32.mrf.mxu0
  %v4582 = vpop.f32.mrf.mxu0
  %v4583 = vadd.f32 0.0, %v4582
  %v4584 = vpop.f32.mrf.mxu0
  %4585 = vmatprep.mubr.bf16.mxu0 0
  %4586 = vmatmul.mubr.bf16.gmra.mxu0 %v4385
  %v4587 = vpop.f32.mrf.mxu0
  %v4588 = vadd.f32 0.0, %v4587
  %v4589 = vpop.f32.mrf.mxu0
  %v4590 = vpop.f32.mrf.mxu0
  %v4591 = vadd.f32 0.0, %v4590
  %v4592 = vpop.f32.mrf.mxu0
  %4593 = vmatprep.mubr.bf16.mxu0 0
  %4594 = vmatmul.mubr.bf16.gmra.mxu0 %v4388
  %v4595 = vpop.f32.mrf.mxu0
  %v4596 = vadd.f32 0.0, %v4595
  %v4597 = vpop.f32.mrf.mxu0
  %v4598 = vpop.f32.mrf.mxu0
  %v4599 = vadd.f32 0.0, %v4598
  %v4600 = vpop.f32.mrf.mxu0
  %4601 = vmatprep.mubr.bf16.mxu0 0
  %4602 = vmatmul.mubr.bf16.gmra.mxu0 %v4391
  %v4603 = vpop.f32.mrf.mxu0
  %v4604 = vadd.f32 0.0, %v4603
  %v4605 = vpop.f32.mrf.mxu0
  %v4606 = vpop.f32.mrf.mxu0
  %v4607 = vadd.f32 0.0, %v4606
  %v4608 = vpop.f32.mrf.mxu0
  %4609 = vmatprep.mubr.bf16.mxu0 0
  %4610 = vmatmul.mubr.bf16.gmra.mxu0 %v4394
  %v4611 = vpop.f32.mrf.mxu0
  %v4612 = vadd.f32 0.0, %v4611
  %v4613 = vpop.f32.mrf.mxu0
  %v4614 = vpop.f32.mrf.mxu0
  %v4615 = vadd.f32 0.0, %v4614
  %v4616 = vpop.f32.mrf.mxu0
  %4617 = vmatprep.mubr.bf16.mxu0 0
  %4618 = vmatmul.mubr.bf16.gmra.mxu0 %v4397
  %v4619 = vpop.f32.mrf.mxu0
  %v4620 = vadd.f32 0.0, %v4619
  %v4621 = vpop.f32.mrf.mxu0
  %v4622 = vpop.f32.mrf.mxu0
  %v4623 = vadd.f32 0.0, %v4622
  %v4624 = vpop.f32.mrf.mxu0
  %4625 = vmatprep.mubr.bf16.mxu0 0
  %4626 = vmatmul.mubr.bf16.gmra.mxu0 %v4400
  %v4627 = vpop.f32.mrf.mxu0
  %v4628 = vadd.f32 0.0, %v4627
  %v4629 = vpop.f32.mrf.mxu0
  %v4630 = vpop.f32.mrf.mxu0
  %v4631 = vadd.f32 0.0, %v4630
  %v4632 = vpop.f32.mrf.mxu0
  %4633 = vmatprep.mubr.bf16.mxu0 0
  %4634 = vmatmul.mubr.bf16.gmra.mxu0 %v4403
  %v4635 = vpop.f32.mrf.mxu0
  %v4636 = vadd.f32 0.0, %v4635
  %v4637 = vpop.f32.mrf.mxu0
  %v4638 = vpop.f32.mrf.mxu0
  %v4639 = vadd.f32 0.0, %v4638
  %v4640 = vpop.f32.mrf.mxu0
  %4641 = vmatprep.mubr.bf16.mxu0 0
  %4642 = vmatmul.mubr.bf16.gmra.mxu0 %v4406
  %v4643 = vpop.f32.mrf.mxu0
  %v4644 = vadd.f32 0.0, %v4643
  %v4645 = vpop.f32.mrf.mxu0
  %v4646 = vpop.f32.mrf.mxu0
  %v4647 = vadd.f32 0.0, %v4646
  %v4648 = vpop.f32.mrf.mxu0
  %4649 = vmatprep.mubr.bf16.mxu0 0
  %4650 = vmatmul.mubr.bf16.gmra.mxu0 %v4409
  %v4651 = vpop.f32.mrf.mxu0
  %v4652 = vadd.f32 0.0, %v4651
  %v4653 = vpop.f32.mrf.mxu0
  %v4654 = vpop.f32.mrf.mxu0
  %v4655 = vadd.f32 0.0, %v4654
  %v4656 = vpop.f32.mrf.mxu0
  %4657 = vmatprep.mubr.bf16.mxu0 0
  %4658 = vmatmul.mubr.bf16.gmra.mxu0 %v4412
  %v4659 = vpop.f32.mrf.mxu0
  %v4660 = vadd.f32 0.0, %v4659
  %v4661 = vpop.f32.mrf.mxu0
  %v4662 = vpop.f32.mrf.mxu0
  %v4663 = vadd.f32 0.0, %v4662
  %v4664 = vpop.f32.mrf.mxu0
  %4665 = vmatprep.mubr.bf16.mxu0 0
  %4666 = vmatmul.mubr.bf16.gmra.mxu0 %v4415
  %v4667 = vpop.f32.mrf.mxu0
  %v4668 = vadd.f32 0.0, %v4667
  %v4669 = vpop.f32.mrf.mxu0
  %v4670 = vpop.f32.mrf.mxu0
  %v4671 = vadd.f32 0.0, %v4670
  %v4672 = vpop.f32.mrf.mxu0
  %4673 = vmatprep.mubr.bf16.mxu0 0
  %4674 = vmatmul.mubr.bf16.gmra.mxu0 %v4418
  %v4675 = vpop.f32.mrf.mxu0
  %v4676 = vadd.f32 0.0, %v4675
  %v4677 = vpop.f32.mrf.mxu0
  %v4678 = vpop.f32.mrf.mxu0
  %v4679 = vadd.f32 0.0, %v4678
  %v4680 = vpop.f32.mrf.mxu0
  %4681 = vmatprep.mubr.bf16.mxu0 0
  %4682 = vmatmul.mubr.bf16.gmra.mxu0 %v4421
  %v4683 = vpop.f32.mrf.mxu0
  %v4684 = vadd.f32 0.0, %v4683
  %v4685 = vpop.f32.mrf.mxu0
  %v4686 = vpop.f32.mrf.mxu0
  %v4687 = vadd.f32 0.0, %v4686
  %v4688 = vpop.f32.mrf.mxu0
  %4689 = vmatprep.mubr.bf16.mxu0 0
  %4690 = vmatmul.mubr.bf16.gmra.mxu0 %v4424
  %v4691 = vpop.f32.mrf.mxu0
  %v4692 = vadd.f32 0.0, %v4691
  %v4693 = vpop.f32.mrf.mxu0
  %v4694 = vpop.f32.mrf.mxu0
  %v4695 = vadd.f32 0.0, %v4694
  %v4696 = vpop.f32.mrf.mxu0
  %4697 = vmatprep.mubr.bf16.mxu0 0
  %4698 = vmatmul.mubr.bf16.gmra.mxu0 %v4427
  %v4699 = vpop.f32.mrf.mxu0
  %v4700 = vadd.f32 0.0, %v4699
  %v4701 = vpop.f32.mrf.mxu0
  %v4702 = vpop.f32.mrf.mxu0
  %v4703 = vadd.f32 0.0, %v4702
  %v4704 = vpop.f32.mrf.mxu0
  %4705 = vmatprep.mubr.bf16.mxu0 0
  %4706 = vmatmul.mubr.bf16.gmra.mxu0 %v4430
  %v4707 = vpop.f32.mrf.mxu0
  %v4708 = vadd.f32 0.0, %v4707
  %v4709 = vpop.f32.mrf.mxu0
  %v4710 = vpop.f32.mrf.mxu0
  %v4711 = vadd.f32 0.0, %v4710
  %v4712 = vpop.f32.mrf.mxu0
  %4713 = vmatprep.mubr.bf16.mxu0 0
  %4714 = vmatmul.mubr.bf16.gmra.mxu0 %v4433
  %v4715 = vpop.f32.mrf.mxu0
  %v4716 = vadd.f32 0.0, %v4715
  %v4717 = vpop.f32.mrf.mxu0
  %v4718 = vpop.f32.mrf.mxu0
  %v4719 = vadd.f32 0.0, %v4718
  %v4720 = vpop.f32.mrf.mxu0
  %4721 = vmatprep.mubr.bf16.mxu0 0
  %4722 = vmatmul.mubr.bf16.gmra.mxu0 %v4436
  %v4723 = vpop.f32.mrf.mxu0
  %v4724 = vadd.f32 0.0, %v4723
  %v4725 = vpop.f32.mrf.mxu0
  %v4726 = vpop.f32.mrf.mxu0
  %v4727 = vadd.f32 0.0, %v4726
  %v4728 = vpop.f32.mrf.mxu0
  %4729 = vmatprep.mubr.bf16.mxu0 0
  %4730 = vmatmul.mubr.bf16.gmra.mxu0 %v4439
  %v4731 = vpop.f32.mrf.mxu0
  %v4732 = vadd.f32 0.0, %v4731
  %v4733 = vpop.f32.mrf.mxu0
  %v4734 = vpop.f32.mrf.mxu0
  %v4735 = vadd.f32 0.0, %v4734
  %v4736 = vpop.f32.mrf.mxu0
  %4737 = vmatprep.mubr.bf16.mxu0 0
  %4738 = vmatmul.mubr.bf16.gmra.mxu0 %v4442
  %v4739 = vpop.f32.mrf.mxu0
  %v4740 = vadd.f32 0.0, %v4739
  %v4741 = vpop.f32.mrf.mxu0
  %v4742 = vpop.f32.mrf.mxu0
  %v4743 = vadd.f32 0.0, %v4742
  %v4744 = vpop.f32.mrf.mxu0
  %4745 = vmatprep.mubr.bf16.mxu0 0
  %4746 = vmatmul.mubr.bf16.gmra.mxu0 %v4445
  %v4747 = vpop.f32.mrf.mxu0
  %v4748 = vadd.f32 0.0, %v4747
  %v4749 = vpop.f32.mrf.mxu0
  %v4750 = vpop.f32.mrf.mxu0
  %v4751 = vadd.f32 0.0, %v4750
  %v4752 = vpop.f32.mrf.mxu0
  %4753 = vmatprep.mubr.bf16.mxu0 0
  %4754 = vmatmul.mubr.bf16.gmra.mxu0 %v4448
  %v4755 = vpop.f32.mrf.mxu0
  %v4756 = vadd.f32 0.0, %v4755
  %v4757 = vpop.f32.mrf.mxu0
  %v4758 = vpop.f32.mrf.mxu0
  %v4759 = vadd.f32 0.0, %v4758
  %v4760 = vpop.f32.mrf.mxu0
  %4761 = vmatprep.mubr.bf16.mxu0 0
  %4762 = vmatmul.mubr.bf16.gmra.mxu0 %v4451
  %v4763 = vpop.f32.mrf.mxu0
  %v4764 = vadd.f32 0.0, %v4763
  %v4765 = vpop.f32.mrf.mxu0
  %v4766 = vpop.f32.mrf.mxu0
  %v4767 = vadd.f32 0.0, %v4766
  %v4768 = vpop.f32.mrf.mxu0
  %4769 = vmatprep.mubr.bf16.mxu0 0
  %4770 = vmatmul.mubr.bf16.gmra.mxu0 %v4454
  %v4771 = vpop.f32.mrf.mxu0
  %v4772 = vadd.f32 0.0, %v4771
  %v4773 = vpop.f32.mrf.mxu0
  %v4774 = vpop.f32.mrf.mxu0
  %v4775 = vadd.f32 0.0, %v4774
  %v4776 = vpop.f32.mrf.mxu0
  %4777 = vmatprep.mubr.bf16.mxu0 0
  %4778 = vmatmul.mubr.bf16.gmra.mxu0 %v4457
  %v4779 = vpop.f32.mrf.mxu0
  %v4780 = vadd.f32 0.0, %v4779
  %v4781 = vpop.f32.mrf.mxu0
  %v4782 = vpop.f32.mrf.mxu0
  %v4783 = vadd.f32 0.0, %v4782
  %v4784 = vpop.f32.mrf.mxu0
  %4785 = vmatprep.mubr.bf16.mxu0 0
  %4786 = vmatmul.mubr.bf16.gmra.mxu0 %v4460
  %v4787 = vpop.f32.mrf.mxu0
  %v4788 = vadd.f32 0.0, %v4787
  %v4789 = vpop.f32.mrf.mxu0
  %v4790 = vpop.f32.mrf.mxu0
  %v4791 = vadd.f32 0.0, %v4790
  %v4792 = vpop.f32.mrf.mxu0
  %4793 = vmatprep.mubr.bf16.mxu0 0
  %4794 = vmatmul.mubr.bf16.gmra.mxu0 %v4463
  %v4795 = vpop.f32.mrf.mxu0
  %v4796 = vadd.f32 0.0, %v4795
  %v4797 = vpop.f32.mrf.mxu0
  %v4798 = vpop.f32.mrf.mxu0
  %v4799 = vadd.f32 0.0, %v4798
  %v4800 = vpop.f32.mrf.mxu0
  %4801 = vmatprep.mubr.bf16.mxu0 0
  %4802 = vmatmul.mubr.bf16.gmra.mxu0 %v4466
  %v4803 = vpop.f32.mrf.mxu0
  %v4804 = vadd.f32 0.0, %v4803
  %v4805 = vpop.f32.mrf.mxu0
  %v4806 = vpop.f32.mrf.mxu0
  %v4807 = vadd.f32 0.0, %v4806
  %v4808 = vpop.f32.mrf.mxu0
  %4809 = vmatprep.mubr.bf16.mxu0 0
  %4810 = vmatmul.mubr.bf16.gmra.mxu0 %v4469
  %v4811 = vpop.f32.mrf.mxu0
  %v4812 = vadd.f32 0.0, %v4811
  %v4813 = vpop.f32.mrf.mxu0
  %v4814 = vpop.f32.mrf.mxu0
  %v4815 = vadd.f32 0.0, %v4814
  %v4816 = vpop.f32.mrf.mxu0
  %4817 = vmatprep.mubr.bf16.mxu0 0
  %4818 = vmatmul.mubr.bf16.gmra.mxu0 %v4472
  %v4819 = vpop.f32.mrf.mxu0
  %v4820 = vadd.f32 0.0, %v4819
  %v4821 = vpop.f32.mrf.mxu0
  %v4822 = vpop.f32.mrf.mxu0
  %v4823 = vadd.f32 0.0, %v4822
  %v4824 = vpop.f32.mrf.mxu0
  %4825 = vmatprep.mubr.bf16.mxu0 0
  %4826 = vmatmul.mubr.bf16.gmra.mxu0 %v4475
  %v4827 = vpop.f32.mrf.mxu0
  %v4828 = vadd.f32 0.0, %v4827
  %v4829 = vpop.f32.mrf.mxu0
  %v4830 = vpop.f32.mrf.mxu0
  %v4831 = vadd.f32 0.0, %v4830
  %v4832 = vpop.f32.mrf.mxu0
  %4833 = vmatprep.mubr.bf16.mxu0 0
  %4834 = vmatmul.mubr.bf16.gmra.mxu0 %v4478
  %v4835 = vpop.f32.mrf.mxu0
  %v4836 = vadd.f32 0.0, %v4835
  %v4837 = vpop.f32.mrf.mxu0
  %v4838 = vpop.f32.mrf.mxu0
  %v4839 = vadd.f32 0.0, %v4838
  %v4840 = vpop.f32.mrf.mxu0
  %4841 = vmatprep.mubr.bf16.mxu0 0
  %4842 = vmatmul.mubr.bf16.gmra.mxu0 %v4481
  %v4843 = vpop.f32.mrf.mxu0
  %v4844 = vadd.f32 0.0, %v4843
  %v4845 = vpop.f32.mrf.mxu0
  %v4846 = vpop.f32.mrf.mxu0
  %v4847 = vadd.f32 0.0, %v4846
  %v4848 = vpop.f32.mrf.mxu0
  %4849 = vmatprep.mubr.bf16.mxu0 0
  %4850 = vmatmul.mubr.bf16.gmra.mxu0 %v4484
  %v4851 = vpop.f32.mrf.mxu0
  %v4852 = vadd.f32 0.0, %v4851
  %v4853 = vpop.f32.mrf.mxu0
  %v4854 = vpop.f32.mrf.mxu0
  %v4855 = vadd.f32 0.0, %v4854
  %v4856 = vpop.f32.mrf.mxu0
  %4857 = vdwg.mxu0
  %v4858 = vadd.f32 %v3891, %v4524
  %v4859 = vadd.f32 %v3892, %v4527
  %v4860 = vadd.f32 %v3893, %v4532
  %v4861 = vadd.f32 %v3894, %v4535
  %v4862 = vadd.f32 %v3895, %v4540
  %v4863 = vadd.f32 %v3896, %v4543
  %v4864 = vadd.f32 %v3897, %v4548
  %v4865 = vadd.f32 %v3898, %v4551
  %v4866 = vadd.f32 %v3899, %v4556
  %v4867 = vadd.f32 %v3900, %v4559
  %v4868 = vadd.f32 %v3901, %v4564
  %v4869 = vadd.f32 %v3902, %v4567
  %v4870 = vadd.f32 %v3903, %v4572
  %v4871 = vadd.f32 %v3904, %v4575
  %v4872 = vadd.f32 %v3905, %v4580
  %v4873 = vadd.f32 %v3906, %v4583
  %v4874 = vadd.f32 %v3907, %v4588
  %v4875 = vadd.f32 %v3908, %v4591
  %v4876 = vadd.f32 %v3909, %v4596
  %v4877 = vadd.f32 %v3910, %v4599
  %v4878 = vadd.f32 %v3911, %v4604
  %v4879 = vadd.f32 %v3912, %v4607
  %v4880 = vadd.f32 %v3913, %v4612
  %v4881 = vadd.f32 %v3914, %v4615
  %v4882 = vadd.f32 %v3915, %v4620
  %v4883 = vadd.f32 %v3916, %v4623
  %v4884 = vadd.f32 %v3917, %v4628
  %v4885 = vadd.f32 %v3918, %v4631
  %v4886 = vadd.f32 %v3919, %v4636
  %v4887 = vadd.f32 %v3920, %v4639
  %v4888 = vadd.f32 %v3921, %v4644
  %v4889 = vadd.f32 %v3922, %v4647
  %v4890 = vadd.f32 %v3923, %v4652
  %v4891 = vadd.f32 %v3924, %v4655
  %v4892 = vadd.f32 %v3925, %v4660
  %v4893 = vadd.f32 %v3926, %v4663
  %v4894 = vadd.f32 %v3927, %v4668
  %v4895 = vadd.f32 %v3928, %v4671
  %v4896 = vadd.f32 %v3929, %v4676
  %v4897 = vadd.f32 %v3930, %v4679
  %v4898 = vadd.f32 %v3931, %v4684
  %v4899 = vadd.f32 %v3932, %v4687
  %v4900 = vadd.f32 %v3933, %v4692
  %v4901 = vadd.f32 %v3934, %v4695
  %v4902 = vadd.f32 %v3935, %v4700
  %v4903 = vadd.f32 %v3936, %v4703
  %v4904 = vadd.f32 %v3937, %v4708
  %v4905 = vadd.f32 %v3938, %v4711
  %v4906 = vadd.f32 %v3939, %v4716
  %v4907 = vadd.f32 %v3940, %v4719
  %v4908 = vadd.f32 %v3941, %v4724
  %v4909 = vadd.f32 %v3942, %v4727
  %v4910 = vadd.f32 %v3943, %v4732
  %v4911 = vadd.f32 %v3944, %v4735
  %v4912 = vadd.f32 %v3945, %v4740
  %v4913 = vadd.f32 %v3946, %v4743
  %v4914 = vadd.f32 %v3947, %v4748
  %v4915 = vadd.f32 %v3948, %v4751
  %v4916 = vadd.f32 %v3949, %v4756
  %v4917 = vadd.f32 %v3950, %v4759
  %v4918 = vadd.f32 %v3951, %v4764
  %v4919 = vadd.f32 %v3952, %v4767
  %v4920 = vadd.f32 %v3953, %v4772
  %v4921 = vadd.f32 %v3954, %v4775
  %v4922 = vadd.f32 %v3955, %v4780
  %v4923 = vadd.f32 %v3956, %v4783
  %v4924 = vadd.f32 %v3957, %v4788
  %v4925 = vadd.f32 %v3958, %v4791
  %v4926 = vadd.f32 %v3959, %v4796
  %v4927 = vadd.f32 %v3960, %v4799
  %v4928 = vadd.f32 %v3961, %v4804
  %v4929 = vadd.f32 %v3962, %v4807
  %v4930 = vadd.f32 %v3963, %v4812
  %v4931 = vadd.f32 %v3964, %v4815
  %v4932 = vadd.f32 %v3965, %v4820
  %v4933 = vadd.f32 %v3966, %v4823
  %v4934 = vadd.f32 %v3967, %v4828
  %v4935 = vadd.f32 %v3968, %v4831
  %v4936 = vadd.f32 %v3969, %v4836
  %v4937 = vadd.f32 %v3970, %v4839
  %v4938 = vadd.f32 %v3971, %v4844
  %v4939 = vadd.f32 %v3972, %v4847
  %v4940 = vadd.f32 %v3973, %v4852
  %v4941 = vadd.f32 %v3974, %v4855
  %4942 = vst [vmem:[%s4] sm:$0xff] %v4858
  %4943 = vst [vmem:[%s4 + $0x8] sm:$0xff] %v4859
  %4944 = vst [vmem:[%s4 + $0x10] sm:$0xff] %v4860
  %4945 = vst [vmem:[%s4 + $0x18] sm:$0xff] %v4861
  %4946 = vst [vmem:[%s4 + $0x20] sm:$0xff] %v4862
  %4947 = vst [vmem:[%s4 + $0x28] sm:$0xff] %v4863
  %4948 = vst [vmem:[%s4 + $0x30] sm:$0xff] %v4864
  %4949 = vst [vmem:[%s4 + $0x38] sm:$0xff] %v4865
  %4950 = vst [vmem:[%s4 + $0x40] sm:$0xff] %v4866
  %4951 = vst [vmem:[%s4 + $0x48] sm:$0xff] %v4867
  %4952 = vst [vmem:[%s4 + $0x50] sm:$0xff] %v4868
  %4953 = vst [vmem:[%s4 + $0x58] sm:$0xff] %v4869
  %4954 = vst [vmem:[%s4 + $0x60] sm:$0xff] %v4870
  %4955 = vst [vmem:[%s4 + $0x68] sm:$0xff] %v4871
  %4956 = vst [vmem:[%s4 + $0x70] sm:$0xff] %v4872
  %4957 = vst [vmem:[%s4 + $0x78] sm:$0xff] %v4873
  %4958 = vst [vmem:[%s4 + $0x80] sm:$0xff] %v4874
  %4959 = vst [vmem:[%s4 + $0x88] sm:$0xff] %v4875
  %4960 = vst [vmem:[%s4 + $0x90] sm:$0xff] %v4876
  %4961 = vst [vmem:[%s4 + $0x98] sm:$0xff] %v4877
  %4962 = vst [vmem:[%s4 + $0xa0] sm:$0xff] %v4878
  %4963 = vst [vmem:[%s4 + $0xa8] sm:$0xff] %v4879
  %4964 = vst [vmem:[%s4 + $0xb0] sm:$0xff] %v4880
  %4965 = vst [vmem:[%s4 + $0xb8] sm:$0xff] %v4881
  %4966 = vst [vmem:[%s4 + $0xc0] sm:$0xff] %v4882
  %4967 = vst [vmem:[%s4 + $0xc8] sm:$0xff] %v4883
  %4968 = vst [vmem:[%s4 + $0xd0] sm:$0xff] %v4884
  %4969 = vst [vmem:[%s4 + $0xd8] sm:$0xff] %v4885
  %4970 = vst [vmem:[%s4 + $0xe0] sm:$0xff] %v4886
  %4971 = vst [vmem:[%s4 + $0xe8] sm:$0xff] %v4887
  %4972 = vst [vmem:[%s4 + $0xf0] sm:$0xff] %v4888
  %4973 = vst [vmem:[%s4 + $0xf8] sm:$0xff] %v4889
  %4974 = vst [vmem:[%s4 + $0x100] sm:$0xff] %v4890
  %4975 = vst [vmem:[%s4 + $0x108] sm:$0xff] %v4891
  %4976 = vst [vmem:[%s4 + $0x110] sm:$0xff] %v4892
  %4977 = vst [vmem:[%s4 + $0x118] sm:$0xff] %v4893
  %4978 = vst [vmem:[%s4 + $0x120] sm:$0xff] %v4894
  %4979 = vst [vmem:[%s4 + $0x128] sm:$0xff] %v4895
  %4980 = vst [vmem:[%s4 + $0x130] sm:$0xff] %v4896
  %4981 = vst [vmem:[%s4 + $0x138] sm:$0xff] %v4897
  %4982 = vst [vmem:[%s4 + $0x140] sm:$0xff] %v4898
  %4983 = vst [vmem:[%s4 + $0x148] sm:$0xff] %v4899
  %4984 = vst [vmem:[%s4 + $0x150] sm:$0xff] %v4900
  %4985 = vst [vmem:[%s4 + $0x158] sm:$0xff] %v4901
  %4986 = vst [vmem:[%s4 + $0x160] sm:$0xff] %v4902
  %4987 = vst [vmem:[%s4 + $0x168] sm:$0xff] %v4903
  %4988 = vst [vmem:[%s4 + $0x170] sm:$0xff] %v4904
  %4989 = vst [vmem:[%s4 + $0x178] sm:$0xff] %v4905
  %4990 = vst [vmem:[%s4 + $0x180] sm:$0xff] %v4906
  %4991 = vst [vmem:[%s4 + $0x188] sm:$0xff] %v4907
  %4992 = vst [vmem:[%s4 + $0x190] sm:$0xff] %v4908
  %4993 = vst [vmem:[%s4 + $0x198] sm:$0xff] %v4909
  %4994 = vst [vmem:[%s4 + $0x1a0] sm:$0xff] %v4910
  %4995 = vst [vmem:[%s4 + $0x1a8] sm:$0xff] %v4911
  %4996 = vst [vmem:[%s4 + $0x1b0] sm:$0xff] %v4912
  %4997 = vst [vmem:[%s4 + $0x1b8] sm:$0xff] %v4913
  %4998 = vst [vmem:[%s4 + $0x1c0] sm:$0xff] %v4914
  %4999 = vst [vmem:[%s4 + $0x1c8] sm:$0xff] %v4915
  %5000 = vst [vmem:[%s4 + $0x1d0] sm:$0xff] %v4916
  %5001 = vst [vmem:[%s4 + $0x1d8] sm:$0xff] %v4917
  %5002 = vst [vmem:[%s4 + $0x1e0] sm:$0xff] %v4918
  %5003 = vst [vmem:[%s4 + $0x1e8] sm:$0xff] %v4919
  %5004 = vst [vmem:[%s4 + $0x1f0] sm:$0xff] %v4920
  %5005 = vst [vmem:[%s4 + $0x1f8] sm:$0xff] %v4921
  %5006 = vst [vmem:[%s4 + $0x200] sm:$0xff] %v4922
  %5007 = vst [vmem:[%s4 + $0x208] sm:$0xff] %v4923
  %5008 = vst [vmem:[%s4 + $0x210] sm:$0xff] %v4924
  %5009 = vst [vmem:[%s4 + $0x218] sm:$0xff] %v4925
  %5010 = vst [vmem:[%s4 + $0x220] sm:$0xff] %v4926
  %5011 = vst [vmem:[%s4 + $0x228] sm:$0xff] %v4927
  %5012 = vst [vmem:[%s4 + $0x230] sm:$0xff] %v4928
  %5013 = vst [vmem:[%s4 + $0x238] sm:$0xff] %v4929
  %5014 = vst [vmem:[%s4 + $0x240] sm:$0xff] %v4930
  %5015 = vst [vmem:[%s4 + $0x248] sm:$0xff] %v4931
  %5016 = vst [vmem:[%s4 + $0x250] sm:$0xff] %v4932
  %5017 = vst [vmem:[%s4 + $0x258] sm:$0xff] %v4933
  %5018 = vst [vmem:[%s4 + $0x260] sm:$0xff] %v4934
  %5019 = vst [vmem:[%s4 + $0x268] sm:$0xff] %v4935
  %5020 = vst [vmem:[%s4 + $0x270] sm:$0xff] %v4936
  %5021 = vst [vmem:[%s4 + $0x278] sm:$0xff] %v4937
  %5022 = vst [vmem:[%s4 + $0x280] sm:$0xff] %v4938
  %5023 = vst [vmem:[%s4 + $0x288] sm:$0xff] %v4939
  %5024 = vst [vmem:[%s4 + $0x290] sm:$0xff] %v4940
  %5025 = vst [vmem:[%s4 + $0x298] sm:$0xff] %v4941
  %v5026 = vld [vmem:[%s4] sm:$0xff]
  %v5027 = vld [vmem:[%s4 + $0x8] sm:$0xff]
  %v5028 = vld [vmem:[%s4 + $0x10] sm:$0xff]
  %v5029 = vld [vmem:[%s4 + $0x18] sm:$0xff]
  %v5030 = vld [vmem:[%s4 + $0x20] sm:$0xff]
  %v5031 = vld [vmem:[%s4 + $0x28] sm:$0xff]
  %v5032 = vld [vmem:[%s4 + $0x30] sm:$0xff]
  %v5033 = vld [vmem:[%s4 + $0x38] sm:$0xff]
  %v5034 = vld [vmem:[%s4 + $0x40] sm:$0xff]
  %v5035 = vld [vmem:[%s4 + $0x48] sm:$0xff]
  %v5036 = vld [vmem:[%s4 + $0x50] sm:$0xff]
  %v5037 = vld [vmem:[%s4 + $0x58] sm:$0xff]
  %v5038 = vld [vmem:[%s4 + $0x60] sm:$0xff]
  %v5039 = vld [vmem:[%s4 + $0x68] sm:$0xff]
  %v5040 = vld [vmem:[%s4 + $0x70] sm:$0xff]
  %v5041 = vld [vmem:[%s4 + $0x78] sm:$0xff]
  %v5042 = vld [vmem:[%s4 + $0x80] sm:$0xff]
  %v5043 = vld [vmem:[%s4 + $0x88] sm:$0xff]
  %v5044 = vld [vmem:[%s4 + $0x90] sm:$0xff]
  %v5045 = vld [vmem:[%s4 + $0x98] sm:$0xff]
  %v5046 = vld [vmem:[%s4 + $0xa0] sm:$0xff]
  %v5047 = vld [vmem:[%s4 + $0xa8] sm:$0xff]
  %v5048 = vld [vmem:[%s4 + $0xb0] sm:$0xff]
  %v5049 = vld [vmem:[%s4 + $0xb8] sm:$0xff]
  %v5050 = vld [vmem:[%s4 + $0xc0] sm:$0xff]
  %v5051 = vld [vmem:[%s4 + $0xc8] sm:$0xff]
  %v5052 = vld [vmem:[%s4 + $0xd0] sm:$0xff]
  %v5053 = vld [vmem:[%s4 + $0xd8] sm:$0xff]
  %v5054 = vld [vmem:[%s4 + $0xe0] sm:$0xff]
  %v5055 = vld [vmem:[%s4 + $0xe8] sm:$0xff]
  %v5056 = vld [vmem:[%s4 + $0xf0] sm:$0xff]
  %v5057 = vld [vmem:[%s4 + $0xf8] sm:$0xff]
  %v5058 = vld [vmem:[%s4 + $0x100] sm:$0xff]
  %v5059 = vld [vmem:[%s4 + $0x108] sm:$0xff]
  %v5060 = vld [vmem:[%s4 + $0x110] sm:$0xff]
  %v5061 = vld [vmem:[%s4 + $0x118] sm:$0xff]
  %v5062 = vld [vmem:[%s4 + $0x120] sm:$0xff]
  %v5063 = vld [vmem:[%s4 + $0x128] sm:$0xff]
  %v5064 = vld [vmem:[%s4 + $0x130] sm:$0xff]
  %v5065 = vld [vmem:[%s4 + $0x138] sm:$0xff]
  %v5066 = vld [vmem:[%s4 + $0x140] sm:$0xff]
  %v5067 = vld [vmem:[%s4 + $0x148] sm:$0xff]
  %v5068 = vld [vmem:[%s4 + $0x150] sm:$0xff]
  %v5069 = vld [vmem:[%s4 + $0x158] sm:$0xff]
  %v5070 = vld [vmem:[%s4 + $0x160] sm:$0xff]
  %v5071 = vld [vmem:[%s4 + $0x168] sm:$0xff]
  %v5072 = vld [vmem:[%s4 + $0x170] sm:$0xff]
  %v5073 = vld [vmem:[%s4 + $0x178] sm:$0xff]
  %v5074 = vld [vmem:[%s4 + $0x180] sm:$0xff]
  %v5075 = vld [vmem:[%s4 + $0x188] sm:$0xff]
  %v5076 = vld [vmem:[%s4 + $0x190] sm:$0xff]
  %v5077 = vld [vmem:[%s4 + $0x198] sm:$0xff]
  %v5078 = vld [vmem:[%s4 + $0x1a0] sm:$0xff]
  %v5079 = vld [vmem:[%s4 + $0x1a8] sm:$0xff]
  %v5080 = vld [vmem:[%s4 + $0x1b0] sm:$0xff]
  %v5081 = vld [vmem:[%s4 + $0x1b8] sm:$0xff]
  %v5082 = vld [vmem:[%s4 + $0x1c0] sm:$0xff]
  %v5083 = vld [vmem:[%s4 + $0x1c8] sm:$0xff]
  %v5084 = vld [vmem:[%s4 + $0x1d0] sm:$0xff]
  %v5085 = vld [vmem:[%s4 + $0x1d8] sm:$0xff]
  %v5086 = vld [vmem:[%s4 + $0x1e0] sm:$0xff]
  %v5087 = vld [vmem:[%s4 + $0x1e8] sm:$0xff]
  %v5088 = vld [vmem:[%s4 + $0x1f0] sm:$0xff]
  %v5089 = vld [vmem:[%s4 + $0x1f8] sm:$0xff]
  %v5090 = vld [vmem:[%s4 + $0x200] sm:$0xff]
  %v5091 = vld [vmem:[%s4 + $0x208] sm:$0xff]
  %v5092 = vld [vmem:[%s4 + $0x210] sm:$0xff]
  %v5093 = vld [vmem:[%s4 + $0x218] sm:$0xff]
  %v5094 = vld [vmem:[%s4 + $0x220] sm:$0xff]
  %v5095 = vld [vmem:[%s4 + $0x228] sm:$0xff]
  %v5096 = vld [vmem:[%s4 + $0x230] sm:$0xff]
  %v5097 = vld [vmem:[%s4 + $0x238] sm:$0xff]
  %v5098 = vld [vmem:[%s4 + $0x240] sm:$0xff]
  %v5099 = vld [vmem:[%s4 + $0x248] sm:$0xff]
  %v5100 = vld [vmem:[%s4 + $0x250] sm:$0xff]
  %v5101 = vld [vmem:[%s4 + $0x258] sm:$0xff]
  %v5102 = vld [vmem:[%s4 + $0x260] sm:$0xff]
  %v5103 = vld [vmem:[%s4 + $0x268] sm:$0xff]
  %v5104 = vld [vmem:[%s4 + $0x270] sm:$0xff]
  %v5105 = vld [vmem:[%s4 + $0x278] sm:$0xff]
  %v5106 = vld [vmem:[%s4 + $0x280] sm:$0xff]
  %v5107 = vld [vmem:[%s4 + $0x288] sm:$0xff]
  %v5108 = vld [vmem:[%s4 + $0x290] sm:$0xff]
  %v5109 = vld [vmem:[%s4 + $0x298] sm:$0xff]
  %v5110 = vld [vmem:[#allocation2 + $0x8] sm:$0xe]
  %v5111 = vld [vmem:[#allocation2 + $0xc] sm:$0xf]
  %v5112 = vld [vmem:[#allocation2 + $0x10] sm:$0xf]
  %v5113 = vld [vmem:[#allocation2 + $0x14] sm:$0xf]
  %v5114 = vld [vmem:[#allocation2 + $0x18] sm:$0xf]
  %v5115 = vld [vmem:[#allocation2 + $0x1c] sm:$0xf]
  %v5116 = vld [vmem:[#allocation2 + $0x20] sm:$0xf]
  %v5117 = vld [vmem:[#allocation2 + $0x24] sm:$0xf]
  %v5118 = vld [vmem:[#allocation2 + $0x28] sm:$0xf]
  %v5119 = vld [vmem:[#allocation2 + $0x2c] sm:$0xf]
  %v5120 = vld [vmem:[#allocation2 + $0x30] sm:$0xf]
  %v5121 = vld [vmem:[#allocation2 + $0x34] sm:$0xf]
  %v5122 = vld [vmem:[#allocation2 + $0x38] sm:$0xf]
  %v5123 = vld [vmem:[#allocation2 + $0x3c] sm:$0xf]
  %v5124 = vld [vmem:[#allocation2 + $0x40] sm:$0xf]
  %v5125 = vld [vmem:[#allocation2 + $0x44] sm:$0xf]
  %v5126 = vld [vmem:[#allocation2 + $0x48] sm:$0xf]
  %v5127 = vld [vmem:[#allocation2 + $0x4c] sm:$0xf]
  %v5128 = vld [vmem:[#allocation2 + $0x50] sm:$0xf]
  %v5129 = vld [vmem:[#allocation2 + $0x54] sm:$0xf]
  %v5130 = vld [vmem:[#allocation2 + $0x58] sm:$0xf]
  %v5131 = vld [vmem:[#allocation2 + $0x5c] sm:$0xf]
  %v5132 = vld [vmem:[#allocation2 + $0x60] sm:$0xf]
  %v5133 = vld [vmem:[#allocation2 + $0x64] sm:$0xf]
  %v5134 = vld [vmem:[#allocation2 + $0x68] sm:$0xf]
  %v5135 = vld [vmem:[#allocation2 + $0x6c] sm:$0xf]
  %v5136 = vld [vmem:[#allocation2 + $0x70] sm:$0xf]
  %v5137 = vld [vmem:[#allocation2 + $0x74] sm:$0xf]
  %v5138 = vld [vmem:[#allocation2 + $0x78] sm:$0xf]
  %v5139 = vld [vmem:[#allocation2 + $0x7c] sm:$0xf]
  %v5140 = vld [vmem:[#allocation2 + $0x80] sm:$0xf]
  %v5141 = vld [vmem:[#allocation2 + $0x84] sm:$0xf]
  %v5142 = vld [vmem:[#allocation2 + $0x88] sm:$0xf]
  %v5143 = vld [vmem:[#allocation2 + $0x8c] sm:$0xf]
  %v5144 = vld [vmem:[#allocation2 + $0x90] sm:$0xf]
  %v5145 = vld [vmem:[#allocation2 + $0x94] sm:$0xf]
  %v5146 = vld [vmem:[#allocation2 + $0x98] sm:$0xf]
  %v5147 = vld [vmem:[#allocation2 + $0x9c] sm:$0xf]
  %v5148 = vld [vmem:[#allocation2 + $0xa0] sm:$0xf]
  %v5149 = vld [vmem:[#allocation2 + $0xa4] sm:$0xf]
  %v5150 = vld [vmem:[#allocation2 + $0xa8] sm:$0xf]
  %v5151 = vld [vmem:[#allocation2 + $0xac] sm:$0xf]
  %v5152 = vld [vmem:[#allocation2 + $0xb0] sm:$0xf]
  %v5153 = vld [vmem:[#allocation2 + $0xb4] sm:$0xf]
  %v5154 = vld [vmem:[#allocation2 + $0xb8] sm:$0xf]
  %v5155 = vld [vmem:[#allocation2 + $0xbc] sm:$0xf]
  %v5156 = vld [vmem:[#allocation2 + $0xc0] sm:$0xf]
  %v5157 = vld [vmem:[#allocation2 + $0xc4] sm:$0xf]
  %v5158 = vld [vmem:[#allocation2 + $0xc8] sm:$0xf]
  %v5159 = vld [vmem:[#allocation2 + $0xcc] sm:$0xf]
  %v5160 = vld [vmem:[#allocation2 + $0xd0] sm:$0xf]
  %v5161 = vld [vmem:[#allocation2 + $0xd4] sm:$0xf]
  %v5162 = vld [vmem:[#allocation2 + $0xd8] sm:$0xf]
  %v5163 = vld [vmem:[#allocation2 + $0xdc] sm:$0xf]
  %v5164 = vld [vmem:[#allocation2 + $0xe0] sm:$0xf]
  %v5165 = vld [vmem:[#allocation2 + $0xe4] sm:$0xf]
  %v5166 = vld [vmem:[#allocation2 + $0xe8] sm:$0xf]
  %v5167 = vld [vmem:[#allocation2 + $0xec] sm:$0xf]
  %v5168 = vld [vmem:[#allocation2 + $0xf0] sm:$0xf]
  %v5169 = vld [vmem:[#allocation2 + $0xf4] sm:$0xf]
  %v5170 = vld [vmem:[#allocation2 + $0xf8] sm:$0xf]
  %v5171 = vld [vmem:[#allocation2 + $0xfc] sm:$0xf]
  %v5172 = vld [vmem:[#allocation2 + $0x100] sm:$0xf]
  %v5173 = vld [vmem:[#allocation2 + $0x104] sm:$0xf]
  %v5174 = vld [vmem:[#allocation2 + $0x108] sm:$0xf]
  %v5175 = vld [vmem:[#allocation2 + $0x10c] sm:$0xf]
  %v5176 = vld [vmem:[#allocation2 + $0x110] sm:$0xf]
  %v5177 = vld [vmem:[#allocation2 + $0x114] sm:$0xf]
  %v5178 = vld [vmem:[#allocation2 + $0x118] sm:$0xf]
  %v5179 = vld [vmem:[#allocation2 + $0x11c] sm:$0xf]
  %v5180 = vld [vmem:[#allocation2 + $0x120] sm:$0xf]
  %v5181 = vld [vmem:[#allocation2 + $0x124] sm:$0xf]
  %v5182 = vld [vmem:[#allocation2 + $0x128] sm:$0xf]
  %v5183 = vld [vmem:[#allocation2 + $0x12c] sm:$0xf]
  %v5184 = vld [vmem:[#allocation2 + $0x130] sm:$0xf]
  %v5185 = vld [vmem:[#allocation2 + $0x134] sm:$0xf]
  %v5186 = vld [vmem:[#allocation2 + $0x138] sm:$0xf]
  %v5187 = vld [vmem:[#allocation2 + $0x13c] sm:$0xf]
  %v5188 = vld [vmem:[#allocation2 + $0x140] sm:$0xf]
  %v5189 = vld [vmem:[#allocation2 + $0x144] sm:$0xf]
  %v5190 = vld [vmem:[#allocation2 + $0x148] sm:$0xf]
  %v5191 = vld [vmem:[#allocation2 + $0x14c] sm:$0xf]
  %v5192 = vld [vmem:[#allocation2 + $0x150] sm:$0xf]
  %v5193 = vld [vmem:[#allocation2 + $0x154] sm:$0xf]
  %v5194 = vld [vmem:[#allocation2 + $0x158] sm:$0x3]
  %s5195 = scalar_lea.vmem %s2, 16
  %v5196 = vld [vmem:[%s5195] sm:$0xf]
  %v5282 = vunpack.c.l.b16 %v5110
  %v5283 = vunpack.c.l.b16 %v5111
  %v5284 = vunpack.c.l.b16 %v5112
  %v5285 = vunpack.c.l.b16 %v5113
  %v5286 = vunpack.c.l.b16 %v5114
  %v5287 = vunpack.c.l.b16 %v5115
  %v5288 = vunpack.c.l.b16 %v5116
  %v5289 = vunpack.c.l.b16 %v5117
  %v5290 = vunpack.c.l.b16 %v5118
  %v5291 = vunpack.c.l.b16 %v5119
  %v5292 = vunpack.c.l.b16 %v5120
  %v5293 = vunpack.c.l.b16 %v5121
  %v5294 = vunpack.c.l.b16 %v5122
  %v5295 = vunpack.c.l.b16 %v5123
  %v5296 = vunpack.c.l.b16 %v5124
  %v5297 = vunpack.c.l.b16 %v5125
  %v5298 = vunpack.c.l.b16 %v5126
  %v5299 = vunpack.c.l.b16 %v5127
  %v5300 = vunpack.c.l.b16 %v5128
  %v5301 = vunpack.c.l.b16 %v5129
  %v5302 = vunpack.c.l.b16 %v5130
  %v5303 = vunpack.c.l.b16 %v5131
  %v5304 = vunpack.c.l.b16 %v5132
  %v5305 = vunpack.c.l.b16 %v5133
  %v5306 = vunpack.c.l.b16 %v5134
  %v5307 = vunpack.c.l.b16 %v5135
  %v5308 = vunpack.c.l.b16 %v5136
  %v5309 = vunpack.c.l.b16 %v5137
  %v5310 = vunpack.c.l.b16 %v5138
  %v5311 = vunpack.c.l.b16 %v5139
  %v5312 = vunpack.c.l.b16 %v5140
  %v5313 = vunpack.c.l.b16 %v5141
  %v5314 = vunpack.c.l.b16 %v5142
  %v5315 = vunpack.c.l.b16 %v5143
  %v5316 = vunpack.c.l.b16 %v5144
  %v5317 = vunpack.c.l.b16 %v5145
  %v5318 = vunpack.c.l.b16 %v5146
  %v5319 = vunpack.c.l.b16 %v5147
  %v5320 = vunpack.c.l.b16 %v5148
  %v5321 = vunpack.c.l.b16 %v5149
  %v5322 = vunpack.c.l.b16 %v5150
  %v5323 = vunpack.c.l.b16 %v5151
  %v5324 = vunpack.c.l.b16 %v5152
  %v5325 = vunpack.c.l.b16 %v5153
  %v5326 = vunpack.c.l.b16 %v5154
  %v5327 = vunpack.c.l.b16 %v5155
  %v5328 = vunpack.c.l.b16 %v5156
  %v5329 = vunpack.c.l.b16 %v5157
  %v5330 = vunpack.c.l.b16 %v5158
  %v5331 = vunpack.c.l.b16 %v5159
  %v5332 = vunpack.c.l.b16 %v5160
  %v5333 = vunpack.c.l.b16 %v5161
  %v5334 = vunpack.c.l.b16 %v5162
  %v5335 = vunpack.c.l.b16 %v5163
  %v5336 = vunpack.c.l.b16 %v5164
  %v5337 = vunpack.c.l.b16 %v5165
  %v5338 = vunpack.c.l.b16 %v5166
  %v5339 = vunpack.c.l.b16 %v5167
  %v5340 = vunpack.c.l.b16 %v5168
  %v5341 = vunpack.c.l.b16 %v5169
  %v5342 = vunpack.c.l.b16 %v5170
  %v5343 = vunpack.c.l.b16 %v5171
  %v5344 = vunpack.c.l.b16 %v5172
  %v5345 = vunpack.c.l.b16 %v5173
  %v5346 = vunpack.c.l.b16 %v5174
  %v5347 = vunpack.c.l.b16 %v5175
  %v5348 = vunpack.c.l.b16 %v5176
  %v5349 = vunpack.c.l.b16 %v5177
  %v5350 = vunpack.c.l.b16 %v5178
  %v5351 = vunpack.c.l.b16 %v5179
  %v5352 = vunpack.c.l.b16 %v5180
  %v5353 = vunpack.c.l.b16 %v5181
  %v5354 = vunpack.c.l.b16 %v5182
  %v5355 = vunpack.c.l.b16 %v5183
  %v5356 = vunpack.c.l.b16 %v5184
  %v5357 = vunpack.c.l.b16 %v5185
  %v5358 = vunpack.c.l.b16 %v5186
  %v5359 = vunpack.c.l.b16 %v5187
  %v5360 = vunpack.c.l.b16 %v5188
  %v5361 = vunpack.c.l.b16 %v5189
  %v5362 = vunpack.c.l.b16 %v5190
  %v5363 = vunpack.c.l.b16 %v5191
  %v5364 = vunpack.c.l.b16 %v5192
  %v5365 = vunpack.c.l.b16 %v5193
  %v5366 = vunpack.c.l.b16 %v5194
  %v5367 = vpack.c.b16 %v5283, %v5282
  %v5368 = vpack.c.b16 %v5285, %v5284
  %v5369 = vpack.c.b16 %v5287, %v5286
  %v5370 = vpack.c.b16 %v5289, %v5288
  %v5371 = vpack.c.b16 %v5291, %v5290
  %v5372 = vpack.c.b16 %v5293, %v5292
  %v5373 = vpack.c.b16 %v5295, %v5294
  %v5374 = vpack.c.b16 %v5297, %v5296
  %v5375 = vpack.c.b16 %v5299, %v5298
  %v5376 = vpack.c.b16 %v5301, %v5300
  %v5377 = vpack.c.b16 %v5303, %v5302
  %v5378 = vpack.c.b16 %v5305, %v5304
  %v5379 = vpack.c.b16 %v5307, %v5306
  %v5380 = vpack.c.b16 %v5309, %v5308
  %v5381 = vpack.c.b16 %v5311, %v5310
  %v5382 = vpack.c.b16 %v5313, %v5312
  %v5383 = vpack.c.b16 %v5315, %v5314
  %v5384 = vpack.c.b16 %v5317, %v5316
  %v5385 = vpack.c.b16 %v5319, %v5318
  %v5386 = vpack.c.b16 %v5321, %v5320
  %v5387 = vpack.c.b16 %v5323, %v5322
  %v5388 = vpack.c.b16 %v5325, %v5324
  %v5389 = vpack.c.b16 %v5327, %v5326
  %v5390 = vpack.c.b16 %v5329, %v5328
  %v5391 = vpack.c.b16 %v5331, %v5330
  %v5392 = vpack.c.b16 %v5333, %v5332
  %v5393 = vpack.c.b16 %v5335, %v5334
  %v5394 = vpack.c.b16 %v5337, %v5336
  %v5395 = vpack.c.b16 %v5339, %v5338
  %v5396 = vpack.c.b16 %v5341, %v5340
  %v5397 = vpack.c.b16 %v5343, %v5342
  %v5398 = vpack.c.b16 %v5345, %v5344
  %v5399 = vpack.c.b16 %v5347, %v5346
  %v5400 = vpack.c.b16 %v5349, %v5348
  %v5401 = vpack.c.b16 %v5351, %v5350
  %v5402 = vpack.c.b16 %v5353, %v5352
  %v5403 = vpack.c.b16 %v5355, %v5354
  %v5404 = vpack.c.b16 %v5357, %v5356
  %v5405 = vpack.c.b16 %v5359, %v5358
  %v5406 = vpack.c.b16 %v5361, %v5360
  %v5407 = vpack.c.b16 %v5363, %v5362
  %v5408 = vpack.c.b16 %v5365, %v5364
  %v5409 = vpack.c.b16 %v5366, %v5366
  %vm5410 = vsmask.f32 6400
  %v5412 = vshrl.u32 %v5367, 16
  %v5414 = vrot.slane %v5412, 1
  %v5415 = vshll.u32 %v5367, 16
  %v5417 = vrot.slane %v5415, 2
  %v5418 = vor.u32 %v5414, %v5417
  %v5420 = vshrl.u32 %v5368, 16
  %v5422 = vrot.slane %v5420, 1
  %v5423 = vshll.u32 %v5368, 16
  %v5425 = vrot.slane %v5423, 2
  %v5426 = vor.u32 %v5422, %v5425
  %v5427 = vsel %vm5410, %v5418, %v5426
  %v5429 = vshrl.u32 %v5369, 16
  %v5431 = vrot.slane %v5429, 1
  %v5432 = vshll.u32 %v5369, 16
  %v5434 = vrot.slane %v5432, 2
  %v5435 = vor.u32 %v5431, %v5434
  %v5436 = vsel %vm5410, %v5426, %v5435
  %v5438 = vshrl.u32 %v5370, 16
  %v5440 = vrot.slane %v5438, 1
  %v5441 = vshll.u32 %v5370, 16
  %v5443 = vrot.slane %v5441, 2
  %v5444 = vor.u32 %v5440, %v5443
  %v5445 = vsel %vm5410, %v5435, %v5444
  %v5447 = vshrl.u32 %v5371, 16
  %v5449 = vrot.slane %v5447, 1
  %v5450 = vshll.u32 %v5371, 16
  %v5452 = vrot.slane %v5450, 2
  %v5453 = vor.u32 %v5449, %v5452
  %v5454 = vsel %vm5410, %v5444, %v5453
  %v5456 = vshrl.u32 %v5372, 16
  %v5458 = vrot.slane %v5456, 1
  %v5459 = vshll.u32 %v5372, 16
  %v5461 = vrot.slane %v5459, 2
  %v5462 = vor.u32 %v5458, %v5461
  %v5463 = vsel %vm5410, %v5453, %v5462
  %v5465 = vshrl.u32 %v5373, 16
  %v5467 = vrot.slane %v5465, 1
  %v5468 = vshll.u32 %v5373, 16
  %v5470 = vrot.slane %v5468, 2
  %v5471 = vor.u32 %v5467, %v5470
  %v5472 = vsel %vm5410, %v5462, %v5471
  %v5474 = vshrl.u32 %v5374, 16
  %v5476 = vrot.slane %v5474, 1
  %v5477 = vshll.u32 %v5374, 16
  %v5479 = vrot.slane %v5477, 2
  %v5480 = vor.u32 %v5476, %v5479
  %v5481 = vsel %vm5410, %v5471, %v5480
  %v5483 = vshrl.u32 %v5375, 16
  %v5485 = vrot.slane %v5483, 1
  %v5486 = vshll.u32 %v5375, 16
  %v5488 = vrot.slane %v5486, 2
  %v5489 = vor.u32 %v5485, %v5488
  %v5490 = vsel %vm5410, %v5480, %v5489
  %v5492 = vshrl.u32 %v5376, 16
  %v5494 = vrot.slane %v5492, 1
  %v5495 = vshll.u32 %v5376, 16
  %v5497 = vrot.slane %v5495, 2
  %v5498 = vor.u32 %v5494, %v5497
  %v5499 = vsel %vm5410, %v5489, %v5498
  %v5501 = vshrl.u32 %v5377, 16
  %v5503 = vrot.slane %v5501, 1
  %v5504 = vshll.u32 %v5377, 16
  %v5506 = vrot.slane %v5504, 2
  %v5507 = vor.u32 %v5503, %v5506
  %v5508 = vsel %vm5410, %v5498, %v5507
  %v5510 = vshrl.u32 %v5378, 16
  %v5512 = vrot.slane %v5510, 1
  %v5513 = vshll.u32 %v5378, 16
  %v5515 = vrot.slane %v5513, 2
  %v5516 = vor.u32 %v5512, %v5515
  %v5517 = vsel %vm5410, %v5507, %v5516
  %v5519 = vshrl.u32 %v5379, 16
  %v5521 = vrot.slane %v5519, 1
  %v5522 = vshll.u32 %v5379, 16
  %v5524 = vrot.slane %v5522, 2
  %v5525 = vor.u32 %v5521, %v5524
  %v5526 = vsel %vm5410, %v5516, %v5525
  %v5528 = vshrl.u32 %v5380, 16
  %v5530 = vrot.slane %v5528, 1
  %v5531 = vshll.u32 %v5380, 16
  %v5533 = vrot.slane %v5531, 2
  %v5534 = vor.u32 %v5530, %v5533
  %v5535 = vsel %vm5410, %v5525, %v5534
  %v5537 = vshrl.u32 %v5381, 16
  %v5539 = vrot.slane %v5537, 1
  %v5540 = vshll.u32 %v5381, 16
  %v5542 = vrot.slane %v5540, 2
  %v5543 = vor.u32 %v5539, %v5542
  %v5544 = vsel %vm5410, %v5534, %v5543
  %v5546 = vshrl.u32 %v5382, 16
  %v5548 = vrot.slane %v5546, 1
  %v5549 = vshll.u32 %v5382, 16
  %v5551 = vrot.slane %v5549, 2
  %v5552 = vor.u32 %v5548, %v5551
  %v5553 = vsel %vm5410, %v5543, %v5552
  %v5555 = vshrl.u32 %v5383, 16
  %v5557 = vrot.slane %v5555, 1
  %v5558 = vshll.u32 %v5383, 16
  %v5560 = vrot.slane %v5558, 2
  %v5561 = vor.u32 %v5557, %v5560
  %v5562 = vsel %vm5410, %v5552, %v5561
  %v5564 = vshrl.u32 %v5384, 16
  %v5566 = vrot.slane %v5564, 1
  %v5567 = vshll.u32 %v5384, 16
  %v5569 = vrot.slane %v5567, 2
  %v5570 = vor.u32 %v5566, %v5569
  %v5571 = vsel %vm5410, %v5561, %v5570
  %v5573 = vshrl.u32 %v5385, 16
  %v5575 = vrot.slane %v5573, 1
  %v5576 = vshll.u32 %v5385, 16
  %v5578 = vrot.slane %v5576, 2
  %v5579 = vor.u32 %v5575, %v5578
  %v5580 = vsel %vm5410, %v5570, %v5579
  %v5582 = vshrl.u32 %v5386, 16
  %v5584 = vrot.slane %v5582, 1
  %v5585 = vshll.u32 %v5386, 16
  %v5587 = vrot.slane %v5585, 2
  %v5588 = vor.u32 %v5584, %v5587
  %v5589 = vsel %vm5410, %v5579, %v5588
  %v5591 = vshrl.u32 %v5387, 16
  %v5593 = vrot.slane %v5591, 1
  %v5594 = vshll.u32 %v5387, 16
  %v5596 = vrot.slane %v5594, 2
  %v5597 = vor.u32 %v5593, %v5596
  %v5598 = vsel %vm5410, %v5588, %v5597
  %v5600 = vshrl.u32 %v5388, 16
  %v5602 = vrot.slane %v5600, 1
  %v5603 = vshll.u32 %v5388, 16
  %v5605 = vrot.slane %v5603, 2
  %v5606 = vor.u32 %v5602, %v5605
  %v5607 = vsel %vm5410, %v5597, %v5606
  %v5609 = vshrl.u32 %v5389, 16
  %v5611 = vrot.slane %v5609, 1
  %v5612 = vshll.u32 %v5389, 16
  %v5614 = vrot.slane %v5612, 2
  %v5615 = vor.u32 %v5611, %v5614
  %v5616 = vsel %vm5410, %v5606, %v5615
  %v5618 = vshrl.u32 %v5390, 16
  %v5620 = vrot.slane %v5618, 1
  %v5621 = vshll.u32 %v5390, 16
  %v5623 = vrot.slane %v5621, 2
  %v5624 = vor.u32 %v5620, %v5623
  %v5625 = vsel %vm5410, %v5615, %v5624
  %v5627 = vshrl.u32 %v5391, 16
  %v5629 = vrot.slane %v5627, 1
  %v5630 = vshll.u32 %v5391, 16
  %v5632 = vrot.slane %v5630, 2
  %v5633 = vor.u32 %v5629, %v5632
  %v5634 = vsel %vm5410, %v5624, %v5633
  %v5636 = vshrl.u32 %v5392, 16
  %v5638 = vrot.slane %v5636, 1
  %v5639 = vshll.u32 %v5392, 16
  %v5641 = vrot.slane %v5639, 2
  %v5642 = vor.u32 %v5638, %v5641
  %v5643 = vsel %vm5410, %v5633, %v5642
  %v5645 = vshrl.u32 %v5393, 16
  %v5647 = vrot.slane %v5645, 1
  %v5648 = vshll.u32 %v5393, 16
  %v5650 = vrot.slane %v5648, 2
  %v5651 = vor.u32 %v5647, %v5650
  %v5652 = vsel %vm5410, %v5642, %v5651
  %v5654 = vshrl.u32 %v5394, 16
  %v5656 = vrot.slane %v5654, 1
  %v5657 = vshll.u32 %v5394, 16
  %v5659 = vrot.slane %v5657, 2
  %v5660 = vor.u32 %v5656, %v5659
  %v5661 = vsel %vm5410, %v5651, %v5660
  %v5663 = vshrl.u32 %v5395, 16
  %v5665 = vrot.slane %v5663, 1
  %v5666 = vshll.u32 %v5395, 16
  %v5668 = vrot.slane %v5666, 2
  %v5669 = vor.u32 %v5665, %v5668
  %v5670 = vsel %vm5410, %v5660, %v5669
  %v5672 = vshrl.u32 %v5396, 16
  %v5674 = vrot.slane %v5672, 1
  %v5675 = vshll.u32 %v5396, 16
  %v5677 = vrot.slane %v5675, 2
  %v5678 = vor.u32 %v5674, %v5677
  %v5679 = vsel %vm5410, %v5669, %v5678
  %v5681 = vshrl.u32 %v5397, 16
  %v5683 = vrot.slane %v5681, 1
  %v5684 = vshll.u32 %v5397, 16
  %v5686 = vrot.slane %v5684, 2
  %v5687 = vor.u32 %v5683, %v5686
  %v5688 = vsel %vm5410, %v5678, %v5687
  %v5690 = vshrl.u32 %v5398, 16
  %v5692 = vrot.slane %v5690, 1
  %v5693 = vshll.u32 %v5398, 16
  %v5695 = vrot.slane %v5693, 2
  %v5696 = vor.u32 %v5692, %v5695
  %v5697 = vsel %vm5410, %v5687, %v5696
  %v5699 = vshrl.u32 %v5399, 16
  %v5701 = vrot.slane %v5699, 1
  %v5702 = vshll.u32 %v5399, 16
  %v5704 = vrot.slane %v5702, 2
  %v5705 = vor.u32 %v5701, %v5704
  %v5706 = vsel %vm5410, %v5696, %v5705
  %v5708 = vshrl.u32 %v5400, 16
  %v5710 = vrot.slane %v5708, 1
  %v5711 = vshll.u32 %v5400, 16
  %v5713 = vrot.slane %v5711, 2
  %v5714 = vor.u32 %v5710, %v5713
  %v5715 = vsel %vm5410, %v5705, %v5714
  %v5717 = vshrl.u32 %v5401, 16
  %v5719 = vrot.slane %v5717, 1
  %v5720 = vshll.u32 %v5401, 16
  %v5722 = vrot.slane %v5720, 2
  %v5723 = vor.u32 %v5719, %v5722
  %v5724 = vsel %vm5410, %v5714, %v5723
  %v5726 = vshrl.u32 %v5402, 16
  %v5728 = vrot.slane %v5726, 1
  %v5729 = vshll.u32 %v5402, 16
  %v5731 = vrot.slane %v5729, 2
  %v5732 = vor.u32 %v5728, %v5731
  %v5733 = vsel %vm5410, %v5723, %v5732
  %v5735 = vshrl.u32 %v5403, 16
  %v5737 = vrot.slane %v5735, 1
  %v5738 = vshll.u32 %v5403, 16
  %v5740 = vrot.slane %v5738, 2
  %v5741 = vor.u32 %v5737, %v5740
  %v5742 = vsel %vm5410, %v5732, %v5741
  %v5744 = vshrl.u32 %v5404, 16
  %v5746 = vrot.slane %v5744, 1
  %v5747 = vshll.u32 %v5404, 16
  %v5749 = vrot.slane %v5747, 2
  %v5750 = vor.u32 %v5746, %v5749
  %v5751 = vsel %vm5410, %v5741, %v5750
  %v5753 = vshrl.u32 %v5405, 16
  %v5755 = vrot.slane %v5753, 1
  %v5756 = vshll.u32 %v5405, 16
  %v5758 = vrot.slane %v5756, 2
  %v5759 = vor.u32 %v5755, %v5758
  %v5760 = vsel %vm5410, %v5750, %v5759
  %v5762 = vshrl.u32 %v5406, 16
  %v5764 = vrot.slane %v5762, 1
  %v5765 = vshll.u32 %v5406, 16
  %v5767 = vrot.slane %v5765, 2
  %v5768 = vor.u32 %v5764, %v5767
  %v5769 = vsel %vm5410, %v5759, %v5768
  %v5771 = vshrl.u32 %v5407, 16
  %v5773 = vrot.slane %v5771, 1
  %v5774 = vshll.u32 %v5407, 16
  %v5776 = vrot.slane %v5774, 2
  %v5777 = vor.u32 %v5773, %v5776
  %v5778 = vsel %vm5410, %v5768, %v5777
  %v5780 = vshrl.u32 %v5408, 16
  %v5782 = vrot.slane %v5780, 1
  %v5783 = vshll.u32 %v5408, 16
  %v5785 = vrot.slane %v5783, 2
  %v5786 = vor.u32 %v5782, %v5785
  %v5787 = vsel %vm5410, %v5777, %v5786
  %v5789 = vshrl.u32 %v5409, 16
  %v5791 = vrot.slane %v5789, 1
  %v5792 = vshll.u32 %v5409, 16
  %v5794 = vrot.slane %v5792, 2
  %v5795 = vor.u32 %v5791, %v5794
  %v5796 = vsel %vm5410, %v5786, %v5795
  %v5798 = vsel %vm696, %v5427, 0
  %v5801 = vsel %vm696, %v5436, 0
  %v5804 = vsel %vm696, %v5445, 0
  %v5807 = vsel %vm696, %v5454, 0
  %v5810 = vsel %vm696, %v5463, 0
  %v5813 = vsel %vm696, %v5472, 0
  %v5816 = vsel %vm696, %v5481, 0
  %v5819 = vsel %vm696, %v5490, 0
  %v5822 = vsel %vm696, %v5499, 0
  %v5825 = vsel %vm696, %v5508, 0
  %v5828 = vsel %vm696, %v5517, 0
  %v5831 = vsel %vm696, %v5526, 0
  %v5834 = vsel %vm696, %v5535, 0
  %v5837 = vsel %vm696, %v5544, 0
  %v5840 = vsel %vm696, %v5553, 0
  %v5843 = vsel %vm696, %v5562, 0
  %v5846 = vsel %vm696, %v5571, 0
  %v5849 = vsel %vm696, %v5580, 0
  %v5852 = vsel %vm696, %v5589, 0
  %v5855 = vsel %vm696, %v5598, 0
  %v5858 = vsel %vm696, %v5607, 0
  %v5861 = vsel %vm696, %v5616, 0
  %v5864 = vsel %vm696, %v5625, 0
  %v5867 = vsel %vm696, %v5634, 0
  %v5870 = vsel %vm696, %v5643, 0
  %v5873 = vsel %vm696, %v5652, 0
  %v5876 = vsel %vm696, %v5661, 0
  %v5879 = vsel %vm696, %v5670, 0
  %v5882 = vsel %vm696, %v5679, 0
  %v5885 = vsel %vm696, %v5688, 0
  %v5888 = vsel %vm696, %v5697, 0
  %v5891 = vsel %vm696, %v5706, 0
  %v5894 = vsel %vm696, %v5715, 0
  %v5897 = vsel %vm696, %v5724, 0
  %v5900 = vsel %vm696, %v5733, 0
  %v5903 = vsel %vm696, %v5742, 0
  %v5906 = vsel %vm696, %v5751, 0
  %v5909 = vsel %vm696, %v5760, 0
  %v5912 = vsel %vm696, %v5769, 0
  %v5915 = vsel %vm696, %v5778, 0
  %v5918 = vsel %vm696, %v5787, 0
  %v5921 = vsel %vm696, %v5796, 0
  %v5924 = vsel %vm823, %v5196, 0
  %5926 = vmatprep.subr.bf16.mxu0 0
  %5927 = vmatpush1.bf16.msra.mxu0 0
  %5928 = vmatprep.subr.bf16.mxu0 0
  %5929 = vmatpush1.bf16.msra.mxu0 0
  %5930 = vmatprep.subr.bf16.mxu0 0
  %5931 = vmatpush1.bf16.msra.mxu0 0
  %5932 = vmatprep.subr.bf16.mxu0 0
  %5933 = vmatpush1.bf16.msra.mxu0 0
  %5934 = vmatprep.subr.bf16.mxu0 0
  %5935 = vmatpush1.bf16.msra.mxu0 0
  %5936 = vmatprep.subr.bf16.mxu0 0
  %5937 = vmatpush1.bf16.msra.mxu0 0
  %5938 = vmatprep.subr.bf16.mxu0 0
  %5939 = vmatpush1.bf16.msra.mxu0 0
  %5940 = vmatprep.subr.bf16.mxu0 0
  %5941 = vmatpush1.bf16.msra.mxu0 %v5924
  %5942 = vmatprep.subr.bf16.mxu0 0
  %5943 = vmatpush2.bf16.msra.mxu0 0
  %5944 = vmatprep.subr.bf16.mxu0 0
  %5945 = vmatpush2.bf16.msra.mxu0 0
  %5946 = vmatprep.subr.bf16.mxu0 0
  %5947 = vmatpush2.bf16.msra.mxu0 0
  %5948 = vmatprep.subr.bf16.mxu0 0
  %5949 = vmatpush2.bf16.msra.mxu0 0
  %5950 = vmatprep.subr.bf16.mxu0 0
  %5951 = vmatpush2.bf16.msra.mxu0 0
  %5952 = vmatprep.subr.bf16.mxu0 0
  %5953 = vmatpush2.bf16.msra.mxu0 0
  %5954 = vmatprep.subr.bf16.mxu0 0
  %5955 = vmatpush2.bf16.msra.mxu0 0
  %5956 = vmatprep.subr.bf16.mxu0 0
  %5957 = vmatpush2.bf16.msra.mxu0 0
  %5958 = vmatprep.mubr.bf16.mxu0 0
  %5959 = vmatmul.mubr.bf16.gmra.mxu0 %v5798
  %v5960 = vpop.f32.mrf.mxu0
  %v5961 = vadd.f32 0.0, %v5960
  %v5962 = vpop.f32.mrf.mxu0
  %v5963 = vpop.f32.mrf.mxu0
  %v5964 = vadd.f32 0.0, %v5963
  %v5965 = vpop.f32.mrf.mxu0
  %5966 = vmatprep.mubr.bf16.mxu0 0
  %5967 = vmatmul.mubr.bf16.gmra.mxu0 %v5801
  %v5968 = vpop.f32.mrf.mxu0
  %v5969 = vadd.f32 0.0, %v5968
  %v5970 = vpop.f32.mrf.mxu0
  %v5971 = vpop.f32.mrf.mxu0
  %v5972 = vadd.f32 0.0, %v5971
  %v5973 = vpop.f32.mrf.mxu0
  %5974 = vmatprep.mubr.bf16.mxu0 0
  %5975 = vmatmul.mubr.bf16.gmra.mxu0 %v5804
  %v5976 = vpop.f32.mrf.mxu0
  %v5977 = vadd.f32 0.0, %v5976
  %v5978 = vpop.f32.mrf.mxu0
  %v5979 = vpop.f32.mrf.mxu0
  %v5980 = vadd.f32 0.0, %v5979
  %v5981 = vpop.f32.mrf.mxu0
  %5982 = vmatprep.mubr.bf16.mxu0 0
  %5983 = vmatmul.mubr.bf16.gmra.mxu0 %v5807
  %v5984 = vpop.f32.mrf.mxu0
  %v5985 = vadd.f32 0.0, %v5984
  %v5986 = vpop.f32.mrf.mxu0
  %v5987 = vpop.f32.mrf.mxu0
  %v5988 = vadd.f32 0.0, %v5987
  %v5989 = vpop.f32.mrf.mxu0
  %5990 = vmatprep.mubr.bf16.mxu0 0
  %5991 = vmatmul.mubr.bf16.gmra.mxu0 %v5810
  %v5992 = vpop.f32.mrf.mxu0
  %v5993 = vadd.f32 0.0, %v5992
  %v5994 = vpop.f32.mrf.mxu0
  %v5995 = vpop.f32.mrf.mxu0
  %v5996 = vadd.f32 0.0, %v5995
  %v5997 = vpop.f32.mrf.mxu0
  %5998 = vmatprep.mubr.bf16.mxu0 0
  %5999 = vmatmul.mubr.bf16.gmra.mxu0 %v5813
  %v6000 = vpop.f32.mrf.mxu0
  %v6001 = vadd.f32 0.0, %v6000
  %v6002 = vpop.f32.mrf.mxu0
  %v6003 = vpop.f32.mrf.mxu0
  %v6004 = vadd.f32 0.0, %v6003
  %v6005 = vpop.f32.mrf.mxu0
  %6006 = vmatprep.mubr.bf16.mxu0 0
  %6007 = vmatmul.mubr.bf16.gmra.mxu0 %v5816
  %v6008 = vpop.f32.mrf.mxu0
  %v6009 = vadd.f32 0.0, %v6008
  %v6010 = vpop.f32.mrf.mxu0
  %v6011 = vpop.f32.mrf.mxu0
  %v6012 = vadd.f32 0.0, %v6011
  %v6013 = vpop.f32.mrf.mxu0
  %6014 = vmatprep.mubr.bf16.mxu0 0
  %6015 = vmatmul.mubr.bf16.gmra.mxu0 %v5819
  %v6016 = vpop.f32.mrf.mxu0
  %v6017 = vadd.f32 0.0, %v6016
  %v6018 = vpop.f32.mrf.mxu0
  %v6019 = vpop.f32.mrf.mxu0
  %v6020 = vadd.f32 0.0, %v6019
  %v6021 = vpop.f32.mrf.mxu0
  %6022 = vmatprep.mubr.bf16.mxu0 0
  %6023 = vmatmul.mubr.bf16.gmra.mxu0 %v5822
  %v6024 = vpop.f32.mrf.mxu0
  %v6025 = vadd.f32 0.0, %v6024
  %v6026 = vpop.f32.mrf.mxu0
  %v6027 = vpop.f32.mrf.mxu0
  %v6028 = vadd.f32 0.0, %v6027
  %v6029 = vpop.f32.mrf.mxu0
  %6030 = vmatprep.mubr.bf16.mxu0 0
  %6031 = vmatmul.mubr.bf16.gmra.mxu0 %v5825
  %v6032 = vpop.f32.mrf.mxu0
  %v6033 = vadd.f32 0.0, %v6032
  %v6034 = vpop.f32.mrf.mxu0
  %v6035 = vpop.f32.mrf.mxu0
  %v6036 = vadd.f32 0.0, %v6035
  %v6037 = vpop.f32.mrf.mxu0
  %6038 = vmatprep.mubr.bf16.mxu0 0
  %6039 = vmatmul.mubr.bf16.gmra.mxu0 %v5828
  %v6040 = vpop.f32.mrf.mxu0
  %v6041 = vadd.f32 0.0, %v6040
  %v6042 = vpop.f32.mrf.mxu0
  %v6043 = vpop.f32.mrf.mxu0
  %v6044 = vadd.f32 0.0, %v6043
  %v6045 = vpop.f32.mrf.mxu0
  %6046 = vmatprep.mubr.bf16.mxu0 0
  %6047 = vmatmul.mubr.bf16.gmra.mxu0 %v5831
  %v6048 = vpop.f32.mrf.mxu0
  %v6049 = vadd.f32 0.0, %v6048
  %v6050 = vpop.f32.mrf.mxu0
  %v6051 = vpop.f32.mrf.mxu0
  %v6052 = vadd.f32 0.0, %v6051
  %v6053 = vpop.f32.mrf.mxu0
  %6054 = vmatprep.mubr.bf16.mxu0 0
  %6055 = vmatmul.mubr.bf16.gmra.mxu0 %v5834
  %v6056 = vpop.f32.mrf.mxu0
  %v6057 = vadd.f32 0.0, %v6056
  %v6058 = vpop.f32.mrf.mxu0
  %v6059 = vpop.f32.mrf.mxu0
  %v6060 = vadd.f32 0.0, %v6059
  %v6061 = vpop.f32.mrf.mxu0
  %6062 = vmatprep.mubr.bf16.mxu0 0
  %6063 = vmatmul.mubr.bf16.gmra.mxu0 %v5837
  %v6064 = vpop.f32.mrf.mxu0
  %v6065 = vadd.f32 0.0, %v6064
  %v6066 = vpop.f32.mrf.mxu0
  %v6067 = vpop.f32.mrf.mxu0
  %v6068 = vadd.f32 0.0, %v6067
  %v6069 = vpop.f32.mrf.mxu0
  %6070 = vmatprep.mubr.bf16.mxu0 0
  %6071 = vmatmul.mubr.bf16.gmra.mxu0 %v5840
  %v6072 = vpop.f32.mrf.mxu0
  %v6073 = vadd.f32 0.0, %v6072
  %v6074 = vpop.f32.mrf.mxu0
  %v6075 = vpop.f32.mrf.mxu0
  %v6076 = vadd.f32 0.0, %v6075
  %v6077 = vpop.f32.mrf.mxu0
  %6078 = vmatprep.mubr.bf16.mxu0 0
  %6079 = vmatmul.mubr.bf16.gmra.mxu0 %v5843
  %v6080 = vpop.f32.mrf.mxu0
  %v6081 = vadd.f32 0.0, %v6080
  %v6082 = vpop.f32.mrf.mxu0
  %v6083 = vpop.f32.mrf.mxu0
  %v6084 = vadd.f32 0.0, %v6083
  %v6085 = vpop.f32.mrf.mxu0
  %6086 = vmatprep.mubr.bf16.mxu0 0
  %6087 = vmatmul.mubr.bf16.gmra.mxu0 %v5846
  %v6088 = vpop.f32.mrf.mxu0
  %v6089 = vadd.f32 0.0, %v6088
  %v6090 = vpop.f32.mrf.mxu0
  %v6091 = vpop.f32.mrf.mxu0
  %v6092 = vadd.f32 0.0, %v6091
  %v6093 = vpop.f32.mrf.mxu0
  %6094 = vmatprep.mubr.bf16.mxu0 0
  %6095 = vmatmul.mubr.bf16.gmra.mxu0 %v5849
  %v6096 = vpop.f32.mrf.mxu0
  %v6097 = vadd.f32 0.0, %v6096
  %v6098 = vpop.f32.mrf.mxu0
  %v6099 = vpop.f32.mrf.mxu0
  %v6100 = vadd.f32 0.0, %v6099
  %v6101 = vpop.f32.mrf.mxu0
  %6102 = vmatprep.mubr.bf16.mxu0 0
  %6103 = vmatmul.mubr.bf16.gmra.mxu0 %v5852
  %v6104 = vpop.f32.mrf.mxu0
  %v6105 = vadd.f32 0.0, %v6104
  %v6106 = vpop.f32.mrf.mxu0
  %v6107 = vpop.f32.mrf.mxu0
  %v6108 = vadd.f32 0.0, %v6107
  %v6109 = vpop.f32.mrf.mxu0
  %6110 = vmatprep.mubr.bf16.mxu0 0
  %6111 = vmatmul.mubr.bf16.gmra.mxu0 %v5855
  %v6112 = vpop.f32.mrf.mxu0
  %v6113 = vadd.f32 0.0, %v6112
  %v6114 = vpop.f32.mrf.mxu0
  %v6115 = vpop.f32.mrf.mxu0
  %v6116 = vadd.f32 0.0, %v6115
  %v6117 = vpop.f32.mrf.mxu0
  %6118 = vmatprep.mubr.bf16.mxu0 0
  %6119 = vmatmul.mubr.bf16.gmra.mxu0 %v5858
  %v6120 = vpop.f32.mrf.mxu0
  %v6121 = vadd.f32 0.0, %v6120
  %v6122 = vpop.f32.mrf.mxu0
  %v6123 = vpop.f32.mrf.mxu0
  %v6124 = vadd.f32 0.0, %v6123
  %v6125 = vpop.f32.mrf.mxu0
  %6126 = vmatprep.mubr.bf16.mxu0 0
  %6127 = vmatmul.mubr.bf16.gmra.mxu0 %v5861
  %v6128 = vpop.f32.mrf.mxu0
  %v6129 = vadd.f32 0.0, %v6128
  %v6130 = vpop.f32.mrf.mxu0
  %v6131 = vpop.f32.mrf.mxu0
  %v6132 = vadd.f32 0.0, %v6131
  %v6133 = vpop.f32.mrf.mxu0
  %6134 = vmatprep.mubr.bf16.mxu0 0
  %6135 = vmatmul.mubr.bf16.gmra.mxu0 %v5864
  %v6136 = vpop.f32.mrf.mxu0
  %v6137 = vadd.f32 0.0, %v6136
  %v6138 = vpop.f32.mrf.mxu0
  %v6139 = vpop.f32.mrf.mxu0
  %v6140 = vadd.f32 0.0, %v6139
  %v6141 = vpop.f32.mrf.mxu0
  %6142 = vmatprep.mubr.bf16.mxu0 0
  %6143 = vmatmul.mubr.bf16.gmra.mxu0 %v5867
  %v6144 = vpop.f32.mrf.mxu0
  %v6145 = vadd.f32 0.0, %v6144
  %v6146 = vpop.f32.mrf.mxu0
  %v6147 = vpop.f32.mrf.mxu0
  %v6148 = vadd.f32 0.0, %v6147
  %v6149 = vpop.f32.mrf.mxu0
  %6150 = vmatprep.mubr.bf16.mxu0 0
  %6151 = vmatmul.mubr.bf16.gmra.mxu0 %v5870
  %v6152 = vpop.f32.mrf.mxu0
  %v6153 = vadd.f32 0.0, %v6152
  %v6154 = vpop.f32.mrf.mxu0
  %v6155 = vpop.f32.mrf.mxu0
  %v6156 = vadd.f32 0.0, %v6155
  %v6157 = vpop.f32.mrf.mxu0
  %6158 = vmatprep.mubr.bf16.mxu0 0
  %6159 = vmatmul.mubr.bf16.gmra.mxu0 %v5873
  %v6160 = vpop.f32.mrf.mxu0
  %v6161 = vadd.f32 0.0, %v6160
  %v6162 = vpop.f32.mrf.mxu0
  %v6163 = vpop.f32.mrf.mxu0
  %v6164 = vadd.f32 0.0, %v6163
  %v6165 = vpop.f32.mrf.mxu0
  %6166 = vmatprep.mubr.bf16.mxu0 0
  %6167 = vmatmul.mubr.bf16.gmra.mxu0 %v5876
  %v6168 = vpop.f32.mrf.mxu0
  %v6169 = vadd.f32 0.0, %v6168
  %v6170 = vpop.f32.mrf.mxu0
  %v6171 = vpop.f32.mrf.mxu0
  %v6172 = vadd.f32 0.0, %v6171
  %v6173 = vpop.f32.mrf.mxu0
  %6174 = vmatprep.mubr.bf16.mxu0 0
  %6175 = vmatmul.mubr.bf16.gmra.mxu0 %v5879
  %v6176 = vpop.f32.mrf.mxu0
  %v6177 = vadd.f32 0.0, %v6176
  %v6178 = vpop.f32.mrf.mxu0
  %v6179 = vpop.f32.mrf.mxu0
  %v6180 = vadd.f32 0.0, %v6179
  %v6181 = vpop.f32.mrf.mxu0
  %6182 = vmatprep.mubr.bf16.mxu0 0
  %6183 = vmatmul.mubr.bf16.gmra.mxu0 %v5882
  %v6184 = vpop.f32.mrf.mxu0
  %v6185 = vadd.f32 0.0, %v6184
  %v6186 = vpop.f32.mrf.mxu0
  %v6187 = vpop.f32.mrf.mxu0
  %v6188 = vadd.f32 0.0, %v6187
  %v6189 = vpop.f32.mrf.mxu0
  %6190 = vmatprep.mubr.bf16.mxu0 0
  %6191 = vmatmul.mubr.bf16.gmra.mxu0 %v5885
  %v6192 = vpop.f32.mrf.mxu0
  %v6193 = vadd.f32 0.0, %v6192
  %v6194 = vpop.f32.mrf.mxu0
  %v6195 = vpop.f32.mrf.mxu0
  %v6196 = vadd.f32 0.0, %v6195
  %v6197 = vpop.f32.mrf.mxu0
  %6198 = vmatprep.mubr.bf16.mxu0 0
  %6199 = vmatmul.mubr.bf16.gmra.mxu0 %v5888
  %v6200 = vpop.f32.mrf.mxu0
  %v6201 = vadd.f32 0.0, %v6200
  %v6202 = vpop.f32.mrf.mxu0
  %v6203 = vpop.f32.mrf.mxu0
  %v6204 = vadd.f32 0.0, %v6203
  %v6205 = vpop.f32.mrf.mxu0
  %6206 = vmatprep.mubr.bf16.mxu0 0
  %6207 = vmatmul.mubr.bf16.gmra.mxu0 %v5891
  %v6208 = vpop.f32.mrf.mxu0
  %v6209 = vadd.f32 0.0, %v6208
  %v6210 = vpop.f32.mrf.mxu0
  %v6211 = vpop.f32.mrf.mxu0
  %v6212 = vadd.f32 0.0, %v6211
  %v6213 = vpop.f32.mrf.mxu0
  %6214 = vmatprep.mubr.bf16.mxu0 0
  %6215 = vmatmul.mubr.bf16.gmra.mxu0 %v5894
  %v6216 = vpop.f32.mrf.mxu0
  %v6217 = vadd.f32 0.0, %v6216
  %v6218 = vpop.f32.mrf.mxu0
  %v6219 = vpop.f32.mrf.mxu0
  %v6220 = vadd.f32 0.0, %v6219
  %v6221 = vpop.f32.mrf.mxu0
  %6222 = vmatprep.mubr.bf16.mxu0 0
  %6223 = vmatmul.mubr.bf16.gmra.mxu0 %v5897
  %v6224 = vpop.f32.mrf.mxu0
  %v6225 = vadd.f32 0.0, %v6224
  %v6226 = vpop.f32.mrf.mxu0
  %v6227 = vpop.f32.mrf.mxu0
  %v6228 = vadd.f32 0.0, %v6227
  %v6229 = vpop.f32.mrf.mxu0
  %6230 = vmatprep.mubr.bf16.mxu0 0
  %6231 = vmatmul.mubr.bf16.gmra.mxu0 %v5900
  %v6232 = vpop.f32.mrf.mxu0
  %v6233 = vadd.f32 0.0, %v6232
  %v6234 = vpop.f32.mrf.mxu0
  %v6235 = vpop.f32.mrf.mxu0
  %v6236 = vadd.f32 0.0, %v6235
  %v6237 = vpop.f32.mrf.mxu0
  %6238 = vmatprep.mubr.bf16.mxu0 0
  %6239 = vmatmul.mubr.bf16.gmra.mxu0 %v5903
  %v6240 = vpop.f32.mrf.mxu0
  %v6241 = vadd.f32 0.0, %v6240
  %v6242 = vpop.f32.mrf.mxu0
  %v6243 = vpop.f32.mrf.mxu0
  %v6244 = vadd.f32 0.0, %v6243
  %v6245 = vpop.f32.mrf.mxu0
  %6246 = vmatprep.mubr.bf16.mxu0 0
  %6247 = vmatmul.mubr.bf16.gmra.mxu0 %v5906
  %v6248 = vpop.f32.mrf.mxu0
  %v6249 = vadd.f32 0.0, %v6248
  %v6250 = vpop.f32.mrf.mxu0
  %v6251 = vpop.f32.mrf.mxu0
  %v6252 = vadd.f32 0.0, %v6251
  %v6253 = vpop.f32.mrf.mxu0
  %6254 = vmatprep.mubr.bf16.mxu0 0
  %6255 = vmatmul.mubr.bf16.gmra.mxu0 %v5909
  %v6256 = vpop.f32.mrf.mxu0
  %v6257 = vadd.f32 0.0, %v6256
  %v6258 = vpop.f32.mrf.mxu0
  %v6259 = vpop.f32.mrf.mxu0
  %v6260 = vadd.f32 0.0, %v6259
  %v6261 = vpop.f32.mrf.mxu0
  %6262 = vmatprep.mubr.bf16.mxu0 0
  %6263 = vmatmul.mubr.bf16.gmra.mxu0 %v5912
  %v6264 = vpop.f32.mrf.mxu0
  %v6265 = vadd.f32 0.0, %v6264
  %v6266 = vpop.f32.mrf.mxu0
  %v6267 = vpop.f32.mrf.mxu0
  %v6268 = vadd.f32 0.0, %v6267
  %v6269 = vpop.f32.mrf.mxu0
  %6270 = vmatprep.mubr.bf16.mxu0 0
  %6271 = vmatmul.mubr.bf16.gmra.mxu0 %v5915
  %v6272 = vpop.f32.mrf.mxu0
  %v6273 = vadd.f32 0.0, %v6272
  %v6274 = vpop.f32.mrf.mxu0
  %v6275 = vpop.f32.mrf.mxu0
  %v6276 = vadd.f32 0.0, %v6275
  %v6277 = vpop.f32.mrf.mxu0
  %6278 = vmatprep.mubr.bf16.mxu0 0
  %6279 = vmatmul.mubr.bf16.gmra.mxu0 %v5918
  %v6280 = vpop.f32.mrf.mxu0
  %v6281 = vadd.f32 0.0, %v6280
  %v6282 = vpop.f32.mrf.mxu0
  %v6283 = vpop.f32.mrf.mxu0
  %v6284 = vadd.f32 0.0, %v6283
  %v6285 = vpop.f32.mrf.mxu0
  %6286 = vmatprep.mubr.bf16.mxu0 0
  %6287 = vmatmul.mubr.bf16.gmra.mxu0 %v5921
  %v6288 = vpop.f32.mrf.mxu0
  %v6289 = vadd.f32 0.0, %v6288
  %v6290 = vpop.f32.mrf.mxu0
  %v6291 = vpop.f32.mrf.mxu0
  %v6292 = vadd.f32 0.0, %v6291
  %v6293 = vpop.f32.mrf.mxu0
  %6294 = vdwg.mxu0
  %v6295 = vadd.f32 %v5026, %v5961
  %v6296 = vadd.f32 %v5027, %v5964
  %v6297 = vadd.f32 %v5028, %v5969
  %v6298 = vadd.f32 %v5029, %v5972
  %v6299 = vadd.f32 %v5030, %v5977
  %v6300 = vadd.f32 %v5031, %v5980
  %v6301 = vadd.f32 %v5032, %v5985
  %v6302 = vadd.f32 %v5033, %v5988
  %v6303 = vadd.f32 %v5034, %v5993
  %v6304 = vadd.f32 %v5035, %v5996
  %v6305 = vadd.f32 %v5036, %v6001
  %v6306 = vadd.f32 %v5037, %v6004
  %v6307 = vadd.f32 %v5038, %v6009
  %v6308 = vadd.f32 %v5039, %v6012
  %v6309 = vadd.f32 %v5040, %v6017
  %v6310 = vadd.f32 %v5041, %v6020
  %v6311 = vadd.f32 %v5042, %v6025
  %v6312 = vadd.f32 %v5043, %v6028
  %v6313 = vadd.f32 %v5044, %v6033
  %v6314 = vadd.f32 %v5045, %v6036
  %v6315 = vadd.f32 %v5046, %v6041
  %v6316 = vadd.f32 %v5047, %v6044
  %v6317 = vadd.f32 %v5048, %v6049
  %v6318 = vadd.f32 %v5049, %v6052
  %v6319 = vadd.f32 %v5050, %v6057
  %v6320 = vadd.f32 %v5051, %v6060
  %v6321 = vadd.f32 %v5052, %v6065
  %v6322 = vadd.f32 %v5053, %v6068
  %v6323 = vadd.f32 %v5054, %v6073
  %v6324 = vadd.f32 %v5055, %v6076
  %v6325 = vadd.f32 %v5056, %v6081
  %v6326 = vadd.f32 %v5057, %v6084
  %v6327 = vadd.f32 %v5058, %v6089
  %v6328 = vadd.f32 %v5059, %v6092
  %v6329 = vadd.f32 %v5060, %v6097
  %v6330 = vadd.f32 %v5061, %v6100
  %v6331 = vadd.f32 %v5062, %v6105
  %v6332 = vadd.f32 %v5063, %v6108
  %v6333 = vadd.f32 %v5064, %v6113
  %v6334 = vadd.f32 %v5065, %v6116
  %v6335 = vadd.f32 %v5066, %v6121
  %v6336 = vadd.f32 %v5067, %v6124
  %v6337 = vadd.f32 %v5068, %v6129
  %v6338 = vadd.f32 %v5069, %v6132
  %v6339 = vadd.f32 %v5070, %v6137
  %v6340 = vadd.f32 %v5071, %v6140
  %v6341 = vadd.f32 %v5072, %v6145
  %v6342 = vadd.f32 %v5073, %v6148
  %v6343 = vadd.f32 %v5074, %v6153
  %v6344 = vadd.f32 %v5075, %v6156
  %v6345 = vadd.f32 %v5076, %v6161
  %v6346 = vadd.f32 %v5077, %v6164
  %v6347 = vadd.f32 %v5078, %v6169
  %v6348 = vadd.f32 %v5079, %v6172
  %v6349 = vadd.f32 %v5080, %v6177
  %v6350 = vadd.f32 %v5081, %v6180
  %v6351 = vadd.f32 %v5082, %v6185
  %v6352 = vadd.f32 %v5083, %v6188
  %v6353 = vadd.f32 %v5084, %v6193
  %v6354 = vadd.f32 %v5085, %v6196
  %v6355 = vadd.f32 %v5086, %v6201
  %v6356 = vadd.f32 %v5087, %v6204
  %v6357 = vadd.f32 %v5088, %v6209
  %v6358 = vadd.f32 %v5089, %v6212
  %v6359 = vadd.f32 %v5090, %v6217
  %v6360 = vadd.f32 %v5091, %v6220
  %v6361 = vadd.f32 %v5092, %v6225
  %v6362 = vadd.f32 %v5093, %v6228
  %v6363 = vadd.f32 %v5094, %v6233
  %v6364 = vadd.f32 %v5095, %v6236
  %v6365 = vadd.f32 %v5096, %v6241
  %v6366 = vadd.f32 %v5097, %v6244
  %v6367 = vadd.f32 %v5098, %v6249
  %v6368 = vadd.f32 %v5099, %v6252
  %v6369 = vadd.f32 %v5100, %v6257
  %v6370 = vadd.f32 %v5101, %v6260
  %v6371 = vadd.f32 %v5102, %v6265
  %v6372 = vadd.f32 %v5103, %v6268
  %v6373 = vadd.f32 %v5104, %v6273
  %v6374 = vadd.f32 %v5105, %v6276
  %v6375 = vadd.f32 %v5106, %v6281
  %v6376 = vadd.f32 %v5107, %v6284
  %v6377 = vadd.f32 %v5108, %v6289
  %v6378 = vadd.f32 %v5109, %v6292
  %6379 = vst [vmem:[%s4] sm:$0xff] %v6295
  %6380 = vst [vmem:[%s4 + $0x8] sm:$0xff] %v6296
  %6381 = vst [vmem:[%s4 + $0x10] sm:$0xff] %v6297
  %6382 = vst [vmem:[%s4 + $0x18] sm:$0xff] %v6298
  %6383 = vst [vmem:[%s4 + $0x20] sm:$0xff] %v6299
  %6384 = vst [vmem:[%s4 + $0x28] sm:$0xff] %v6300
  %6385 = vst [vmem:[%s4 + $0x30] sm:$0xff] %v6301
  %6386 = vst [vmem:[%s4 + $0x38] sm:$0xff] %v6302
  %6387 = vst [vmem:[%s4 + $0x40] sm:$0xff] %v6303
  %6388 = vst [vmem:[%s4 + $0x48] sm:$0xff] %v6304
  %6389 = vst [vmem:[%s4 + $0x50] sm:$0xff] %v6305
  %6390 = vst [vmem:[%s4 + $0x58] sm:$0xff] %v6306
  %6391 = vst [vmem:[%s4 + $0x60] sm:$0xff] %v6307
  %6392 = vst [vmem:[%s4 + $0x68] sm:$0xff] %v6308
  %6393 = vst [vmem:[%s4 + $0x70] sm:$0xff] %v6309
  %6394 = vst [vmem:[%s4 + $0x78] sm:$0xff] %v6310
  %6395 = vst [vmem:[%s4 + $0x80] sm:$0xff] %v6311
  %6396 = vst [vmem:[%s4 + $0x88] sm:$0xff] %v6312
  %6397 = vst [vmem:[%s4 + $0x90] sm:$0xff] %v6313
  %6398 = vst [vmem:[%s4 + $0x98] sm:$0xff] %v6314
  %6399 = vst [vmem:[%s4 + $0xa0] sm:$0xff] %v6315
  %6400 = vst [vmem:[%s4 + $0xa8] sm:$0xff] %v6316
  %6401 = vst [vmem:[%s4 + $0xb0] sm:$0xff] %v6317
  %6402 = vst [vmem:[%s4 + $0xb8] sm:$0xff] %v6318
  %6403 = vst [vmem:[%s4 + $0xc0] sm:$0xff] %v6319
  %6404 = vst [vmem:[%s4 + $0xc8] sm:$0xff] %v6320
  %6405 = vst [vmem:[%s4 + $0xd0] sm:$0xff] %v6321
  %6406 = vst [vmem:[%s4 + $0xd8] sm:$0xff] %v6322
  %6407 = vst [vmem:[%s4 + $0xe0] sm:$0xff] %v6323
  %6408 = vst [vmem:[%s4 + $0xe8] sm:$0xff] %v6324
  %6409 = vst [vmem:[%s4 + $0xf0] sm:$0xff] %v6325
  %6410 = vst [vmem:[%s4 + $0xf8] sm:$0xff] %v6326
  %6411 = vst [vmem:[%s4 + $0x100] sm:$0xff] %v6327
  %6412 = vst [vmem:[%s4 + $0x108] sm:$0xff] %v6328
  %6413 = vst [vmem:[%s4 + $0x110] sm:$0xff] %v6329
  %6414 = vst [vmem:[%s4 + $0x118] sm:$0xff] %v6330
  %6415 = vst [vmem:[%s4 + $0x120] sm:$0xff] %v6331
  %6416 = vst [vmem:[%s4 + $0x128] sm:$0xff] %v6332
  %6417 = vst [vmem:[%s4 + $0x130] sm:$0xff] %v6333
  %6418 = vst [vmem:[%s4 + $0x138] sm:$0xff] %v6334
  %6419 = vst [vmem:[%s4 + $0x140] sm:$0xff] %v6335
  %6420 = vst [vmem:[%s4 + $0x148] sm:$0xff] %v6336
  %6421 = vst [vmem:[%s4 + $0x150] sm:$0xff] %v6337
  %6422 = vst [vmem:[%s4 + $0x158] sm:$0xff] %v6338
  %6423 = vst [vmem:[%s4 + $0x160] sm:$0xff] %v6339
  %6424 = vst [vmem:[%s4 + $0x168] sm:$0xff] %v6340
  %6425 = vst [vmem:[%s4 + $0x170] sm:$0xff] %v6341
  %6426 = vst [vmem:[%s4 + $0x178] sm:$0xff] %v6342
  %6427 = vst [vmem:[%s4 + $0x180] sm:$0xff] %v6343
  %6428 = vst [vmem:[%s4 + $0x188] sm:$0xff] %v6344
  %6429 = vst [vmem:[%s4 + $0x190] sm:$0xff] %v6345
  %6430 = vst [vmem:[%s4 + $0x198] sm:$0xff] %v6346
  %6431 = vst [vmem:[%s4 + $0x1a0] sm:$0xff] %v6347
  %6432 = vst [vmem:[%s4 + $0x1a8] sm:$0xff] %v6348
  %6433 = vst [vmem:[%s4 + $0x1b0] sm:$0xff] %v6349
  %6434 = vst [vmem:[%s4 + $0x1b8] sm:$0xff] %v6350
  %6435 = vst [vmem:[%s4 + $0x1c0] sm:$0xff] %v6351
  %6436 = vst [vmem:[%s4 + $0x1c8] sm:$0xff] %v6352
  %6437 = vst [vmem:[%s4 + $0x1d0] sm:$0xff] %v6353
  %6438 = vst [vmem:[%s4 + $0x1d8] sm:$0xff] %v6354
  %6439 = vst [vmem:[%s4 + $0x1e0] sm:$0xff] %v6355
  %6440 = vst [vmem:[%s4 + $0x1e8] sm:$0xff] %v6356
  %6441 = vst [vmem:[%s4 + $0x1f0] sm:$0xff] %v6357
  %6442 = vst [vmem:[%s4 + $0x1f8] sm:$0xff] %v6358
  %6443 = vst [vmem:[%s4 + $0x200] sm:$0xff] %v6359
  %6444 = vst [vmem:[%s4 + $0x208] sm:$0xff] %v6360
  %6445 = vst [vmem:[%s4 + $0x210] sm:$0xff] %v6361
  %6446 = vst [vmem:[%s4 + $0x218] sm:$0xff] %v6362
  %6447 = vst [vmem:[%s4 + $0x220] sm:$0xff] %v6363
  %6448 = vst [vmem:[%s4 + $0x228] sm:$0xff] %v6364
  %6449 = vst [vmem:[%s4 + $0x230] sm:$0xff] %v6365
  %6450 = vst [vmem:[%s4 + $0x238] sm:$0xff] %v6366
  %6451 = vst [vmem:[%s4 + $0x240] sm:$0xff] %v6367
  %6452 = vst [vmem:[%s4 + $0x248] sm:$0xff] %v6368
  %6453 = vst [vmem:[%s4 + $0x250] sm:$0xff] %v6369
  %6454 = vst [vmem:[%s4 + $0x258] sm:$0xff] %v6370
  %6455 = vst [vmem:[%s4 + $0x260] sm:$0xff] %v6371
  %6456 = vst [vmem:[%s4 + $0x268] sm:$0xff] %v6372
  %6457 = vst [vmem:[%s4 + $0x270] sm:$0xff] %v6373
  %6458 = vst [vmem:[%s4 + $0x278] sm:$0xff] %v6374
  %6459 = vst [vmem:[%s4 + $0x280] sm:$0xff] %v6375
  %6460 = vst [vmem:[%s4 + $0x288] sm:$0xff] %v6376
  %6461 = vst [vmem:[%s4 + $0x290] sm:$0xff] %v6377
  %6462 = vst [vmem:[%s4 + $0x298] sm:$0xff] %v6378
  %v6463 = vld [vmem:[%s4] sm:$0xff]
  %v6464 = vld [vmem:[%s4 + $0x8] sm:$0xff]
  %v6465 = vld [vmem:[%s4 + $0x10] sm:$0xff]
  %v6466 = vld [vmem:[%s4 + $0x18] sm:$0xff]
  %v6467 = vld [vmem:[%s4 + $0x20] sm:$0xff]
  %v6468 = vld [vmem:[%s4 + $0x28] sm:$0xff]
  %v6469 = vld [vmem:[%s4 + $0x30] sm:$0xff]
  %v6470 = vld [vmem:[%s4 + $0x38] sm:$0xff]
  %v6471 = vld [vmem:[%s4 + $0x40] sm:$0xff]
  %v6472 = vld [vmem:[%s4 + $0x48] sm:$0xff]
  %v6473 = vld [vmem:[%s4 + $0x50] sm:$0xff]
  %v6474 = vld [vmem:[%s4 + $0x58] sm:$0xff]
  %v6475 = vld [vmem:[%s4 + $0x60] sm:$0xff]
  %v6476 = vld [vmem:[%s4 + $0x68] sm:$0xff]
  %v6477 = vld [vmem:[%s4 + $0x70] sm:$0xff]
  %v6478 = vld [vmem:[%s4 + $0x78] sm:$0xff]
  %v6479 = vld [vmem:[%s4 + $0x80] sm:$0xff]
  %v6480 = vld [vmem:[%s4 + $0x88] sm:$0xff]
  %v6481 = vld [vmem:[%s4 + $0x90] sm:$0xff]
  %v6482 = vld [vmem:[%s4 + $0x98] sm:$0xff]
  %v6483 = vld [vmem:[%s4 + $0xa0] sm:$0xff]
  %v6484 = vld [vmem:[%s4 + $0xa8] sm:$0xff]
  %v6485 = vld [vmem:[%s4 + $0xb0] sm:$0xff]
  %v6486 = vld [vmem:[%s4 + $0xb8] sm:$0xff]
  %v6487 = vld [vmem:[%s4 + $0xc0] sm:$0xff]
  %v6488 = vld [vmem:[%s4 + $0xc8] sm:$0xff]
  %v6489 = vld [vmem:[%s4 + $0xd0] sm:$0xff]
  %v6490 = vld [vmem:[%s4 + $0xd8] sm:$0xff]
  %v6491 = vld [vmem:[%s4 + $0xe0] sm:$0xff]
  %v6492 = vld [vmem:[%s4 + $0xe8] sm:$0xff]
  %v6493 = vld [vmem:[%s4 + $0xf0] sm:$0xff]
  %v6494 = vld [vmem:[%s4 + $0xf8] sm:$0xff]
  %v6495 = vld [vmem:[%s4 + $0x100] sm:$0xff]
  %v6496 = vld [vmem:[%s4 + $0x108] sm:$0xff]
  %v6497 = vld [vmem:[%s4 + $0x110] sm:$0xff]
  %v6498 = vld [vmem:[%s4 + $0x118] sm:$0xff]
  %v6499 = vld [vmem:[%s4 + $0x120] sm:$0xff]
  %v6500 = vld [vmem:[%s4 + $0x128] sm:$0xff]
  %v6501 = vld [vmem:[%s4 + $0x130] sm:$0xff]
  %v6502 = vld [vmem:[%s4 + $0x138] sm:$0xff]
  %v6503 = vld [vmem:[%s4 + $0x140] sm:$0xff]
  %v6504 = vld [vmem:[%s4 + $0x148] sm:$0xff]
  %v6505 = vld [vmem:[%s4 + $0x150] sm:$0xff]
  %v6506 = vld [vmem:[%s4 + $0x158] sm:$0xff]
  %v6507 = vld [vmem:[%s4 + $0x160] sm:$0xff]
  %v6508 = vld [vmem:[%s4 + $0x168] sm:$0xff]
  %v6509 = vld [vmem:[%s4 + $0x170] sm:$0xff]
  %v6510 = vld [vmem:[%s4 + $0x178] sm:$0xff]
  %v6511 = vld [vmem:[%s4 + $0x180] sm:$0xff]
  %v6512 = vld [vmem:[%s4 + $0x188] sm:$0xff]
  %v6513 = vld [vmem:[%s4 + $0x190] sm:$0xff]
  %v6514 = vld [vmem:[%s4 + $0x198] sm:$0xff]
  %v6515 = vld [vmem:[%s4 + $0x1a0] sm:$0xff]
  %v6516 = vld [vmem:[%s4 + $0x1a8] sm:$0xff]
  %v6517 = vld [vmem:[%s4 + $0x1b0] sm:$0xff]
  %v6518 = vld [vmem:[%s4 + $0x1b8] sm:$0xff]
  %v6519 = vld [vmem:[%s4 + $0x1c0] sm:$0xff]
  %v6520 = vld [vmem:[%s4 + $0x1c8] sm:$0xff]
  %v6521 = vld [vmem:[%s4 + $0x1d0] sm:$0xff]
  %v6522 = vld [vmem:[%s4 + $0x1d8] sm:$0xff]
  %v6523 = vld [vmem:[%s4 + $0x1e0] sm:$0xff]
  %v6524 = vld [vmem:[%s4 + $0x1e8] sm:$0xff]
  %v6525 = vld [vmem:[%s4 + $0x1f0] sm:$0xff]
  %v6526 = vld [vmem:[%s4 + $0x1f8] sm:$0xff]
  %v6527 = vld [vmem:[%s4 + $0x200] sm:$0xff]
  %v6528 = vld [vmem:[%s4 + $0x208] sm:$0xff]
  %v6529 = vld [vmem:[%s4 + $0x210] sm:$0xff]
  %v6530 = vld [vmem:[%s4 + $0x218] sm:$0xff]
  %v6531 = vld [vmem:[%s4 + $0x220] sm:$0xff]
  %v6532 = vld [vmem:[%s4 + $0x228] sm:$0xff]
  %v6533 = vld [vmem:[%s4 + $0x230] sm:$0xff]
  %v6534 = vld [vmem:[%s4 + $0x238] sm:$0xff]
  %v6535 = vld [vmem:[%s4 + $0x240] sm:$0xff]
  %v6536 = vld [vmem:[%s4 + $0x248] sm:$0xff]
  %v6537 = vld [vmem:[%s4 + $0x250] sm:$0xff]
  %v6538 = vld [vmem:[%s4 + $0x258] sm:$0xff]
  %v6539 = vld [vmem:[%s4 + $0x260] sm:$0xff]
  %v6540 = vld [vmem:[%s4 + $0x268] sm:$0xff]
  %v6541 = vld [vmem:[%s4 + $0x270] sm:$0xff]
  %v6542 = vld [vmem:[%s4 + $0x278] sm:$0xff]
  %v6543 = vld [vmem:[%s4 + $0x280] sm:$0xff]
  %v6544 = vld [vmem:[%s4 + $0x288] sm:$0xff]
  %v6545 = vld [vmem:[%s4 + $0x290] sm:$0xff]
  %v6546 = vld [vmem:[%s4 + $0x298] sm:$0xff]
  %v6547 = vld [vmem:[#allocation2 + $0x8] sm:$0xc]
  %v6548 = vld [vmem:[#allocation2 + $0xc] sm:$0xf]
  %v6549 = vld [vmem:[#allocation2 + $0x10] sm:$0xf]
  %v6550 = vld [vmem:[#allocation2 + $0x14] sm:$0xf]
  %v6551 = vld [vmem:[#allocation2 + $0x18] sm:$0xf]
  %v6552 = vld [vmem:[#allocation2 + $0x1c] sm:$0xf]
  %v6553 = vld [vmem:[#allocation2 + $0x20] sm:$0xf]
  %v6554 = vld [vmem:[#allocation2 + $0x24] sm:$0xf]
  %v6555 = vld [vmem:[#allocation2 + $0x28] sm:$0xf]
  %v6556 = vld [vmem:[#allocation2 + $0x2c] sm:$0xf]
  %v6557 = vld [vmem:[#allocation2 + $0x30] sm:$0xf]
  %v6558 = vld [vmem:[#allocation2 + $0x34] sm:$0xf]
  %v6559 = vld [vmem:[#allocation2 + $0x38] sm:$0xf]
  %v6560 = vld [vmem:[#allocation2 + $0x3c] sm:$0xf]
  %v6561 = vld [vmem:[#allocation2 + $0x40] sm:$0xf]
  %v6562 = vld [vmem:[#allocation2 + $0x44] sm:$0xf]
  %v6563 = vld [vmem:[#allocation2 + $0x48] sm:$0xf]
  %v6564 = vld [vmem:[#allocation2 + $0x4c] sm:$0xf]
  %v6565 = vld [vmem:[#allocation2 + $0x50] sm:$0xf]
  %v6566 = vld [vmem:[#allocation2 + $0x54] sm:$0xf]
  %v6567 = vld [vmem:[#allocation2 + $0x58] sm:$0xf]
  %v6568 = vld [vmem:[#allocation2 + $0x5c] sm:$0xf]
  %v6569 = vld [vmem:[#allocation2 + $0x60] sm:$0xf]
  %v6570 = vld [vmem:[#allocation2 + $0x64] sm:$0xf]
  %v6571 = vld [vmem:[#allocation2 + $0x68] sm:$0xf]
  %v6572 = vld [vmem:[#allocation2 + $0x6c] sm:$0xf]
  %v6573 = vld [vmem:[#allocation2 + $0x70] sm:$0xf]
  %v6574 = vld [vmem:[#allocation2 + $0x74] sm:$0xf]
  %v6575 = vld [vmem:[#allocation2 + $0x78] sm:$0xf]
  %v6576 = vld [vmem:[#allocation2 + $0x7c] sm:$0xf]
  %v6577 = vld [vmem:[#allocation2 + $0x80] sm:$0xf]
  %v6578 = vld [vmem:[#allocation2 + $0x84] sm:$0xf]
  %v6579 = vld [vmem:[#allocation2 + $0x88] sm:$0xf]
  %v6580 = vld [vmem:[#allocation2 + $0x8c] sm:$0xf]
  %v6581 = vld [vmem:[#allocation2 + $0x90] sm:$0xf]
  %v6582 = vld [vmem:[#allocation2 + $0x94] sm:$0xf]
  %v6583 = vld [vmem:[#allocation2 + $0x98] sm:$0xf]
  %v6584 = vld [vmem:[#allocation2 + $0x9c] sm:$0xf]
  %v6585 = vld [vmem:[#allocation2 + $0xa0] sm:$0xf]
  %v6586 = vld [vmem:[#allocation2 + $0xa4] sm:$0xf]
  %v6587 = vld [vmem:[#allocation2 + $0xa8] sm:$0xf]
  %v6588 = vld [vmem:[#allocation2 + $0xac] sm:$0xf]
  %v6589 = vld [vmem:[#allocation2 + $0xb0] sm:$0xf]
  %v6590 = vld [vmem:[#allocation2 + $0xb4] sm:$0xf]
  %v6591 = vld [vmem:[#allocation2 + $0xb8] sm:$0xf]
  %v6592 = vld [vmem:[#allocation2 + $0xbc] sm:$0xf]
  %v6593 = vld [vmem:[#allocation2 + $0xc0] sm:$0xf]
  %v6594 = vld [vmem:[#allocation2 + $0xc4] sm:$0xf]
  %v6595 = vld [vmem:[#allocation2 + $0xc8] sm:$0xf]
  %v6596 = vld [vmem:[#allocation2 + $0xcc] sm:$0xf]
  %v6597 = vld [vmem:[#allocation2 + $0xd0] sm:$0xf]
  %v6598 = vld [vmem:[#allocation2 + $0xd4] sm:$0xf]
  %v6599 = vld [vmem:[#allocation2 + $0xd8] sm:$0xf]
  %v6600 = vld [vmem:[#allocation2 + $0xdc] sm:$0xf]
  %v6601 = vld [vmem:[#allocation2 + $0xe0] sm:$0xf]
  %v6602 = vld [vmem:[#allocation2 + $0xe4] sm:$0xf]
  %v6603 = vld [vmem:[#allocation2 + $0xe8] sm:$0xf]
  %v6604 = vld [vmem:[#allocation2 + $0xec] sm:$0xf]
  %v6605 = vld [vmem:[#allocation2 + $0xf0] sm:$0xf]
  %v6606 = vld [vmem:[#allocation2 + $0xf4] sm:$0xf]
  %v6607 = vld [vmem:[#allocation2 + $0xf8] sm:$0xf]
  %v6608 = vld [vmem:[#allocation2 + $0xfc] sm:$0xf]
  %v6609 = vld [vmem:[#allocation2 + $0x100] sm:$0xf]
  %v6610 = vld [vmem:[#allocation2 + $0x104] sm:$0xf]
  %v6611 = vld [vmem:[#allocation2 + $0x108] sm:$0xf]
  %v6612 = vld [vmem:[#allocation2 + $0x10c] sm:$0xf]
  %v6613 = vld [vmem:[#allocation2 + $0x110] sm:$0xf]
  %v6614 = vld [vmem:[#allocation2 + $0x114] sm:$0xf]
  %v6615 = vld [vmem:[#allocation2 + $0x118] sm:$0xf]
  %v6616 = vld [vmem:[#allocation2 + $0x11c] sm:$0xf]
  %v6617 = vld [vmem:[#allocation2 + $0x120] sm:$0xf]
  %v6618 = vld [vmem:[#allocation2 + $0x124] sm:$0xf]
  %v6619 = vld [vmem:[#allocation2 + $0x128] sm:$0xf]
  %v6620 = vld [vmem:[#allocation2 + $0x12c] sm:$0xf]
  %v6621 = vld [vmem:[#allocation2 + $0x130] sm:$0xf]
  %v6622 = vld [vmem:[#allocation2 + $0x134] sm:$0xf]
  %v6623 = vld [vmem:[#allocation2 + $0x138] sm:$0xf]
  %v6624 = vld [vmem:[#allocation2 + $0x13c] sm:$0xf]
  %v6625 = vld [vmem:[#allocation2 + $0x140] sm:$0xf]
  %v6626 = vld [vmem:[#allocation2 + $0x144] sm:$0xf]
  %v6627 = vld [vmem:[#allocation2 + $0x148] sm:$0xf]
  %v6628 = vld [vmem:[#allocation2 + $0x14c] sm:$0xf]
  %v6629 = vld [vmem:[#allocation2 + $0x150] sm:$0xf]
  %v6630 = vld [vmem:[#allocation2 + $0x154] sm:$0xf]
  %v6631 = vld [vmem:[#allocation2 + $0x158] sm:$0x3]
  %s6632 = scalar_lea.vmem %s2, 20
  %v6633 = vld [vmem:[%s6632] sm:$0xf]
  %v6719 = vunpack.c.l.b16 %v6547
  %v6720 = vunpack.c.l.b16 %v6548
  %v6721 = vunpack.c.l.b16 %v6549
  %v6722 = vunpack.c.l.b16 %v6550
  %v6723 = vunpack.c.l.b16 %v6551
  %v6724 = vunpack.c.l.b16 %v6552
  %v6725 = vunpack.c.l.b16 %v6553
  %v6726 = vunpack.c.l.b16 %v6554
  %v6727 = vunpack.c.l.b16 %v6555
  %v6728 = vunpack.c.l.b16 %v6556
  %v6729 = vunpack.c.l.b16 %v6557
  %v6730 = vunpack.c.l.b16 %v6558
  %v6731 = vunpack.c.l.b16 %v6559
  %v6732 = vunpack.c.l.b16 %v6560
  %v6733 = vunpack.c.l.b16 %v6561
  %v6734 = vunpack.c.l.b16 %v6562
  %v6735 = vunpack.c.l.b16 %v6563
  %v6736 = vunpack.c.l.b16 %v6564
  %v6737 = vunpack.c.l.b16 %v6565
  %v6738 = vunpack.c.l.b16 %v6566
  %v6739 = vunpack.c.l.b16 %v6567
  %v6740 = vunpack.c.l.b16 %v6568
  %v6741 = vunpack.c.l.b16 %v6569
  %v6742 = vunpack.c.l.b16 %v6570
  %v6743 = vunpack.c.l.b16 %v6571
  %v6744 = vunpack.c.l.b16 %v6572
  %v6745 = vunpack.c.l.b16 %v6573
  %v6746 = vunpack.c.l.b16 %v6574
  %v6747 = vunpack.c.l.b16 %v6575
  %v6748 = vunpack.c.l.b16 %v6576
  %v6749 = vunpack.c.l.b16 %v6577
  %v6750 = vunpack.c.l.b16 %v6578
  %v6751 = vunpack.c.l.b16 %v6579
  %v6752 = vunpack.c.l.b16 %v6580
  %v6753 = vunpack.c.l.b16 %v6581
  %v6754 = vunpack.c.l.b16 %v6582
  %v6755 = vunpack.c.l.b16 %v6583
  %v6756 = vunpack.c.l.b16 %v6584
  %v6757 = vunpack.c.l.b16 %v6585
  %v6758 = vunpack.c.l.b16 %v6586
  %v6759 = vunpack.c.l.b16 %v6587
  %v6760 = vunpack.c.l.b16 %v6588
  %v6761 = vunpack.c.l.b16 %v6589
  %v6762 = vunpack.c.l.b16 %v6590
  %v6763 = vunpack.c.l.b16 %v6591
  %v6764 = vunpack.c.l.b16 %v6592
  %v6765 = vunpack.c.l.b16 %v6593
  %v6766 = vunpack.c.l.b16 %v6594
  %v6767 = vunpack.c.l.b16 %v6595
  %v6768 = vunpack.c.l.b16 %v6596
  %v6769 = vunpack.c.l.b16 %v6597
  %v6770 = vunpack.c.l.b16 %v6598
  %v6771 = vunpack.c.l.b16 %v6599
  %v6772 = vunpack.c.l.b16 %v6600
  %v6773 = vunpack.c.l.b16 %v6601
  %v6774 = vunpack.c.l.b16 %v6602
  %v6775 = vunpack.c.l.b16 %v6603
  %v6776 = vunpack.c.l.b16 %v6604
  %v6777 = vunpack.c.l.b16 %v6605
  %v6778 = vunpack.c.l.b16 %v6606
  %v6779 = vunpack.c.l.b16 %v6607
  %v6780 = vunpack.c.l.b16 %v6608
  %v6781 = vunpack.c.l.b16 %v6609
  %v6782 = vunpack.c.l.b16 %v6610
  %v6783 = vunpack.c.l.b16 %v6611
  %v6784 = vunpack.c.l.b16 %v6612
  %v6785 = vunpack.c.l.b16 %v6613
  %v6786 = vunpack.c.l.b16 %v6614
  %v6787 = vunpack.c.l.b16 %v6615
  %v6788 = vunpack.c.l.b16 %v6616
  %v6789 = vunpack.c.l.b16 %v6617
  %v6790 = vunpack.c.l.b16 %v6618
  %v6791 = vunpack.c.l.b16 %v6619
  %v6792 = vunpack.c.l.b16 %v6620
  %v6793 = vunpack.c.l.b16 %v6621
  %v6794 = vunpack.c.l.b16 %v6622
  %v6795 = vunpack.c.l.b16 %v6623
  %v6796 = vunpack.c.l.b16 %v6624
  %v6797 = vunpack.c.l.b16 %v6625
  %v6798 = vunpack.c.l.b16 %v6626
  %v6799 = vunpack.c.l.b16 %v6627
  %v6800 = vunpack.c.l.b16 %v6628
  %v6801 = vunpack.c.l.b16 %v6629
  %v6802 = vunpack.c.l.b16 %v6630
  %v6803 = vunpack.c.l.b16 %v6631
  %v6804 = vpack.c.b16 %v6720, %v6719
  %v6805 = vpack.c.b16 %v6722, %v6721
  %v6806 = vpack.c.b16 %v6724, %v6723
  %v6807 = vpack.c.b16 %v6726, %v6725
  %v6808 = vpack.c.b16 %v6728, %v6727
  %v6809 = vpack.c.b16 %v6730, %v6729
  %v6810 = vpack.c.b16 %v6732, %v6731
  %v6811 = vpack.c.b16 %v6734, %v6733
  %v6812 = vpack.c.b16 %v6736, %v6735
  %v6813 = vpack.c.b16 %v6738, %v6737
  %v6814 = vpack.c.b16 %v6740, %v6739
  %v6815 = vpack.c.b16 %v6742, %v6741
  %v6816 = vpack.c.b16 %v6744, %v6743
  %v6817 = vpack.c.b16 %v6746, %v6745
  %v6818 = vpack.c.b16 %v6748, %v6747
  %v6819 = vpack.c.b16 %v6750, %v6749
  %v6820 = vpack.c.b16 %v6752, %v6751
  %v6821 = vpack.c.b16 %v6754, %v6753
  %v6822 = vpack.c.b16 %v6756, %v6755
  %v6823 = vpack.c.b16 %v6758, %v6757
  %v6824 = vpack.c.b16 %v6760, %v6759
  %v6825 = vpack.c.b16 %v6762, %v6761
  %v6826 = vpack.c.b16 %v6764, %v6763
  %v6827 = vpack.c.b16 %v6766, %v6765
  %v6828 = vpack.c.b16 %v6768, %v6767
  %v6829 = vpack.c.b16 %v6770, %v6769
  %v6830 = vpack.c.b16 %v6772, %v6771
  %v6831 = vpack.c.b16 %v6774, %v6773
  %v6832 = vpack.c.b16 %v6776, %v6775
  %v6833 = vpack.c.b16 %v6778, %v6777
  %v6834 = vpack.c.b16 %v6780, %v6779
  %v6835 = vpack.c.b16 %v6782, %v6781
  %v6836 = vpack.c.b16 %v6784, %v6783
  %v6837 = vpack.c.b16 %v6786, %v6785
  %v6838 = vpack.c.b16 %v6788, %v6787
  %v6839 = vpack.c.b16 %v6790, %v6789
  %v6840 = vpack.c.b16 %v6792, %v6791
  %v6841 = vpack.c.b16 %v6794, %v6793
  %v6842 = vpack.c.b16 %v6796, %v6795
  %v6843 = vpack.c.b16 %v6798, %v6797
  %v6844 = vpack.c.b16 %v6800, %v6799
  %v6845 = vpack.c.b16 %v6802, %v6801
  %v6846 = vpack.c.b16 %v6803, %v6803
  %vm6847 = vcmask 1045504
  %v6848 = vrot.slane %v6804, 2
  %v6849 = vrot.slane %v6805, 2
  %v6850 = vsel %vm6847, %v6848, %v6849
  %v6851 = vrot.slane %v6806, 2
  %v6852 = vsel %vm6847, %v6849, %v6851
  %v6853 = vrot.slane %v6807, 2
  %v6854 = vsel %vm6847, %v6851, %v6853
  %v6855 = vrot.slane %v6808, 2
  %v6856 = vsel %vm6847, %v6853, %v6855
  %v6857 = vrot.slane %v6809, 2
  %v6858 = vsel %vm6847, %v6855, %v6857
  %v6859 = vrot.slane %v6810, 2
  %v6860 = vsel %vm6847, %v6857, %v6859
  %v6861 = vrot.slane %v6811, 2
  %v6862 = vsel %vm6847, %v6859, %v6861
  %v6863 = vrot.slane %v6812, 2
  %v6864 = vsel %vm6847, %v6861, %v6863
  %v6865 = vrot.slane %v6813, 2
  %v6866 = vsel %vm6847, %v6863, %v6865
  %v6867 = vrot.slane %v6814, 2
  %v6868 = vsel %vm6847, %v6865, %v6867
  %v6869 = vrot.slane %v6815, 2
  %v6870 = vsel %vm6847, %v6867, %v6869
  %v6871 = vrot.slane %v6816, 2
  %v6872 = vsel %vm6847, %v6869, %v6871
  %v6873 = vrot.slane %v6817, 2
  %v6874 = vsel %vm6847, %v6871, %v6873
  %v6875 = vrot.slane %v6818, 2
  %v6876 = vsel %vm6847, %v6873, %v6875
  %v6877 = vrot.slane %v6819, 2
  %v6878 = vsel %vm6847, %v6875, %v6877
  %v6879 = vrot.slane %v6820, 2
  %v6880 = vsel %vm6847, %v6877, %v6879
  %v6881 = vrot.slane %v6821, 2
  %v6882 = vsel %vm6847, %v6879, %v6881
  %v6883 = vrot.slane %v6822, 2
  %v6884 = vsel %vm6847, %v6881, %v6883
  %v6885 = vrot.slane %v6823, 2
  %v6886 = vsel %vm6847, %v6883, %v6885
  %v6887 = vrot.slane %v6824, 2
  %v6888 = vsel %vm6847, %v6885, %v6887
  %v6889 = vrot.slane %v6825, 2
  %v6890 = vsel %vm6847, %v6887, %v6889
  %v6891 = vrot.slane %v6826, 2
  %v6892 = vsel %vm6847, %v6889, %v6891
  %v6893 = vrot.slane %v6827, 2
  %v6894 = vsel %vm6847, %v6891, %v6893
  %v6895 = vrot.slane %v6828, 2
  %v6896 = vsel %vm6847, %v6893, %v6895
  %v6897 = vrot.slane %v6829, 2
  %v6898 = vsel %vm6847, %v6895, %v6897
  %v6899 = vrot.slane %v6830, 2
  %v6900 = vsel %vm6847, %v6897, %v6899
  %v6901 = vrot.slane %v6831, 2
  %v6902 = vsel %vm6847, %v6899, %v6901
  %v6903 = vrot.slane %v6832, 2
  %v6904 = vsel %vm6847, %v6901, %v6903
  %v6905 = vrot.slane %v6833, 2
  %v6906 = vsel %vm6847, %v6903, %v6905
  %v6907 = vrot.slane %v6834, 2
  %v6908 = vsel %vm6847, %v6905, %v6907
  %v6909 = vrot.slane %v6835, 2
  %v6910 = vsel %vm6847, %v6907, %v6909
  %v6911 = vrot.slane %v6836, 2
  %v6912 = vsel %vm6847, %v6909, %v6911
  %v6913 = vrot.slane %v6837, 2
  %v6914 = vsel %vm6847, %v6911, %v6913
  %v6915 = vrot.slane %v6838, 2
  %v6916 = vsel %vm6847, %v6913, %v6915
  %v6917 = vrot.slane %v6839, 2
  %v6918 = vsel %vm6847, %v6915, %v6917
  %v6919 = vrot.slane %v6840, 2
  %v6920 = vsel %vm6847, %v6917, %v6919
  %v6921 = vrot.slane %v6841, 2
  %v6922 = vsel %vm6847, %v6919, %v6921
  %v6923 = vrot.slane %v6842, 2
  %v6924 = vsel %vm6847, %v6921, %v6923
  %v6925 = vrot.slane %v6843, 2
  %v6926 = vsel %vm6847, %v6923, %v6925
  %v6927 = vrot.slane %v6844, 2
  %v6928 = vsel %vm6847, %v6925, %v6927
  %v6929 = vrot.slane %v6845, 2
  %v6930 = vsel %vm6847, %v6927, %v6929
  %v6931 = vrot.slane %v6846, 2
  %v6932 = vsel %vm6847, %v6929, %v6931
  %v6934 = vsel %vm696, %v6850, 0
  %v6937 = vsel %vm696, %v6852, 0
  %v6940 = vsel %vm696, %v6854, 0
  %v6943 = vsel %vm696, %v6856, 0
  %v6946 = vsel %vm696, %v6858, 0
  %v6949 = vsel %vm696, %v6860, 0
  %v6952 = vsel %vm696, %v6862, 0
  %v6955 = vsel %vm696, %v6864, 0
  %v6958 = vsel %vm696, %v6866, 0
  %v6961 = vsel %vm696, %v6868, 0
  %v6964 = vsel %vm696, %v6870, 0
  %v6967 = vsel %vm696, %v6872, 0
  %v6970 = vsel %vm696, %v6874, 0
  %v6973 = vsel %vm696, %v6876, 0
  %v6976 = vsel %vm696, %v6878, 0
  %v6979 = vsel %vm696, %v6880, 0
  %v6982 = vsel %vm696, %v6882, 0
  %v6985 = vsel %vm696, %v6884, 0
  %v6988 = vsel %vm696, %v6886, 0
  %v6991 = vsel %vm696, %v6888, 0
  %v6994 = vsel %vm696, %v6890, 0
  %v6997 = vsel %vm696, %v6892, 0
  %v7000 = vsel %vm696, %v6894, 0
  %v7003 = vsel %vm696, %v6896, 0
  %v7006 = vsel %vm696, %v6898, 0
  %v7009 = vsel %vm696, %v6900, 0
  %v7012 = vsel %vm696, %v6902, 0
  %v7015 = vsel %vm696, %v6904, 0
  %v7018 = vsel %vm696, %v6906, 0
  %v7021 = vsel %vm696, %v6908, 0
  %v7024 = vsel %vm696, %v6910, 0
  %v7027 = vsel %vm696, %v6912, 0
  %v7030 = vsel %vm696, %v6914, 0
  %v7033 = vsel %vm696, %v6916, 0
  %v7036 = vsel %vm696, %v6918, 0
  %v7039 = vsel %vm696, %v6920, 0
  %v7042 = vsel %vm696, %v6922, 0
  %v7045 = vsel %vm696, %v6924, 0
  %v7048 = vsel %vm696, %v6926, 0
  %v7051 = vsel %vm696, %v6928, 0
  %v7054 = vsel %vm696, %v6930, 0
  %v7057 = vsel %vm696, %v6932, 0
  %v7060 = vsel %vm823, %v6633, 0
  %7062 = vmatprep.subr.bf16.mxu0 0
  %7063 = vmatpush1.bf16.msra.mxu0 0
  %7064 = vmatprep.subr.bf16.mxu0 0
  %7065 = vmatpush1.bf16.msra.mxu0 0
  %7066 = vmatprep.subr.bf16.mxu0 0
  %7067 = vmatpush1.bf16.msra.mxu0 0
  %7068 = vmatprep.subr.bf16.mxu0 0
  %7069 = vmatpush1.bf16.msra.mxu0 0
  %7070 = vmatprep.subr.bf16.mxu0 0
  %7071 = vmatpush1.bf16.msra.mxu0 0
  %7072 = vmatprep.subr.bf16.mxu0 0
  %7073 = vmatpush1.bf16.msra.mxu0 0
  %7074 = vmatprep.subr.bf16.mxu0 0
  %7075 = vmatpush1.bf16.msra.mxu0 0
  %7076 = vmatprep.subr.bf16.mxu0 0
  %7077 = vmatpush1.bf16.msra.mxu0 %v7060
  %7078 = vmatprep.subr.bf16.mxu0 0
  %7079 = vmatpush2.bf16.msra.mxu0 0
  %7080 = vmatprep.subr.bf16.mxu0 0
  %7081 = vmatpush2.bf16.msra.mxu0 0
  %7082 = vmatprep.subr.bf16.mxu0 0
  %7083 = vmatpush2.bf16.msra.mxu0 0
  %7084 = vmatprep.subr.bf16.mxu0 0
  %7085 = vmatpush2.bf16.msra.mxu0 0
  %7086 = vmatprep.subr.bf16.mxu0 0
  %7087 = vmatpush2.bf16.msra.mxu0 0
  %7088 = vmatprep.subr.bf16.mxu0 0
  %7089 = vmatpush2.bf16.msra.mxu0 0
  %7090 = vmatprep.subr.bf16.mxu0 0
  %7091 = vmatpush2.bf16.msra.mxu0 0
  %7092 = vmatprep.subr.bf16.mxu0 0
  %7093 = vmatpush2.bf16.msra.mxu0 0
  %7094 = vmatprep.mubr.bf16.mxu0 0
  %7095 = vmatmul.mubr.bf16.gmra.mxu0 %v6934
  %v7096 = vpop.f32.mrf.mxu0
  %v7097 = vadd.f32 0.0, %v7096
  %v7098 = vpop.f32.mrf.mxu0
  %v7099 = vpop.f32.mrf.mxu0
  %v7100 = vadd.f32 0.0, %v7099
  %v7101 = vpop.f32.mrf.mxu0
  %7102 = vmatprep.mubr.bf16.mxu0 0
  %7103 = vmatmul.mubr.bf16.gmra.mxu0 %v6937
  %v7104 = vpop.f32.mrf.mxu0
  %v7105 = vadd.f32 0.0, %v7104
  %v7106 = vpop.f32.mrf.mxu0
  %v7107 = vpop.f32.mrf.mxu0
  %v7108 = vadd.f32 0.0, %v7107
  %v7109 = vpop.f32.mrf.mxu0
  %7110 = vmatprep.mubr.bf16.mxu0 0
  %7111 = vmatmul.mubr.bf16.gmra.mxu0 %v6940
  %v7112 = vpop.f32.mrf.mxu0
  %v7113 = vadd.f32 0.0, %v7112
  %v7114 = vpop.f32.mrf.mxu0
  %v7115 = vpop.f32.mrf.mxu0
  %v7116 = vadd.f32 0.0, %v7115
  %v7117 = vpop.f32.mrf.mxu0
  %7118 = vmatprep.mubr.bf16.mxu0 0
  %7119 = vmatmul.mubr.bf16.gmra.mxu0 %v6943
  %v7120 = vpop.f32.mrf.mxu0
  %v7121 = vadd.f32 0.0, %v7120
  %v7122 = vpop.f32.mrf.mxu0
  %v7123 = vpop.f32.mrf.mxu0
  %v7124 = vadd.f32 0.0, %v7123
  %v7125 = vpop.f32.mrf.mxu0
  %7126 = vmatprep.mubr.bf16.mxu0 0
  %7127 = vmatmul.mubr.bf16.gmra.mxu0 %v6946
  %v7128 = vpop.f32.mrf.mxu0
  %v7129 = vadd.f32 0.0, %v7128
  %v7130 = vpop.f32.mrf.mxu0
  %v7131 = vpop.f32.mrf.mxu0
  %v7132 = vadd.f32 0.0, %v7131
  %v7133 = vpop.f32.mrf.mxu0
  %7134 = vmatprep.mubr.bf16.mxu0 0
  %7135 = vmatmul.mubr.bf16.gmra.mxu0 %v6949
  %v7136 = vpop.f32.mrf.mxu0
  %v7137 = vadd.f32 0.0, %v7136
  %v7138 = vpop.f32.mrf.mxu0
  %v7139 = vpop.f32.mrf.mxu0
  %v7140 = vadd.f32 0.0, %v7139
  %v7141 = vpop.f32.mrf.mxu0
  %7142 = vmatprep.mubr.bf16.mxu0 0
  %7143 = vmatmul.mubr.bf16.gmra.mxu0 %v6952
  %v7144 = vpop.f32.mrf.mxu0
  %v7145 = vadd.f32 0.0, %v7144
  %v7146 = vpop.f32.mrf.mxu0
  %v7147 = vpop.f32.mrf.mxu0
  %v7148 = vadd.f32 0.0, %v7147
  %v7149 = vpop.f32.mrf.mxu0
  %7150 = vmatprep.mubr.bf16.mxu0 0
  %7151 = vmatmul.mubr.bf16.gmra.mxu0 %v6955
  %v7152 = vpop.f32.mrf.mxu0
  %v7153 = vadd.f32 0.0, %v7152
  %v7154 = vpop.f32.mrf.mxu0
  %v7155 = vpop.f32.mrf.mxu0
  %v7156 = vadd.f32 0.0, %v7155
  %v7157 = vpop.f32.mrf.mxu0
  %7158 = vmatprep.mubr.bf16.mxu0 0
  %7159 = vmatmul.mubr.bf16.gmra.mxu0 %v6958
  %v7160 = vpop.f32.mrf.mxu0
  %v7161 = vadd.f32 0.0, %v7160
  %v7162 = vpop.f32.mrf.mxu0
  %v7163 = vpop.f32.mrf.mxu0
  %v7164 = vadd.f32 0.0, %v7163
  %v7165 = vpop.f32.mrf.mxu0
  %7166 = vmatprep.mubr.bf16.mxu0 0
  %7167 = vmatmul.mubr.bf16.gmra.mxu0 %v6961
  %v7168 = vpop.f32.mrf.mxu0
  %v7169 = vadd.f32 0.0, %v7168
  %v7170 = vpop.f32.mrf.mxu0
  %v7171 = vpop.f32.mrf.mxu0
  %v7172 = vadd.f32 0.0, %v7171
  %v7173 = vpop.f32.mrf.mxu0
  %7174 = vmatprep.mubr.bf16.mxu0 0
  %7175 = vmatmul.mubr.bf16.gmra.mxu0 %v6964
  %v7176 = vpop.f32.mrf.mxu0
  %v7177 = vadd.f32 0.0, %v7176
  %v7178 = vpop.f32.mrf.mxu0
  %v7179 = vpop.f32.mrf.mxu0
  %v7180 = vadd.f32 0.0, %v7179
  %v7181 = vpop.f32.mrf.mxu0
  %7182 = vmatprep.mubr.bf16.mxu0 0
  %7183 = vmatmul.mubr.bf16.gmra.mxu0 %v6967
  %v7184 = vpop.f32.mrf.mxu0
  %v7185 = vadd.f32 0.0, %v7184
  %v7186 = vpop.f32.mrf.mxu0
  %v7187 = vpop.f32.mrf.mxu0
  %v7188 = vadd.f32 0.0, %v7187
  %v7189 = vpop.f32.mrf.mxu0
  %7190 = vmatprep.mubr.bf16.mxu0 0
  %7191 = vmatmul.mubr.bf16.gmra.mxu0 %v6970
  %v7192 = vpop.f32.mrf.mxu0
  %v7193 = vadd.f32 0.0, %v7192
  %v7194 = vpop.f32.mrf.mxu0
  %v7195 = vpop.f32.mrf.mxu0
  %v7196 = vadd.f32 0.0, %v7195
  %v7197 = vpop.f32.mrf.mxu0
  %7198 = vmatprep.mubr.bf16.mxu0 0
  %7199 = vmatmul.mubr.bf16.gmra.mxu0 %v6973
  %v7200 = vpop.f32.mrf.mxu0
  %v7201 = vadd.f32 0.0, %v7200
  %v7202 = vpop.f32.mrf.mxu0
  %v7203 = vpop.f32.mrf.mxu0
  %v7204 = vadd.f32 0.0, %v7203
  %v7205 = vpop.f32.mrf.mxu0
  %7206 = vmatprep.mubr.bf16.mxu0 0
  %7207 = vmatmul.mubr.bf16.gmra.mxu0 %v6976
  %v7208 = vpop.f32.mrf.mxu0
  %v7209 = vadd.f32 0.0, %v7208
  %v7210 = vpop.f32.mrf.mxu0
  %v7211 = vpop.f32.mrf.mxu0
  %v7212 = vadd.f32 0.0, %v7211
  %v7213 = vpop.f32.mrf.mxu0
  %7214 = vmatprep.mubr.bf16.mxu0 0
  %7215 = vmatmul.mubr.bf16.gmra.mxu0 %v6979
  %v7216 = vpop.f32.mrf.mxu0
  %v7217 = vadd.f32 0.0, %v7216
  %v7218 = vpop.f32.mrf.mxu0
  %v7219 = vpop.f32.mrf.mxu0
  %v7220 = vadd.f32 0.0, %v7219
  %v7221 = vpop.f32.mrf.mxu0
  %7222 = vmatprep.mubr.bf16.mxu0 0
  %7223 = vmatmul.mubr.bf16.gmra.mxu0 %v6982
  %v7224 = vpop.f32.mrf.mxu0
  %v7225 = vadd.f32 0.0, %v7224
  %v7226 = vpop.f32.mrf.mxu0
  %v7227 = vpop.f32.mrf.mxu0
  %v7228 = vadd.f32 0.0, %v7227
  %v7229 = vpop.f32.mrf.mxu0
  %7230 = vmatprep.mubr.bf16.mxu0 0
  %7231 = vmatmul.mubr.bf16.gmra.mxu0 %v6985
  %v7232 = vpop.f32.mrf.mxu0
  %v7233 = vadd.f32 0.0, %v7232
  %v7234 = vpop.f32.mrf.mxu0
  %v7235 = vpop.f32.mrf.mxu0
  %v7236 = vadd.f32 0.0, %v7235
  %v7237 = vpop.f32.mrf.mxu0
  %7238 = vmatprep.mubr.bf16.mxu0 0
  %7239 = vmatmul.mubr.bf16.gmra.mxu0 %v6988
  %v7240 = vpop.f32.mrf.mxu0
  %v7241 = vadd.f32 0.0, %v7240
  %v7242 = vpop.f32.mrf.mxu0
  %v7243 = vpop.f32.mrf.mxu0
  %v7244 = vadd.f32 0.0, %v7243
  %v7245 = vpop.f32.mrf.mxu0
  %7246 = vmatprep.mubr.bf16.mxu0 0
  %7247 = vmatmul.mubr.bf16.gmra.mxu0 %v6991
  %v7248 = vpop.f32.mrf.mxu0
  %v7249 = vadd.f32 0.0, %v7248
  %v7250 = vpop.f32.mrf.mxu0
  %v7251 = vpop.f32.mrf.mxu0
  %v7252 = vadd.f32 0.0, %v7251
  %v7253 = vpop.f32.mrf.mxu0
  %7254 = vmatprep.mubr.bf16.mxu0 0
  %7255 = vmatmul.mubr.bf16.gmra.mxu0 %v6994
  %v7256 = vpop.f32.mrf.mxu0
  %v7257 = vadd.f32 0.0, %v7256
  %v7258 = vpop.f32.mrf.mxu0
  %v7259 = vpop.f32.mrf.mxu0
  %v7260 = vadd.f32 0.0, %v7259
  %v7261 = vpop.f32.mrf.mxu0
  %7262 = vmatprep.mubr.bf16.mxu0 0
  %7263 = vmatmul.mubr.bf16.gmra.mxu0 %v6997
  %v7264 = vpop.f32.mrf.mxu0
  %v7265 = vadd.f32 0.0, %v7264
  %v7266 = vpop.f32.mrf.mxu0
  %v7267 = vpop.f32.mrf.mxu0
  %v7268 = vadd.f32 0.0, %v7267
  %v7269 = vpop.f32.mrf.mxu0
  %7270 = vmatprep.mubr.bf16.mxu0 0
  %7271 = vmatmul.mubr.bf16.gmra.mxu0 %v7000
  %v7272 = vpop.f32.mrf.mxu0
  %v7273 = vadd.f32 0.0, %v7272
  %v7274 = vpop.f32.mrf.mxu0
  %v7275 = vpop.f32.mrf.mxu0
  %v7276 = vadd.f32 0.0, %v7275
  %v7277 = vpop.f32.mrf.mxu0
  %7278 = vmatprep.mubr.bf16.mxu0 0
  %7279 = vmatmul.mubr.bf16.gmra.mxu0 %v7003
  %v7280 = vpop.f32.mrf.mxu0
  %v7281 = vadd.f32 0.0, %v7280
  %v7282 = vpop.f32.mrf.mxu0
  %v7283 = vpop.f32.mrf.mxu0
  %v7284 = vadd.f32 0.0, %v7283
  %v7285 = vpop.f32.mrf.mxu0
  %7286 = vmatprep.mubr.bf16.mxu0 0
  %7287 = vmatmul.mubr.bf16.gmra.mxu0 %v7006
  %v7288 = vpop.f32.mrf.mxu0
  %v7289 = vadd.f32 0.0, %v7288
  %v7290 = vpop.f32.mrf.mxu0
  %v7291 = vpop.f32.mrf.mxu0
  %v7292 = vadd.f32 0.0, %v7291
  %v7293 = vpop.f32.mrf.mxu0
  %7294 = vmatprep.mubr.bf16.mxu0 0
  %7295 = vmatmul.mubr.bf16.gmra.mxu0 %v7009
  %v7296 = vpop.f32.mrf.mxu0
  %v7297 = vadd.f32 0.0, %v7296
  %v7298 = vpop.f32.mrf.mxu0
  %v7299 = vpop.f32.mrf.mxu0
  %v7300 = vadd.f32 0.0, %v7299
  %v7301 = vpop.f32.mrf.mxu0
  %7302 = vmatprep.mubr.bf16.mxu0 0
  %7303 = vmatmul.mubr.bf16.gmra.mxu0 %v7012
  %v7304 = vpop.f32.mrf.mxu0
  %v7305 = vadd.f32 0.0, %v7304
  %v7306 = vpop.f32.mrf.mxu0
  %v7307 = vpop.f32.mrf.mxu0
  %v7308 = vadd.f32 0.0, %v7307
  %v7309 = vpop.f32.mrf.mxu0
  %7310 = vmatprep.mubr.bf16.mxu0 0
  %7311 = vmatmul.mubr.bf16.gmra.mxu0 %v7015
  %v7312 = vpop.f32.mrf.mxu0
  %v7313 = vadd.f32 0.0, %v7312
  %v7314 = vpop.f32.mrf.mxu0
  %v7315 = vpop.f32.mrf.mxu0
  %v7316 = vadd.f32 0.0, %v7315
  %v7317 = vpop.f32.mrf.mxu0
  %7318 = vmatprep.mubr.bf16.mxu0 0
  %7319 = vmatmul.mubr.bf16.gmra.mxu0 %v7018
  %v7320 = vpop.f32.mrf.mxu0
  %v7321 = vadd.f32 0.0, %v7320
  %v7322 = vpop.f32.mrf.mxu0
  %v7323 = vpop.f32.mrf.mxu0
  %v7324 = vadd.f32 0.0, %v7323
  %v7325 = vpop.f32.mrf.mxu0
  %7326 = vmatprep.mubr.bf16.mxu0 0
  %7327 = vmatmul.mubr.bf16.gmra.mxu0 %v7021
  %v7328 = vpop.f32.mrf.mxu0
  %v7329 = vadd.f32 0.0, %v7328
  %v7330 = vpop.f32.mrf.mxu0
  %v7331 = vpop.f32.mrf.mxu0
  %v7332 = vadd.f32 0.0, %v7331
  %v7333 = vpop.f32.mrf.mxu0
  %7334 = vmatprep.mubr.bf16.mxu0 0
  %7335 = vmatmul.mubr.bf16.gmra.mxu0 %v7024
  %v7336 = vpop.f32.mrf.mxu0
  %v7337 = vadd.f32 0.0, %v7336
  %v7338 = vpop.f32.mrf.mxu0
  %v7339 = vpop.f32.mrf.mxu0
  %v7340 = vadd.f32 0.0, %v7339
  %v7341 = vpop.f32.mrf.mxu0
  %7342 = vmatprep.mubr.bf16.mxu0 0
  %7343 = vmatmul.mubr.bf16.gmra.mxu0 %v7027
  %v7344 = vpop.f32.mrf.mxu0
  %v7345 = vadd.f32 0.0, %v7344
  %v7346 = vpop.f32.mrf.mxu0
  %v7347 = vpop.f32.mrf.mxu0
  %v7348 = vadd.f32 0.0, %v7347
  %v7349 = vpop.f32.mrf.mxu0
  %7350 = vmatprep.mubr.bf16.mxu0 0
  %7351 = vmatmul.mubr.bf16.gmra.mxu0 %v7030
  %v7352 = vpop.f32.mrf.mxu0
  %v7353 = vadd.f32 0.0, %v7352
  %v7354 = vpop.f32.mrf.mxu0
  %v7355 = vpop.f32.mrf.mxu0
  %v7356 = vadd.f32 0.0, %v7355
  %v7357 = vpop.f32.mrf.mxu0
  %7358 = vmatprep.mubr.bf16.mxu0 0
  %7359 = vmatmul.mubr.bf16.gmra.mxu0 %v7033
  %v7360 = vpop.f32.mrf.mxu0
  %v7361 = vadd.f32 0.0, %v7360
  %v7362 = vpop.f32.mrf.mxu0
  %v7363 = vpop.f32.mrf.mxu0
  %v7364 = vadd.f32 0.0, %v7363
  %v7365 = vpop.f32.mrf.mxu0
  %7366 = vmatprep.mubr.bf16.mxu0 0
  %7367 = vmatmul.mubr.bf16.gmra.mxu0 %v7036
  %v7368 = vpop.f32.mrf.mxu0
  %v7369 = vadd.f32 0.0, %v7368
  %v7370 = vpop.f32.mrf.mxu0
  %v7371 = vpop.f32.mrf.mxu0
  %v7372 = vadd.f32 0.0, %v7371
  %v7373 = vpop.f32.mrf.mxu0
  %7374 = vmatprep.mubr.bf16.mxu0 0
  %7375 = vmatmul.mubr.bf16.gmra.mxu0 %v7039
  %v7376 = vpop.f32.mrf.mxu0
  %v7377 = vadd.f32 0.0, %v7376
  %v7378 = vpop.f32.mrf.mxu0
  %v7379 = vpop.f32.mrf.mxu0
  %v7380 = vadd.f32 0.0, %v7379
  %v7381 = vpop.f32.mrf.mxu0
  %7382 = vmatprep.mubr.bf16.mxu0 0
  %7383 = vmatmul.mubr.bf16.gmra.mxu0 %v7042
  %v7384 = vpop.f32.mrf.mxu0
  %v7385 = vadd.f32 0.0, %v7384
  %v7386 = vpop.f32.mrf.mxu0
  %v7387 = vpop.f32.mrf.mxu0
  %v7388 = vadd.f32 0.0, %v7387
  %v7389 = vpop.f32.mrf.mxu0
  %7390 = vmatprep.mubr.bf16.mxu0 0
  %7391 = vmatmul.mubr.bf16.gmra.mxu0 %v7045
  %v7392 = vpop.f32.mrf.mxu0
  %v7393 = vadd.f32 0.0, %v7392
  %v7394 = vpop.f32.mrf.mxu0
  %v7395 = vpop.f32.mrf.mxu0
  %v7396 = vadd.f32 0.0, %v7395
  %v7397 = vpop.f32.mrf.mxu0
  %7398 = vmatprep.mubr.bf16.mxu0 0
  %7399 = vmatmul.mubr.bf16.gmra.mxu0 %v7048
  %v7400 = vpop.f32.mrf.mxu0
  %v7401 = vadd.f32 0.0, %v7400
  %v7402 = vpop.f32.mrf.mxu0
  %v7403 = vpop.f32.mrf.mxu0
  %v7404 = vadd.f32 0.0, %v7403
  %v7405 = vpop.f32.mrf.mxu0
  %7406 = vmatprep.mubr.bf16.mxu0 0
  %7407 = vmatmul.mubr.bf16.gmra.mxu0 %v7051
  %v7408 = vpop.f32.mrf.mxu0
  %v7409 = vadd.f32 0.0, %v7408
  %v7410 = vpop.f32.mrf.mxu0
  %v7411 = vpop.f32.mrf.mxu0
  %v7412 = vadd.f32 0.0, %v7411
  %v7413 = vpop.f32.mrf.mxu0
  %7414 = vmatprep.mubr.bf16.mxu0 0
  %7415 = vmatmul.mubr.bf16.gmra.mxu0 %v7054
  %v7416 = vpop.f32.mrf.mxu0
  %v7417 = vadd.f32 0.0, %v7416
  %v7418 = vpop.f32.mrf.mxu0
  %v7419 = vpop.f32.mrf.mxu0
  %v7420 = vadd.f32 0.0, %v7419
  %v7421 = vpop.f32.mrf.mxu0
  %7422 = vmatprep.mubr.bf16.mxu0 0
  %7423 = vmatmul.mubr.bf16.gmra.mxu0 %v7057
  %v7424 = vpop.f32.mrf.mxu0
  %v7425 = vadd.f32 0.0, %v7424
  %v7426 = vpop.f32.mrf.mxu0
  %v7427 = vpop.f32.mrf.mxu0
  %v7428 = vadd.f32 0.0, %v7427
  %v7429 = vpop.f32.mrf.mxu0
  %7430 = vdwg.mxu0
  %v7431 = vadd.f32 %v6463, %v7097
  %v7432 = vadd.f32 %v6464, %v7100
  %v7433 = vadd.f32 %v6465, %v7105
  %v7434 = vadd.f32 %v6466, %v7108
  %v7435 = vadd.f32 %v6467, %v7113
  %v7436 = vadd.f32 %v6468, %v7116
  %v7437 = vadd.f32 %v6469, %v7121
  %v7438 = vadd.f32 %v6470, %v7124
  %v7439 = vadd.f32 %v6471, %v7129
  %v7440 = vadd.f32 %v6472, %v7132
  %v7441 = vadd.f32 %v6473, %v7137
  %v7442 = vadd.f32 %v6474, %v7140
  %v7443 = vadd.f32 %v6475, %v7145
  %v7444 = vadd.f32 %v6476, %v7148
  %v7445 = vadd.f32 %v6477, %v7153
  %v7446 = vadd.f32 %v6478, %v7156
  %v7447 = vadd.f32 %v6479, %v7161
  %v7448 = vadd.f32 %v6480, %v7164
  %v7449 = vadd.f32 %v6481, %v7169
  %v7450 = vadd.f32 %v6482, %v7172
  %v7451 = vadd.f32 %v6483, %v7177
  %v7452 = vadd.f32 %v6484, %v7180
  %v7453 = vadd.f32 %v6485, %v7185
  %v7454 = vadd.f32 %v6486, %v7188
  %v7455 = vadd.f32 %v6487, %v7193
  %v7456 = vadd.f32 %v6488, %v7196
  %v7457 = vadd.f32 %v6489, %v7201
  %v7458 = vadd.f32 %v6490, %v7204
  %v7459 = vadd.f32 %v6491, %v7209
  %v7460 = vadd.f32 %v6492, %v7212
  %v7461 = vadd.f32 %v6493, %v7217
  %v7462 = vadd.f32 %v6494, %v7220
  %v7463 = vadd.f32 %v6495, %v7225
  %v7464 = vadd.f32 %v6496, %v7228
  %v7465 = vadd.f32 %v6497, %v7233
  %v7466 = vadd.f32 %v6498, %v7236
  %v7467 = vadd.f32 %v6499, %v7241
  %v7468 = vadd.f32 %v6500, %v7244
  %v7469 = vadd.f32 %v6501, %v7249
  %v7470 = vadd.f32 %v6502, %v7252
  %v7471 = vadd.f32 %v6503, %v7257
  %v7472 = vadd.f32 %v6504, %v7260
  %v7473 = vadd.f32 %v6505, %v7265
  %v7474 = vadd.f32 %v6506, %v7268
  %v7475 = vadd.f32 %v6507, %v7273
  %v7476 = vadd.f32 %v6508, %v7276
  %v7477 = vadd.f32 %v6509, %v7281
  %v7478 = vadd.f32 %v6510, %v7284
  %v7479 = vadd.f32 %v6511, %v7289
  %v7480 = vadd.f32 %v6512, %v7292
  %v7481 = vadd.f32 %v6513, %v7297
  %v7482 = vadd.f32 %v6514, %v7300
  %v7483 = vadd.f32 %v6515, %v7305
  %v7484 = vadd.f32 %v6516, %v7308
  %v7485 = vadd.f32 %v6517, %v7313
  %v7486 = vadd.f32 %v6518, %v7316
  %v7487 = vadd.f32 %v6519, %v7321
  %v7488 = vadd.f32 %v6520, %v7324
  %v7489 = vadd.f32 %v6521, %v7329
  %v7490 = vadd.f32 %v6522, %v7332
  %v7491 = vadd.f32 %v6523, %v7337
  %v7492 = vadd.f32 %v6524, %v7340
  %v7493 = vadd.f32 %v6525, %v7345
  %v7494 = vadd.f32 %v6526, %v7348
  %v7495 = vadd.f32 %v6527, %v7353
  %v7496 = vadd.f32 %v6528, %v7356
  %v7497 = vadd.f32 %v6529, %v7361
  %v7498 = vadd.f32 %v6530, %v7364
  %v7499 = vadd.f32 %v6531, %v7369
  %v7500 = vadd.f32 %v6532, %v7372
  %v7501 = vadd.f32 %v6533, %v7377
  %v7502 = vadd.f32 %v6534, %v7380
  %v7503 = vadd.f32 %v6535, %v7385
  %v7504 = vadd.f32 %v6536, %v7388
  %v7505 = vadd.f32 %v6537, %v7393
  %v7506 = vadd.f32 %v6538, %v7396
  %v7507 = vadd.f32 %v6539, %v7401
  %v7508 = vadd.f32 %v6540, %v7404
  %v7509 = vadd.f32 %v6541, %v7409
  %v7510 = vadd.f32 %v6542, %v7412
  %v7511 = vadd.f32 %v6543, %v7417
  %v7512 = vadd.f32 %v6544, %v7420
  %v7513 = vadd.f32 %v6545, %v7425
  %v7514 = vadd.f32 %v6546, %v7428
  %7515 = vst [vmem:[%s4] sm:$0xff] %v7431
  %7516 = vst [vmem:[%s4 + $0x8] sm:$0xff] %v7432
  %7517 = vst [vmem:[%s4 + $0x10] sm:$0xff] %v7433
  %7518 = vst [vmem:[%s4 + $0x18] sm:$0xff] %v7434
  %7519 = vst [vmem:[%s4 + $0x20] sm:$0xff] %v7435
  %7520 = vst [vmem:[%s4 + $0x28] sm:$0xff] %v7436
  %7521 = vst [vmem:[%s4 + $0x30] sm:$0xff] %v7437
  %7522 = vst [vmem:[%s4 + $0x38] sm:$0xff] %v7438
  %7523 = vst [vmem:[%s4 + $0x40] sm:$0xff] %v7439
  %7524 = vst [vmem:[%s4 + $0x48] sm:$0xff] %v7440
  %7525 = vst [vmem:[%s4 + $0x50] sm:$0xff] %v7441
  %7526 = vst [vmem:[%s4 + $0x58] sm:$0xff] %v7442
  %7527 = vst [vmem:[%s4 + $0x60] sm:$0xff] %v7443
  %7528 = vst [vmem:[%s4 + $0x68] sm:$0xff] %v7444
  %7529 = vst [vmem:[%s4 + $0x70] sm:$0xff] %v7445
  %7530 = vst [vmem:[%s4 + $0x78] sm:$0xff] %v7446
  %7531 = vst [vmem:[%s4 + $0x80] sm:$0xff] %v7447
  %7532 = vst [vmem:[%s4 + $0x88] sm:$0xff] %v7448
  %7533 = vst [vmem:[%s4 + $0x90] sm:$0xff] %v7449
  %7534 = vst [vmem:[%s4 + $0x98] sm:$0xff] %v7450
  %7535 = vst [vmem:[%s4 + $0xa0] sm:$0xff] %v7451
  %7536 = vst [vmem:[%s4 + $0xa8] sm:$0xff] %v7452
  %7537 = vst [vmem:[%s4 + $0xb0] sm:$0xff] %v7453
  %7538 = vst [vmem:[%s4 + $0xb8] sm:$0xff] %v7454
  %7539 = vst [vmem:[%s4 + $0xc0] sm:$0xff] %v7455
  %7540 = vst [vmem:[%s4 + $0xc8] sm:$0xff] %v7456
  %7541 = vst [vmem:[%s4 + $0xd0] sm:$0xff] %v7457
  %7542 = vst [vmem:[%s4 + $0xd8] sm:$0xff] %v7458
  %7543 = vst [vmem:[%s4 + $0xe0] sm:$0xff] %v7459
  %7544 = vst [vmem:[%s4 + $0xe8] sm:$0xff] %v7460
  %7545 = vst [vmem:[%s4 + $0xf0] sm:$0xff] %v7461
  %7546 = vst [vmem:[%s4 + $0xf8] sm:$0xff] %v7462
  %7547 = vst [vmem:[%s4 + $0x100] sm:$0xff] %v7463
  %7548 = vst [vmem:[%s4 + $0x108] sm:$0xff] %v7464
  %7549 = vst [vmem:[%s4 + $0x110] sm:$0xff] %v7465
  %7550 = vst [vmem:[%s4 + $0x118] sm:$0xff] %v7466
  %7551 = vst [vmem:[%s4 + $0x120] sm:$0xff] %v7467
  %7552 = vst [vmem:[%s4 + $0x128] sm:$0xff] %v7468
  %7553 = vst [vmem:[%s4 + $0x130] sm:$0xff] %v7469
  %7554 = vst [vmem:[%s4 + $0x138] sm:$0xff] %v7470
  %7555 = vst [vmem:[%s4 + $0x140] sm:$0xff] %v7471
  %7556 = vst [vmem:[%s4 + $0x148] sm:$0xff] %v7472
  %7557 = vst [vmem:[%s4 + $0x150] sm:$0xff] %v7473
  %7558 = vst [vmem:[%s4 + $0x158] sm:$0xff] %v7474
  %7559 = vst [vmem:[%s4 + $0x160] sm:$0xff] %v7475
  %7560 = vst [vmem:[%s4 + $0x168] sm:$0xff] %v7476
  %7561 = vst [vmem:[%s4 + $0x170] sm:$0xff] %v7477
  %7562 = vst [vmem:[%s4 + $0x178] sm:$0xff] %v7478
  %7563 = vst [vmem:[%s4 + $0x180] sm:$0xff] %v7479
  %7564 = vst [vmem:[%s4 + $0x188] sm:$0xff] %v7480
  %7565 = vst [vmem:[%s4 + $0x190] sm:$0xff] %v7481
  %7566 = vst [vmem:[%s4 + $0x198] sm:$0xff] %v7482
  %7567 = vst [vmem:[%s4 + $0x1a0] sm:$0xff] %v7483
  %7568 = vst [vmem:[%s4 + $0x1a8] sm:$0xff] %v7484
  %7569 = vst [vmem:[%s4 + $0x1b0] sm:$0xff] %v7485
  %7570 = vst [vmem:[%s4 + $0x1b8] sm:$0xff] %v7486
  %7571 = vst [vmem:[%s4 + $0x1c0] sm:$0xff] %v7487
  %7572 = vst [vmem:[%s4 + $0x1c8] sm:$0xff] %v7488
  %7573 = vst [vmem:[%s4 + $0x1d0] sm:$0xff] %v7489
  %7574 = vst [vmem:[%s4 + $0x1d8] sm:$0xff] %v7490
  %7575 = vst [vmem:[%s4 + $0x1e0] sm:$0xff] %v7491
  %7576 = vst [vmem:[%s4 + $0x1e8] sm:$0xff] %v7492
  %7577 = vst [vmem:[%s4 + $0x1f0] sm:$0xff] %v7493
  %7578 = vst [vmem:[%s4 + $0x1f8] sm:$0xff] %v7494
  %7579 = vst [vmem:[%s4 + $0x200] sm:$0xff] %v7495
  %7580 = vst [vmem:[%s4 + $0x208] sm:$0xff] %v7496
  %7581 = vst [vmem:[%s4 + $0x210] sm:$0xff] %v7497
  %7582 = vst [vmem:[%s4 + $0x218] sm:$0xff] %v7498
  %7583 = vst [vmem:[%s4 + $0x220] sm:$0xff] %v7499
  %7584 = vst [vmem:[%s4 + $0x228] sm:$0xff] %v7500
  %7585 = vst [vmem:[%s4 + $0x230] sm:$0xff] %v7501
  %7586 = vst [vmem:[%s4 + $0x238] sm:$0xff] %v7502
  %7587 = vst [vmem:[%s4 + $0x240] sm:$0xff] %v7503
  %7588 = vst [vmem:[%s4 + $0x248] sm:$0xff] %v7504
  %7589 = vst [vmem:[%s4 + $0x250] sm:$0xff] %v7505
  %7590 = vst [vmem:[%s4 + $0x258] sm:$0xff] %v7506
  %7591 = vst [vmem:[%s4 + $0x260] sm:$0xff] %v7507
  %7592 = vst [vmem:[%s4 + $0x268] sm:$0xff] %v7508
  %7593 = vst [vmem:[%s4 + $0x270] sm:$0xff] %v7509
  %7594 = vst [vmem:[%s4 + $0x278] sm:$0xff] %v7510
  %7595 = vst [vmem:[%s4 + $0x280] sm:$0xff] %v7511
  %7596 = vst [vmem:[%s4 + $0x288] sm:$0xff] %v7512
  %7597 = vst [vmem:[%s4 + $0x290] sm:$0xff] %v7513
  %7598 = vst [vmem:[%s4 + $0x298] sm:$0xff] %v7514
  %v7599 = vld [vmem:[%s4] sm:$0xff]
  %v7600 = vld [vmem:[%s4 + $0x8] sm:$0xff]
  %v7601 = vld [vmem:[%s4 + $0x10] sm:$0xff]
  %v7602 = vld [vmem:[%s4 + $0x18] sm:$0xff]
  %v7603 = vld [vmem:[%s4 + $0x20] sm:$0xff]
  %v7604 = vld [vmem:[%s4 + $0x28] sm:$0xff]
  %v7605 = vld [vmem:[%s4 + $0x30] sm:$0xff]
  %v7606 = vld [vmem:[%s4 + $0x38] sm:$0xff]
  %v7607 = vld [vmem:[%s4 + $0x40] sm:$0xff]
  %v7608 = vld [vmem:[%s4 + $0x48] sm:$0xff]
  %v7609 = vld [vmem:[%s4 + $0x50] sm:$0xff]
  %v7610 = vld [vmem:[%s4 + $0x58] sm:$0xff]
  %v7611 = vld [vmem:[%s4 + $0x60] sm:$0xff]
  %v7612 = vld [vmem:[%s4 + $0x68] sm:$0xff]
  %v7613 = vld [vmem:[%s4 + $0x70] sm:$0xff]
  %v7614 = vld [vmem:[%s4 + $0x78] sm:$0xff]
  %v7615 = vld [vmem:[%s4 + $0x80] sm:$0xff]
  %v7616 = vld [vmem:[%s4 + $0x88] sm:$0xff]
  %v7617 = vld [vmem:[%s4 + $0x90] sm:$0xff]
  %v7618 = vld [vmem:[%s4 + $0x98] sm:$0xff]
  %v7619 = vld [vmem:[%s4 + $0xa0] sm:$0xff]
  %v7620 = vld [vmem:[%s4 + $0xa8] sm:$0xff]
  %v7621 = vld [vmem:[%s4 + $0xb0] sm:$0xff]
  %v7622 = vld [vmem:[%s4 + $0xb8] sm:$0xff]
  %v7623 = vld [vmem:[%s4 + $0xc0] sm:$0xff]
  %v7624 = vld [vmem:[%s4 + $0xc8] sm:$0xff]
  %v7625 = vld [vmem:[%s4 + $0xd0] sm:$0xff]
  %v7626 = vld [vmem:[%s4 + $0xd8] sm:$0xff]
  %v7627 = vld [vmem:[%s4 + $0xe0] sm:$0xff]
  %v7628 = vld [vmem:[%s4 + $0xe8] sm:$0xff]
  %v7629 = vld [vmem:[%s4 + $0xf0] sm:$0xff]
  %v7630 = vld [vmem:[%s4 + $0xf8] sm:$0xff]
  %v7631 = vld [vmem:[%s4 + $0x100] sm:$0xff]
  %v7632 = vld [vmem:[%s4 + $0x108] sm:$0xff]
  %v7633 = vld [vmem:[%s4 + $0x110] sm:$0xff]
  %v7634 = vld [vmem:[%s4 + $0x118] sm:$0xff]
  %v7635 = vld [vmem:[%s4 + $0x120] sm:$0xff]
  %v7636 = vld [vmem:[%s4 + $0x128] sm:$0xff]
  %v7637 = vld [vmem:[%s4 + $0x130] sm:$0xff]
  %v7638 = vld [vmem:[%s4 + $0x138] sm:$0xff]
  %v7639 = vld [vmem:[%s4 + $0x140] sm:$0xff]
  %v7640 = vld [vmem:[%s4 + $0x148] sm:$0xff]
  %v7641 = vld [vmem:[%s4 + $0x150] sm:$0xff]
  %v7642 = vld [vmem:[%s4 + $0x158] sm:$0xff]
  %v7643 = vld [vmem:[%s4 + $0x160] sm:$0xff]
  %v7644 = vld [vmem:[%s4 + $0x168] sm:$0xff]
  %v7645 = vld [vmem:[%s4 + $0x170] sm:$0xff]
  %v7646 = vld [vmem:[%s4 + $0x178] sm:$0xff]
  %v7647 = vld [vmem:[%s4 + $0x180] sm:$0xff]
  %v7648 = vld [vmem:[%s4 + $0x188] sm:$0xff]
  %v7649 = vld [vmem:[%s4 + $0x190] sm:$0xff]
  %v7650 = vld [vmem:[%s4 + $0x198] sm:$0xff]
  %v7651 = vld [vmem:[%s4 + $0x1a0] sm:$0xff]
  %v7652 = vld [vmem:[%s4 + $0x1a8] sm:$0xff]
  %v7653 = vld [vmem:[%s4 + $0x1b0] sm:$0xff]
  %v7654 = vld [vmem:[%s4 + $0x1b8] sm:$0xff]
  %v7655 = vld [vmem:[%s4 + $0x1c0] sm:$0xff]
  %v7656 = vld [vmem:[%s4 + $0x1c8] sm:$0xff]
  %v7657 = vld [vmem:[%s4 + $0x1d0] sm:$0xff]
  %v7658 = vld [vmem:[%s4 + $0x1d8] sm:$0xff]
  %v7659 = vld [vmem:[%s4 + $0x1e0] sm:$0xff]
  %v7660 = vld [vmem:[%s4 + $0x1e8] sm:$0xff]
  %v7661 = vld [vmem:[%s4 + $0x1f0] sm:$0xff]
  %v7662 = vld [vmem:[%s4 + $0x1f8] sm:$0xff]
  %v7663 = vld [vmem:[%s4 + $0x200] sm:$0xff]
  %v7664 = vld [vmem:[%s4 + $0x208] sm:$0xff]
  %v7665 = vld [vmem:[%s4 + $0x210] sm:$0xff]
  %v7666 = vld [vmem:[%s4 + $0x218] sm:$0xff]
  %v7667 = vld [vmem:[%s4 + $0x220] sm:$0xff]
  %v7668 = vld [vmem:[%s4 + $0x228] sm:$0xff]
  %v7669 = vld [vmem:[%s4 + $0x230] sm:$0xff]
  %v7670 = vld [vmem:[%s4 + $0x238] sm:$0xff]
  %v7671 = vld [vmem:[%s4 + $0x240] sm:$0xff]
  %v7672 = vld [vmem:[%s4 + $0x248] sm:$0xff]
  %v7673 = vld [vmem:[%s4 + $0x250] sm:$0xff]
  %v7674 = vld [vmem:[%s4 + $0x258] sm:$0xff]
  %v7675 = vld [vmem:[%s4 + $0x260] sm:$0xff]
  %v7676 = vld [vmem:[%s4 + $0x268] sm:$0xff]
  %v7677 = vld [vmem:[%s4 + $0x270] sm:$0xff]
  %v7678 = vld [vmem:[%s4 + $0x278] sm:$0xff]
  %v7679 = vld [vmem:[%s4 + $0x280] sm:$0xff]
  %v7680 = vld [vmem:[%s4 + $0x288] sm:$0xff]
  %v7681 = vld [vmem:[%s4 + $0x290] sm:$0xff]
  %v7682 = vld [vmem:[%s4 + $0x298] sm:$0xff]
  %v7683 = vld [vmem:[#allocation2 + $0x10] sm:$0xc]
  %v7684 = vld [vmem:[#allocation2 + $0x14] sm:$0xf]
  %v7685 = vld [vmem:[#allocation2 + $0x18] sm:$0xf]
  %v7686 = vld [vmem:[#allocation2 + $0x1c] sm:$0xf]
  %v7687 = vld [vmem:[#allocation2 + $0x20] sm:$0xf]
  %v7688 = vld [vmem:[#allocation2 + $0x24] sm:$0xf]
  %v7689 = vld [vmem:[#allocation2 + $0x28] sm:$0xf]
  %v7690 = vld [vmem:[#allocation2 + $0x2c] sm:$0xf]
  %v7691 = vld [vmem:[#allocation2 + $0x30] sm:$0xf]
  %v7692 = vld [vmem:[#allocation2 + $0x34] sm:$0xf]
  %v7693 = vld [vmem:[#allocation2 + $0x38] sm:$0xf]
  %v7694 = vld [vmem:[#allocation2 + $0x3c] sm:$0xf]
  %v7695 = vld [vmem:[#allocation2 + $0x40] sm:$0xf]
  %v7696 = vld [vmem:[#allocation2 + $0x44] sm:$0xf]
  %v7697 = vld [vmem:[#allocation2 + $0x48] sm:$0xf]
  %v7698 = vld [vmem:[#allocation2 + $0x4c] sm:$0xf]
  %v7699 = vld [vmem:[#allocation2 + $0x50] sm:$0xf]
  %v7700 = vld [vmem:[#allocation2 + $0x54] sm:$0xf]
  %v7701 = vld [vmem:[#allocation2 + $0x58] sm:$0xf]
  %v7702 = vld [vmem:[#allocation2 + $0x5c] sm:$0xf]
  %v7703 = vld [vmem:[#allocation2 + $0x60] sm:$0xf]
  %v7704 = vld [vmem:[#allocation2 + $0x64] sm:$0xf]
  %v7705 = vld [vmem:[#allocation2 + $0x68] sm:$0xf]
  %v7706 = vld [vmem:[#allocation2 + $0x6c] sm:$0xf]
  %v7707 = vld [vmem:[#allocation2 + $0x70] sm:$0xf]
  %v7708 = vld [vmem:[#allocation2 + $0x74] sm:$0xf]
  %v7709 = vld [vmem:[#allocation2 + $0x78] sm:$0xf]
  %v7710 = vld [vmem:[#allocation2 + $0x7c] sm:$0xf]
  %v7711 = vld [vmem:[#allocation2 + $0x80] sm:$0xf]
  %v7712 = vld [vmem:[#allocation2 + $0x84] sm:$0xf]
  %v7713 = vld [vmem:[#allocation2 + $0x88] sm:$0xf]
  %v7714 = vld [vmem:[#allocation2 + $0x8c] sm:$0xf]
  %v7715 = vld [vmem:[#allocation2 + $0x90] sm:$0xf]
  %v7716 = vld [vmem:[#allocation2 + $0x94] sm:$0xf]
  %v7717 = vld [vmem:[#allocation2 + $0x98] sm:$0xf]
  %v7718 = vld [vmem:[#allocation2 + $0x9c] sm:$0xf]
  %v7719 = vld [vmem:[#allocation2 + $0xa0] sm:$0xf]
  %v7720 = vld [vmem:[#allocation2 + $0xa4] sm:$0xf]
  %v7721 = vld [vmem:[#allocation2 + $0xa8] sm:$0xf]
  %v7722 = vld [vmem:[#allocation2 + $0xac] sm:$0xf]
  %v7723 = vld [vmem:[#allocation2 + $0xb0] sm:$0xf]
  %v7724 = vld [vmem:[#allocation2 + $0xb4] sm:$0xf]
  %v7725 = vld [vmem:[#allocation2 + $0xb8] sm:$0xf]
  %v7726 = vld [vmem:[#allocation2 + $0xbc] sm:$0xf]
  %v7727 = vld [vmem:[#allocation2 + $0xc0] sm:$0xf]
  %v7728 = vld [vmem:[#allocation2 + $0xc4] sm:$0xf]
  %v7729 = vld [vmem:[#allocation2 + $0xc8] sm:$0xf]
  %v7730 = vld [vmem:[#allocation2 + $0xcc] sm:$0xf]
  %v7731 = vld [vmem:[#allocation2 + $0xd0] sm:$0xf]
  %v7732 = vld [vmem:[#allocation2 + $0xd4] sm:$0xf]
  %v7733 = vld [vmem:[#allocation2 + $0xd8] sm:$0xf]
  %v7734 = vld [vmem:[#allocation2 + $0xdc] sm:$0xf]
  %v7735 = vld [vmem:[#allocation2 + $0xe0] sm:$0xf]
  %v7736 = vld [vmem:[#allocation2 + $0xe4] sm:$0xf]
  %v7737 = vld [vmem:[#allocation2 + $0xe8] sm:$0xf]
  %v7738 = vld [vmem:[#allocation2 + $0xec] sm:$0xf]
  %v7739 = vld [vmem:[#allocation2 + $0xf0] sm:$0xf]
  %v7740 = vld [vmem:[#allocation2 + $0xf4] sm:$0xf]
  %v7741 = vld [vmem:[#allocation2 + $0xf8] sm:$0xf]
  %v7742 = vld [vmem:[#allocation2 + $0xfc] sm:$0xf]
  %v7743 = vld [vmem:[#allocation2 + $0x100] sm:$0xf]
  %v7744 = vld [vmem:[#allocation2 + $0x104] sm:$0xf]
  %v7745 = vld [vmem:[#allocation2 + $0x108] sm:$0xf]
  %v7746 = vld [vmem:[#allocation2 + $0x10c] sm:$0xf]
  %v7747 = vld [vmem:[#allocation2 + $0x110] sm:$0xf]
  %v7748 = vld [vmem:[#allocation2 + $0x114] sm:$0xf]
  %v7749 = vld [vmem:[#allocation2 + $0x118] sm:$0xf]
  %v7750 = vld [vmem:[#allocation2 + $0x11c] sm:$0xf]
  %v7751 = vld [vmem:[#allocation2 + $0x120] sm:$0xf]
  %v7752 = vld [vmem:[#allocation2 + $0x124] sm:$0xf]
  %v7753 = vld [vmem:[#allocation2 + $0x128] sm:$0xf]
  %v7754 = vld [vmem:[#allocation2 + $0x12c] sm:$0xf]
  %v7755 = vld [vmem:[#allocation2 + $0x130] sm:$0xf]
  %v7756 = vld [vmem:[#allocation2 + $0x134] sm:$0xf]
  %v7757 = vld [vmem:[#allocation2 + $0x138] sm:$0xf]
  %v7758 = vld [vmem:[#allocation2 + $0x13c] sm:$0xf]
  %v7759 = vld [vmem:[#allocation2 + $0x140] sm:$0xf]
  %v7760 = vld [vmem:[#allocation2 + $0x144] sm:$0xf]
  %v7761 = vld [vmem:[#allocation2 + $0x148] sm:$0xf]
  %v7762 = vld [vmem:[#allocation2 + $0x14c] sm:$0xf]
  %v7763 = vld [vmem:[#allocation2 + $0x150] sm:$0xf]
  %v7764 = vld [vmem:[#allocation2 + $0x154] sm:$0xf]
  %v7765 = vld [vmem:[#allocation2 + $0x158] sm:$0xf]
  %v7766 = vld [vmem:[#allocation2 + $0x15c] sm:$0xf]
  %v7767 = vld [vmem:[#allocation2 + $0x160] sm:$0x3]
  %s7768 = scalar_lea.vmem %s2, 24
  %v7769 = vld [vmem:[%s7768] sm:$0xf]
  %v7855 = vunpack.c.l.b16 %v7683
  %v7856 = vunpack.c.l.b16 %v7684
  %v7857 = vunpack.c.l.b16 %v7685
  %v7858 = vunpack.c.l.b16 %v7686
  %v7859 = vunpack.c.l.b16 %v7687
  %v7860 = vunpack.c.l.b16 %v7688
  %v7861 = vunpack.c.l.b16 %v7689
  %v7862 = vunpack.c.l.b16 %v7690
  %v7863 = vunpack.c.l.b16 %v7691
  %v7864 = vunpack.c.l.b16 %v7692
  %v7865 = vunpack.c.l.b16 %v7693
  %v7866 = vunpack.c.l.b16 %v7694
  %v7867 = vunpack.c.l.b16 %v7695
  %v7868 = vunpack.c.l.b16 %v7696
  %v7869 = vunpack.c.l.b16 %v7697
  %v7870 = vunpack.c.l.b16 %v7698
  %v7871 = vunpack.c.l.b16 %v7699
  %v7872 = vunpack.c.l.b16 %v7700
  %v7873 = vunpack.c.l.b16 %v7701
  %v7874 = vunpack.c.l.b16 %v7702
  %v7875 = vunpack.c.l.b16 %v7703
  %v7876 = vunpack.c.l.b16 %v7704
  %v7877 = vunpack.c.l.b16 %v7705
  %v7878 = vunpack.c.l.b16 %v7706
  %v7879 = vunpack.c.l.b16 %v7707
  %v7880 = vunpack.c.l.b16 %v7708
  %v7881 = vunpack.c.l.b16 %v7709
  %v7882 = vunpack.c.l.b16 %v7710
  %v7883 = vunpack.c.l.b16 %v7711
  %v7884 = vunpack.c.l.b16 %v7712
  %v7885 = vunpack.c.l.b16 %v7713
  %v7886 = vunpack.c.l.b16 %v7714
  %v7887 = vunpack.c.l.b16 %v7715
  %v7888 = vunpack.c.l.b16 %v7716
  %v7889 = vunpack.c.l.b16 %v7717
  %v7890 = vunpack.c.l.b16 %v7718
  %v7891 = vunpack.c.l.b16 %v7719
  %v7892 = vunpack.c.l.b16 %v7720
  %v7893 = vunpack.c.l.b16 %v7721
  %v7894 = vunpack.c.l.b16 %v7722
  %v7895 = vunpack.c.l.b16 %v7723
  %v7896 = vunpack.c.l.b16 %v7724
  %v7897 = vunpack.c.l.b16 %v7725
  %v7898 = vunpack.c.l.b16 %v7726
  %v7899 = vunpack.c.l.b16 %v7727
  %v7900 = vunpack.c.l.b16 %v7728
  %v7901 = vunpack.c.l.b16 %v7729
  %v7902 = vunpack.c.l.b16 %v7730
  %v7903 = vunpack.c.l.b16 %v7731
  %v7904 = vunpack.c.l.b16 %v7732
  %v7905 = vunpack.c.l.b16 %v7733
  %v7906 = vunpack.c.l.b16 %v7734
  %v7907 = vunpack.c.l.b16 %v7735
  %v7908 = vunpack.c.l.b16 %v7736
  %v7909 = vunpack.c.l.b16 %v7737
  %v7910 = vunpack.c.l.b16 %v7738
  %v7911 = vunpack.c.l.b16 %v7739
  %v7912 = vunpack.c.l.b16 %v7740
  %v7913 = vunpack.c.l.b16 %v7741
  %v7914 = vunpack.c.l.b16 %v7742
  %v7915 = vunpack.c.l.b16 %v7743
  %v7916 = vunpack.c.l.b16 %v7744
  %v7917 = vunpack.c.l.b16 %v7745
  %v7918 = vunpack.c.l.b16 %v7746
  %v7919 = vunpack.c.l.b16 %v7747
  %v7920 = vunpack.c.l.b16 %v7748
  %v7921 = vunpack.c.l.b16 %v7749
  %v7922 = vunpack.c.l.b16 %v7750
  %v7923 = vunpack.c.l.b16 %v7751
  %v7924 = vunpack.c.l.b16 %v7752
  %v7925 = vunpack.c.l.b16 %v7753
  %v7926 = vunpack.c.l.b16 %v7754
  %v7927 = vunpack.c.l.b16 %v7755
  %v7928 = vunpack.c.l.b16 %v7756
  %v7929 = vunpack.c.l.b16 %v7757
  %v7930 = vunpack.c.l.b16 %v7758
  %v7931 = vunpack.c.l.b16 %v7759
  %v7932 = vunpack.c.l.b16 %v7760
  %v7933 = vunpack.c.l.b16 %v7761
  %v7934 = vunpack.c.l.b16 %v7762
  %v7935 = vunpack.c.l.b16 %v7763
  %v7936 = vunpack.c.l.b16 %v7764
  %v7937 = vunpack.c.l.b16 %v7765
  %v7938 = vunpack.c.l.b16 %v7766
  %v7939 = vunpack.c.l.b16 %v7767
  %v7940 = vpack.c.b16 %v7856, %v7855
  %v7941 = vpack.c.b16 %v7858, %v7857
  %v7942 = vpack.c.b16 %v7860, %v7859
  %v7943 = vpack.c.b16 %v7862, %v7861
  %v7944 = vpack.c.b16 %v7864, %v7863
  %v7945 = vpack.c.b16 %v7866, %v7865
  %v7946 = vpack.c.b16 %v7868, %v7867
  %v7947 = vpack.c.b16 %v7870, %v7869
  %v7948 = vpack.c.b16 %v7872, %v7871
  %v7949 = vpack.c.b16 %v7874, %v7873
  %v7950 = vpack.c.b16 %v7876, %v7875
  %v7951 = vpack.c.b16 %v7878, %v7877
  %v7952 = vpack.c.b16 %v7880, %v7879
  %v7953 = vpack.c.b16 %v7882, %v7881
  %v7954 = vpack.c.b16 %v7884, %v7883
  %v7955 = vpack.c.b16 %v7886, %v7885
  %v7956 = vpack.c.b16 %v7888, %v7887
  %v7957 = vpack.c.b16 %v7890, %v7889
  %v7958 = vpack.c.b16 %v7892, %v7891
  %v7959 = vpack.c.b16 %v7894, %v7893
  %v7960 = vpack.c.b16 %v7896, %v7895
  %v7961 = vpack.c.b16 %v7898, %v7897
  %v7962 = vpack.c.b16 %v7900, %v7899
  %v7963 = vpack.c.b16 %v7902, %v7901
  %v7964 = vpack.c.b16 %v7904, %v7903
  %v7965 = vpack.c.b16 %v7906, %v7905
  %v7966 = vpack.c.b16 %v7908, %v7907
  %v7967 = vpack.c.b16 %v7910, %v7909
  %v7968 = vpack.c.b16 %v7912, %v7911
  %v7969 = vpack.c.b16 %v7914, %v7913
  %v7970 = vpack.c.b16 %v7916, %v7915
  %v7971 = vpack.c.b16 %v7918, %v7917
  %v7972 = vpack.c.b16 %v7920, %v7919
  %v7973 = vpack.c.b16 %v7922, %v7921
  %v7974 = vpack.c.b16 %v7924, %v7923
  %v7975 = vpack.c.b16 %v7926, %v7925
  %v7976 = vpack.c.b16 %v7928, %v7927
  %v7977 = vpack.c.b16 %v7930, %v7929
  %v7978 = vpack.c.b16 %v7932, %v7931
  %v7979 = vpack.c.b16 %v7934, %v7933
  %v7980 = vpack.c.b16 %v7936, %v7935
  %v7981 = vpack.c.b16 %v7938, %v7937
  %v7982 = vpack.c.b16 %v7939, %v7939
  %v7983 = vrot.slane %v7940, 2
  %v7984 = vrot.slane %v7941, 2
  %v7985 = vsel %vm6847, %v7983, %v7984
  %v7986 = vrot.slane %v7942, 2
  %v7987 = vsel %vm6847, %v7984, %v7986
  %v7988 = vrot.slane %v7943, 2
  %v7989 = vsel %vm6847, %v7986, %v7988
  %v7990 = vrot.slane %v7944, 2
  %v7991 = vsel %vm6847, %v7988, %v7990
  %v7992 = vrot.slane %v7945, 2
  %v7993 = vsel %vm6847, %v7990, %v7992
  %v7994 = vrot.slane %v7946, 2
  %v7995 = vsel %vm6847, %v7992, %v7994
  %v7996 = vrot.slane %v7947, 2
  %v7997 = vsel %vm6847, %v7994, %v7996
  %v7998 = vrot.slane %v7948, 2
  %v7999 = vsel %vm6847, %v7996, %v7998
  %v8000 = vrot.slane %v7949, 2
  %v8001 = vsel %vm6847, %v7998, %v8000
  %v8002 = vrot.slane %v7950, 2
  %v8003 = vsel %vm6847, %v8000, %v8002
  %v8004 = vrot.slane %v7951, 2
  %v8005 = vsel %vm6847, %v8002, %v8004
  %v8006 = vrot.slane %v7952, 2
  %v8007 = vsel %vm6847, %v8004, %v8006
  %v8008 = vrot.slane %v7953, 2
  %v8009 = vsel %vm6847, %v8006, %v8008
  %v8010 = vrot.slane %v7954, 2
  %v8011 = vsel %vm6847, %v8008, %v8010
  %v8012 = vrot.slane %v7955, 2
  %v8013 = vsel %vm6847, %v8010, %v8012
  %v8014 = vrot.slane %v7956, 2
  %v8015 = vsel %vm6847, %v8012, %v8014
  %v8016 = vrot.slane %v7957, 2
  %v8017 = vsel %vm6847, %v8014, %v8016
  %v8018 = vrot.slane %v7958, 2
  %v8019 = vsel %vm6847, %v8016, %v8018
  %v8020 = vrot.slane %v7959, 2
  %v8021 = vsel %vm6847, %v8018, %v8020
  %v8022 = vrot.slane %v7960, 2
  %v8023 = vsel %vm6847, %v8020, %v8022
  %v8024 = vrot.slane %v7961, 2
  %v8025 = vsel %vm6847, %v8022, %v8024
  %v8026 = vrot.slane %v7962, 2
  %v8027 = vsel %vm6847, %v8024, %v8026
  %v8028 = vrot.slane %v7963, 2
  %v8029 = vsel %vm6847, %v8026, %v8028
  %v8030 = vrot.slane %v7964, 2
  %v8031 = vsel %vm6847, %v8028, %v8030
  %v8032 = vrot.slane %v7965, 2
  %v8033 = vsel %vm6847, %v8030, %v8032
  %v8034 = vrot.slane %v7966, 2
  %v8035 = vsel %vm6847, %v8032, %v8034
  %v8036 = vrot.slane %v7967, 2
  %v8037 = vsel %vm6847, %v8034, %v8036
  %v8038 = vrot.slane %v7968, 2
  %v8039 = vsel %vm6847, %v8036, %v8038
  %v8040 = vrot.slane %v7969, 2
  %v8041 = vsel %vm6847, %v8038, %v8040
  %v8042 = vrot.slane %v7970, 2
  %v8043 = vsel %vm6847, %v8040, %v8042
  %v8044 = vrot.slane %v7971, 2
  %v8045 = vsel %vm6847, %v8042, %v8044
  %v8046 = vrot.slane %v7972, 2
  %v8047 = vsel %vm6847, %v8044, %v8046
  %v8048 = vrot.slane %v7973, 2
  %v8049 = vsel %vm6847, %v8046, %v8048
  %v8050 = vrot.slane %v7974, 2
  %v8051 = vsel %vm6847, %v8048, %v8050
  %v8052 = vrot.slane %v7975, 2
  %v8053 = vsel %vm6847, %v8050, %v8052
  %v8054 = vrot.slane %v7976, 2
  %v8055 = vsel %vm6847, %v8052, %v8054
  %v8056 = vrot.slane %v7977, 2
  %v8057 = vsel %vm6847, %v8054, %v8056
  %v8058 = vrot.slane %v7978, 2
  %v8059 = vsel %vm6847, %v8056, %v8058
  %v8060 = vrot.slane %v7979, 2
  %v8061 = vsel %vm6847, %v8058, %v8060
  %v8062 = vrot.slane %v7980, 2
  %v8063 = vsel %vm6847, %v8060, %v8062
  %v8064 = vrot.slane %v7981, 2
  %v8065 = vsel %vm6847, %v8062, %v8064
  %v8066 = vrot.slane %v7982, 2
  %v8067 = vsel %vm6847, %v8064, %v8066
  %v8069 = vsel %vm696, %v7985, 0
  %v8072 = vsel %vm696, %v7987, 0
  %v8075 = vsel %vm696, %v7989, 0
  %v8078 = vsel %vm696, %v7991, 0
  %v8081 = vsel %vm696, %v7993, 0
  %v8084 = vsel %vm696, %v7995, 0
  %v8087 = vsel %vm696, %v7997, 0
  %v8090 = vsel %vm696, %v7999, 0
  %v8093 = vsel %vm696, %v8001, 0
  %v8096 = vsel %vm696, %v8003, 0
  %v8099 = vsel %vm696, %v8005, 0
  %v8102 = vsel %vm696, %v8007, 0
  %v8105 = vsel %vm696, %v8009, 0
  %v8108 = vsel %vm696, %v8011, 0
  %v8111 = vsel %vm696, %v8013, 0
  %v8114 = vsel %vm696, %v8015, 0
  %v8117 = vsel %vm696, %v8017, 0
  %v8120 = vsel %vm696, %v8019, 0
  %v8123 = vsel %vm696, %v8021, 0
  %v8126 = vsel %vm696, %v8023, 0
  %v8129 = vsel %vm696, %v8025, 0
  %v8132 = vsel %vm696, %v8027, 0
  %v8135 = vsel %vm696, %v8029, 0
  %v8138 = vsel %vm696, %v8031, 0
  %v8141 = vsel %vm696, %v8033, 0
  %v8144 = vsel %vm696, %v8035, 0
  %v8147 = vsel %vm696, %v8037, 0
  %v8150 = vsel %vm696, %v8039, 0
  %v8153 = vsel %vm696, %v8041, 0
  %v8156 = vsel %vm696, %v8043, 0
  %v8159 = vsel %vm696, %v8045, 0
  %v8162 = vsel %vm696, %v8047, 0
  %v8165 = vsel %vm696, %v8049, 0
  %v8168 = vsel %vm696, %v8051, 0
  %v8171 = vsel %vm696, %v8053, 0
  %v8174 = vsel %vm696, %v8055, 0
  %v8177 = vsel %vm696, %v8057, 0
  %v8180 = vsel %vm696, %v8059, 0
  %v8183 = vsel %vm696, %v8061, 0
  %v8186 = vsel %vm696, %v8063, 0
  %v8189 = vsel %vm696, %v8065, 0
  %v8192 = vsel %vm696, %v8067, 0
  %v8195 = vsel %vm823, %v7769, 0
  %8197 = vmatprep.subr.bf16.mxu0 0
  %8198 = vmatpush1.bf16.msra.mxu0 0
  %8199 = vmatprep.subr.bf16.mxu0 0
  %8200 = vmatpush1.bf16.msra.mxu0 0
  %8201 = vmatprep.subr.bf16.mxu0 0
  %8202 = vmatpush1.bf16.msra.mxu0 0
  %8203 = vmatprep.subr.bf16.mxu0 0
  %8204 = vmatpush1.bf16.msra.mxu0 0
  %8205 = vmatprep.subr.bf16.mxu0 0
  %8206 = vmatpush1.bf16.msra.mxu0 0
  %8207 = vmatprep.subr.bf16.mxu0 0
  %8208 = vmatpush1.bf16.msra.mxu0 0
  %8209 = vmatprep.subr.bf16.mxu0 0
  %8210 = vmatpush1.bf16.msra.mxu0 0
  %8211 = vmatprep.subr.bf16.mxu0 0
  %8212 = vmatpush1.bf16.msra.mxu0 %v8195
  %8213 = vmatprep.subr.bf16.mxu0 0
  %8214 = vmatpush2.bf16.msra.mxu0 0
  %8215 = vmatprep.subr.bf16.mxu0 0
  %8216 = vmatpush2.bf16.msra.mxu0 0
  %8217 = vmatprep.subr.bf16.mxu0 0
  %8218 = vmatpush2.bf16.msra.mxu0 0
  %8219 = vmatprep.subr.bf16.mxu0 0
  %8220 = vmatpush2.bf16.msra.mxu0 0
  %8221 = vmatprep.subr.bf16.mxu0 0
  %8222 = vmatpush2.bf16.msra.mxu0 0
  %8223 = vmatprep.subr.bf16.mxu0 0
  %8224 = vmatpush2.bf16.msra.mxu0 0
  %8225 = vmatprep.subr.bf16.mxu0 0
  %8226 = vmatpush2.bf16.msra.mxu0 0
  %8227 = vmatprep.subr.bf16.mxu0 0
  %8228 = vmatpush2.bf16.msra.mxu0 0
  %8229 = vmatprep.mubr.bf16.mxu0 0
  %8230 = vmatmul.mubr.bf16.gmra.mxu0 %v8069
  %v8231 = vpop.f32.mrf.mxu0
  %v8232 = vadd.f32 0.0, %v8231
  %v8233 = vpop.f32.mrf.mxu0
  %v8234 = vpop.f32.mrf.mxu0
  %v8235 = vadd.f32 0.0, %v8234
  %v8236 = vpop.f32.mrf.mxu0
  %8237 = vmatprep.mubr.bf16.mxu0 0
  %8238 = vmatmul.mubr.bf16.gmra.mxu0 %v8072
  %v8239 = vpop.f32.mrf.mxu0
  %v8240 = vadd.f32 0.0, %v8239
  %v8241 = vpop.f32.mrf.mxu0
  %v8242 = vpop.f32.mrf.mxu0
  %v8243 = vadd.f32 0.0, %v8242
  %v8244 = vpop.f32.mrf.mxu0
  %8245 = vmatprep.mubr.bf16.mxu0 0
  %8246 = vmatmul.mubr.bf16.gmra.mxu0 %v8075
  %v8247 = vpop.f32.mrf.mxu0
  %v8248 = vadd.f32 0.0, %v8247
  %v8249 = vpop.f32.mrf.mxu0
  %v8250 = vpop.f32.mrf.mxu0
  %v8251 = vadd.f32 0.0, %v8250
  %v8252 = vpop.f32.mrf.mxu0
  %8253 = vmatprep.mubr.bf16.mxu0 0
  %8254 = vmatmul.mubr.bf16.gmra.mxu0 %v8078
  %v8255 = vpop.f32.mrf.mxu0
  %v8256 = vadd.f32 0.0, %v8255
  %v8257 = vpop.f32.mrf.mxu0
  %v8258 = vpop.f32.mrf.mxu0
  %v8259 = vadd.f32 0.0, %v8258
  %v8260 = vpop.f32.mrf.mxu0
  %8261 = vmatprep.mubr.bf16.mxu0 0
  %8262 = vmatmul.mubr.bf16.gmra.mxu0 %v8081
  %v8263 = vpop.f32.mrf.mxu0
  %v8264 = vadd.f32 0.0, %v8263
  %v8265 = vpop.f32.mrf.mxu0
  %v8266 = vpop.f32.mrf.mxu0
  %v8267 = vadd.f32 0.0, %v8266
  %v8268 = vpop.f32.mrf.mxu0
  %8269 = vmatprep.mubr.bf16.mxu0 0
  %8270 = vmatmul.mubr.bf16.gmra.mxu0 %v8084
  %v8271 = vpop.f32.mrf.mxu0
  %v8272 = vadd.f32 0.0, %v8271
  %v8273 = vpop.f32.mrf.mxu0
  %v8274 = vpop.f32.mrf.mxu0
  %v8275 = vadd.f32 0.0, %v8274
  %v8276 = vpop.f32.mrf.mxu0
  %8277 = vmatprep.mubr.bf16.mxu0 0
  %8278 = vmatmul.mubr.bf16.gmra.mxu0 %v8087
  %v8279 = vpop.f32.mrf.mxu0
  %v8280 = vadd.f32 0.0, %v8279
  %v8281 = vpop.f32.mrf.mxu0
  %v8282 = vpop.f32.mrf.mxu0
  %v8283 = vadd.f32 0.0, %v8282
  %v8284 = vpop.f32.mrf.mxu0
  %8285 = vmatprep.mubr.bf16.mxu0 0
  %8286 = vmatmul.mubr.bf16.gmra.mxu0 %v8090
  %v8287 = vpop.f32.mrf.mxu0
  %v8288 = vadd.f32 0.0, %v8287
  %v8289 = vpop.f32.mrf.mxu0
  %v8290 = vpop.f32.mrf.mxu0
  %v8291 = vadd.f32 0.0, %v8290
  %v8292 = vpop.f32.mrf.mxu0
  %8293 = vmatprep.mubr.bf16.mxu0 0
  %8294 = vmatmul.mubr.bf16.gmra.mxu0 %v8093
  %v8295 = vpop.f32.mrf.mxu0
  %v8296 = vadd.f32 0.0, %v8295
  %v8297 = vpop.f32.mrf.mxu0
  %v8298 = vpop.f32.mrf.mxu0
  %v8299 = vadd.f32 0.0, %v8298
  %v8300 = vpop.f32.mrf.mxu0
  %8301 = vmatprep.mubr.bf16.mxu0 0
  %8302 = vmatmul.mubr.bf16.gmra.mxu0 %v8096
  %v8303 = vpop.f32.mrf.mxu0
  %v8304 = vadd.f32 0.0, %v8303
  %v8305 = vpop.f32.mrf.mxu0
  %v8306 = vpop.f32.mrf.mxu0
  %v8307 = vadd.f32 0.0, %v8306
  %v8308 = vpop.f32.mrf.mxu0
  %8309 = vmatprep.mubr.bf16.mxu0 0
  %8310 = vmatmul.mubr.bf16.gmra.mxu0 %v8099
  %v8311 = vpop.f32.mrf.mxu0
  %v8312 = vadd.f32 0.0, %v8311
  %v8313 = vpop.f32.mrf.mxu0
  %v8314 = vpop.f32.mrf.mxu0
  %v8315 = vadd.f32 0.0, %v8314
  %v8316 = vpop.f32.mrf.mxu0
  %8317 = vmatprep.mubr.bf16.mxu0 0
  %8318 = vmatmul.mubr.bf16.gmra.mxu0 %v8102
  %v8319 = vpop.f32.mrf.mxu0
  %v8320 = vadd.f32 0.0, %v8319
  %v8321 = vpop.f32.mrf.mxu0
  %v8322 = vpop.f32.mrf.mxu0
  %v8323 = vadd.f32 0.0, %v8322
  %v8324 = vpop.f32.mrf.mxu0
  %8325 = vmatprep.mubr.bf16.mxu0 0
  %8326 = vmatmul.mubr.bf16.gmra.mxu0 %v8105
  %v8327 = vpop.f32.mrf.mxu0
  %v8328 = vadd.f32 0.0, %v8327
  %v8329 = vpop.f32.mrf.mxu0
  %v8330 = vpop.f32.mrf.mxu0
  %v8331 = vadd.f32 0.0, %v8330
  %v8332 = vpop.f32.mrf.mxu0
  %8333 = vmatprep.mubr.bf16.mxu0 0
  %8334 = vmatmul.mubr.bf16.gmra.mxu0 %v8108
  %v8335 = vpop.f32.mrf.mxu0
  %v8336 = vadd.f32 0.0, %v8335
  %v8337 = vpop.f32.mrf.mxu0
  %v8338 = vpop.f32.mrf.mxu0
  %v8339 = vadd.f32 0.0, %v8338
  %v8340 = vpop.f32.mrf.mxu0
  %8341 = vmatprep.mubr.bf16.mxu0 0
  %8342 = vmatmul.mubr.bf16.gmra.mxu0 %v8111
  %v8343 = vpop.f32.mrf.mxu0
  %v8344 = vadd.f32 0.0, %v8343
  %v8345 = vpop.f32.mrf.mxu0
  %v8346 = vpop.f32.mrf.mxu0
  %v8347 = vadd.f32 0.0, %v8346
  %v8348 = vpop.f32.mrf.mxu0
  %8349 = vmatprep.mubr.bf16.mxu0 0
  %8350 = vmatmul.mubr.bf16.gmra.mxu0 %v8114
  %v8351 = vpop.f32.mrf.mxu0
  %v8352 = vadd.f32 0.0, %v8351
  %v8353 = vpop.f32.mrf.mxu0
  %v8354 = vpop.f32.mrf.mxu0
  %v8355 = vadd.f32 0.0, %v8354
  %v8356 = vpop.f32.mrf.mxu0
  %8357 = vmatprep.mubr.bf16.mxu0 0
  %8358 = vmatmul.mubr.bf16.gmra.mxu0 %v8117
  %v8359 = vpop.f32.mrf.mxu0
  %v8360 = vadd.f32 0.0, %v8359
  %v8361 = vpop.f32.mrf.mxu0
  %v8362 = vpop.f32.mrf.mxu0
  %v8363 = vadd.f32 0.0, %v8362
  %v8364 = vpop.f32.mrf.mxu0
  %8365 = vmatprep.mubr.bf16.mxu0 0
  %8366 = vmatmul.mubr.bf16.gmra.mxu0 %v8120
  %v8367 = vpop.f32.mrf.mxu0
  %v8368 = vadd.f32 0.0, %v8367
  %v8369 = vpop.f32.mrf.mxu0
  %v8370 = vpop.f32.mrf.mxu0
  %v8371 = vadd.f32 0.0, %v8370
  %v8372 = vpop.f32.mrf.mxu0
  %8373 = vmatprep.mubr.bf16.mxu0 0
  %8374 = vmatmul.mubr.bf16.gmra.mxu0 %v8123
  %v8375 = vpop.f32.mrf.mxu0
  %v8376 = vadd.f32 0.0, %v8375
  %v8377 = vpop.f32.mrf.mxu0
  %v8378 = vpop.f32.mrf.mxu0
  %v8379 = vadd.f32 0.0, %v8378
  %v8380 = vpop.f32.mrf.mxu0
  %8381 = vmatprep.mubr.bf16.mxu0 0
  %8382 = vmatmul.mubr.bf16.gmra.mxu0 %v8126
  %v8383 = vpop.f32.mrf.mxu0
  %v8384 = vadd.f32 0.0, %v8383
  %v8385 = vpop.f32.mrf.mxu0
  %v8386 = vpop.f32.mrf.mxu0
  %v8387 = vadd.f32 0.0, %v8386
  %v8388 = vpop.f32.mrf.mxu0
  %8389 = vmatprep.mubr.bf16.mxu0 0
  %8390 = vmatmul.mubr.bf16.gmra.mxu0 %v8129
  %v8391 = vpop.f32.mrf.mxu0
  %v8392 = vadd.f32 0.0, %v8391
  %v8393 = vpop.f32.mrf.mxu0
  %v8394 = vpop.f32.mrf.mxu0
  %v8395 = vadd.f32 0.0, %v8394
  %v8396 = vpop.f32.mrf.mxu0
  %8397 = vmatprep.mubr.bf16.mxu0 0
  %8398 = vmatmul.mubr.bf16.gmra.mxu0 %v8132
  %v8399 = vpop.f32.mrf.mxu0
  %v8400 = vadd.f32 0.0, %v8399
  %v8401 = vpop.f32.mrf.mxu0
  %v8402 = vpop.f32.mrf.mxu0
  %v8403 = vadd.f32 0.0, %v8402
  %v8404 = vpop.f32.mrf.mxu0
  %8405 = vmatprep.mubr.bf16.mxu0 0
  %8406 = vmatmul.mubr.bf16.gmra.mxu0 %v8135
  %v8407 = vpop.f32.mrf.mxu0
  %v8408 = vadd.f32 0.0, %v8407
  %v8409 = vpop.f32.mrf.mxu0
  %v8410 = vpop.f32.mrf.mxu0
  %v8411 = vadd.f32 0.0, %v8410
  %v8412 = vpop.f32.mrf.mxu0
  %8413 = vmatprep.mubr.bf16.mxu0 0
  %8414 = vmatmul.mubr.bf16.gmra.mxu0 %v8138
  %v8415 = vpop.f32.mrf.mxu0
  %v8416 = vadd.f32 0.0, %v8415
  %v8417 = vpop.f32.mrf.mxu0
  %v8418 = vpop.f32.mrf.mxu0
  %v8419 = vadd.f32 0.0, %v8418
  %v8420 = vpop.f32.mrf.mxu0
  %8421 = vmatprep.mubr.bf16.mxu0 0
  %8422 = vmatmul.mubr.bf16.gmra.mxu0 %v8141
  %v8423 = vpop.f32.mrf.mxu0
  %v8424 = vadd.f32 0.0, %v8423
  %v8425 = vpop.f32.mrf.mxu0
  %v8426 = vpop.f32.mrf.mxu0
  %v8427 = vadd.f32 0.0, %v8426
  %v8428 = vpop.f32.mrf.mxu0
  %8429 = vmatprep.mubr.bf16.mxu0 0
  %8430 = vmatmul.mubr.bf16.gmra.mxu0 %v8144
  %v8431 = vpop.f32.mrf.mxu0
  %v8432 = vadd.f32 0.0, %v8431
  %v8433 = vpop.f32.mrf.mxu0
  %v8434 = vpop.f32.mrf.mxu0
  %v8435 = vadd.f32 0.0, %v8434
  %v8436 = vpop.f32.mrf.mxu0
  %8437 = vmatprep.mubr.bf16.mxu0 0
  %8438 = vmatmul.mubr.bf16.gmra.mxu0 %v8147
  %v8439 = vpop.f32.mrf.mxu0
  %v8440 = vadd.f32 0.0, %v8439
  %v8441 = vpop.f32.mrf.mxu0
  %v8442 = vpop.f32.mrf.mxu0
  %v8443 = vadd.f32 0.0, %v8442
  %v8444 = vpop.f32.mrf.mxu0
  %8445 = vmatprep.mubr.bf16.mxu0 0
  %8446 = vmatmul.mubr.bf16.gmra.mxu0 %v8150
  %v8447 = vpop.f32.mrf.mxu0
  %v8448 = vadd.f32 0.0, %v8447
  %v8449 = vpop.f32.mrf.mxu0
  %v8450 = vpop.f32.mrf.mxu0
  %v8451 = vadd.f32 0.0, %v8450
  %v8452 = vpop.f32.mrf.mxu0
  %8453 = vmatprep.mubr.bf16.mxu0 0
  %8454 = vmatmul.mubr.bf16.gmra.mxu0 %v8153
  %v8455 = vpop.f32.mrf.mxu0
  %v8456 = vadd.f32 0.0, %v8455
  %v8457 = vpop.f32.mrf.mxu0
  %v8458 = vpop.f32.mrf.mxu0
  %v8459 = vadd.f32 0.0, %v8458
  %v8460 = vpop.f32.mrf.mxu0
  %8461 = vmatprep.mubr.bf16.mxu0 0
  %8462 = vmatmul.mubr.bf16.gmra.mxu0 %v8156
  %v8463 = vpop.f32.mrf.mxu0
  %v8464 = vadd.f32 0.0, %v8463
  %v8465 = vpop.f32.mrf.mxu0
  %v8466 = vpop.f32.mrf.mxu0
  %v8467 = vadd.f32 0.0, %v8466
  %v8468 = vpop.f32.mrf.mxu0
  %8469 = vmatprep.mubr.bf16.mxu0 0
  %8470 = vmatmul.mubr.bf16.gmra.mxu0 %v8159
  %v8471 = vpop.f32.mrf.mxu0
  %v8472 = vadd.f32 0.0, %v8471
  %v8473 = vpop.f32.mrf.mxu0
  %v8474 = vpop.f32.mrf.mxu0
  %v8475 = vadd.f32 0.0, %v8474
  %v8476 = vpop.f32.mrf.mxu0
  %8477 = vmatprep.mubr.bf16.mxu0 0
  %8478 = vmatmul.mubr.bf16.gmra.mxu0 %v8162
  %v8479 = vpop.f32.mrf.mxu0
  %v8480 = vadd.f32 0.0, %v8479
  %v8481 = vpop.f32.mrf.mxu0
  %v8482 = vpop.f32.mrf.mxu0
  %v8483 = vadd.f32 0.0, %v8482
  %v8484 = vpop.f32.mrf.mxu0
  %8485 = vmatprep.mubr.bf16.mxu0 0
  %8486 = vmatmul.mubr.bf16.gmra.mxu0 %v8165
  %v8487 = vpop.f32.mrf.mxu0
  %v8488 = vadd.f32 0.0, %v8487
  %v8489 = vpop.f32.mrf.mxu0
  %v8490 = vpop.f32.mrf.mxu0
  %v8491 = vadd.f32 0.0, %v8490
  %v8492 = vpop.f32.mrf.mxu0
  %8493 = vmatprep.mubr.bf16.mxu0 0
  %8494 = vmatmul.mubr.bf16.gmra.mxu0 %v8168
  %v8495 = vpop.f32.mrf.mxu0
  %v8496 = vadd.f32 0.0, %v8495
  %v8497 = vpop.f32.mrf.mxu0
  %v8498 = vpop.f32.mrf.mxu0
  %v8499 = vadd.f32 0.0, %v8498
  %v8500 = vpop.f32.mrf.mxu0
  %8501 = vmatprep.mubr.bf16.mxu0 0
  %8502 = vmatmul.mubr.bf16.gmra.mxu0 %v8171
  %v8503 = vpop.f32.mrf.mxu0
  %v8504 = vadd.f32 0.0, %v8503
  %v8505 = vpop.f32.mrf.mxu0
  %v8506 = vpop.f32.mrf.mxu0
  %v8507 = vadd.f32 0.0, %v8506
  %v8508 = vpop.f32.mrf.mxu0
  %8509 = vmatprep.mubr.bf16.mxu0 0
  %8510 = vmatmul.mubr.bf16.gmra.mxu0 %v8174
  %v8511 = vpop.f32.mrf.mxu0
  %v8512 = vadd.f32 0.0, %v8511
  %v8513 = vpop.f32.mrf.mxu0
  %v8514 = vpop.f32.mrf.mxu0
  %v8515 = vadd.f32 0.0, %v8514
  %v8516 = vpop.f32.mrf.mxu0
  %8517 = vmatprep.mubr.bf16.mxu0 0
  %8518 = vmatmul.mubr.bf16.gmra.mxu0 %v8177
  %v8519 = vpop.f32.mrf.mxu0
  %v8520 = vadd.f32 0.0, %v8519
  %v8521 = vpop.f32.mrf.mxu0
  %v8522 = vpop.f32.mrf.mxu0
  %v8523 = vadd.f32 0.0, %v8522
  %v8524 = vpop.f32.mrf.mxu0
  %8525 = vmatprep.mubr.bf16.mxu0 0
  %8526 = vmatmul.mubr.bf16.gmra.mxu0 %v8180
  %v8527 = vpop.f32.mrf.mxu0
  %v8528 = vadd.f32 0.0, %v8527
  %v8529 = vpop.f32.mrf.mxu0
  %v8530 = vpop.f32.mrf.mxu0
  %v8531 = vadd.f32 0.0, %v8530
  %v8532 = vpop.f32.mrf.mxu0
  %8533 = vmatprep.mubr.bf16.mxu0 0
  %8534 = vmatmul.mubr.bf16.gmra.mxu0 %v8183
  %v8535 = vpop.f32.mrf.mxu0
  %v8536 = vadd.f32 0.0, %v8535
  %v8537 = vpop.f32.mrf.mxu0
  %v8538 = vpop.f32.mrf.mxu0
  %v8539 = vadd.f32 0.0, %v8538
  %v8540 = vpop.f32.mrf.mxu0
  %8541 = vmatprep.mubr.bf16.mxu0 0
  %8542 = vmatmul.mubr.bf16.gmra.mxu0 %v8186
  %v8543 = vpop.f32.mrf.mxu0
  %v8544 = vadd.f32 0.0, %v8543
  %v8545 = vpop.f32.mrf.mxu0
  %v8546 = vpop.f32.mrf.mxu0
  %v8547 = vadd.f32 0.0, %v8546
  %v8548 = vpop.f32.mrf.mxu0
  %8549 = vmatprep.mubr.bf16.mxu0 0
  %8550 = vmatmul.mubr.bf16.gmra.mxu0 %v8189
  %v8551 = vpop.f32.mrf.mxu0
  %v8552 = vadd.f32 0.0, %v8551
  %v8553 = vpop.f32.mrf.mxu0
  %v8554 = vpop.f32.mrf.mxu0
  %v8555 = vadd.f32 0.0, %v8554
  %v8556 = vpop.f32.mrf.mxu0
  %8557 = vmatprep.mubr.bf16.mxu0 0
  %8558 = vmatmul.mubr.bf16.gmra.mxu0 %v8192
  %v8559 = vpop.f32.mrf.mxu0
  %v8560 = vadd.f32 0.0, %v8559
  %v8561 = vpop.f32.mrf.mxu0
  %v8562 = vpop.f32.mrf.mxu0
  %v8563 = vadd.f32 0.0, %v8562
  %v8564 = vpop.f32.mrf.mxu0
  %8565 = vdwg.mxu0
  %v8566 = vadd.f32 %v7599, %v8232
  %v8567 = vadd.f32 %v7600, %v8235
  %v8568 = vadd.f32 %v7601, %v8240
  %v8569 = vadd.f32 %v7602, %v8243
  %v8570 = vadd.f32 %v7603, %v8248
  %v8571 = vadd.f32 %v7604, %v8251
  %v8572 = vadd.f32 %v7605, %v8256
  %v8573 = vadd.f32 %v7606, %v8259
  %v8574 = vadd.f32 %v7607, %v8264
  %v8575 = vadd.f32 %v7608, %v8267
  %v8576 = vadd.f32 %v7609, %v8272
  %v8577 = vadd.f32 %v7610, %v8275
  %v8578 = vadd.f32 %v7611, %v8280
  %v8579 = vadd.f32 %v7612, %v8283
  %v8580 = vadd.f32 %v7613, %v8288
  %v8581 = vadd.f32 %v7614, %v8291
  %v8582 = vadd.f32 %v7615, %v8296
  %v8583 = vadd.f32 %v7616, %v8299
  %v8584 = vadd.f32 %v7617, %v8304
  %v8585 = vadd.f32 %v7618, %v8307
  %v8586 = vadd.f32 %v7619, %v8312
  %v8587 = vadd.f32 %v7620, %v8315
  %v8588 = vadd.f32 %v7621, %v8320
  %v8589 = vadd.f32 %v7622, %v8323
  %v8590 = vadd.f32 %v7623, %v8328
  %v8591 = vadd.f32 %v7624, %v8331
  %v8592 = vadd.f32 %v7625, %v8336
  %v8593 = vadd.f32 %v7626, %v8339
  %v8594 = vadd.f32 %v7627, %v8344
  %v8595 = vadd.f32 %v7628, %v8347
  %v8596 = vadd.f32 %v7629, %v8352
  %v8597 = vadd.f32 %v7630, %v8355
  %v8598 = vadd.f32 %v7631, %v8360
  %v8599 = vadd.f32 %v7632, %v8363
  %v8600 = vadd.f32 %v7633, %v8368
  %v8601 = vadd.f32 %v7634, %v8371
  %v8602 = vadd.f32 %v7635, %v8376
  %v8603 = vadd.f32 %v7636, %v8379
  %v8604 = vadd.f32 %v7637, %v8384
  %v8605 = vadd.f32 %v7638, %v8387
  %v8606 = vadd.f32 %v7639, %v8392
  %v8607 = vadd.f32 %v7640, %v8395
  %v8608 = vadd.f32 %v7641, %v8400
  %v8609 = vadd.f32 %v7642, %v8403
  %v8610 = vadd.f32 %v7643, %v8408
  %v8611 = vadd.f32 %v7644, %v8411
  %v8612 = vadd.f32 %v7645, %v8416
  %v8613 = vadd.f32 %v7646, %v8419
  %v8614 = vadd.f32 %v7647, %v8424
  %v8615 = vadd.f32 %v7648, %v8427
  %v8616 = vadd.f32 %v7649, %v8432
  %v8617 = vadd.f32 %v7650, %v8435
  %v8618 = vadd.f32 %v7651, %v8440
  %v8619 = vadd.f32 %v7652, %v8443
  %v8620 = vadd.f32 %v7653, %v8448
  %v8621 = vadd.f32 %v7654, %v8451
  %v8622 = vadd.f32 %v7655, %v8456
  %v8623 = vadd.f32 %v7656, %v8459
  %v8624 = vadd.f32 %v7657, %v8464
  %v8625 = vadd.f32 %v7658, %v8467
  %v8626 = vadd.f32 %v7659, %v8472
  %v8627 = vadd.f32 %v7660, %v8475
  %v8628 = vadd.f32 %v7661, %v8480
  %v8629 = vadd.f32 %v7662, %v8483
  %v8630 = vadd.f32 %v7663, %v8488
  %v8631 = vadd.f32 %v7664, %v8491
  %v8632 = vadd.f32 %v7665, %v8496
  %v8633 = vadd.f32 %v7666, %v8499
  %v8634 = vadd.f32 %v7667, %v8504
  %v8635 = vadd.f32 %v7668, %v8507
  %v8636 = vadd.f32 %v7669, %v8512
  %v8637 = vadd.f32 %v7670, %v8515
  %v8638 = vadd.f32 %v7671, %v8520
  %v8639 = vadd.f32 %v7672, %v8523
  %v8640 = vadd.f32 %v7673, %v8528
  %v8641 = vadd.f32 %v7674, %v8531
  %v8642 = vadd.f32 %v7675, %v8536
  %v8643 = vadd.f32 %v7676, %v8539
  %v8644 = vadd.f32 %v7677, %v8544
  %v8645 = vadd.f32 %v7678, %v8547
  %v8646 = vadd.f32 %v7679, %v8552
  %v8647 = vadd.f32 %v7680, %v8555
  %v8648 = vadd.f32 %v7681, %v8560
  %v8649 = vadd.f32 %v7682, %v8563
  %8650 = vst [vmem:[%s4] sm:$0xff] %v8566
  %8651 = vst [vmem:[%s4 + $0x8] sm:$0xff] %v8567
  %8652 = vst [vmem:[%s4 + $0x10] sm:$0xff] %v8568
  %8653 = vst [vmem:[%s4 + $0x18] sm:$0xff] %v8569
  %8654 = vst [vmem:[%s4 + $0x20] sm:$0xff] %v8570
  %8655 = vst [vmem:[%s4 + $0x28] sm:$0xff] %v8571
  %8656 = vst [vmem:[%s4 + $0x30] sm:$0xff] %v8572
  %8657 = vst [vmem:[%s4 + $0x38] sm:$0xff] %v8573
  %8658 = vst [vmem:[%s4 + $0x40] sm:$0xff] %v8574
  %8659 = vst [vmem:[%s4 + $0x48] sm:$0xff] %v8575
  %8660 = vst [vmem:[%s4 + $0x50] sm:$0xff] %v8576
  %8661 = vst [vmem:[%s4 + $0x58] sm:$0xff] %v8577
  %8662 = vst [vmem:[%s4 + $0x60] sm:$0xff] %v8578
  %8663 = vst [vmem:[%s4 + $0x68] sm:$0xff] %v8579
  %8664 = vst [vmem:[%s4 + $0x70] sm:$0xff] %v8580
  %8665 = vst [vmem:[%s4 + $0x78] sm:$0xff] %v8581
  %8666 = vst [vmem:[%s4 + $0x80] sm:$0xff] %v8582
  %8667 = vst [vmem:[%s4 + $0x88] sm:$0xff] %v8583
  %8668 = vst [vmem:[%s4 + $0x90] sm:$0xff] %v8584
  %8669 = vst [vmem:[%s4 + $0x98] sm:$0xff] %v8585
  %8670 = vst [vmem:[%s4 + $0xa0] sm:$0xff] %v8586
  %8671 = vst [vmem:[%s4 + $0xa8] sm:$0xff] %v8587
  %8672 = vst [vmem:[%s4 + $0xb0] sm:$0xff] %v8588
  %8673 = vst [vmem:[%s4 + $0xb8] sm:$0xff] %v8589
  %8674 = vst [vmem:[%s4 + $0xc0] sm:$0xff] %v8590
  %8675 = vst [vmem:[%s4 + $0xc8] sm:$0xff] %v8591
  %8676 = vst [vmem:[%s4 + $0xd0] sm:$0xff] %v8592
  %8677 = vst [vmem:[%s4 + $0xd8] sm:$0xff] %v8593
  %8678 = vst [vmem:[%s4 + $0xe0] sm:$0xff] %v8594
  %8679 = vst [vmem:[%s4 + $0xe8] sm:$0xff] %v8595
  %8680 = vst [vmem:[%s4 + $0xf0] sm:$0xff] %v8596
  %8681 = vst [vmem:[%s4 + $0xf8] sm:$0xff] %v8597
  %8682 = vst [vmem:[%s4 + $0x100] sm:$0xff] %v8598
  %8683 = vst [vmem:[%s4 + $0x108] sm:$0xff] %v8599
  %8684 = vst [vmem:[%s4 + $0x110] sm:$0xff] %v8600
  %8685 = vst [vmem:[%s4 + $0x118] sm:$0xff] %v8601
  %8686 = vst [vmem:[%s4 + $0x120] sm:$0xff] %v8602
  %8687 = vst [vmem:[%s4 + $0x128] sm:$0xff] %v8603
  %8688 = vst [vmem:[%s4 + $0x130] sm:$0xff] %v8604
  %8689 = vst [vmem:[%s4 + $0x138] sm:$0xff] %v8605
  %8690 = vst [vmem:[%s4 + $0x140] sm:$0xff] %v8606
  %8691 = vst [vmem:[%s4 + $0x148] sm:$0xff] %v8607
  %8692 = vst [vmem:[%s4 + $0x150] sm:$0xff] %v8608
  %8693 = vst [vmem:[%s4 + $0x158] sm:$0xff] %v8609
  %8694 = vst [vmem:[%s4 + $0x160] sm:$0xff] %v8610
  %8695 = vst [vmem:[%s4 + $0x168] sm:$0xff] %v8611
  %8696 = vst [vmem:[%s4 + $0x170] sm:$0xff] %v8612
  %8697 = vst [vmem:[%s4 + $0x178] sm:$0xff] %v8613
  %8698 = vst [vmem:[%s4 + $0x180] sm:$0xff] %v8614
  %8699 = vst [vmem:[%s4 + $0x188] sm:$0xff] %v8615
  %8700 = vst [vmem:[%s4 + $0x190] sm:$0xff] %v8616
  %8701 = vst [vmem:[%s4 + $0x198] sm:$0xff] %v8617
  %8702 = vst [vmem:[%s4 + $0x1a0] sm:$0xff] %v8618
  %8703 = vst [vmem:[%s4 + $0x1a8] sm:$0xff] %v8619
  %8704 = vst [vmem:[%s4 + $0x1b0] sm:$0xff] %v8620
  %8705 = vst [vmem:[%s4 + $0x1b8] sm:$0xff] %v8621
  %8706 = vst [vmem:[%s4 + $0x1c0] sm:$0xff] %v8622
  %8707 = vst [vmem:[%s4 + $0x1c8] sm:$0xff] %v8623
  %8708 = vst [vmem:[%s4 + $0x1d0] sm:$0xff] %v8624
  %8709 = vst [vmem:[%s4 + $0x1d8] sm:$0xff] %v8625
  %8710 = vst [vmem:[%s4 + $0x1e0] sm:$0xff] %v8626
  %8711 = vst [vmem:[%s4 + $0x1e8] sm:$0xff] %v8627
  %8712 = vst [vmem:[%s4 + $0x1f0] sm:$0xff] %v8628
  %8713 = vst [vmem:[%s4 + $0x1f8] sm:$0xff] %v8629
  %8714 = vst [vmem:[%s4 + $0x200] sm:$0xff] %v8630
  %8715 = vst [vmem:[%s4 + $0x208] sm:$0xff] %v8631
  %8716 = vst [vmem:[%s4 + $0x210] sm:$0xff] %v8632
  %8717 = vst [vmem:[%s4 + $0x218] sm:$0xff] %v8633
  %8718 = vst [vmem:[%s4 + $0x220] sm:$0xff] %v8634
  %8719 = vst [vmem:[%s4 + $0x228] sm:$0xff] %v8635
  %8720 = vst [vmem:[%s4 + $0x230] sm:$0xff] %v8636
  %8721 = vst [vmem:[%s4 + $0x238] sm:$0xff] %v8637
  %8722 = vst [vmem:[%s4 + $0x240] sm:$0xff] %v8638
  %8723 = vst [vmem:[%s4 + $0x248] sm:$0xff] %v8639
  %8724 = vst [vmem:[%s4 + $0x250] sm:$0xff] %v8640
  %8725 = vst [vmem:[%s4 + $0x258] sm:$0xff] %v8641
  %8726 = vst [vmem:[%s4 + $0x260] sm:$0xff] %v8642
  %8727 = vst [vmem:[%s4 + $0x268] sm:$0xff] %v8643
  %8728 = vst [vmem:[%s4 + $0x270] sm:$0xff] %v8644
  %8729 = vst [vmem:[%s4 + $0x278] sm:$0xff] %v8645
  %8730 = vst [vmem:[%s4 + $0x280] sm:$0xff] %v8646
  %8731 = vst [vmem:[%s4 + $0x288] sm:$0xff] %v8647
  %8732 = vst [vmem:[%s4 + $0x290] sm:$0xff] %v8648
  %8733 = vst [vmem:[%s4 + $0x298] sm:$0xff] %v8649
  %v8734 = vld [vmem:[%s4] sm:$0xff]
  %v8735 = vld [vmem:[%s4 + $0x8] sm:$0xff]
  %v8736 = vld [vmem:[%s4 + $0x10] sm:$0xff]
  %v8737 = vld [vmem:[%s4 + $0x18] sm:$0xff]
  %v8738 = vld [vmem:[%s4 + $0x20] sm:$0xff]
  %v8739 = vld [vmem:[%s4 + $0x28] sm:$0xff]
  %v8740 = vld [vmem:[%s4 + $0x30] sm:$0xff]
  %v8741 = vld [vmem:[%s4 + $0x38] sm:$0xff]
  %v8742 = vld [vmem:[%s4 + $0x40] sm:$0xff]
  %v8743 = vld [vmem:[%s4 + $0x48] sm:$0xff]
  %v8744 = vld [vmem:[%s4 + $0x50] sm:$0xff]
  %v8745 = vld [vmem:[%s4 + $0x58] sm:$0xff]
  %v8746 = vld [vmem:[%s4 + $0x60] sm:$0xff]
  %v8747 = vld [vmem:[%s4 + $0x68] sm:$0xff]
  %v8748 = vld [vmem:[%s4 + $0x70] sm:$0xff]
  %v8749 = vld [vmem:[%s4 + $0x78] sm:$0xff]
  %v8750 = vld [vmem:[%s4 + $0x80] sm:$0xff]
  %v8751 = vld [vmem:[%s4 + $0x88] sm:$0xff]
  %v8752 = vld [vmem:[%s4 + $0x90] sm:$0xff]
  %v8753 = vld [vmem:[%s4 + $0x98] sm:$0xff]
  %v8754 = vld [vmem:[%s4 + $0xa0] sm:$0xff]
  %v8755 = vld [vmem:[%s4 + $0xa8] sm:$0xff]
  %v8756 = vld [vmem:[%s4 + $0xb0] sm:$0xff]
  %v8757 = vld [vmem:[%s4 + $0xb8] sm:$0xff]
  %v8758 = vld [vmem:[%s4 + $0xc0] sm:$0xff]
  %v8759 = vld [vmem:[%s4 + $0xc8] sm:$0xff]
  %v8760 = vld [vmem:[%s4 + $0xd0] sm:$0xff]
  %v8761 = vld [vmem:[%s4 + $0xd8] sm:$0xff]
  %v8762 = vld [vmem:[%s4 + $0xe0] sm:$0xff]
  %v8763 = vld [vmem:[%s4 + $0xe8] sm:$0xff]
  %v8764 = vld [vmem:[%s4 + $0xf0] sm:$0xff]
  %v8765 = vld [vmem:[%s4 + $0xf8] sm:$0xff]
  %v8766 = vld [vmem:[%s4 + $0x100] sm:$0xff]
  %v8767 = vld [vmem:[%s4 + $0x108] sm:$0xff]
  %v8768 = vld [vmem:[%s4 + $0x110] sm:$0xff]
  %v8769 = vld [vmem:[%s4 + $0x118] sm:$0xff]
  %v8770 = vld [vmem:[%s4 + $0x120] sm:$0xff]
  %v8771 = vld [vmem:[%s4 + $0x128] sm:$0xff]
  %v8772 = vld [vmem:[%s4 + $0x130] sm:$0xff]
  %v8773 = vld [vmem:[%s4 + $0x138] sm:$0xff]
  %v8774 = vld [vmem:[%s4 + $0x140] sm:$0xff]
  %v8775 = vld [vmem:[%s4 + $0x148] sm:$0xff]
  %v8776 = vld [vmem:[%s4 + $0x150] sm:$0xff]
  %v8777 = vld [vmem:[%s4 + $0x158] sm:$0xff]
  %v8778 = vld [vmem:[%s4 + $0x160] sm:$0xff]
  %v8779 = vld [vmem:[%s4 + $0x168] sm:$0xff]
  %v8780 = vld [vmem:[%s4 + $0x170] sm:$0xff]
  %v8781 = vld [vmem:[%s4 + $0x178] sm:$0xff]
  %v8782 = vld [vmem:[%s4 + $0x180] sm:$0xff]
  %v8783 = vld [vmem:[%s4 + $0x188] sm:$0xff]
  %v8784 = vld [vmem:[%s4 + $0x190] sm:$0xff]
  %v8785 = vld [vmem:[%s4 + $0x198] sm:$0xff]
  %v8786 = vld [vmem:[%s4 + $0x1a0] sm:$0xff]
  %v8787 = vld [vmem:[%s4 + $0x1a8] sm:$0xff]
  %v8788 = vld [vmem:[%s4 + $0x1b0] sm:$0xff]
  %v8789 = vld [vmem:[%s4 + $0x1b8] sm:$0xff]
  %v8790 = vld [vmem:[%s4 + $0x1c0] sm:$0xff]
  %v8791 = vld [vmem:[%s4 + $0x1c8] sm:$0xff]
  %v8792 = vld [vmem:[%s4 + $0x1d0] sm:$0xff]
  %v8793 = vld [vmem:[%s4 + $0x1d8] sm:$0xff]
  %v8794 = vld [vmem:[%s4 + $0x1e0] sm:$0xff]
  %v8795 = vld [vmem:[%s4 + $0x1e8] sm:$0xff]
  %v8796 = vld [vmem:[%s4 + $0x1f0] sm:$0xff]
  %v8797 = vld [vmem:[%s4 + $0x1f8] sm:$0xff]
  %v8798 = vld [vmem:[%s4 + $0x200] sm:$0xff]
  %v8799 = vld [vmem:[%s4 + $0x208] sm:$0xff]
  %v8800 = vld [vmem:[%s4 + $0x210] sm:$0xff]
  %v8801 = vld [vmem:[%s4 + $0x218] sm:$0xff]
  %v8802 = vld [vmem:[%s4 + $0x220] sm:$0xff]
  %v8803 = vld [vmem:[%s4 + $0x228] sm:$0xff]
  %v8804 = vld [vmem:[%s4 + $0x230] sm:$0xff]
  %v8805 = vld [vmem:[%s4 + $0x238] sm:$0xff]
  %v8806 = vld [vmem:[%s4 + $0x240] sm:$0xff]
  %v8807 = vld [vmem:[%s4 + $0x248] sm:$0xff]
  %v8808 = vld [vmem:[%s4 + $0x250] sm:$0xff]
  %v8809 = vld [vmem:[%s4 + $0x258] sm:$0xff]
  %v8810 = vld [vmem:[%s4 + $0x260] sm:$0xff]
  %v8811 = vld [vmem:[%s4 + $0x268] sm:$0xff]
  %v8812 = vld [vmem:[%s4 + $0x270] sm:$0xff]
  %v8813 = vld [vmem:[%s4 + $0x278] sm:$0xff]
  %v8814 = vld [vmem:[%s4 + $0x280] sm:$0xff]
  %v8815 = vld [vmem:[%s4 + $0x288] sm:$0xff]
  %v8816 = vld [vmem:[%s4 + $0x290] sm:$0xff]
  %v8817 = vld [vmem:[%s4 + $0x298] sm:$0xff]
  %v8818 = vld [vmem:[#allocation2 + $0x10] sm:$0xc]
  %v8819 = vld [vmem:[#allocation2 + $0x14] sm:$0xf]
  %v8820 = vld [vmem:[#allocation2 + $0x18] sm:$0xf]
  %v8821 = vld [vmem:[#allocation2 + $0x1c] sm:$0xf]
  %v8822 = vld [vmem:[#allocation2 + $0x20] sm:$0xf]
  %v8823 = vld [vmem:[#allocation2 + $0x24] sm:$0xf]
  %v8824 = vld [vmem:[#allocation2 + $0x28] sm:$0xf]
  %v8825 = vld [vmem:[#allocation2 + $0x2c] sm:$0xf]
  %v8826 = vld [vmem:[#allocation2 + $0x30] sm:$0xf]
  %v8827 = vld [vmem:[#allocation2 + $0x34] sm:$0xf]
  %v8828 = vld [vmem:[#allocation2 + $0x38] sm:$0xf]
  %v8829 = vld [vmem:[#allocation2 + $0x3c] sm:$0xf]
  %v8830 = vld [vmem:[#allocation2 + $0x40] sm:$0xf]
  %v8831 = vld [vmem:[#allocation2 + $0x44] sm:$0xf]
  %v8832 = vld [vmem:[#allocation2 + $0x48] sm:$0xf]
  %v8833 = vld [vmem:[#allocation2 + $0x4c] sm:$0xf]
  %v8834 = vld [vmem:[#allocation2 + $0x50] sm:$0xf]
  %v8835 = vld [vmem:[#allocation2 + $0x54] sm:$0xf]
  %v8836 = vld [vmem:[#allocation2 + $0x58] sm:$0xf]
  %v8837 = vld [vmem:[#allocation2 + $0x5c] sm:$0xf]
  %v8838 = vld [vmem:[#allocation2 + $0x60] sm:$0xf]
  %v8839 = vld [vmem:[#allocation2 + $0x64] sm:$0xf]
  %v8840 = vld [vmem:[#allocation2 + $0x68] sm:$0xf]
  %v8841 = vld [vmem:[#allocation2 + $0x6c] sm:$0xf]
  %v8842 = vld [vmem:[#allocation2 + $0x70] sm:$0xf]
  %v8843 = vld [vmem:[#allocation2 + $0x74] sm:$0xf]
  %v8844 = vld [vmem:[#allocation2 + $0x78] sm:$0xf]
  %v8845 = vld [vmem:[#allocation2 + $0x7c] sm:$0xf]
  %v8846 = vld [vmem:[#allocation2 + $0x80] sm:$0xf]
  %v8847 = vld [vmem:[#allocation2 + $0x84] sm:$0xf]
  %v8848 = vld [vmem:[#allocation2 + $0x88] sm:$0xf]
  %v8849 = vld [vmem:[#allocation2 + $0x8c] sm:$0xf]
  %v8850 = vld [vmem:[#allocation2 + $0x90] sm:$0xf]
  %v8851 = vld [vmem:[#allocation2 + $0x94] sm:$0xf]
  %v8852 = vld [vmem:[#allocation2 + $0x98] sm:$0xf]
  %v8853 = vld [vmem:[#allocation2 + $0x9c] sm:$0xf]
  %v8854 = vld [vmem:[#allocation2 + $0xa0] sm:$0xf]
  %v8855 = vld [vmem:[#allocation2 + $0xa4] sm:$0xf]
  %v8856 = vld [vmem:[#allocation2 + $0xa8] sm:$0xf]
  %v8857 = vld [vmem:[#allocation2 + $0xac] sm:$0xf]
  %v8858 = vld [vmem:[#allocation2 + $0xb0] sm:$0xf]
  %v8859 = vld [vmem:[#allocation2 + $0xb4] sm:$0xf]
  %v8860 = vld [vmem:[#allocation2 + $0xb8] sm:$0xf]
  %v8861 = vld [vmem:[#allocation2 + $0xbc] sm:$0xf]
  %v8862 = vld [vmem:[#allocation2 + $0xc0] sm:$0xf]
  %v8863 = vld [vmem:[#allocation2 + $0xc4] sm:$0xf]
  %v8864 = vld [vmem:[#allocation2 + $0xc8] sm:$0xf]
  %v8865 = vld [vmem:[#allocation2 + $0xcc] sm:$0xf]
  %v8866 = vld [vmem:[#allocation2 + $0xd0] sm:$0xf]
  %v8867 = vld [vmem:[#allocation2 + $0xd4] sm:$0xf]
  %v8868 = vld [vmem:[#allocation2 + $0xd8] sm:$0xf]
  %v8869 = vld [vmem:[#allocation2 + $0xdc] sm:$0xf]
  %v8870 = vld [vmem:[#allocation2 + $0xe0] sm:$0xf]
  %v8871 = vld [vmem:[#allocation2 + $0xe4] sm:$0xf]
  %v8872 = vld [vmem:[#allocation2 + $0xe8] sm:$0xf]
  %v8873 = vld [vmem:[#allocation2 + $0xec] sm:$0xf]
  %v8874 = vld [vmem:[#allocation2 + $0xf0] sm:$0xf]
  %v8875 = vld [vmem:[#allocation2 + $0xf4] sm:$0xf]
  %v8876 = vld [vmem:[#allocation2 + $0xf8] sm:$0xf]
  %v8877 = vld [vmem:[#allocation2 + $0xfc] sm:$0xf]
  %v8878 = vld [vmem:[#allocation2 + $0x100] sm:$0xf]
  %v8879 = vld [vmem:[#allocation2 + $0x104] sm:$0xf]
  %v8880 = vld [vmem:[#allocation2 + $0x108] sm:$0xf]
  %v8881 = vld [vmem:[#allocation2 + $0x10c] sm:$0xf]
  %v8882 = vld [vmem:[#allocation2 + $0x110] sm:$0xf]
  %v8883 = vld [vmem:[#allocation2 + $0x114] sm:$0xf]
  %v8884 = vld [vmem:[#allocation2 + $0x118] sm:$0xf]
  %v8885 = vld [vmem:[#allocation2 + $0x11c] sm:$0xf]
  %v8886 = vld [vmem:[#allocation2 + $0x120] sm:$0xf]
  %v8887 = vld [vmem:[#allocation2 + $0x124] sm:$0xf]
  %v8888 = vld [vmem:[#allocation2 + $0x128] sm:$0xf]
  %v8889 = vld [vmem:[#allocation2 + $0x12c] sm:$0xf]
  %v8890 = vld [vmem:[#allocation2 + $0x130] sm:$0xf]
  %v8891 = vld [vmem:[#allocation2 + $0x134] sm:$0xf]
  %v8892 = vld [vmem:[#allocation2 + $0x138] sm:$0xf]
  %v8893 = vld [vmem:[#allocation2 + $0x13c] sm:$0xf]
  %v8894 = vld [vmem:[#allocation2 + $0x140] sm:$0xf]
  %v8895 = vld [vmem:[#allocation2 + $0x144] sm:$0xf]
  %v8896 = vld [vmem:[#allocation2 + $0x148] sm:$0xf]
  %v8897 = vld [vmem:[#allocation2 + $0x14c] sm:$0xf]
  %v8898 = vld [vmem:[#allocation2 + $0x150] sm:$0xf]
  %v8899 = vld [vmem:[#allocation2 + $0x154] sm:$0xf]
  %v8900 = vld [vmem:[#allocation2 + $0x158] sm:$0xf]
  %v8901 = vld [vmem:[#allocation2 + $0x15c] sm:$0xf]
  %v8902 = vld [vmem:[#allocation2 + $0x160] sm:$0x7]
  %s8903 = scalar_lea.vmem %s2, 28
  %v8904 = vld [vmem:[%s8903] sm:$0xf]
  %v8990 = vunpack.c.l.b16 %v8818
  %v8991 = vunpack.c.l.b16 %v8819
  %v8992 = vunpack.c.l.b16 %v8820
  %v8993 = vunpack.c.l.b16 %v8821
  %v8994 = vunpack.c.l.b16 %v8822
  %v8995 = vunpack.c.l.b16 %v8823
  %v8996 = vunpack.c.l.b16 %v8824
  %v8997 = vunpack.c.l.b16 %v8825
  %v8998 = vunpack.c.l.b16 %v8826
  %v8999 = vunpack.c.l.b16 %v8827
  %v9000 = vunpack.c.l.b16 %v8828
  %v9001 = vunpack.c.l.b16 %v8829
  %v9002 = vunpack.c.l.b16 %v8830
  %v9003 = vunpack.c.l.b16 %v8831
  %v9004 = vunpack.c.l.b16 %v8832
  %v9005 = vunpack.c.l.b16 %v8833
  %v9006 = vunpack.c.l.b16 %v8834
  %v9007 = vunpack.c.l.b16 %v8835
  %v9008 = vunpack.c.l.b16 %v8836
  %v9009 = vunpack.c.l.b16 %v8837
  %v9010 = vunpack.c.l.b16 %v8838
  %v9011 = vunpack.c.l.b16 %v8839
  %v9012 = vunpack.c.l.b16 %v8840
  %v9013 = vunpack.c.l.b16 %v8841
  %v9014 = vunpack.c.l.b16 %v8842
  %v9015 = vunpack.c.l.b16 %v8843
  %v9016 = vunpack.c.l.b16 %v8844
  %v9017 = vunpack.c.l.b16 %v8845
  %v9018 = vunpack.c.l.b16 %v8846
  %v9019 = vunpack.c.l.b16 %v8847
  %v9020 = vunpack.c.l.b16 %v8848
  %v9021 = vunpack.c.l.b16 %v8849
  %v9022 = vunpack.c.l.b16 %v8850
  %v9023 = vunpack.c.l.b16 %v8851
  %v9024 = vunpack.c.l.b16 %v8852
  %v9025 = vunpack.c.l.b16 %v8853
  %v9026 = vunpack.c.l.b16 %v8854
  %v9027 = vunpack.c.l.b16 %v8855
  %v9028 = vunpack.c.l.b16 %v8856
  %v9029 = vunpack.c.l.b16 %v8857
  %v9030 = vunpack.c.l.b16 %v8858
  %v9031 = vunpack.c.l.b16 %v8859
  %v9032 = vunpack.c.l.b16 %v8860
  %v9033 = vunpack.c.l.b16 %v8861
  %v9034 = vunpack.c.l.b16 %v8862
  %v9035 = vunpack.c.l.b16 %v8863
  %v9036 = vunpack.c.l.b16 %v8864
  %v9037 = vunpack.c.l.b16 %v8865
  %v9038 = vunpack.c.l.b16 %v8866
  %v9039 = vunpack.c.l.b16 %v8867
  %v9040 = vunpack.c.l.b16 %v8868
  %v9041 = vunpack.c.l.b16 %v8869
  %v9042 = vunpack.c.l.b16 %v8870
  %v9043 = vunpack.c.l.b16 %v8871
  %v9044 = vunpack.c.l.b16 %v8872
  %v9045 = vunpack.c.l.b16 %v8873
  %v9046 = vunpack.c.l.b16 %v8874
  %v9047 = vunpack.c.l.b16 %v8875
  %v9048 = vunpack.c.l.b16 %v8876
  %v9049 = vunpack.c.l.b16 %v8877
  %v9050 = vunpack.c.l.b16 %v8878
  %v9051 = vunpack.c.l.b16 %v8879
  %v9052 = vunpack.c.l.b16 %v8880
  %v9053 = vunpack.c.l.b16 %v8881
  %v9054 = vunpack.c.l.b16 %v8882
  %v9055 = vunpack.c.l.b16 %v8883
  %v9056 = vunpack.c.l.b16 %v8884
  %v9057 = vunpack.c.l.b16 %v8885
  %v9058 = vunpack.c.l.b16 %v8886
  %v9059 = vunpack.c.l.b16 %v8887
  %v9060 = vunpack.c.l.b16 %v8888
  %v9061 = vunpack.c.l.b16 %v8889
  %v9062 = vunpack.c.l.b16 %v8890
  %v9063 = vunpack.c.l.b16 %v8891
  %v9064 = vunpack.c.l.b16 %v8892
  %v9065 = vunpack.c.l.b16 %v8893
  %v9066 = vunpack.c.l.b16 %v8894
  %v9067 = vunpack.c.l.b16 %v8895
  %v9068 = vunpack.c.l.b16 %v8896
  %v9069 = vunpack.c.l.b16 %v8897
  %v9070 = vunpack.c.l.b16 %v8898
  %v9071 = vunpack.c.l.b16 %v8899
  %v9072 = vunpack.c.l.b16 %v8900
  %v9073 = vunpack.c.l.b16 %v8901
  %v9074 = vunpack.c.l.b16 %v8902
  %v9075 = vpack.c.b16 %v8991, %v8990
  %v9076 = vpack.c.b16 %v8993, %v8992
  %v9077 = vpack.c.b16 %v8995, %v8994
  %v9078 = vpack.c.b16 %v8997, %v8996
  %v9079 = vpack.c.b16 %v8999, %v8998
  %v9080 = vpack.c.b16 %v9001, %v9000
  %v9081 = vpack.c.b16 %v9003, %v9002
  %v9082 = vpack.c.b16 %v9005, %v9004
  %v9083 = vpack.c.b16 %v9007, %v9006
  %v9084 = vpack.c.b16 %v9009, %v9008
  %v9085 = vpack.c.b16 %v9011, %v9010
  %v9086 = vpack.c.b16 %v9013, %v9012
  %v9087 = vpack.c.b16 %v9015, %v9014
  %v9088 = vpack.c.b16 %v9017, %v9016
  %v9089 = vpack.c.b16 %v9019, %v9018
  %v9090 = vpack.c.b16 %v9021, %v9020
  %v9091 = vpack.c.b16 %v9023, %v9022
  %v9092 = vpack.c.b16 %v9025, %v9024
  %v9093 = vpack.c.b16 %v9027, %v9026
  %v9094 = vpack.c.b16 %v9029, %v9028
  %v9095 = vpack.c.b16 %v9031, %v9030
  %v9096 = vpack.c.b16 %v9033, %v9032
  %v9097 = vpack.c.b16 %v9035, %v9034
  %v9098 = vpack.c.b16 %v9037, %v9036
  %v9099 = vpack.c.b16 %v9039, %v9038
  %v9100 = vpack.c.b16 %v9041, %v9040
  %v9101 = vpack.c.b16 %v9043, %v9042
  %v9102 = vpack.c.b16 %v9045, %v9044
  %v9103 = vpack.c.b16 %v9047, %v9046
  %v9104 = vpack.c.b16 %v9049, %v9048
  %v9105 = vpack.c.b16 %v9051, %v9050
  %v9106 = vpack.c.b16 %v9053, %v9052
  %v9107 = vpack.c.b16 %v9055, %v9054
  %v9108 = vpack.c.b16 %v9057, %v9056
  %v9109 = vpack.c.b16 %v9059, %v9058
  %v9110 = vpack.c.b16 %v9061, %v9060
  %v9111 = vpack.c.b16 %v9063, %v9062
  %v9112 = vpack.c.b16 %v9065, %v9064
  %v9113 = vpack.c.b16 %v9067, %v9066
  %v9114 = vpack.c.b16 %v9069, %v9068
  %v9115 = vpack.c.b16 %v9071, %v9070
  %v9116 = vpack.c.b16 %v9073, %v9072
  %v9117 = vpack.c.b16 %v9074, %v9074
  %vm9118 = vsmask.f32 5376
  %v9120 = vshrl.u32 %v9075, 16
  %v9122 = vrot.slane %v9120, 2
  %v9123 = vshll.u32 %v9075, 16
  %v9125 = vrot.slane %v9123, 3
  %v9126 = vor.u32 %v9122, %v9125
  %v9128 = vshrl.u32 %v9076, 16
  %v9130 = vrot.slane %v9128, 2
  %v9131 = vshll.u32 %v9076, 16
  %v9133 = vrot.slane %v9131, 3
  %v9134 = vor.u32 %v9130, %v9133
  %v9135 = vsel %vm9118, %v9126, %v9134
  %v9137 = vshrl.u32 %v9077, 16
  %v9139 = vrot.slane %v9137, 2
  %v9140 = vshll.u32 %v9077, 16
  %v9142 = vrot.slane %v9140, 3
  %v9143 = vor.u32 %v9139, %v9142
  %v9144 = vsel %vm9118, %v9134, %v9143
  %v9146 = vshrl.u32 %v9078, 16
  %v9148 = vrot.slane %v9146, 2
  %v9149 = vshll.u32 %v9078, 16
  %v9151 = vrot.slane %v9149, 3
  %v9152 = vor.u32 %v9148, %v9151
  %v9153 = vsel %vm9118, %v9143, %v9152
  %v9155 = vshrl.u32 %v9079, 16
  %v9157 = vrot.slane %v9155, 2
  %v9158 = vshll.u32 %v9079, 16
  %v9160 = vrot.slane %v9158, 3
  %v9161 = vor.u32 %v9157, %v9160
  %v9162 = vsel %vm9118, %v9152, %v9161
  %v9164 = vshrl.u32 %v9080, 16
  %v9166 = vrot.slane %v9164, 2
  %v9167 = vshll.u32 %v9080, 16
  %v9169 = vrot.slane %v9167, 3
  %v9170 = vor.u32 %v9166, %v9169
  %v9171 = vsel %vm9118, %v9161, %v9170
  %v9173 = vshrl.u32 %v9081, 16
  %v9175 = vrot.slane %v9173, 2
  %v9176 = vshll.u32 %v9081, 16
  %v9178 = vrot.slane %v9176, 3
  %v9179 = vor.u32 %v9175, %v9178
  %v9180 = vsel %vm9118, %v9170, %v9179
  %v9182 = vshrl.u32 %v9082, 16
  %v9184 = vrot.slane %v9182, 2
  %v9185 = vshll.u32 %v9082, 16
  %v9187 = vrot.slane %v9185, 3
  %v9188 = vor.u32 %v9184, %v9187
  %v9189 = vsel %vm9118, %v9179, %v9188
  %v9191 = vshrl.u32 %v9083, 16
  %v9193 = vrot.slane %v9191, 2
  %v9194 = vshll.u32 %v9083, 16
  %v9196 = vrot.slane %v9194, 3
  %v9197 = vor.u32 %v9193, %v9196
  %v9198 = vsel %vm9118, %v9188, %v9197
  %v9200 = vshrl.u32 %v9084, 16
  %v9202 = vrot.slane %v9200, 2
  %v9203 = vshll.u32 %v9084, 16
  %v9205 = vrot.slane %v9203, 3
  %v9206 = vor.u32 %v9202, %v9205
  %v9207 = vsel %vm9118, %v9197, %v9206
  %v9209 = vshrl.u32 %v9085, 16
  %v9211 = vrot.slane %v9209, 2
  %v9212 = vshll.u32 %v9085, 16
  %v9214 = vrot.slane %v9212, 3
  %v9215 = vor.u32 %v9211, %v9214
  %v9216 = vsel %vm9118, %v9206, %v9215
  %v9218 = vshrl.u32 %v9086, 16
  %v9220 = vrot.slane %v9218, 2
  %v9221 = vshll.u32 %v9086, 16
  %v9223 = vrot.slane %v9221, 3
  %v9224 = vor.u32 %v9220, %v9223
  %v9225 = vsel %vm9118, %v9215, %v9224
  %v9227 = vshrl.u32 %v9087, 16
  %v9229 = vrot.slane %v9227, 2
  %v9230 = vshll.u32 %v9087, 16
  %v9232 = vrot.slane %v9230, 3
  %v9233 = vor.u32 %v9229, %v9232
  %v9234 = vsel %vm9118, %v9224, %v9233
  %v9236 = vshrl.u32 %v9088, 16
  %v9238 = vrot.slane %v9236, 2
  %v9239 = vshll.u32 %v9088, 16
  %v9241 = vrot.slane %v9239, 3
  %v9242 = vor.u32 %v9238, %v9241
  %v9243 = vsel %vm9118, %v9233, %v9242
  %v9245 = vshrl.u32 %v9089, 16
  %v9247 = vrot.slane %v9245, 2
  %v9248 = vshll.u32 %v9089, 16
  %v9250 = vrot.slane %v9248, 3
  %v9251 = vor.u32 %v9247, %v9250
  %v9252 = vsel %vm9118, %v9242, %v9251
  %v9254 = vshrl.u32 %v9090, 16
  %v9256 = vrot.slane %v9254, 2
  %v9257 = vshll.u32 %v9090, 16
  %v9259 = vrot.slane %v9257, 3
  %v9260 = vor.u32 %v9256, %v9259
  %v9261 = vsel %vm9118, %v9251, %v9260
  %v9263 = vshrl.u32 %v9091, 16
  %v9265 = vrot.slane %v9263, 2
  %v9266 = vshll.u32 %v9091, 16
  %v9268 = vrot.slane %v9266, 3
  %v9269 = vor.u32 %v9265, %v9268
  %v9270 = vsel %vm9118, %v9260, %v9269
  %v9272 = vshrl.u32 %v9092, 16
  %v9274 = vrot.slane %v9272, 2
  %v9275 = vshll.u32 %v9092, 16
  %v9277 = vrot.slane %v9275, 3
  %v9278 = vor.u32 %v9274, %v9277
  %v9279 = vsel %vm9118, %v9269, %v9278
  %v9281 = vshrl.u32 %v9093, 16
  %v9283 = vrot.slane %v9281, 2
  %v9284 = vshll.u32 %v9093, 16
  %v9286 = vrot.slane %v9284, 3
  %v9287 = vor.u32 %v9283, %v9286
  %v9288 = vsel %vm9118, %v9278, %v9287
  %v9290 = vshrl.u32 %v9094, 16
  %v9292 = vrot.slane %v9290, 2
  %v9293 = vshll.u32 %v9094, 16
  %v9295 = vrot.slane %v9293, 3
  %v9296 = vor.u32 %v9292, %v9295
  %v9297 = vsel %vm9118, %v9287, %v9296
  %v9299 = vshrl.u32 %v9095, 16
  %v9301 = vrot.slane %v9299, 2
  %v9302 = vshll.u32 %v9095, 16
  %v9304 = vrot.slane %v9302, 3
  %v9305 = vor.u32 %v9301, %v9304
  %v9306 = vsel %vm9118, %v9296, %v9305
  %v9308 = vshrl.u32 %v9096, 16
  %v9310 = vrot.slane %v9308, 2
  %v9311 = vshll.u32 %v9096, 16
  %v9313 = vrot.slane %v9311, 3
  %v9314 = vor.u32 %v9310, %v9313
  %v9315 = vsel %vm9118, %v9305, %v9314
  %v9317 = vshrl.u32 %v9097, 16
  %v9319 = vrot.slane %v9317, 2
  %v9320 = vshll.u32 %v9097, 16
  %v9322 = vrot.slane %v9320, 3
  %v9323 = vor.u32 %v9319, %v9322
  %v9324 = vsel %vm9118, %v9314, %v9323
  %v9326 = vshrl.u32 %v9098, 16
  %v9328 = vrot.slane %v9326, 2
  %v9329 = vshll.u32 %v9098, 16
  %v9331 = vrot.slane %v9329, 3
  %v9332 = vor.u32 %v9328, %v9331
  %v9333 = vsel %vm9118, %v9323, %v9332
  %v9335 = vshrl.u32 %v9099, 16
  %v9337 = vrot.slane %v9335, 2
  %v9338 = vshll.u32 %v9099, 16
  %v9340 = vrot.slane %v9338, 3
  %v9341 = vor.u32 %v9337, %v9340
  %v9342 = vsel %vm9118, %v9332, %v9341
  %v9344 = vshrl.u32 %v9100, 16
  %v9346 = vrot.slane %v9344, 2
  %v9347 = vshll.u32 %v9100, 16
  %v9349 = vrot.slane %v9347, 3
  %v9350 = vor.u32 %v9346, %v9349
  %v9351 = vsel %vm9118, %v9341, %v9350
  %v9353 = vshrl.u32 %v9101, 16
  %v9355 = vrot.slane %v9353, 2
  %v9356 = vshll.u32 %v9101, 16
  %v9358 = vrot.slane %v9356, 3
  %v9359 = vor.u32 %v9355, %v9358
  %v9360 = vsel %vm9118, %v9350, %v9359
  %v9362 = vshrl.u32 %v9102, 16
  %v9364 = vrot.slane %v9362, 2
  %v9365 = vshll.u32 %v9102, 16
  %v9367 = vrot.slane %v9365, 3
  %v9368 = vor.u32 %v9364, %v9367
  %v9369 = vsel %vm9118, %v9359, %v9368
  %v9371 = vshrl.u32 %v9103, 16
  %v9373 = vrot.slane %v9371, 2
  %v9374 = vshll.u32 %v9103, 16
  %v9376 = vrot.slane %v9374, 3
  %v9377 = vor.u32 %v9373, %v9376
  %v9378 = vsel %vm9118, %v9368, %v9377
  %v9380 = vshrl.u32 %v9104, 16
  %v9382 = vrot.slane %v9380, 2
  %v9383 = vshll.u32 %v9104, 16
  %v9385 = vrot.slane %v9383, 3
  %v9386 = vor.u32 %v9382, %v9385
  %v9387 = vsel %vm9118, %v9377, %v9386
  %v9389 = vshrl.u32 %v9105, 16
  %v9391 = vrot.slane %v9389, 2
  %v9392 = vshll.u32 %v9105, 16
  %v9394 = vrot.slane %v9392, 3
  %v9395 = vor.u32 %v9391, %v9394
  %v9396 = vsel %vm9118, %v9386, %v9395
  %v9398 = vshrl.u32 %v9106, 16
  %v9400 = vrot.slane %v9398, 2
  %v9401 = vshll.u32 %v9106, 16
  %v9403 = vrot.slane %v9401, 3
  %v9404 = vor.u32 %v9400, %v9403
  %v9405 = vsel %vm9118, %v9395, %v9404
  %v9407 = vshrl.u32 %v9107, 16
  %v9409 = vrot.slane %v9407, 2
  %v9410 = vshll.u32 %v9107, 16
  %v9412 = vrot.slane %v9410, 3
  %v9413 = vor.u32 %v9409, %v9412
  %v9414 = vsel %vm9118, %v9404, %v9413
  %v9416 = vshrl.u32 %v9108, 16
  %v9418 = vrot.slane %v9416, 2
  %v9419 = vshll.u32 %v9108, 16
  %v9421 = vrot.slane %v9419, 3
  %v9422 = vor.u32 %v9418, %v9421
  %v9423 = vsel %vm9118, %v9413, %v9422
  %v9425 = vshrl.u32 %v9109, 16
  %v9427 = vrot.slane %v9425, 2
  %v9428 = vshll.u32 %v9109, 16
  %v9430 = vrot.slane %v9428, 3
  %v9431 = vor.u32 %v9427, %v9430
  %v9432 = vsel %vm9118, %v9422, %v9431
  %v9434 = vshrl.u32 %v9110, 16
  %v9436 = vrot.slane %v9434, 2
  %v9437 = vshll.u32 %v9110, 16
  %v9439 = vrot.slane %v9437, 3
  %v9440 = vor.u32 %v9436, %v9439
  %v9441 = vsel %vm9118, %v9431, %v9440
  %v9443 = vshrl.u32 %v9111, 16
  %v9445 = vrot.slane %v9443, 2
  %v9446 = vshll.u32 %v9111, 16
  %v9448 = vrot.slane %v9446, 3
  %v9449 = vor.u32 %v9445, %v9448
  %v9450 = vsel %vm9118, %v9440, %v9449
  %v9452 = vshrl.u32 %v9112, 16
  %v9454 = vrot.slane %v9452, 2
  %v9455 = vshll.u32 %v9112, 16
  %v9457 = vrot.slane %v9455, 3
  %v9458 = vor.u32 %v9454, %v9457
  %v9459 = vsel %vm9118, %v9449, %v9458
  %v9461 = vshrl.u32 %v9113, 16
  %v9463 = vrot.slane %v9461, 2
  %v9464 = vshll.u32 %v9113, 16
  %v9466 = vrot.slane %v9464, 3
  %v9467 = vor.u32 %v9463, %v9466
  %v9468 = vsel %vm9118, %v9458, %v9467
  %v9470 = vshrl.u32 %v9114, 16
  %v9472 = vrot.slane %v9470, 2
  %v9473 = vshll.u32 %v9114, 16
  %v9475 = vrot.slane %v9473, 3
  %v9476 = vor.u32 %v9472, %v9475
  %v9477 = vsel %vm9118, %v9467, %v9476
  %v9479 = vshrl.u32 %v9115, 16
  %v9481 = vrot.slane %v9479, 2
  %v9482 = vshll.u32 %v9115, 16
  %v9484 = vrot.slane %v9482, 3
  %v9485 = vor.u32 %v9481, %v9484
  %v9486 = vsel %vm9118, %v9476, %v9485
  %v9488 = vshrl.u32 %v9116, 16
  %v9490 = vrot.slane %v9488, 2
  %v9491 = vshll.u32 %v9116, 16
  %v9493 = vrot.slane %v9491, 3
  %v9494 = vor.u32 %v9490, %v9493
  %v9495 = vsel %vm9118, %v9485, %v9494
  %v9497 = vshrl.u32 %v9117, 16
  %v9499 = vrot.slane %v9497, 2
  %v9500 = vshll.u32 %v9117, 16
  %v9502 = vrot.slane %v9500, 3
  %v9503 = vor.u32 %v9499, %v9502
  %v9504 = vsel %vm9118, %v9494, %v9503
  %v9506 = vsel %vm696, %v9135, 0
  %v9509 = vsel %vm696, %v9144, 0
  %v9512 = vsel %vm696, %v9153, 0
  %v9515 = vsel %vm696, %v9162, 0
  %v9518 = vsel %vm696, %v9171, 0
  %v9521 = vsel %vm696, %v9180, 0
  %v9524 = vsel %vm696, %v9189, 0
  %v9527 = vsel %vm696, %v9198, 0
  %v9530 = vsel %vm696, %v9207, 0
  %v9533 = vsel %vm696, %v9216, 0
  %v9536 = vsel %vm696, %v9225, 0
  %v9539 = vsel %vm696, %v9234, 0
  %v9542 = vsel %vm696, %v9243, 0
  %v9545 = vsel %vm696, %v9252, 0
  %v9548 = vsel %vm696, %v9261, 0
  %v9551 = vsel %vm696, %v9270, 0
  %v9554 = vsel %vm696, %v9279, 0
  %v9557 = vsel %vm696, %v9288, 0
  %v9560 = vsel %vm696, %v9297, 0
  %v9563 = vsel %vm696, %v9306, 0
  %v9566 = vsel %vm696, %v9315, 0
  %v9569 = vsel %vm696, %v9324, 0
  %v9572 = vsel %vm696, %v9333, 0
  %v9575 = vsel %vm696, %v9342, 0
  %v9578 = vsel %vm696, %v9351, 0
  %v9581 = vsel %vm696, %v9360, 0
  %v9584 = vsel %vm696, %v9369, 0
  %v9587 = vsel %vm696, %v9378, 0
  %v9590 = vsel %vm696, %v9387, 0
  %v9593 = vsel %vm696, %v9396, 0
  %v9596 = vsel %vm696, %v9405, 0
  %v9599 = vsel %vm696, %v9414, 0
  %v9602 = vsel %vm696, %v9423, 0
  %v9605 = vsel %vm696, %v9432, 0
  %v9608 = vsel %vm696, %v9441, 0
  %v9611 = vsel %vm696, %v9450, 0
  %v9614 = vsel %vm696, %v9459, 0
  %v9617 = vsel %vm696, %v9468, 0
  %v9620 = vsel %vm696, %v9477, 0
  %v9623 = vsel %vm696, %v9486, 0
  %v9626 = vsel %vm696, %v9495, 0
  %v9629 = vsel %vm696, %v9504, 0
  %v9632 = vsel %vm823, %v8904, 0
  %9634 = vmatprep.subr.bf16.mxu0 0
  %9635 = vmatpush1.bf16.msra.mxu0 0
  %9636 = vmatprep.subr.bf16.mxu0 0
  %9637 = vmatpush1.bf16.msra.mxu0 0
  %9638 = vmatprep.subr.bf16.mxu0 0
  %9639 = vmatpush1.bf16.msra.mxu0 0
  %9640 = vmatprep.subr.bf16.mxu0 0
  %9641 = vmatpush1.bf16.msra.mxu0 0
  %9642 = vmatprep.subr.bf16.mxu0 0
  %9643 = vmatpush1.bf16.msra.mxu0 0
  %9644 = vmatprep.subr.bf16.mxu0 0
  %9645 = vmatpush1.bf16.msra.mxu0 0
  %9646 = vmatprep.subr.bf16.mxu0 0
  %9647 = vmatpush1.bf16.msra.mxu0 0
  %9648 = vmatprep.subr.bf16.mxu0 0
  %9649 = vmatpush1.bf16.msra.mxu0 %v9632
  %9650 = vmatprep.subr.bf16.mxu0 0
  %9651 = vmatpush2.bf16.msra.mxu0 0
  %9652 = vmatprep.subr.bf16.mxu0 0
  %9653 = vmatpush2.bf16.msra.mxu0 0
  %9654 = vmatprep.subr.bf16.mxu0 0
  %9655 = vmatpush2.bf16.msra.mxu0 0
  %9656 = vmatprep.subr.bf16.mxu0 0
  %9657 = vmatpush2.bf16.msra.mxu0 0
  %9658 = vmatprep.subr.bf16.mxu0 0
  %9659 = vmatpush2.bf16.msra.mxu0 0
  %9660 = vmatprep.subr.bf16.mxu0 0
  %9661 = vmatpush2.bf16.msra.mxu0 0
  %9662 = vmatprep.subr.bf16.mxu0 0
  %9663 = vmatpush2.bf16.msra.mxu0 0
  %9664 = vmatprep.subr.bf16.mxu0 0
  %9665 = vmatpush2.bf16.msra.mxu0 0
  %9666 = vmatprep.mubr.bf16.mxu0 0
  %9667 = vmatmul.mubr.bf16.gmra.mxu0 %v9506
  %v9668 = vpop.f32.mrf.mxu0
  %v9669 = vadd.f32 0.0, %v9668
  %v9670 = vpop.f32.mrf.mxu0
  %v9671 = vpop.f32.mrf.mxu0
  %v9672 = vadd.f32 0.0, %v9671
  %v9673 = vpop.f32.mrf.mxu0
  %9674 = vmatprep.mubr.bf16.mxu0 0
  %9675 = vmatmul.mubr.bf16.gmra.mxu0 %v9509
  %v9676 = vpop.f32.mrf.mxu0
  %v9677 = vadd.f32 0.0, %v9676
  %v9678 = vpop.f32.mrf.mxu0
  %v9679 = vpop.f32.mrf.mxu0
  %v9680 = vadd.f32 0.0, %v9679
  %v9681 = vpop.f32.mrf.mxu0
  %9682 = vmatprep.mubr.bf16.mxu0 0
  %9683 = vmatmul.mubr.bf16.gmra.mxu0 %v9512
  %v9684 = vpop.f32.mrf.mxu0
  %v9685 = vadd.f32 0.0, %v9684
  %v9686 = vpop.f32.mrf.mxu0
  %v9687 = vpop.f32.mrf.mxu0
  %v9688 = vadd.f32 0.0, %v9687
  %v9689 = vpop.f32.mrf.mxu0
  %9690 = vmatprep.mubr.bf16.mxu0 0
  %9691 = vmatmul.mubr.bf16.gmra.mxu0 %v9515
  %v9692 = vpop.f32.mrf.mxu0
  %v9693 = vadd.f32 0.0, %v9692
  %v9694 = vpop.f32.mrf.mxu0
  %v9695 = vpop.f32.mrf.mxu0
  %v9696 = vadd.f32 0.0, %v9695
  %v9697 = vpop.f32.mrf.mxu0
  %9698 = vmatprep.mubr.bf16.mxu0 0
  %9699 = vmatmul.mubr.bf16.gmra.mxu0 %v9518
  %v9700 = vpop.f32.mrf.mxu0
  %v9701 = vadd.f32 0.0, %v9700
  %v9702 = vpop.f32.mrf.mxu0
  %v9703 = vpop.f32.mrf.mxu0
  %v9704 = vadd.f32 0.0, %v9703
  %v9705 = vpop.f32.mrf.mxu0
  %9706 = vmatprep.mubr.bf16.mxu0 0
  %9707 = vmatmul.mubr.bf16.gmra.mxu0 %v9521
  %v9708 = vpop.f32.mrf.mxu0
  %v9709 = vadd.f32 0.0, %v9708
  %v9710 = vpop.f32.mrf.mxu0
  %v9711 = vpop.f32.mrf.mxu0
  %v9712 = vadd.f32 0.0, %v9711
  %v9713 = vpop.f32.mrf.mxu0
  %9714 = vmatprep.mubr.bf16.mxu0 0
  %9715 = vmatmul.mubr.bf16.gmra.mxu0 %v9524
  %v9716 = vpop.f32.mrf.mxu0
  %v9717 = vadd.f32 0.0, %v9716
  %v9718 = vpop.f32.mrf.mxu0
  %v9719 = vpop.f32.mrf.mxu0
  %v9720 = vadd.f32 0.0, %v9719
  %v9721 = vpop.f32.mrf.mxu0
  %9722 = vmatprep.mubr.bf16.mxu0 0
  %9723 = vmatmul.mubr.bf16.gmra.mxu0 %v9527
  %v9724 = vpop.f32.mrf.mxu0
  %v9725 = vadd.f32 0.0, %v9724
  %v9726 = vpop.f32.mrf.mxu0
  %v9727 = vpop.f32.mrf.mxu0
  %v9728 = vadd.f32 0.0, %v9727
  %v9729 = vpop.f32.mrf.mxu0
  %9730 = vmatprep.mubr.bf16.mxu0 0
  %9731 = vmatmul.mubr.bf16.gmra.mxu0 %v9530
  %v9732 = vpop.f32.mrf.mxu0
  %v9733 = vadd.f32 0.0, %v9732
  %v9734 = vpop.f32.mrf.mxu0
  %v9735 = vpop.f32.mrf.mxu0
  %v9736 = vadd.f32 0.0, %v9735
  %v9737 = vpop.f32.mrf.mxu0
  %9738 = vmatprep.mubr.bf16.mxu0 0
  %9739 = vmatmul.mubr.bf16.gmra.mxu0 %v9533
  %v9740 = vpop.f32.mrf.mxu0
  %v9741 = vadd.f32 0.0, %v9740
  %v9742 = vpop.f32.mrf.mxu0
  %v9743 = vpop.f32.mrf.mxu0
  %v9744 = vadd.f32 0.0, %v9743
  %v9745 = vpop.f32.mrf.mxu0
  %9746 = vmatprep.mubr.bf16.mxu0 0
  %9747 = vmatmul.mubr.bf16.gmra.mxu0 %v9536
  %v9748 = vpop.f32.mrf.mxu0
  %v9749 = vadd.f32 0.0, %v9748
  %v9750 = vpop.f32.mrf.mxu0
  %v9751 = vpop.f32.mrf.mxu0
  %v9752 = vadd.f32 0.0, %v9751
  %v9753 = vpop.f32.mrf.mxu0
  %9754 = vmatprep.mubr.bf16.mxu0 0
  %9755 = vmatmul.mubr.bf16.gmra.mxu0 %v9539
  %v9756 = vpop.f32.mrf.mxu0
  %v9757 = vadd.f32 0.0, %v9756
  %v9758 = vpop.f32.mrf.mxu0
  %v9759 = vpop.f32.mrf.mxu0
  %v9760 = vadd.f32 0.0, %v9759
  %v9761 = vpop.f32.mrf.mxu0
  %9762 = vmatprep.mubr.bf16.mxu0 0
  %9763 = vmatmul.mubr.bf16.gmra.mxu0 %v9542
  %v9764 = vpop.f32.mrf.mxu0
  %v9765 = vadd.f32 0.0, %v9764
  %v9766 = vpop.f32.mrf.mxu0
  %v9767 = vpop.f32.mrf.mxu0
  %v9768 = vadd.f32 0.0, %v9767
  %v9769 = vpop.f32.mrf.mxu0
  %9770 = vmatprep.mubr.bf16.mxu0 0
  %9771 = vmatmul.mubr.bf16.gmra.mxu0 %v9545
  %v9772 = vpop.f32.mrf.mxu0
  %v9773 = vadd.f32 0.0, %v9772
  %v9774 = vpop.f32.mrf.mxu0
  %v9775 = vpop.f32.mrf.mxu0
  %v9776 = vadd.f32 0.0, %v9775
  %v9777 = vpop.f32.mrf.mxu0
  %9778 = vmatprep.mubr.bf16.mxu0 0
  %9779 = vmatmul.mubr.bf16.gmra.mxu0 %v9548
  %v9780 = vpop.f32.mrf.mxu0
  %v9781 = vadd.f32 0.0, %v9780
  %v9782 = vpop.f32.mrf.mxu0
  %v9783 = vpop.f32.mrf.mxu0
  %v9784 = vadd.f32 0.0, %v9783
  %v9785 = vpop.f32.mrf.mxu0
  %9786 = vmatprep.mubr.bf16.mxu0 0
  %9787 = vmatmul.mubr.bf16.gmra.mxu0 %v9551
  %v9788 = vpop.f32.mrf.mxu0
  %v9789 = vadd.f32 0.0, %v9788
  %v9790 = vpop.f32.mrf.mxu0
  %v9791 = vpop.f32.mrf.mxu0
  %v9792 = vadd.f32 0.0, %v9791
  %v9793 = vpop.f32.mrf.mxu0
  %9794 = vmatprep.mubr.bf16.mxu0 0
  %9795 = vmatmul.mubr.bf16.gmra.mxu0 %v9554
  %v9796 = vpop.f32.mrf.mxu0
  %v9797 = vadd.f32 0.0, %v9796
  %v9798 = vpop.f32.mrf.mxu0
  %v9799 = vpop.f32.mrf.mxu0
  %v9800 = vadd.f32 0.0, %v9799
  %v9801 = vpop.f32.mrf.mxu0
  %9802 = vmatprep.mubr.bf16.mxu0 0
  %9803 = vmatmul.mubr.bf16.gmra.mxu0 %v9557
  %v9804 = vpop.f32.mrf.mxu0
  %v9805 = vadd.f32 0.0, %v9804
  %v9806 = vpop.f32.mrf.mxu0
  %v9807 = vpop.f32.mrf.mxu0
  %v9808 = vadd.f32 0.0, %v9807
  %v9809 = vpop.f32.mrf.mxu0
  %9810 = vmatprep.mubr.bf16.mxu0 0
  %9811 = vmatmul.mubr.bf16.gmra.mxu0 %v9560
  %v9812 = vpop.f32.mrf.mxu0
  %v9813 = vadd.f32 0.0, %v9812
  %v9814 = vpop.f32.mrf.mxu0
  %v9815 = vpop.f32.mrf.mxu0
  %v9816 = vadd.f32 0.0, %v9815
  %v9817 = vpop.f32.mrf.mxu0
  %9818 = vmatprep.mubr.bf16.mxu0 0
  %9819 = vmatmul.mubr.bf16.gmra.mxu0 %v9563
  %v9820 = vpop.f32.mrf.mxu0
  %v9821 = vadd.f32 0.0, %v9820
  %v9822 = vpop.f32.mrf.mxu0
  %v9823 = vpop.f32.mrf.mxu0
  %v9824 = vadd.f32 0.0, %v9823
  %v9825 = vpop.f32.mrf.mxu0
  %9826 = vmatprep.mubr.bf16.mxu0 0
  %9827 = vmatmul.mubr.bf16.gmra.mxu0 %v9566
  %v9828 = vpop.f32.mrf.mxu0
  %v9829 = vadd.f32 0.0, %v9828
  %v9830 = vpop.f32.mrf.mxu0
  %v9831 = vpop.f32.mrf.mxu0
  %v9832 = vadd.f32 0.0, %v9831
  %v9833 = vpop.f32.mrf.mxu0
  %9834 = vmatprep.mubr.bf16.mxu0 0
  %9835 = vmatmul.mubr.bf16.gmra.mxu0 %v9569
  %v9836 = vpop.f32.mrf.mxu0
  %v9837 = vadd.f32 0.0, %v9836
  %v9838 = vpop.f32.mrf.mxu0
  %v9839 = vpop.f32.mrf.mxu0
  %v9840 = vadd.f32 0.0, %v9839
  %v9841 = vpop.f32.mrf.mxu0
  %9842 = vmatprep.mubr.bf16.mxu0 0
  %9843 = vmatmul.mubr.bf16.gmra.mxu0 %v9572
  %v9844 = vpop.f32.mrf.mxu0
  %v9845 = vadd.f32 0.0, %v9844
  %v9846 = vpop.f32.mrf.mxu0
  %v9847 = vpop.f32.mrf.mxu0
  %v9848 = vadd.f32 0.0, %v9847
  %v9849 = vpop.f32.mrf.mxu0
  %9850 = vmatprep.mubr.bf16.mxu0 0
  %9851 = vmatmul.mubr.bf16.gmra.mxu0 %v9575
  %v9852 = vpop.f32.mrf.mxu0
  %v9853 = vadd.f32 0.0, %v9852
  %v9854 = vpop.f32.mrf.mxu0
  %v9855 = vpop.f32.mrf.mxu0
  %v9856 = vadd.f32 0.0, %v9855
  %v9857 = vpop.f32.mrf.mxu0
  %9858 = vmatprep.mubr.bf16.mxu0 0
  %9859 = vmatmul.mubr.bf16.gmra.mxu0 %v9578
  %v9860 = vpop.f32.mrf.mxu0
  %v9861 = vadd.f32 0.0, %v9860
  %v9862 = vpop.f32.mrf.mxu0
  %v9863 = vpop.f32.mrf.mxu0
  %v9864 = vadd.f32 0.0, %v9863
  %v9865 = vpop.f32.mrf.mxu0
  %9866 = vmatprep.mubr.bf16.mxu0 0
  %9867 = vmatmul.mubr.bf16.gmra.mxu0 %v9581
  %v9868 = vpop.f32.mrf.mxu0
  %v9869 = vadd.f32 0.0, %v9868
  %v9870 = vpop.f32.mrf.mxu0
  %v9871 = vpop.f32.mrf.mxu0
  %v9872 = vadd.f32 0.0, %v9871
  %v9873 = vpop.f32.mrf.mxu0
  %9874 = vmatprep.mubr.bf16.mxu0 0
  %9875 = vmatmul.mubr.bf16.gmra.mxu0 %v9584
  %v9876 = vpop.f32.mrf.mxu0
  %v9877 = vadd.f32 0.0, %v9876
  %v9878 = vpop.f32.mrf.mxu0
  %v9879 = vpop.f32.mrf.mxu0
  %v9880 = vadd.f32 0.0, %v9879
  %v9881 = vpop.f32.mrf.mxu0
  %9882 = vmatprep.mubr.bf16.mxu0 0
  %9883 = vmatmul.mubr.bf16.gmra.mxu0 %v9587
  %v9884 = vpop.f32.mrf.mxu0
  %v9885 = vadd.f32 0.0, %v9884
  %v9886 = vpop.f32.mrf.mxu0
  %v9887 = vpop.f32.mrf.mxu0
  %v9888 = vadd.f32 0.0, %v9887
  %v9889 = vpop.f32.mrf.mxu0
  %9890 = vmatprep.mubr.bf16.mxu0 0
  %9891 = vmatmul.mubr.bf16.gmra.mxu0 %v9590
  %v9892 = vpop.f32.mrf.mxu0
  %v9893 = vadd.f32 0.0, %v9892
  %v9894 = vpop.f32.mrf.mxu0
  %v9895 = vpop.f32.mrf.mxu0
  %v9896 = vadd.f32 0.0, %v9895
  %v9897 = vpop.f32.mrf.mxu0
  %9898 = vmatprep.mubr.bf16.mxu0 0
  %9899 = vmatmul.mubr.bf16.gmra.mxu0 %v9593
  %v9900 = vpop.f32.mrf.mxu0
  %v9901 = vadd.f32 0.0, %v9900
  %v9902 = vpop.f32.mrf.mxu0
  %v9903 = vpop.f32.mrf.mxu0
  %v9904 = vadd.f32 0.0, %v9903
  %v9905 = vpop.f32.mrf.mxu0
  %9906 = vmatprep.mubr.bf16.mxu0 0
  %9907 = vmatmul.mubr.bf16.gmra.mxu0 %v9596
  %v9908 = vpop.f32.mrf.mxu0
  %v9909 = vadd.f32 0.0, %v9908
  %v9910 = vpop.f32.mrf.mxu0
  %v9911 = vpop.f32.mrf.mxu0
  %v9912 = vadd.f32 0.0, %v9911
  %v9913 = vpop.f32.mrf.mxu0
  %9914 = vmatprep.mubr.bf16.mxu0 0
  %9915 = vmatmul.mubr.bf16.gmra.mxu0 %v9599
  %v9916 = vpop.f32.mrf.mxu0
  %v9917 = vadd.f32 0.0, %v9916
  %v9918 = vpop.f32.mrf.mxu0
  %v9919 = vpop.f32.mrf.mxu0
  %v9920 = vadd.f32 0.0, %v9919
  %v9921 = vpop.f32.mrf.mxu0
  %9922 = vmatprep.mubr.bf16.mxu0 0
  %9923 = vmatmul.mubr.bf16.gmra.mxu0 %v9602
  %v9924 = vpop.f32.mrf.mxu0
  %v9925 = vadd.f32 0.0, %v9924
  %v9926 = vpop.f32.mrf.mxu0
  %v9927 = vpop.f32.mrf.mxu0
  %v9928 = vadd.f32 0.0, %v9927
  %v9929 = vpop.f32.mrf.mxu0
  %9930 = vmatprep.mubr.bf16.mxu0 0
  %9931 = vmatmul.mubr.bf16.gmra.mxu0 %v9605
  %v9932 = vpop.f32.mrf.mxu0
  %v9933 = vadd.f32 0.0, %v9932
  %v9934 = vpop.f32.mrf.mxu0
  %v9935 = vpop.f32.mrf.mxu0
  %v9936 = vadd.f32 0.0, %v9935
  %v9937 = vpop.f32.mrf.mxu0
  %9938 = vmatprep.mubr.bf16.mxu0 0
  %9939 = vmatmul.mubr.bf16.gmra.mxu0 %v9608
  %v9940 = vpop.f32.mrf.mxu0
  %v9941 = vadd.f32 0.0, %v9940
  %v9942 = vpop.f32.mrf.mxu0
  %v9943 = vpop.f32.mrf.mxu0
  %v9944 = vadd.f32 0.0, %v9943
  %v9945 = vpop.f32.mrf.mxu0
  %9946 = vmatprep.mubr.bf16.mxu0 0
  %9947 = vmatmul.mubr.bf16.gmra.mxu0 %v9611
  %v9948 = vpop.f32.mrf.mxu0
  %v9949 = vadd.f32 0.0, %v9948
  %v9950 = vpop.f32.mrf.mxu0
  %v9951 = vpop.f32.mrf.mxu0
  %v9952 = vadd.f32 0.0, %v9951
  %v9953 = vpop.f32.mrf.mxu0
  %9954 = vmatprep.mubr.bf16.mxu0 0
  %9955 = vmatmul.mubr.bf16.gmra.mxu0 %v9614
  %v9956 = vpop.f32.mrf.mxu0
  %v9957 = vadd.f32 0.0, %v9956
  %v9958 = vpop.f32.mrf.mxu0
  %v9959 = vpop.f32.mrf.mxu0
  %v9960 = vadd.f32 0.0, %v9959
  %v9961 = vpop.f32.mrf.mxu0
  %9962 = vmatprep.mubr.bf16.mxu0 0
  %9963 = vmatmul.mubr.bf16.gmra.mxu0 %v9617
  %v9964 = vpop.f32.mrf.mxu0
  %v9965 = vadd.f32 0.0, %v9964
  %v9966 = vpop.f32.mrf.mxu0
  %v9967 = vpop.f32.mrf.mxu0
  %v9968 = vadd.f32 0.0, %v9967
  %v9969 = vpop.f32.mrf.mxu0
  %9970 = vmatprep.mubr.bf16.mxu0 0
  %9971 = vmatmul.mubr.bf16.gmra.mxu0 %v9620
  %v9972 = vpop.f32.mrf.mxu0
  %v9973 = vadd.f32 0.0, %v9972
  %v9974 = vpop.f32.mrf.mxu0
  %v9975 = vpop.f32.mrf.mxu0
  %v9976 = vadd.f32 0.0, %v9975
  %v9977 = vpop.f32.mrf.mxu0
  %9978 = vmatprep.mubr.bf16.mxu0 0
  %9979 = vmatmul.mubr.bf16.gmra.mxu0 %v9623
  %v9980 = vpop.f32.mrf.mxu0
  %v9981 = vadd.f32 0.0, %v9980
  %v9982 = vpop.f32.mrf.mxu0
  %v9983 = vpop.f32.mrf.mxu0
  %v9984 = vadd.f32 0.0, %v9983
  %v9985 = vpop.f32.mrf.mxu0
  %9986 = vmatprep.mubr.bf16.mxu0 0
  %9987 = vmatmul.mubr.bf16.gmra.mxu0 %v9626
  %v9988 = vpop.f32.mrf.mxu0
  %v9989 = vadd.f32 0.0, %v9988
  %v9990 = vpop.f32.mrf.mxu0
  %v9991 = vpop.f32.mrf.mxu0
  %v9992 = vadd.f32 0.0, %v9991
  %v9993 = vpop.f32.mrf.mxu0
  %9994 = vmatprep.mubr.bf16.mxu0 0
  %9995 = vmatmul.mubr.bf16.gmra.mxu0 %v9629
  %v9996 = vpop.f32.mrf.mxu0
  %v9997 = vadd.f32 0.0, %v9996
  %v9998 = vpop.f32.mrf.mxu0
  %v9999 = vpop.f32.mrf.mxu0
  %v10000 = vadd.f32 0.0, %v9999
  %v10001 = vpop.f32.mrf.mxu0
  %10002 = vdwg.mxu0
  %v10003 = vadd.f32 %v8734, %v9669
  %v10004 = vadd.f32 %v8735, %v9672
  %v10005 = vadd.f32 %v8736, %v9677
  %v10006 = vadd.f32 %v8737, %v9680
  %v10007 = vadd.f32 %v8738, %v9685
  %v10008 = vadd.f32 %v8739, %v9688
  %v10009 = vadd.f32 %v8740, %v9693
  %v10010 = vadd.f32 %v8741, %v9696
  %v10011 = vadd.f32 %v8742, %v9701
  %v10012 = vadd.f32 %v8743, %v9704
  %v10013 = vadd.f32 %v8744, %v9709
  %v10014 = vadd.f32 %v8745, %v9712
  %v10015 = vadd.f32 %v8746, %v9717
  %v10016 = vadd.f32 %v8747, %v9720
  %v10017 = vadd.f32 %v8748, %v9725
  %v10018 = vadd.f32 %v8749, %v9728
  %v10019 = vadd.f32 %v8750, %v9733
  %v10020 = vadd.f32 %v8751, %v9736
  %v10021 = vadd.f32 %v8752, %v9741
  %v10022 = vadd.f32 %v8753, %v9744
  %v10023 = vadd.f32 %v8754, %v9749
  %v10024 = vadd.f32 %v8755, %v9752
  %v10025 = vadd.f32 %v8756, %v9757
  %v10026 = vadd.f32 %v8757, %v9760
  %v10027 = vadd.f32 %v8758, %v9765
  %v10028 = vadd.f32 %v8759, %v9768
  %v10029 = vadd.f32 %v8760, %v9773
  %v10030 = vadd.f32 %v8761, %v9776
  %v10031 = vadd.f32 %v8762, %v9781
  %v10032 = vadd.f32 %v8763, %v9784
  %v10033 = vadd.f32 %v8764, %v9789
  %v10034 = vadd.f32 %v8765, %v9792
  %v10035 = vadd.f32 %v8766, %v9797
  %v10036 = vadd.f32 %v8767, %v9800
  %v10037 = vadd.f32 %v8768, %v9805
  %v10038 = vadd.f32 %v8769, %v9808
  %v10039 = vadd.f32 %v8770, %v9813
  %v10040 = vadd.f32 %v8771, %v9816
  %v10041 = vadd.f32 %v8772, %v9821
  %v10042 = vadd.f32 %v8773, %v9824
  %v10043 = vadd.f32 %v8774, %v9829
  %v10044 = vadd.f32 %v8775, %v9832
  %v10045 = vadd.f32 %v8776, %v9837
  %v10046 = vadd.f32 %v8777, %v9840
  %v10047 = vadd.f32 %v8778, %v9845
  %v10048 = vadd.f32 %v8779, %v9848
  %v10049 = vadd.f32 %v8780, %v9853
  %v10050 = vadd.f32 %v8781, %v9856
  %v10051 = vadd.f32 %v8782, %v9861
  %v10052 = vadd.f32 %v8783, %v9864
  %v10053 = vadd.f32 %v8784, %v9869
  %v10054 = vadd.f32 %v8785, %v9872
  %v10055 = vadd.f32 %v8786, %v9877
  %v10056 = vadd.f32 %v8787, %v9880
  %v10057 = vadd.f32 %v8788, %v9885
  %v10058 = vadd.f32 %v8789, %v9888
  %v10059 = vadd.f32 %v8790, %v9893
  %v10060 = vadd.f32 %v8791, %v9896
  %v10061 = vadd.f32 %v8792, %v9901
  %v10062 = vadd.f32 %v8793, %v9904
  %v10063 = vadd.f32 %v8794, %v9909
  %v10064 = vadd.f32 %v8795, %v9912
  %v10065 = vadd.f32 %v8796, %v9917
  %v10066 = vadd.f32 %v8797, %v9920
  %v10067 = vadd.f32 %v8798, %v9925
  %v10068 = vadd.f32 %v8799, %v9928
  %v10069 = vadd.f32 %v8800, %v9933
  %v10070 = vadd.f32 %v8801, %v9936
  %v10071 = vadd.f32 %v8802, %v9941
  %v10072 = vadd.f32 %v8803, %v9944
  %v10073 = vadd.f32 %v8804, %v9949
  %v10074 = vadd.f32 %v8805, %v9952
  %v10075 = vadd.f32 %v8806, %v9957
  %v10076 = vadd.f32 %v8807, %v9960
  %v10077 = vadd.f32 %v8808, %v9965
  %v10078 = vadd.f32 %v8809, %v9968
  %v10079 = vadd.f32 %v8810, %v9973
  %v10080 = vadd.f32 %v8811, %v9976
  %v10081 = vadd.f32 %v8812, %v9981
  %v10082 = vadd.f32 %v8813, %v9984
  %v10083 = vadd.f32 %v8814, %v9989
  %v10084 = vadd.f32 %v8815, %v9992
  %v10085 = vadd.f32 %v8816, %v9997
  %v10086 = vadd.f32 %v8817, %v10000
  %10087 = vst [vmem:[%s4] sm:$0xff] %v10003
  %10088 = vst [vmem:[%s4 + $0x8] sm:$0xff] %v10004
  %10089 = vst [vmem:[%s4 + $0x10] sm:$0xff] %v10005
  %10090 = vst [vmem:[%s4 + $0x18] sm:$0xff] %v10006
  %10091 = vst [vmem:[%s4 + $0x20] sm:$0xff] %v10007
  %10092 = vst [vmem:[%s4 + $0x28] sm:$0xff] %v10008
  %10093 = vst [vmem:[%s4 + $0x30] sm:$0xff] %v10009
  %10094 = vst [vmem:[%s4 + $0x38] sm:$0xff] %v10010
  %10095 = vst [vmem:[%s4 + $0x40] sm:$0xff] %v10011
  %10096 = vst [vmem:[%s4 + $0x48] sm:$0xff] %v10012
  %10097 = vst [vmem:[%s4 + $0x50] sm:$0xff] %v10013
  %10098 = vst [vmem:[%s4 + $0x58] sm:$0xff] %v10014
  %10099 = vst [vmem:[%s4 + $0x60] sm:$0xff] %v10015
  %10100 = vst [vmem:[%s4 + $0x68] sm:$0xff] %v10016
  %10101 = vst [vmem:[%s4 + $0x70] sm:$0xff] %v10017
  %10102 = vst [vmem:[%s4 + $0x78] sm:$0xff] %v10018
  %10103 = vst [vmem:[%s4 + $0x80] sm:$0xff] %v10019
  %10104 = vst [vmem:[%s4 + $0x88] sm:$0xff] %v10020
  %10105 = vst [vmem:[%s4 + $0x90] sm:$0xff] %v10021
  %10106 = vst [vmem:[%s4 + $0x98] sm:$0xff] %v10022
  %10107 = vst [vmem:[%s4 + $0xa0] sm:$0xff] %v10023
  %10108 = vst [vmem:[%s4 + $0xa8] sm:$0xff] %v10024
  %10109 = vst [vmem:[%s4 + $0xb0] sm:$0xff] %v10025
  %10110 = vst [vmem:[%s4 + $0xb8] sm:$0xff] %v10026
  %10111 = vst [vmem:[%s4 + $0xc0] sm:$0xff] %v10027
  %10112 = vst [vmem:[%s4 + $0xc8] sm:$0xff] %v10028
  %10113 = vst [vmem:[%s4 + $0xd0] sm:$0xff] %v10029
  %10114 = vst [vmem:[%s4 + $0xd8] sm:$0xff] %v10030
  %10115 = vst [vmem:[%s4 + $0xe0] sm:$0xff] %v10031
  %10116 = vst [vmem:[%s4 + $0xe8] sm:$0xff] %v10032
  %10117 = vst [vmem:[%s4 + $0xf0] sm:$0xff] %v10033
  %10118 = vst [vmem:[%s4 + $0xf8] sm:$0xff] %v10034
  %10119 = vst [vmem:[%s4 + $0x100] sm:$0xff] %v10035
  %10120 = vst [vmem:[%s4 + $0x108] sm:$0xff] %v10036
  %10121 = vst [vmem:[%s4 + $0x110] sm:$0xff] %v10037
  %10122 = vst [vmem:[%s4 + $0x118] sm:$0xff] %v10038
  %10123 = vst [vmem:[%s4 + $0x120] sm:$0xff] %v10039
  %10124 = vst [vmem:[%s4 + $0x128] sm:$0xff] %v10040
  %10125 = vst [vmem:[%s4 + $0x130] sm:$0xff] %v10041
  %10126 = vst [vmem:[%s4 + $0x138] sm:$0xff] %v10042
  %10127 = vst [vmem:[%s4 + $0x140] sm:$0xff] %v10043
  %10128 = vst [vmem:[%s4 + $0x148] sm:$0xff] %v10044
  %10129 = vst [vmem:[%s4 + $0x150] sm:$0xff] %v10045
  %10130 = vst [vmem:[%s4 + $0x158] sm:$0xff] %v10046
  %10131 = vst [vmem:[%s4 + $0x160] sm:$0xff] %v10047
  %10132 = vst [vmem:[%s4 + $0x168] sm:$0xff] %v10048
  %10133 = vst [vmem:[%s4 + $0x170] sm:$0xff] %v10049
  %10134 = vst [vmem:[%s4 + $0x178] sm:$0xff] %v10050
  %10135 = vst [vmem:[%s4 + $0x180] sm:$0xff] %v10051
  %10136 = vst [vmem:[%s4 + $0x188] sm:$0xff] %v10052
  %10137 = vst [vmem:[%s4 + $0x190] sm:$0xff] %v10053
  %10138 = vst [vmem:[%s4 + $0x198] sm:$0xff] %v10054
  %10139 = vst [vmem:[%s4 + $0x1a0] sm:$0xff] %v10055
  %10140 = vst [vmem:[%s4 + $0x1a8] sm:$0xff] %v10056
  %10141 = vst [vmem:[%s4 + $0x1b0] sm:$0xff] %v10057
  %10142 = vst [vmem:[%s4 + $0x1b8] sm:$0xff] %v10058
  %10143 = vst [vmem:[%s4 + $0x1c0] sm:$0xff] %v10059
  %10144 = vst [vmem:[%s4 + $0x1c8] sm:$0xff] %v10060
  %10145 = vst [vmem:[%s4 + $0x1d0] sm:$0xff] %v10061
  %10146 = vst [vmem:[%s4 + $0x1d8] sm:$0xff] %v10062
  %10147 = vst [vmem:[%s4 + $0x1e0] sm:$0xff] %v10063
  %10148 = vst [vmem:[%s4 + $0x1e8] sm:$0xff] %v10064
  %10149 = vst [vmem:[%s4 + $0x1f0] sm:$0xff] %v10065
  %10150 = vst [vmem:[%s4 + $0x1f8] sm:$0xff] %v10066
  %10151 = vst [vmem:[%s4 + $0x200] sm:$0xff] %v10067
  %10152 = vst [vmem:[%s4 + $0x208] sm:$0xff] %v10068
  %10153 = vst [vmem:[%s4 + $0x210] sm:$0xff] %v10069
  %10154 = vst [vmem:[%s4 + $0x218] sm:$0xff] %v10070
  %10155 = vst [vmem:[%s4 + $0x220] sm:$0xff] %v10071
  %10156 = vst [vmem:[%s4 + $0x228] sm:$0xff] %v10072
  %10157 = vst [vmem:[%s4 + $0x230] sm:$0xff] %v10073
  %10158 = vst [vmem:[%s4 + $0x238] sm:$0xff] %v10074
  %10159 = vst [vmem:[%s4 + $0x240] sm:$0xff] %v10075
  %10160 = vst [vmem:[%s4 + $0x248] sm:$0xff] %v10076
  %10161 = vst [vmem:[%s4 + $0x250] sm:$0xff] %v10077
  %10162 = vst [vmem:[%s4 + $0x258] sm:$0xff] %v10078
  %10163 = vst [vmem:[%s4 + $0x260] sm:$0xff] %v10079
  %10164 = vst [vmem:[%s4 + $0x268] sm:$0xff] %v10080
  %10165 = vst [vmem:[%s4 + $0x270] sm:$0xff] %v10081
  %10166 = vst [vmem:[%s4 + $0x278] sm:$0xff] %v10082
  %10167 = vst [vmem:[%s4 + $0x280] sm:$0xff] %v10083
  %10168 = vst [vmem:[%s4 + $0x288] sm:$0xff] %v10084
  %10169 = vst [vmem:[%s4 + $0x290] sm:$0xff] %v10085
  %10170 = vst [vmem:[%s4 + $0x298] sm:$0xff] %v10086
  %v10171 = vld [vmem:[%s4] sm:$0xff]
  %v10172 = vld [vmem:[%s4 + $0x8] sm:$0xff]
  %v10173 = vld [vmem:[%s4 + $0x10] sm:$0xff]
  %v10174 = vld [vmem:[%s4 + $0x18] sm:$0xff]
  %v10175 = vld [vmem:[%s4 + $0x20] sm:$0xff]
  %v10176 = vld [vmem:[%s4 + $0x28] sm:$0xff]
  %v10177 = vld [vmem:[%s4 + $0x30] sm:$0xff]
  %v10178 = vld [vmem:[%s4 + $0x38] sm:$0xff]
  %v10179 = vld [vmem:[%s4 + $0x40] sm:$0xff]
  %v10180 = vld [vmem:[%s4 + $0x48] sm:$0xff]
  %v10181 = vld [vmem:[%s4 + $0x50] sm:$0xff]
  %v10182 = vld [vmem:[%s4 + $0x58] sm:$0xff]
  %v10183 = vld [vmem:[%s4 + $0x60] sm:$0xff]
  %v10184 = vld [vmem:[%s4 + $0x68] sm:$0xff]
  %v10185 = vld [vmem:[%s4 + $0x70] sm:$0xff]
  %v10186 = vld [vmem:[%s4 + $0x78] sm:$0xff]
  %v10187 = vld [vmem:[%s4 + $0x80] sm:$0xff]
  %v10188 = vld [vmem:[%s4 + $0x88] sm:$0xff]
  %v10189 = vld [vmem:[%s4 + $0x90] sm:$0xff]
  %v10190 = vld [vmem:[%s4 + $0x98] sm:$0xff]
  %v10191 = vld [vmem:[%s4 + $0xa0] sm:$0xff]
  %v10192 = vld [vmem:[%s4 + $0xa8] sm:$0xff]
  %v10193 = vld [vmem:[%s4 + $0xb0] sm:$0xff]
  %v10194 = vld [vmem:[%s4 + $0xb8] sm:$0xff]
  %v10195 = vld [vmem:[%s4 + $0xc0] sm:$0xff]
  %v10196 = vld [vmem:[%s4 + $0xc8] sm:$0xff]
  %v10197 = vld [vmem:[%s4 + $0xd0] sm:$0xff]
  %v10198 = vld [vmem:[%s4 + $0xd8] sm:$0xff]
  %v10199 = vld [vmem:[%s4 + $0xe0] sm:$0xff]
  %v10200 = vld [vmem:[%s4 + $0xe8] sm:$0xff]
  %v10201 = vld [vmem:[%s4 + $0xf0] sm:$0xff]
  %v10202 = vld [vmem:[%s4 + $0xf8] sm:$0xff]
  %v10203 = vld [vmem:[%s4 + $0x100] sm:$0xff]
  %v10204 = vld [vmem:[%s4 + $0x108] sm:$0xff]
  %v10205 = vld [vmem:[%s4 + $0x110] sm:$0xff]
  %v10206 = vld [vmem:[%s4 + $0x118] sm:$0xff]
  %v10207 = vld [vmem:[%s4 + $0x120] sm:$0xff]
  %v10208 = vld [vmem:[%s4 + $0x128] sm:$0xff]
  %v10209 = vld [vmem:[%s4 + $0x130] sm:$0xff]
  %v10210 = vld [vmem:[%s4 + $0x138] sm:$0xff]
  %v10211 = vld [vmem:[%s4 + $0x140] sm:$0xff]
  %v10212 = vld [vmem:[%s4 + $0x148] sm:$0xff]
  %v10213 = vld [vmem:[%s4 + $0x150] sm:$0xff]
  %v10214 = vld [vmem:[%s4 + $0x158] sm:$0xff]
  %v10215 = vld [vmem:[%s4 + $0x160] sm:$0xff]
  %v10216 = vld [vmem:[%s4 + $0x168] sm:$0xff]
  %v10217 = vld [vmem:[%s4 + $0x170] sm:$0xff]
  %v10218 = vld [vmem:[%s4 + $0x178] sm:$0xff]
  %v10219 = vld [vmem:[%s4 + $0x180] sm:$0xff]
  %v10220 = vld [vmem:[%s4 + $0x188] sm:$0xff]
  %v10221 = vld [vmem:[%s4 + $0x190] sm:$0xff]
  %v10222 = vld [vmem:[%s4 + $0x198] sm:$0xff]
  %v10223 = vld [vmem:[%s4 + $0x1a0] sm:$0xff]
  %v10224 = vld [vmem:[%s4 + $0x1a8] sm:$0xff]
  %v10225 = vld [vmem:[%s4 + $0x1b0] sm:$0xff]
  %v10226 = vld [vmem:[%s4 + $0x1b8] sm:$0xff]
  %v10227 = vld [vmem:[%s4 + $0x1c0] sm:$0xff]
  %v10228 = vld [vmem:[%s4 + $0x1c8] sm:$0xff]
  %v10229 = vld [vmem:[%s4 + $0x1d0] sm:$0xff]
  %v10230 = vld [vmem:[%s4 + $0x1d8] sm:$0xff]
  %v10231 = vld [vmem:[%s4 + $0x1e0] sm:$0xff]
  %v10232 = vld [vmem:[%s4 + $0x1e8] sm:$0xff]
  %v10233 = vld [vmem:[%s4 + $0x1f0] sm:$0xff]
  %v10234 = vld [vmem:[%s4 + $0x1f8] sm:$0xff]
  %v10235 = vld [vmem:[%s4 + $0x200] sm:$0xff]
  %v10236 = vld [vmem:[%s4 + $0x208] sm:$0xff]
  %v10237 = vld [vmem:[%s4 + $0x210] sm:$0xff]
  %v10238 = vld [vmem:[%s4 + $0x218] sm:$0xff]
  %v10239 = vld [vmem:[%s4 + $0x220] sm:$0xff]
  %v10240 = vld [vmem:[%s4 + $0x228] sm:$0xff]
  %v10241 = vld [vmem:[%s4 + $0x230] sm:$0xff]
  %v10242 = vld [vmem:[%s4 + $0x238] sm:$0xff]
  %v10243 = vld [vmem:[%s4 + $0x240] sm:$0xff]
  %v10244 = vld [vmem:[%s4 + $0x248] sm:$0xff]
  %v10245 = vld [vmem:[%s4 + $0x250] sm:$0xff]
  %v10246 = vld [vmem:[%s4 + $0x258] sm:$0xff]
  %v10247 = vld [vmem:[%s4 + $0x260] sm:$0xff]
  %v10248 = vld [vmem:[%s4 + $0x268] sm:$0xff]
  %v10249 = vld [vmem:[%s4 + $0x270] sm:$0xff]
  %v10250 = vld [vmem:[%s4 + $0x278] sm:$0xff]
  %v10251 = vld [vmem:[%s4 + $0x280] sm:$0xff]
  %v10252 = vld [vmem:[%s4 + $0x288] sm:$0xff]
  %v10253 = vld [vmem:[%s4 + $0x290] sm:$0xff]
  %v10254 = vld [vmem:[%s4 + $0x298] sm:$0xff]
  %v10255 = vld [vmem:[#allocation2 + $0x10] sm:$0x8]
  %v10256 = vld [vmem:[#allocation2 + $0x14] sm:$0xf]
  %v10257 = vld [vmem:[#allocation2 + $0x18] sm:$0xf]
  %v10258 = vld [vmem:[#allocation2 + $0x1c] sm:$0xf]
  %v10259 = vld [vmem:[#allocation2 + $0x20] sm:$0xf]
  %v10260 = vld [vmem:[#allocation2 + $0x24] sm:$0xf]
  %v10261 = vld [vmem:[#allocation2 + $0x28] sm:$0xf]
  %v10262 = vld [vmem:[#allocation2 + $0x2c] sm:$0xf]
  %v10263 = vld [vmem:[#allocation2 + $0x30] sm:$0xf]
  %v10264 = vld [vmem:[#allocation2 + $0x34] sm:$0xf]
  %v10265 = vld [vmem:[#allocation2 + $0x38] sm:$0xf]
  %v10266 = vld [vmem:[#allocation2 + $0x3c] sm:$0xf]
  %v10267 = vld [vmem:[#allocation2 + $0x40] sm:$0xf]
  %v10268 = vld [vmem:[#allocation2 + $0x44] sm:$0xf]
  %v10269 = vld [vmem:[#allocation2 + $0x48] sm:$0xf]
  %v10270 = vld [vmem:[#allocation2 + $0x4c] sm:$0xf]
  %v10271 = vld [vmem:[#allocation2 + $0x50] sm:$0xf]
  %v10272 = vld [vmem:[#allocation2 + $0x54] sm:$0xf]
  %v10273 = vld [vmem:[#allocation2 + $0x58] sm:$0xf]
  %v10274 = vld [vmem:[#allocation2 + $0x5c] sm:$0xf]
  %v10275 = vld [vmem:[#allocation2 + $0x60] sm:$0xf]
  %v10276 = vld [vmem:[#allocation2 + $0x64] sm:$0xf]
  %v10277 = vld [vmem:[#allocation2 + $0x68] sm:$0xf]
  %v10278 = vld [vmem:[#allocation2 + $0x6c] sm:$0xf]
  %v10279 = vld [vmem:[#allocation2 + $0x70] sm:$0xf]
  %v10280 = vld [vmem:[#allocation2 + $0x74] sm:$0xf]
  %v10281 = vld [vmem:[#allocation2 + $0x78] sm:$0xf]
  %v10282 = vld [vmem:[#allocation2 + $0x7c] sm:$0xf]
  %v10283 = vld [vmem:[#allocation2 + $0x80] sm:$0xf]
  %v10284 = vld [vmem:[#allocation2 + $0x84] sm:$0xf]
  %v10285 = vld [vmem:[#allocation2 + $0x88] sm:$0xf]
  %v10286 = vld [vmem:[#allocation2 + $0x8c] sm:$0xf]
  %v10287 = vld [vmem:[#allocation2 + $0x90] sm:$0xf]
  %v10288 = vld [vmem:[#allocation2 + $0x94] sm:$0xf]
  %v10289 = vld [vmem:[#allocation2 + $0x98] sm:$0xf]
  %v10290 = vld [vmem:[#allocation2 + $0x9c] sm:$0xf]
  %v10291 = vld [vmem:[#allocation2 + $0xa0] sm:$0xf]
  %v10292 = vld [vmem:[#allocation2 + $0xa4] sm:$0xf]
  %v10293 = vld [vmem:[#allocation2 + $0xa8] sm:$0xf]
  %v10294 = vld [vmem:[#allocation2 + $0xac] sm:$0xf]
  %v10295 = vld [vmem:[#allocation2 + $0xb0] sm:$0xf]
  %v10296 = vld [vmem:[#allocation2 + $0xb4] sm:$0xf]
  %v10297 = vld [vmem:[#allocation2 + $0xb8] sm:$0xf]
  %v10298 = vld [vmem:[#allocation2 + $0xbc] sm:$0xf]
  %v10299 = vld [vmem:[#allocation2 + $0xc0] sm:$0xf]
  %v10300 = vld [vmem:[#allocation2 + $0xc4] sm:$0xf]
  %v10301 = vld [vmem:[#allocation2 + $0xc8] sm:$0xf]
  %v10302 = vld [vmem:[#allocation2 + $0xcc] sm:$0xf]
  %v10303 = vld [vmem:[#allocation2 + $0xd0] sm:$0xf]
  %v10304 = vld [vmem:[#allocation2 + $0xd4] sm:$0xf]
  %v10305 = vld [vmem:[#allocation2 + $0xd8] sm:$0xf]
  %v10306 = vld [vmem:[#allocation2 + $0xdc] sm:$0xf]
  %v10307 = vld [vmem:[#allocation2 + $0xe0] sm:$0xf]
  %v10308 = vld [vmem:[#allocation2 + $0xe4] sm:$0xf]
  %v10309 = vld [vmem:[#allocation2 + $0xe8] sm:$0xf]
  %v10310 = vld [vmem:[#allocation2 + $0xec] sm:$0xf]
  %v10311 = vld [vmem:[#allocation2 + $0xf0] sm:$0xf]
  %v10312 = vld [vmem:[#allocation2 + $0xf4] sm:$0xf]
  %v10313 = vld [vmem:[#allocation2 + $0xf8] sm:$0xf]
  %v10314 = vld [vmem:[#allocation2 + $0xfc] sm:$0xf]
  %v10315 = vld [vmem:[#allocation2 + $0x100] sm:$0xf]
  %v10316 = vld [vmem:[#allocation2 + $0x104] sm:$0xf]
  %v10317 = vld [vmem:[#allocation2 + $0x108] sm:$0xf]
  %v10318 = vld [vmem:[#allocation2 + $0x10c] sm:$0xf]
  %v10319 = vld [vmem:[#allocation2 + $0x110] sm:$0xf]
  %v10320 = vld [vmem:[#allocation2 + $0x114] sm:$0xf]
  %v10321 = vld [vmem:[#allocation2 + $0x118] sm:$0xf]
  %v10322 = vld [vmem:[#allocation2 + $0x11c] sm:$0xf]
  %v10323 = vld [vmem:[#allocation2 + $0x120] sm:$0xf]
  %v10324 = vld [vmem:[#allocation2 + $0x124] sm:$0xf]
  %v10325 = vld [vmem:[#allocation2 + $0x128] sm:$0xf]
  %v10326 = vld [vmem:[#allocation2 + $0x12c] sm:$0xf]
  %v10327 = vld [vmem:[#allocation2 + $0x130] sm:$0xf]
  %v10328 = vld [vmem:[#allocation2 + $0x134] sm:$0xf]
  %v10329 = vld [vmem:[#allocation2 + $0x138] sm:$0xf]
  %v10330 = vld [vmem:[#allocation2 + $0x13c] sm:$0xf]
  %v10331 = vld [vmem:[#allocation2 + $0x140] sm:$0xf]
  %v10332 = vld [vmem:[#allocation2 + $0x144] sm:$0xf]
  %v10333 = vld [vmem:[#allocation2 + $0x148] sm:$0xf]
  %v10334 = vld [vmem:[#allocation2 + $0x14c] sm:$0xf]
  %v10335 = vld [vmem:[#allocation2 + $0x150] sm:$0xf]
  %v10336 = vld [vmem:[#allocation2 + $0x154] sm:$0xf]
  %v10337 = vld [vmem:[#allocation2 + $0x158] sm:$0xf]
  %v10338 = vld [vmem:[#allocation2 + $0x15c] sm:$0xf]
  %v10339 = vld [vmem:[#allocation2 + $0x160] sm:$0x7]
  %s10340 = scalar_lea.vmem %s2, 32
  %v10341 = vld [vmem:[%s10340] sm:$0xf]
  %v10427 = vunpack.c.l.b16 %v10255
  %v10428 = vunpack.c.l.b16 %v10256
  %v10429 = vunpack.c.l.b16 %v10257
  %v10430 = vunpack.c.l.b16 %v10258
  %v10431 = vunpack.c.l.b16 %v10259
  %v10432 = vunpack.c.l.b16 %v10260
  %v10433 = vunpack.c.l.b16 %v10261
  %v10434 = vunpack.c.l.b16 %v10262
  %v10435 = vunpack.c.l.b16 %v10263
  %v10436 = vunpack.c.l.b16 %v10264
  %v10437 = vunpack.c.l.b16 %v10265
  %v10438 = vunpack.c.l.b16 %v10266
  %v10439 = vunpack.c.l.b16 %v10267
  %v10440 = vunpack.c.l.b16 %v10268
  %v10441 = vunpack.c.l.b16 %v10269
  %v10442 = vunpack.c.l.b16 %v10270
  %v10443 = vunpack.c.l.b16 %v10271
  %v10444 = vunpack.c.l.b16 %v10272
  %v10445 = vunpack.c.l.b16 %v10273
  %v10446 = vunpack.c.l.b16 %v10274
  %v10447 = vunpack.c.l.b16 %v10275
  %v10448 = vunpack.c.l.b16 %v10276
  %v10449 = vunpack.c.l.b16 %v10277
  %v10450 = vunpack.c.l.b16 %v10278
  %v10451 = vunpack.c.l.b16 %v10279
  %v10452 = vunpack.c.l.b16 %v10280
  %v10453 = vunpack.c.l.b16 %v10281
  %v10454 = vunpack.c.l.b16 %v10282
  %v10455 = vunpack.c.l.b16 %v10283
  %v10456 = vunpack.c.l.b16 %v10284
  %v10457 = vunpack.c.l.b16 %v10285
  %v10458 = vunpack.c.l.b16 %v10286
  %v10459 = vunpack.c.l.b16 %v10287
  %v10460 = vunpack.c.l.b16 %v10288
  %v10461 = vunpack.c.l.b16 %v10289
  %v10462 = vunpack.c.l.b16 %v10290
  %v10463 = vunpack.c.l.b16 %v10291
  %v10464 = vunpack.c.l.b16 %v10292
  %v10465 = vunpack.c.l.b16 %v10293
  %v10466 = vunpack.c.l.b16 %v10294
  %v10467 = vunpack.c.l.b16 %v10295
  %v10468 = vunpack.c.l.b16 %v10296
  %v10469 = vunpack.c.l.b16 %v10297
  %v10470 = vunpack.c.l.b16 %v10298
  %v10471 = vunpack.c.l.b16 %v10299
  %v10472 = vunpack.c.l.b16 %v10300
  %v10473 = vunpack.c.l.b16 %v10301
  %v10474 = vunpack.c.l.b16 %v10302
  %v10475 = vunpack.c.l.b16 %v10303
  %v10476 = vunpack.c.l.b16 %v10304
  %v10477 = vunpack.c.l.b16 %v10305
  %v10478 = vunpack.c.l.b16 %v10306
  %v10479 = vunpack.c.l.b16 %v10307
  %v10480 = vunpack.c.l.b16 %v10308
  %v10481 = vunpack.c.l.b16 %v10309
  %v10482 = vunpack.c.l.b16 %v10310
  %v10483 = vunpack.c.l.b16 %v10311
  %v10484 = vunpack.c.l.b16 %v10312
  %v10485 = vunpack.c.l.b16 %v10313
  %v10486 = vunpack.c.l.b16 %v10314
  %v10487 = vunpack.c.l.b16 %v10315
  %v10488 = vunpack.c.l.b16 %v10316
  %v10489 = vunpack.c.l.b16 %v10317
  %v10490 = vunpack.c.l.b16 %v10318
  %v10491 = vunpack.c.l.b16 %v10319
  %v10492 = vunpack.c.l.b16 %v10320
  %v10493 = vunpack.c.l.b16 %v10321
  %v10494 = vunpack.c.l.b16 %v10322
  %v10495 = vunpack.c.l.b16 %v10323
  %v10496 = vunpack.c.l.b16 %v10324
  %v10497 = vunpack.c.l.b16 %v10325
  %v10498 = vunpack.c.l.b16 %v10326
  %v10499 = vunpack.c.l.b16 %v10327
  %v10500 = vunpack.c.l.b16 %v10328
  %v10501 = vunpack.c.l.b16 %v10329
  %v10502 = vunpack.c.l.b16 %v10330
  %v10503 = vunpack.c.l.b16 %v10331
  %v10504 = vunpack.c.l.b16 %v10332
  %v10505 = vunpack.c.l.b16 %v10333
  %v10506 = vunpack.c.l.b16 %v10334
  %v10507 = vunpack.c.l.b16 %v10335
  %v10508 = vunpack.c.l.b16 %v10336
  %v10509 = vunpack.c.l.b16 %v10337
  %v10510 = vunpack.c.l.b16 %v10338
  %v10511 = vunpack.c.l.b16 %v10339
  %v10512 = vpack.c.b16 %v10428, %v10427
  %v10513 = vpack.c.b16 %v10430, %v10429
  %v10514 = vpack.c.b16 %v10432, %v10431
  %v10515 = vpack.c.b16 %v10434, %v10433
  %v10516 = vpack.c.b16 %v10436, %v10435
  %v10517 = vpack.c.b16 %v10438, %v10437
  %v10518 = vpack.c.b16 %v10440, %v10439
  %v10519 = vpack.c.b16 %v10442, %v10441
  %v10520 = vpack.c.b16 %v10444, %v10443
  %v10521 = vpack.c.b16 %v10446, %v10445
  %v10522 = vpack.c.b16 %v10448, %v10447
  %v10523 = vpack.c.b16 %v10450, %v10449
  %v10524 = vpack.c.b16 %v10452, %v10451
  %v10525 = vpack.c.b16 %v10454, %v10453
  %v10526 = vpack.c.b16 %v10456, %v10455
  %v10527 = vpack.c.b16 %v10458, %v10457
  %v10528 = vpack.c.b16 %v10460, %v10459
  %v10529 = vpack.c.b16 %v10462, %v10461
  %v10530 = vpack.c.b16 %v10464, %v10463
  %v10531 = vpack.c.b16 %v10466, %v10465
  %v10532 = vpack.c.b16 %v10468, %v10467
  %v10533 = vpack.c.b16 %v10470, %v10469
  %v10534 = vpack.c.b16 %v10472, %v10471
  %v10535 = vpack.c.b16 %v10474, %v10473
  %v10536 = vpack.c.b16 %v10476, %v10475
  %v10537 = vpack.c.b16 %v10478, %v10477
  %v10538 = vpack.c.b16 %v10480, %v10479
  %v10539 = vpack.c.b16 %v10482, %v10481
  %v10540 = vpack.c.b16 %v10484, %v10483
  %v10541 = vpack.c.b16 %v10486, %v10485
  %v10542 = vpack.c.b16 %v10488, %v10487
  %v10543 = vpack.c.b16 %v10490, %v10489
  %v10544 = vpack.c.b16 %v10492, %v10491
  %v10545 = vpack.c.b16 %v10494, %v10493
  %v10546 = vpack.c.b16 %v10496, %v10495
  %v10547 = vpack.c.b16 %v10498, %v10497
  %v10548 = vpack.c.b16 %v10500, %v10499
  %v10549 = vpack.c.b16 %v10502, %v10501
  %v10550 = vpack.c.b16 %v10504, %v10503
  %v10551 = vpack.c.b16 %v10506, %v10505
  %v10552 = vpack.c.b16 %v10508, %v10507
  %v10553 = vpack.c.b16 %v10510, %v10509
  %v10554 = vpack.c.b16 %v10511, %v10511
  %vm10555 = vcmask 1044480
  %v10556 = vrot.slane %v10512, 3
  %v10557 = vrot.slane %v10513, 3
  %v10558 = vsel %vm10555, %v10556, %v10557
  %v10559 = vrot.slane %v10514, 3
  %v10560 = vsel %vm10555, %v10557, %v10559
  %v10561 = vrot.slane %v10515, 3
  %v10562 = vsel %vm10555, %v10559, %v10561
  %v10563 = vrot.slane %v10516, 3
  %v10564 = vsel %vm10555, %v10561, %v10563
  %v10565 = vrot.slane %v10517, 3
  %v10566 = vsel %vm10555, %v10563, %v10565
  %v10567 = vrot.slane %v10518, 3
  %v10568 = vsel %vm10555, %v10565, %v10567
  %v10569 = vrot.slane %v10519, 3
  %v10570 = vsel %vm10555, %v10567, %v10569
  %v10571 = vrot.slane %v10520, 3
  %v10572 = vsel %vm10555, %v10569, %v10571
  %v10573 = vrot.slane %v10521, 3
  %v10574 = vsel %vm10555, %v10571, %v10573
  %v10575 = vrot.slane %v10522, 3
  %v10576 = vsel %vm10555, %v10573, %v10575
  %v10577 = vrot.slane %v10523, 3
  %v10578 = vsel %vm10555, %v10575, %v10577
  %v10579 = vrot.slane %v10524, 3
  %v10580 = vsel %vm10555, %v10577, %v10579
  %v10581 = vrot.slane %v10525, 3
  %v10582 = vsel %vm10555, %v10579, %v10581
  %v10583 = vrot.slane %v10526, 3
  %v10584 = vsel %vm10555, %v10581, %v10583
  %v10585 = vrot.slane %v10527, 3
  %v10586 = vsel %vm10555, %v10583, %v10585
  %v10587 = vrot.slane %v10528, 3
  %v10588 = vsel %vm10555, %v10585, %v10587
  %v10589 = vrot.slane %v10529, 3
  %v10590 = vsel %vm10555, %v10587, %v10589
  %v10591 = vrot.slane %v10530, 3
  %v10592 = vsel %vm10555, %v10589, %v10591
  %v10593 = vrot.slane %v10531, 3
  %v10594 = vsel %vm10555, %v10591, %v10593
  %v10595 = vrot.slane %v10532, 3
  %v10596 = vsel %vm10555, %v10593, %v10595
  %v10597 = vrot.slane %v10533, 3
  %v10598 = vsel %vm10555, %v10595, %v10597
  %v10599 = vrot.slane %v10534, 3
  %v10600 = vsel %vm10555, %v10597, %v10599
  %v10601 = vrot.slane %v10535, 3
  %v10602 = vsel %vm10555, %v10599, %v10601
  %v10603 = vrot.slane %v10536, 3
  %v10604 = vsel %vm10555, %v10601, %v10603
  %v10605 = vrot.slane %v10537, 3
  %v10606 = vsel %vm10555, %v10603, %v10605
  %v10607 = vrot.slane %v10538, 3
  %v10608 = vsel %vm10555, %v10605, %v10607
  %v10609 = vrot.slane %v10539, 3
  %v10610 = vsel %vm10555, %v10607, %v10609
  %v10611 = vrot.slane %v10540, 3
  %v10612 = vsel %vm10555, %v10609, %v10611
  %v10613 = vrot.slane %v10541, 3
  %v10614 = vsel %vm10555, %v10611, %v10613
  %v10615 = vrot.slane %v10542, 3
  %v10616 = vsel %vm10555, %v10613, %v10615
  %v10617 = vrot.slane %v10543, 3
  %v10618 = vsel %vm10555, %v10615, %v10617
  %v10619 = vrot.slane %v10544, 3
  %v10620 = vsel %vm10555, %v10617, %v10619
  %v10621 = vrot.slane %v10545, 3
  %v10622 = vsel %vm10555, %v10619, %v10621
  %v10623 = vrot.slane %v10546, 3
  %v10624 = vsel %vm10555, %v10621, %v10623
  %v10625 = vrot.slane %v10547, 3
  %v10626 = vsel %vm10555, %v10623, %v10625
  %v10627 = vrot.slane %v10548, 3
  %v10628 = vsel %vm10555, %v10625, %v10627
  %v10629 = vrot.slane %v10549, 3
  %v10630 = vsel %vm10555, %v10627, %v10629
  %v10631 = vrot.slane %v10550, 3
  %v10632 = vsel %vm10555, %v10629, %v10631
  %v10633 = vrot.slane %v10551, 3
  %v10634 = vsel %vm10555, %v10631, %v10633
  %v10635 = vrot.slane %v10552, 3
  %v10636 = vsel %vm10555, %v10633, %v10635
  %v10637 = vrot.slane %v10553, 3
  %v10638 = vsel %vm10555, %v10635, %v10637
  %v10639 = vrot.slane %v10554, 3
  %v10640 = vsel %vm10555, %v10637, %v10639
  %v10642 = vsel %vm696, %v10558, 0
  %v10645 = vsel %vm696, %v10560, 0
  %v10648 = vsel %vm696, %v10562, 0
  %v10651 = vsel %vm696, %v10564, 0
  %v10654 = vsel %vm696, %v10566, 0
  %v10657 = vsel %vm696, %v10568, 0
  %v10660 = vsel %vm696, %v10570, 0
  %v10663 = vsel %vm696, %v10572, 0
  %v10666 = vsel %vm696, %v10574, 0
  %v10669 = vsel %vm696, %v10576, 0
  %v10672 = vsel %vm696, %v10578, 0
  %v10675 = vsel %vm696, %v10580, 0
  %v10678 = vsel %vm696, %v10582, 0
  %v10681 = vsel %vm696, %v10584, 0
  %v10684 = vsel %vm696, %v10586, 0
  %v10687 = vsel %vm696, %v10588, 0
  %v10690 = vsel %vm696, %v10590, 0
  %v10693 = vsel %vm696, %v10592, 0
  %v10696 = vsel %vm696, %v10594, 0
  %v10699 = vsel %vm696, %v10596, 0
  %v10702 = vsel %vm696, %v10598, 0
  %v10705 = vsel %vm696, %v10600, 0
  %v10708 = vsel %vm696, %v10602, 0
  %v10711 = vsel %vm696, %v10604, 0
  %v10714 = vsel %vm696, %v10606, 0
  %v10717 = vsel %vm696, %v10608, 0
  %v10720 = vsel %vm696, %v10610, 0
  %v10723 = vsel %vm696, %v10612, 0
  %v10726 = vsel %vm696, %v10614, 0
  %v10729 = vsel %vm696, %v10616, 0
  %v10732 = vsel %vm696, %v10618, 0
  %v10735 = vsel %vm696, %v10620, 0
  %v10738 = vsel %vm696, %v10622, 0
  %v10741 = vsel %vm696, %v10624, 0
  %v10744 = vsel %vm696, %v10626, 0
  %v10747 = vsel %vm696, %v10628, 0
  %v10750 = vsel %vm696, %v10630, 0
  %v10753 = vsel %vm696, %v10632, 0
  %v10756 = vsel %vm696, %v10634, 0
  %v10759 = vsel %vm696, %v10636, 0
  %v10762 = vsel %vm696, %v10638, 0
  %v10765 = vsel %vm696, %v10640, 0
  %v10768 = vsel %vm823, %v10341, 0
  %10770 = vmatprep.subr.bf16.mxu0 0
  %10771 = vmatpush1.bf16.msra.mxu0 0
  %10772 = vmatprep.subr.bf16.mxu0 0
  %10773 = vmatpush1.bf16.msra.mxu0 0
  %10774 = vmatprep.subr.bf16.mxu0 0
  %10775 = vmatpush1.bf16.msra.mxu0 0
  %10776 = vmatprep.subr.bf16.mxu0 0
  %10777 = vmatpush1.bf16.msra.mxu0 0
  %10778 = vmatprep.subr.bf16.mxu0 0
  %10779 = vmatpush1.bf16.msra.mxu0 0
  %10780 = vmatprep.subr.bf16.mxu0 0
  %10781 = vmatpush1.bf16.msra.mxu0 0
  %10782 = vmatprep.subr.bf16.mxu0 0
  %10783 = vmatpush1.bf16.msra.mxu0 0
  %10784 = vmatprep.subr.bf16.mxu0 0
  %10785 = vmatpush1.bf16.msra.mxu0 %v10768
  %10786 = vmatprep.subr.bf16.mxu0 0
  %10787 = vmatpush2.bf16.msra.mxu0 0
  %10788 = vmatprep.subr.bf16.mxu0 0
  %10789 = vmatpush2.bf16.msra.mxu0 0
  %10790 = vmatprep.subr.bf16.mxu0 0
  %10791 = vmatpush2.bf16.msra.mxu0 0
  %10792 = vmatprep.subr.bf16.mxu0 0
  %10793 = vmatpush2.bf16.msra.mxu0 0
  %10794 = vmatprep.subr.bf16.mxu0 0
  %10795 = vmatpush2.bf16.msra.mxu0 0
  %10796 = vmatprep.subr.bf16.mxu0 0
  %10797 = vmatpush2.bf16.msra.mxu0 0
  %10798 = vmatprep.subr.bf16.mxu0 0
  %10799 = vmatpush2.bf16.msra.mxu0 0
  %10800 = vmatprep.subr.bf16.mxu0 0
  %10801 = vmatpush2.bf16.msra.mxu0 0
  %10802 = vmatprep.mubr.bf16.mxu0 0
  %10803 = vmatmul.mubr.bf16.gmra.mxu0 %v10642
  %v10804 = vpop.f32.mrf.mxu0
  %v10805 = vadd.f32 0.0, %v10804
  %v10806 = vpop.f32.mrf.mxu0
  %v10807 = vpop.f32.mrf.mxu0
  %v10808 = vadd.f32 0.0, %v10807
  %v10809 = vpop.f32.mrf.mxu0
  %10810 = vmatprep.mubr.bf16.mxu0 0
  %10811 = vmatmul.mubr.bf16.gmra.mxu0 %v10645
  %v10812 = vpop.f32.mrf.mxu0
  %v10813 = vadd.f32 0.0, %v10812
  %v10814 = vpop.f32.mrf.mxu0
  %v10815 = vpop.f32.mrf.mxu0
  %v10816 = vadd.f32 0.0, %v10815
  %v10817 = vpop.f32.mrf.mxu0
  %10818 = vmatprep.mubr.bf16.mxu0 0
  %10819 = vmatmul.mubr.bf16.gmra.mxu0 %v10648
  %v10820 = vpop.f32.mrf.mxu0
  %v10821 = vadd.f32 0.0, %v10820
  %v10822 = vpop.f32.mrf.mxu0
  %v10823 = vpop.f32.mrf.mxu0
  %v10824 = vadd.f32 0.0, %v10823
  %v10825 = vpop.f32.mrf.mxu0
  %10826 = vmatprep.mubr.bf16.mxu0 0
  %10827 = vmatmul.mubr.bf16.gmra.mxu0 %v10651
  %v10828 = vpop.f32.mrf.mxu0
  %v10829 = vadd.f32 0.0, %v10828
  %v10830 = vpop.f32.mrf.mxu0
  %v10831 = vpop.f32.mrf.mxu0
  %v10832 = vadd.f32 0.0, %v10831
  %v10833 = vpop.f32.mrf.mxu0
  %10834 = vmatprep.mubr.bf16.mxu0 0
  %10835 = vmatmul.mubr.bf16.gmra.mxu0 %v10654
  %v10836 = vpop.f32.mrf.mxu0
  %v10837 = vadd.f32 0.0, %v10836
  %v10838 = vpop.f32.mrf.mxu0
  %v10839 = vpop.f32.mrf.mxu0
  %v10840 = vadd.f32 0.0, %v10839
  %v10841 = vpop.f32.mrf.mxu0
  %10842 = vmatprep.mubr.bf16.mxu0 0
  %10843 = vmatmul.mubr.bf16.gmra.mxu0 %v10657
  %v10844 = vpop.f32.mrf.mxu0
  %v10845 = vadd.f32 0.0, %v10844
  %v10846 = vpop.f32.mrf.mxu0
  %v10847 = vpop.f32.mrf.mxu0
  %v10848 = vadd.f32 0.0, %v10847
  %v10849 = vpop.f32.mrf.mxu0
  %10850 = vmatprep.mubr.bf16.mxu0 0
  %10851 = vmatmul.mubr.bf16.gmra.mxu0 %v10660
  %v10852 = vpop.f32.mrf.mxu0
  %v10853 = vadd.f32 0.0, %v10852
  %v10854 = vpop.f32.mrf.mxu0
  %v10855 = vpop.f32.mrf.mxu0
  %v10856 = vadd.f32 0.0, %v10855
  %v10857 = vpop.f32.mrf.mxu0
  %10858 = vmatprep.mubr.bf16.mxu0 0
  %10859 = vmatmul.mubr.bf16.gmra.mxu0 %v10663
  %v10860 = vpop.f32.mrf.mxu0
  %v10861 = vadd.f32 0.0, %v10860
  %v10862 = vpop.f32.mrf.mxu0
  %v10863 = vpop.f32.mrf.mxu0
  %v10864 = vadd.f32 0.0, %v10863
  %v10865 = vpop.f32.mrf.mxu0
  %10866 = vmatprep.mubr.bf16.mxu0 0
  %10867 = vmatmul.mubr.bf16.gmra.mxu0 %v10666
  %v10868 = vpop.f32.mrf.mxu0
  %v10869 = vadd.f32 0.0, %v10868
  %v10870 = vpop.f32.mrf.mxu0
  %v10871 = vpop.f32.mrf.mxu0
  %v10872 = vadd.f32 0.0, %v10871
  %v10873 = vpop.f32.mrf.mxu0
  %10874 = vmatprep.mubr.bf16.mxu0 0
  %10875 = vmatmul.mubr.bf16.gmra.mxu0 %v10669
  %v10876 = vpop.f32.mrf.mxu0
  %v10877 = vadd.f32 0.0, %v10876
  %v10878 = vpop.f32.mrf.mxu0
  %v10879 = vpop.f32.mrf.mxu0
  %v10880 = vadd.f32 0.0, %v10879
  %v10881 = vpop.f32.mrf.mxu0
  %10882 = vmatprep.mubr.bf16.mxu0 0
  %10883 = vmatmul.mubr.bf16.gmra.mxu0 %v10672
  %v10884 = vpop.f32.mrf.mxu0
  %v10885 = vadd.f32 0.0, %v10884
  %v10886 = vpop.f32.mrf.mxu0
  %v10887 = vpop.f32.mrf.mxu0
  %v10888 = vadd.f32 0.0, %v10887
  %v10889 = vpop.f32.mrf.mxu0
  %10890 = vmatprep.mubr.bf16.mxu0 0
  %10891 = vmatmul.mubr.bf16.gmra.mxu0 %v10675
  %v10892 = vpop.f32.mrf.mxu0
  %v10893 = vadd.f32 0.0, %v10892
  %v10894 = vpop.f32.mrf.mxu0
  %v10895 = vpop.f32.mrf.mxu0
  %v10896 = vadd.f32 0.0, %v10895
  %v10897 = vpop.f32.mrf.mxu0
  %10898 = vmatprep.mubr.bf16.mxu0 0
  %10899 = vmatmul.mubr.bf16.gmra.mxu0 %v10678
  %v10900 = vpop.f32.mrf.mxu0
  %v10901 = vadd.f32 0.0, %v10900
  %v10902 = vpop.f32.mrf.mxu0
  %v10903 = vpop.f32.mrf.mxu0
  %v10904 = vadd.f32 0.0, %v10903
  %v10905 = vpop.f32.mrf.mxu0
  %10906 = vmatprep.mubr.bf16.mxu0 0
  %10907 = vmatmul.mubr.bf16.gmra.mxu0 %v10681
  %v10908 = vpop.f32.mrf.mxu0
  %v10909 = vadd.f32 0.0, %v10908
  %v10910 = vpop.f32.mrf.mxu0
  %v10911 = vpop.f32.mrf.mxu0
  %v10912 = vadd.f32 0.0, %v10911
  %v10913 = vpop.f32.mrf.mxu0
  %10914 = vmatprep.mubr.bf16.mxu0 0
  %10915 = vmatmul.mubr.bf16.gmra.mxu0 %v10684
  %v10916 = vpop.f32.mrf.mxu0
  %v10917 = vadd.f32 0.0, %v10916
  %v10918 = vpop.f32.mrf.mxu0
  %v10919 = vpop.f32.mrf.mxu0
  %v10920 = vadd.f32 0.0, %v10919
  %v10921 = vpop.f32.mrf.mxu0
  %10922 = vmatprep.mubr.bf16.mxu0 0
  %10923 = vmatmul.mubr.bf16.gmra.mxu0 %v10687
  %v10924 = vpop.f32.mrf.mxu0
  %v10925 = vadd.f32 0.0, %v10924
  %v10926 = vpop.f32.mrf.mxu0
  %v10927 = vpop.f32.mrf.mxu0
  %v10928 = vadd.f32 0.0, %v10927
  %v10929 = vpop.f32.mrf.mxu0
  %10930 = vmatprep.mubr.bf16.mxu0 0
  %10931 = vmatmul.mubr.bf16.gmra.mxu0 %v10690
  %v10932 = vpop.f32.mrf.mxu0
  %v10933 = vadd.f32 0.0, %v10932
  %v10934 = vpop.f32.mrf.mxu0
  %v10935 = vpop.f32.mrf.mxu0
  %v10936 = vadd.f32 0.0, %v10935
  %v10937 = vpop.f32.mrf.mxu0
  %10938 = vmatprep.mubr.bf16.mxu0 0
  %10939 = vmatmul.mubr.bf16.gmra.mxu0 %v10693
  %v10940 = vpop.f32.mrf.mxu0
  %v10941 = vadd.f32 0.0, %v10940
  %v10942 = vpop.f32.mrf.mxu0
  %v10943 = vpop.f32.mrf.mxu0
  %v10944 = vadd.f32 0.0, %v10943
  %v10945 = vpop.f32.mrf.mxu0
  %10946 = vmatprep.mubr.bf16.mxu0 0
  %10947 = vmatmul.mubr.bf16.gmra.mxu0 %v10696
  %v10948 = vpop.f32.mrf.mxu0
  %v10949 = vadd.f32 0.0, %v10948
  %v10950 = vpop.f32.mrf.mxu0
  %v10951 = vpop.f32.mrf.mxu0
  %v10952 = vadd.f32 0.0, %v10951
  %v10953 = vpop.f32.mrf.mxu0
  %10954 = vmatprep.mubr.bf16.mxu0 0
  %10955 = vmatmul.mubr.bf16.gmra.mxu0 %v10699
  %v10956 = vpop.f32.mrf.mxu0
  %v10957 = vadd.f32 0.0, %v10956
  %v10958 = vpop.f32.mrf.mxu0
  %v10959 = vpop.f32.mrf.mxu0
  %v10960 = vadd.f32 0.0, %v10959
  %v10961 = vpop.f32.mrf.mxu0
  %10962 = vmatprep.mubr.bf16.mxu0 0
  %10963 = vmatmul.mubr.bf16.gmra.mxu0 %v10702
  %v10964 = vpop.f32.mrf.mxu0
  %v10965 = vadd.f32 0.0, %v10964
  %v10966 = vpop.f32.mrf.mxu0
  %v10967 = vpop.f32.mrf.mxu0
  %v10968 = vadd.f32 0.0, %v10967
  %v10969 = vpop.f32.mrf.mxu0
  %10970 = vmatprep.mubr.bf16.mxu0 0
  %10971 = vmatmul.mubr.bf16.gmra.mxu0 %v10705
  %v10972 = vpop.f32.mrf.mxu0
  %v10973 = vadd.f32 0.0, %v10972
  %v10974 = vpop.f32.mrf.mxu0
  %v10975 = vpop.f32.mrf.mxu0
  %v10976 = vadd.f32 0.0, %v10975
  %v10977 = vpop.f32.mrf.mxu0
  %10978 = vmatprep.mubr.bf16.mxu0 0
  %10979 = vmatmul.mubr.bf16.gmra.mxu0 %v10708
  %v10980 = vpop.f32.mrf.mxu0
  %v10981 = vadd.f32 0.0, %v10980
  %v10982 = vpop.f32.mrf.mxu0
  %v10983 = vpop.f32.mrf.mxu0
  %v10984 = vadd.f32 0.0, %v10983
  %v10985 = vpop.f32.mrf.mxu0
  %10986 = vmatprep.mubr.bf16.mxu0 0
  %10987 = vmatmul.mubr.bf16.gmra.mxu0 %v10711
  %v10988 = vpop.f32.mrf.mxu0
  %v10989 = vadd.f32 0.0, %v10988
  %v10990 = vpop.f32.mrf.mxu0
  %v10991 = vpop.f32.mrf.mxu0
  %v10992 = vadd.f32 0.0, %v10991
  %v10993 = vpop.f32.mrf.mxu0
  %10994 = vmatprep.mubr.bf16.mxu0 0
  %10995 = vmatmul.mubr.bf16.gmra.mxu0 %v10714
  %v10996 = vpop.f32.mrf.mxu0
  %v10997 = vadd.f32 0.0, %v10996
  %v10998 = vpop.f32.mrf.mxu0
  %v10999 = vpop.f32.mrf.mxu0
  %v11000 = vadd.f32 0.0, %v10999
  %v11001 = vpop.f32.mrf.mxu0
  %11002 = vmatprep.mubr.bf16.mxu0 0
  %11003 = vmatmul.mubr.bf16.gmra.mxu0 %v10717
  %v11004 = vpop.f32.mrf.mxu0
  %v11005 = vadd.f32 0.0, %v11004
  %v11006 = vpop.f32.mrf.mxu0
  %v11007 = vpop.f32.mrf.mxu0
  %v11008 = vadd.f32 0.0, %v11007
  %v11009 = vpop.f32.mrf.mxu0
  %11010 = vmatprep.mubr.bf16.mxu0 0
  %11011 = vmatmul.mubr.bf16.gmra.mxu0 %v10720
  %v11012 = vpop.f32.mrf.mxu0
  %v11013 = vadd.f32 0.0, %v11012
  %v11014 = vpop.f32.mrf.mxu0
  %v11015 = vpop.f32.mrf.mxu0
  %v11016 = vadd.f32 0.0, %v11015
  %v11017 = vpop.f32.mrf.mxu0
  %11018 = vmatprep.mubr.bf16.mxu0 0
  %11019 = vmatmul.mubr.bf16.gmra.mxu0 %v10723
  %v11020 = vpop.f32.mrf.mxu0
  %v11021 = vadd.f32 0.0, %v11020
  %v11022 = vpop.f32.mrf.mxu0
  %v11023 = vpop.f32.mrf.mxu0
  %v11024 = vadd.f32 0.0, %v11023
  %v11025 = vpop.f32.mrf.mxu0
  %11026 = vmatprep.mubr.bf16.mxu0 0
  %11027 = vmatmul.mubr.bf16.gmra.mxu0 %v10726
  %v11028 = vpop.f32.mrf.mxu0
  %v11029 = vadd.f32 0.0, %v11028
  %v11030 = vpop.f32.mrf.mxu0
  %v11031 = vpop.f32.mrf.mxu0
  %v11032 = vadd.f32 0.0, %v11031
  %v11033 = vpop.f32.mrf.mxu0
  %11034 = vmatprep.mubr.bf16.mxu0 0
  %11035 = vmatmul.mubr.bf16.gmra.mxu0 %v10729
  %v11036 = vpop.f32.mrf.mxu0
  %v11037 = vadd.f32 0.0, %v11036
  %v11038 = vpop.f32.mrf.mxu0
  %v11039 = vpop.f32.mrf.mxu0
  %v11040 = vadd.f32 0.0, %v11039
  %v11041 = vpop.f32.mrf.mxu0
  %11042 = vmatprep.mubr.bf16.mxu0 0
  %11043 = vmatmul.mubr.bf16.gmra.mxu0 %v10732
  %v11044 = vpop.f32.mrf.mxu0
  %v11045 = vadd.f32 0.0, %v11044
  %v11046 = vpop.f32.mrf.mxu0
  %v11047 = vpop.f32.mrf.mxu0
  %v11048 = vadd.f32 0.0, %v11047
  %v11049 = vpop.f32.mrf.mxu0
  %11050 = vmatprep.mubr.bf16.mxu0 0
  %11051 = vmatmul.mubr.bf16.gmra.mxu0 %v10735
  %v11052 = vpop.f32.mrf.mxu0
  %v11053 = vadd.f32 0.0, %v11052
  %v11054 = vpop.f32.mrf.mxu0
  %v11055 = vpop.f32.mrf.mxu0
  %v11056 = vadd.f32 0.0, %v11055
  %v11057 = vpop.f32.mrf.mxu0
  %11058 = vmatprep.mubr.bf16.mxu0 0
  %11059 = vmatmul.mubr.bf16.gmra.mxu0 %v10738
  %v11060 = vpop.f32.mrf.mxu0
  %v11061 = vadd.f32 0.0, %v11060
  %v11062 = vpop.f32.mrf.mxu0
  %v11063 = vpop.f32.mrf.mxu0
  %v11064 = vadd.f32 0.0, %v11063
  %v11065 = vpop.f32.mrf.mxu0
  %11066 = vmatprep.mubr.bf16.mxu0 0
  %11067 = vmatmul.mubr.bf16.gmra.mxu0 %v10741
  %v11068 = vpop.f32.mrf.mxu0
  %v11069 = vadd.f32 0.0, %v11068
  %v11070 = vpop.f32.mrf.mxu0
  %v11071 = vpop.f32.mrf.mxu0
  %v11072 = vadd.f32 0.0, %v11071
  %v11073 = vpop.f32.mrf.mxu0
  %11074 = vmatprep.mubr.bf16.mxu0 0
  %11075 = vmatmul.mubr.bf16.gmra.mxu0 %v10744
  %v11076 = vpop.f32.mrf.mxu0
  %v11077 = vadd.f32 0.0, %v11076
  %v11078 = vpop.f32.mrf.mxu0
  %v11079 = vpop.f32.mrf.mxu0
  %v11080 = vadd.f32 0.0, %v11079
  %v11081 = vpop.f32.mrf.mxu0
  %11082 = vmatprep.mubr.bf16.mxu0 0
  %11083 = vmatmul.mubr.bf16.gmra.mxu0 %v10747
  %v11084 = vpop.f32.mrf.mxu0
  %v11085 = vadd.f32 0.0, %v11084
  %v11086 = vpop.f32.mrf.mxu0
  %v11087 = vpop.f32.mrf.mxu0
  %v11088 = vadd.f32 0.0, %v11087
  %v11089 = vpop.f32.mrf.mxu0
  %11090 = vmatprep.mubr.bf16.mxu0 0
  %11091 = vmatmul.mubr.bf16.gmra.mxu0 %v10750
  %v11092 = vpop.f32.mrf.mxu0
  %v11093 = vadd.f32 0.0, %v11092
  %v11094 = vpop.f32.mrf.mxu0
  %v11095 = vpop.f32.mrf.mxu0
  %v11096 = vadd.f32 0.0, %v11095
  %v11097 = vpop.f32.mrf.mxu0
  %11098 = vmatprep.mubr.bf16.mxu0 0
  %11099 = vmatmul.mubr.bf16.gmra.mxu0 %v10753
  %v11100 = vpop.f32.mrf.mxu0
  %v11101 = vadd.f32 0.0, %v11100
  %v11102 = vpop.f32.mrf.mxu0
  %v11103 = vpop.f32.mrf.mxu0
  %v11104 = vadd.f32 0.0, %v11103
  %v11105 = vpop.f32.mrf.mxu0
  %11106 = vmatprep.mubr.bf16.mxu0 0
  %11107 = vmatmul.mubr.bf16.gmra.mxu0 %v10756
  %v11108 = vpop.f32.mrf.mxu0
  %v11109 = vadd.f32 0.0, %v11108
  %v11110 = vpop.f32.mrf.mxu0
  %v11111 = vpop.f32.mrf.mxu0
  %v11112 = vadd.f32 0.0, %v11111
  %v11113 = vpop.f32.mrf.mxu0
  %11114 = vmatprep.mubr.bf16.mxu0 0
  %11115 = vmatmul.mubr.bf16.gmra.mxu0 %v10759
  %v11116 = vpop.f32.mrf.mxu0
  %v11117 = vadd.f32 0.0, %v11116
  %v11118 = vpop.f32.mrf.mxu0
  %v11119 = vpop.f32.mrf.mxu0
  %v11120 = vadd.f32 0.0, %v11119
  %v11121 = vpop.f32.mrf.mxu0
  %11122 = vmatprep.mubr.bf16.mxu0 0
  %11123 = vmatmul.mubr.bf16.gmra.mxu0 %v10762
  %v11124 = vpop.f32.mrf.mxu0
  %v11125 = vadd.f32 0.0, %v11124
  %v11126 = vpop.f32.mrf.mxu0
  %v11127 = vpop.f32.mrf.mxu0
  %v11128 = vadd.f32 0.0, %v11127
  %v11129 = vpop.f32.mrf.mxu0
  %11130 = vmatprep.mubr.bf16.mxu0 0
  %11131 = vmatmul.mubr.bf16.gmra.mxu0 %v10765
  %v11132 = vpop.f32.mrf.mxu0
  %v11133 = vadd.f32 0.0, %v11132
  %v11134 = vpop.f32.mrf.mxu0
  %v11135 = vpop.f32.mrf.mxu0
  %v11136 = vadd.f32 0.0, %v11135
  %v11137 = vpop.f32.mrf.mxu0
  %11138 = vdwg.mxu0
  %v11139 = vadd.f32 %v10171, %v10805
  %v11140 = vadd.f32 %v10172, %v10808
  %v11141 = vadd.f32 %v10173, %v10813
  %v11142 = vadd.f32 %v10174, %v10816
  %v11143 = vadd.f32 %v10175, %v10821
  %v11144 = vadd.f32 %v10176, %v10824
  %v11145 = vadd.f32 %v10177, %v10829
  %v11146 = vadd.f32 %v10178, %v10832
  %v11147 = vadd.f32 %v10179, %v10837
  %v11148 = vadd.f32 %v10180, %v10840
  %v11149 = vadd.f32 %v10181, %v10845
  %v11150 = vadd.f32 %v10182, %v10848
  %v11151 = vadd.f32 %v10183, %v10853
  %v11152 = vadd.f32 %v10184, %v10856
  %v11153 = vadd.f32 %v10185, %v10861
  %v11154 = vadd.f32 %v10186, %v10864
  %v11155 = vadd.f32 %v10187, %v10869
  %v11156 = vadd.f32 %v10188, %v10872
  %v11157 = vadd.f32 %v10189, %v10877
  %v11158 = vadd.f32 %v10190, %v10880
  %v11159 = vadd.f32 %v10191, %v10885
  %v11160 = vadd.f32 %v10192, %v10888
  %v11161 = vadd.f32 %v10193, %v10893
  %v11162 = vadd.f32 %v10194, %v10896
  %v11163 = vadd.f32 %v10195, %v10901
  %v11164 = vadd.f32 %v10196, %v10904
  %v11165 = vadd.f32 %v10197, %v10909
  %v11166 = vadd.f32 %v10198, %v10912
  %v11167 = vadd.f32 %v10199, %v10917
  %v11168 = vadd.f32 %v10200, %v10920
  %v11169 = vadd.f32 %v10201, %v10925
  %v11170 = vadd.f32 %v10202, %v10928
  %v11171 = vadd.f32 %v10203, %v10933
  %v11172 = vadd.f32 %v10204, %v10936
  %v11173 = vadd.f32 %v10205, %v10941
  %v11174 = vadd.f32 %v10206, %v10944
  %v11175 = vadd.f32 %v10207, %v10949
  %v11176 = vadd.f32 %v10208, %v10952
  %v11177 = vadd.f32 %v10209, %v10957
  %v11178 = vadd.f32 %v10210, %v10960
  %v11179 = vadd.f32 %v10211, %v10965
  %v11180 = vadd.f32 %v10212, %v10968
  %v11181 = vadd.f32 %v10213, %v10973
  %v11182 = vadd.f32 %v10214, %v10976
  %v11183 = vadd.f32 %v10215, %v10981
  %v11184 = vadd.f32 %v10216, %v10984
  %v11185 = vadd.f32 %v10217, %v10989
  %v11186 = vadd.f32 %v10218, %v10992
  %v11187 = vadd.f32 %v10219, %v10997
  %v11188 = vadd.f32 %v10220, %v11000
  %v11189 = vadd.f32 %v10221, %v11005
  %v11190 = vadd.f32 %v10222, %v11008
  %v11191 = vadd.f32 %v10223, %v11013
  %v11192 = vadd.f32 %v10224, %v11016
  %v11193 = vadd.f32 %v10225, %v11021
  %v11194 = vadd.f32 %v10226, %v11024
  %v11195 = vadd.f32 %v10227, %v11029
  %v11196 = vadd.f32 %v10228, %v11032
  %v11197 = vadd.f32 %v10229, %v11037
  %v11198 = vadd.f32 %v10230, %v11040
  %v11199 = vadd.f32 %v10231, %v11045
  %v11200 = vadd.f32 %v10232, %v11048
  %v11201 = vadd.f32 %v10233, %v11053
  %v11202 = vadd.f32 %v10234, %v11056
  %v11203 = vadd.f32 %v10235, %v11061
  %v11204 = vadd.f32 %v10236, %v11064
  %v11205 = vadd.f32 %v10237, %v11069
  %v11206 = vadd.f32 %v10238, %v11072
  %v11207 = vadd.f32 %v10239, %v11077
  %v11208 = vadd.f32 %v10240, %v11080
  %v11209 = vadd.f32 %v10241, %v11085
  %v11210 = vadd.f32 %v10242, %v11088
  %v11211 = vadd.f32 %v10243, %v11093
  %v11212 = vadd.f32 %v10244, %v11096
  %v11213 = vadd.f32 %v10245, %v11101
  %v11214 = vadd.f32 %v10246, %v11104
  %v11215 = vadd.f32 %v10247, %v11109
  %v11216 = vadd.f32 %v10248, %v11112
  %v11217 = vadd.f32 %v10249, %v11117
  %v11218 = vadd.f32 %v10250, %v11120
  %v11219 = vadd.f32 %v10251, %v11125
  %v11220 = vadd.f32 %v10252, %v11128
  %v11221 = vadd.f32 %v10253, %v11133
  %v11222 = vadd.f32 %v10254, %v11136
  %11223 = vst [vmem:[%s4] sm:$0xff] %v11139
  %11224 = vst [vmem:[%s4 + $0x8] sm:$0xff] %v11140
  %11225 = vst [vmem:[%s4 + $0x10] sm:$0xff] %v11141
  %11226 = vst [vmem:[%s4 + $0x18] sm:$0xff] %v11142
  %11227 = vst [vmem:[%s4 + $0x20] sm:$0xff] %v11143
  %11228 = vst [vmem:[%s4 + $0x28] sm:$0xff] %v11144
  %11229 = vst [vmem:[%s4 + $0x30] sm:$0xff] %v11145
  %11230 = vst [vmem:[%s4 + $0x38] sm:$0xff] %v11146
  %11231 = vst [vmem:[%s4 + $0x40] sm:$0xff] %v11147
  %11232 = vst [vmem:[%s4 + $0x48] sm:$0xff] %v11148
  %11233 = vst [vmem:[%s4 + $0x50] sm:$0xff] %v11149
  %11234 = vst [vmem:[%s4 + $0x58] sm:$0xff] %v11150
  %11235 = vst [vmem:[%s4 + $0x60] sm:$0xff] %v11151
  %11236 = vst [vmem:[%s4 + $0x68] sm:$0xff] %v11152
  %11237 = vst [vmem:[%s4 + $0x70] sm:$0xff] %v11153
  %11238 = vst [vmem:[%s4 + $0x78] sm:$0xff] %v11154
  %11239 = vst [vmem:[%s4 + $0x80] sm:$0xff] %v11155
  %11240 = vst [vmem:[%s4 + $0x88] sm:$0xff] %v11156
  %11241 = vst [vmem:[%s4 + $0x90] sm:$0xff] %v11157
  %11242 = vst [vmem:[%s4 + $0x98] sm:$0xff] %v11158
  %11243 = vst [vmem:[%s4 + $0xa0] sm:$0xff] %v11159
  %11244 = vst [vmem:[%s4 + $0xa8] sm:$0xff] %v11160
  %11245 = vst [vmem:[%s4 + $0xb0] sm:$0xff] %v11161
  %11246 = vst [vmem:[%s4 + $0xb8] sm:$0xff] %v11162
  %11247 = vst [vmem:[%s4 + $0xc0] sm:$0xff] %v11163
  %11248 = vst [vmem:[%s4 + $0xc8] sm:$0xff] %v11164
  %11249 = vst [vmem:[%s4 + $0xd0] sm:$0xff] %v11165
  %11250 = vst [vmem:[%s4 + $0xd8] sm:$0xff] %v11166
  %11251 = vst [vmem:[%s4 + $0xe0] sm:$0xff] %v11167
  %11252 = vst [vmem:[%s4 + $0xe8] sm:$0xff] %v11168
  %11253 = vst [vmem:[%s4 + $0xf0] sm:$0xff] %v11169
  %11254 = vst [vmem:[%s4 + $0xf8] sm:$0xff] %v11170
  %11255 = vst [vmem:[%s4 + $0x100] sm:$0xff] %v11171
  %11256 = vst [vmem:[%s4 + $0x108] sm:$0xff] %v11172
  %11257 = vst [vmem:[%s4 + $0x110] sm:$0xff] %v11173
  %11258 = vst [vmem:[%s4 + $0x118] sm:$0xff] %v11174
  %11259 = vst [vmem:[%s4 + $0x120] sm:$0xff] %v11175
  %11260 = vst [vmem:[%s4 + $0x128] sm:$0xff] %v11176
  %11261 = vst [vmem:[%s4 + $0x130] sm:$0xff] %v11177
  %11262 = vst [vmem:[%s4 + $0x138] sm:$0xff] %v11178
  %11263 = vst [vmem:[%s4 + $0x140] sm:$0xff] %v11179
  %11264 = vst [vmem:[%s4 + $0x148] sm:$0xff] %v11180
  %11265 = vst [vmem:[%s4 + $0x150] sm:$0xff] %v11181
  %11266 = vst [vmem:[%s4 + $0x158] sm:$0xff] %v11182
  %11267 = vst [vmem:[%s4 + $0x160] sm:$0xff] %v11183
  %11268 = vst [vmem:[%s4 + $0x168] sm:$0xff] %v11184
  %11269 = vst [vmem:[%s4 + $0x170] sm:$0xff] %v11185
  %11270 = vst [vmem:[%s4 + $0x178] sm:$0xff] %v11186
  %11271 = vst [vmem:[%s4 + $0x180] sm:$0xff] %v11187
  %11272 = vst [vmem:[%s4 + $0x188] sm:$0xff] %v11188
  %11273 = vst [vmem:[%s4 + $0x190] sm:$0xff] %v11189
  %11274 = vst [vmem:[%s4 + $0x198] sm:$0xff] %v11190
  %11275 = vst [vmem:[%s4 + $0x1a0] sm:$0xff] %v11191
  %11276 = vst [vmem:[%s4 + $0x1a8] sm:$0xff] %v11192
  %11277 = vst [vmem:[%s4 + $0x1b0] sm:$0xff] %v11193
  %11278 = vst [vmem:[%s4 + $0x1b8] sm:$0xff] %v11194
  %11279 = vst [vmem:[%s4 + $0x1c0] sm:$0xff] %v11195
  %11280 = vst [vmem:[%s4 + $0x1c8] sm:$0xff] %v11196
  %11281 = vst [vmem:[%s4 + $0x1d0] sm:$0xff] %v11197
  %11282 = vst [vmem:[%s4 + $0x1d8] sm:$0xff] %v11198
  %11283 = vst [vmem:[%s4 + $0x1e0] sm:$0xff] %v11199
  %11284 = vst [vmem:[%s4 + $0x1e8] sm:$0xff] %v11200
  %11285 = vst [vmem:[%s4 + $0x1f0] sm:$0xff] %v11201
  %11286 = vst [vmem:[%s4 + $0x1f8] sm:$0xff] %v11202
  %11287 = vst [vmem:[%s4 + $0x200] sm:$0xff] %v11203
  %11288 = vst [vmem:[%s4 + $0x208] sm:$0xff] %v11204
  %11289 = vst [vmem:[%s4 + $0x210] sm:$0xff] %v11205
  %11290 = vst [vmem:[%s4 + $0x218] sm:$0xff] %v11206
  %11291 = vst [vmem:[%s4 + $0x220] sm:$0xff] %v11207
  %11292 = vst [vmem:[%s4 + $0x228] sm:$0xff] %v11208
  %11293 = vst [vmem:[%s4 + $0x230] sm:$0xff] %v11209
  %11294 = vst [vmem:[%s4 + $0x238] sm:$0xff] %v11210
  %11295 = vst [vmem:[%s4 + $0x240] sm:$0xff] %v11211
  %11296 = vst [vmem:[%s4 + $0x248] sm:$0xff] %v11212
  %11297 = vst [vmem:[%s4 + $0x250] sm:$0xff] %v11213
  %11298 = vst [vmem:[%s4 + $0x258] sm:$0xff] %v11214
  %11299 = vst [vmem:[%s4 + $0x260] sm:$0xff] %v11215
  %11300 = vst [vmem:[%s4 + $0x268] sm:$0xff] %v11216
  %11301 = vst [vmem:[%s4 + $0x270] sm:$0xff] %v11217
  %11302 = vst [vmem:[%s4 + $0x278] sm:$0xff] %v11218
  %11303 = vst [vmem:[%s4 + $0x280] sm:$0xff] %v11219
  %11304 = vst [vmem:[%s4 + $0x288] sm:$0xff] %v11220
  %11305 = vst [vmem:[%s4 + $0x290] sm:$0xff] %v11221
  %11306 = vst [vmem:[%s4 + $0x298] sm:$0xff] %v11222
  // Predicated region
  $region18: #{masked_conv2d_pallas.1} parent=0 // pred_check
    _
  $region19: #{masked_conv2d_pallas.1} parent=0 // pred_check_branch
    %11308 = sbr.rel (0) target = $region21
  $region20: #{masked_conv2d_pallas.1} parent=0 // pred_region
    _
  $region21: #{masked_conv2d_pallas.1} parent=0 // pred_fallthru
    _
  // Predicated region
  $region22: #{masked_conv2d_pallas.1} parent=0 // pred_check
    _
  $region23: #{masked_conv2d_pallas.1} parent=0 // pred_check_branch
    %11310 = sbr.rel (0) target = $region25
  $region24: #{masked_conv2d_pallas.1} parent=0 // pred_region
    _
  $region25: #{masked_conv2d_pallas.1} parent=0 // pred_fallthru
    _

</llo_original>
